<compile_context>
chip_gen: v5e
topology: v5e:2x2
jax: 0.10.0
libtpu: 0.0.40
codegen_flags: <defaults>
</compile_context>

<pallas_src>
import math
import jax
import jax.numpy as jnp
from jax.experimental import pallas as pl
from jax.experimental.pallas import tpu as pltpu

EPS = 1e-5


# ----------------------------- tiling helpers -------------------------------

def _round8(n):
    return max(8, (n // 8) * 8)


def _m_tile(M, max_rows=256):
    """Row tile for the GEMM M axis: aim for >=2 grid steps (v7x has 2 TensorCores)."""
    if M <= 16:
        return M
    return min(max_rows, _round8(pl.cdiv(M, 2)))


def _k_tile(K, max_k=1024):
    """K tile that exactly divides K (a partial K block would feed garbage to the dot)."""
    if K <= max_k:
        return K
    best = K
    t = 128
    while t <= max_k:
        if K % t == 0:
            best = t
        t += 128
    return best


def _row_tile(R, max_rows=1024):
    """Row tile for elementwise kernels: >=2 grid steps when possible."""
    if R <= 8:
        return R
    return min(max_rows, _round8(pl.cdiv(R, 2)))


# ----------------------------- Pallas kernels -------------------------------

def _matmul_kernel(x_ref, w_ref, o_ref, acc_ref):
    @pl.when(pl.program_id(1) == 0)
    def _init():
        acc_ref[...] = jnp.zeros_like(acc_ref)

    acc_ref[...] += jnp.dot(x_ref[...], w_ref[...],
                            preferred_element_type=jnp.float32)

    @pl.when(pl.program_id(1) == pl.num_programs(1) - 1)
    def _finalize():
        o_ref[...] = acc_ref[...]


def _matmul_add_kernel(x_ref, w_ref, r_ref, o_ref, acc_ref):
    @pl.when(pl.program_id(1) == 0)
    def _init():
        acc_ref[...] = jnp.zeros_like(acc_ref)

    acc_ref[...] += jnp.dot(x_ref[...], w_ref[...],
                            preferred_element_type=jnp.float32)

    @pl.when(pl.program_id(1) == pl.num_programs(1) - 1)
    def _finalize():
        o_ref[...] = acc_ref[...] + r_ref[...]


def pallas_matmul(x, w, residual=None):
    """x: (M, K) bf16, w: (K, N) bf16 -> (M, N) f32 (optionally + residual (M, N) f32)."""
    M, K = x.shape
    _, N = w.shape
    x = x.astype(jnp.bfloat16)
    w = w.astype(jnp.bfloat16)

    tm = _m_tile(M)
    tk = _k_tile(K)
    nk = max(1, K // tk) if K % tk == 0 else 1
    if K % tk != 0:          # fallback: whole K in one block
        tk, nk = K, 1
    grid = (pl.cdiv(M, tm), nk)

    in_specs = [
        pl.BlockSpec((tm, tk), lambda i, k: (i, k)),
        pl.BlockSpec((tk, N), lambda i, k: (k, 0)),
    ]
    if residual is not None:
        in_specs.append(pl.BlockSpec((tm, N), lambda i, k: (i, 0)))
        kernel = _matmul_add_kernel
        args = (x, w, residual.astype(jnp.float32))
    else:
        kernel = _matmul_kernel
        args = (x, w)

    return pl.pallas_call(
        kernel,
        out_shape=jax.ShapeDtypeStruct((M, N), jnp.float32),
        grid=grid,
        in_specs=in_specs,
        out_specs=pl.BlockSpec((tm, N), lambda i, k: (i, 0)),
        scratch_shapes=[pltpu.VMEM((tm, N), jnp.float32)],
        compiler_params=pltpu.CompilerParams(
            dimension_semantics=("parallel", "arbitrary")),
    )(*args)


def _bn_relu_kernel(x_ref, s_ref, b_ref, o_ref):
    y = x_ref[...] * s_ref[...] + b_ref[...]
    o_ref[...] = jnp.maximum(y, 0.0).astype(o_ref.dtype)


def _bn_relu_gap_kernel(x_ref, s_ref, b_ref, o_ref):
    y = jnp.maximum(x_ref[...] * s_ref[...] + b_ref[...], 0.0)
    o_ref[...] = jnp.mean(y, axis=1)  # global average pool over H*W


def pallas_bn_relu_gap(x, scale, bias):
    """x: (N, H*W, C) f32 -> (N, C) f32: relu(bn(x)) then global average pool."""
    N, HW, C = x.shape
    return pl.pallas_call(
        _bn_relu_gap_kernel,
        out_shape=jax.ShapeDtypeStruct((N, C), jnp.float32),
    )(x, scale.reshape(1, 1, C), bias.reshape(1, 1, C))


# ------------------------------ JAX glue ops ---------------------------------

def _bn_affine(bn):
    scale = bn["gamma"] / jnp.sqrt(bn["var"] + EPS)
    bias = bn["beta"] - bn["mean"] * scale
    return scale, bias


def bn_relu(x_nhwc, bn):
    """Eval-mode BatchNorm + ReLU. Output in bf16 (feeds the conv matmuls)."""
    N, H, W, C = x_nhwc.shape
    scale, bias = _bn_affine(bn)
    total = N * H * W * C

    if C <= 128 and 128 % C == 0 and total % 128 == 0:
        # Lane-dense view: last dim becomes 128 -> unmasked vector stores.
        reps = 128 // C
        x2 = x_nhwc.reshape(total // 128, 128)
        s2 = jnp.tile(scale, reps).reshape(1, 128)
        b2 = jnp.tile(bias, reps).reshape(1, 128)
    else:
        x2 = x_nhwc.reshape(-1, C)
        s2 = scale.reshape(1, C)
        b2 = bias.reshape(1, C)

    R, L = x2.shape
    tr = _row_tile(R)
    y2 = pl.pallas_call(
        _bn_relu_kernel,
        out_shape=jax.ShapeDtypeStruct((R, L), jnp.bfloat16),
        grid=(pl.cdiv(R, tr),),
        in_specs=[
            pl.BlockSpec((tr, L), lambda i: (i, 0)),
            pl.BlockSpec((1, L), lambda i: (0, 0)),
            pl.BlockSpec((1, L), lambda i: (0, 0)),
        ],
        out_specs=pl.BlockSpec((tr, L), lambda i: (i, 0)),
        compiler_params=pltpu.CompilerParams(dimension_semantics=("parallel",)),
    )(x2, s2, b2)
    return y2.reshape(N, H, W, C)


def conv2d(x_nhwc, w_oihw, stride, pad, residual=None):
    """Conv2d (no bias) via bf16 im2col + Pallas MXU matmul.

    x: (N,H,W,Cin); w: PyTorch layout (Cout,Cin,kh,kw).
    If `residual` (N,Ho,Wo,Cout) is given, it is added as a fused matmul epilogue.
    """
    N, H, W, Cin = x_nhwc.shape
    Cout, _, kh, kw = w_oihw.shape
    x = x_nhwc.astype(jnp.bfloat16)
    xp = jnp.pad(x, ((0, 0), (pad, pad), (pad, pad), (0, 0)))
    Ho = (H + 2 * pad - kh) // stride + 1
    Wo = (W + 2 * pad - kw) // stride + 1

    cols = []
    for dy in range(kh):
        for dx in range(kw):
            patch = xp[:, dy:dy + stride * (Ho - 1) + 1:stride,
                          dx:dx + stride * (Wo - 1) + 1:stride, :]
            cols.append(patch)
    xcol = jnp.concatenate(cols, axis=-1).reshape(N * Ho * Wo, kh * kw * Cin)
    # (Cout,Cin,kh,kw) -> (kh,kw,Cin,Cout) -> (K, Cout); constant-folded under jit.
    wmat = jnp.transpose(w_oihw, (2, 3, 1, 0)).reshape(kh * kw * Cin, Cout)
    wmat = wmat.astype(jnp.bfloat16)

    res2d = None if residual is None else residual.reshape(N * Ho * Wo, Cout)
    out = pallas_matmul(xcol, wmat, residual=res2d)
    return out.reshape(N, Ho, Wo, Cout)


# ---------------------------- parameter setup --------------------------------

def init_conv(key, cout, cin, kh, kw):
    n = kh * kw * cout
    std = math.sqrt(2.0 / n)
    return jax.random.normal(key, (cout, cin, kh, kw), jnp.float32) * std


def init_bn(c):
    return dict(
        gamma=jnp.ones((c,), jnp.float32),
        beta=jnp.zeros((c,), jnp.float32),
        mean=jnp.zeros((c,), jnp.float32),
        var=jnp.ones((c,), jnp.float32),
    )


def build_wrn_params(key, depth=10, widen_factor=2):
    nch = [16, 16 * widen_factor, 32 * widen_factor, 64 * widen_factor]
    assert (depth - 4) % 6 == 0
    n = (depth - 4) // 6
    keys = iter(jax.random.split(key, 128))

    def make_block(in_planes, out_planes, stride):
        blk = {
            "bn1": init_bn(in_planes),
            "conv1": init_conv(next(keys), out_planes, in_planes, 3, 3),
            "bn2": init_bn(out_planes),
            "conv2": init_conv(next(keys), out_planes, out_planes, 3, 3),
            "stride": stride,
            "equal": in_planes == out_planes,
        }
        if not blk["equal"]:
            blk["conv_sc"] = init_conv(next(keys), out_planes, in_planes, 1, 1)
        return blk

    def make_netblock(in_planes, out_planes, nb, stride):
        return [
            make_block(in_planes if i == 0 else out_planes, out_planes,
                       stride if i == 0 else 1)
            for i in range(nb)
        ]

    return {
        "conv1": init_conv(next(keys), nch[0], 3, 3, 3),
        "block1": make_netblock(nch[0], nch[1], n, 1),
        "block2": make_netblock(nch[1], nch[2], n, 2),
        "block3": make_netblock(nch[2], nch[3], n, 2),
        "bn1": init_bn(nch[3]),
        "nChannels": nch[3],
    }


# ------------------------------- forward pass --------------------------------

def basic_block(x, blk):
    if blk["equal"]:
        out = bn_relu(x, blk["bn1"])
        short = x                                   # raw (pre-BN) input, as in PyTorch
    else:
        xa = bn_relu(x, blk["bn1"])                 # x replaced, as in the PyTorch code
        out = xa
        short = conv2d(xa, blk["conv_sc"], blk["stride"], 0)
    out = conv2d(out, blk["conv1"], blk["stride"], 1)
    out = bn_relu(out, blk["bn2"])
    # TODO(synk): dropout(p=dropRate) active only in training mode; no-op in eval.
    # conv2 with the residual add fused as the matmul epilogue.
    out = conv2d(out, blk["conv2"], 1, 1, residual=short.astype(jnp.float32))
    return out


def wide_resnet_forward(params, x_nchw):
    # accepts NCHW (PyTorch convention), computes in NHWC
    x = jnp.transpose(x_nchw, (0, 2, 3, 1)).astype(jnp.float32)
    out = conv2d(x, params["conv1"], 1, 1)
    for blk in params["block1"]:
        out = basic_block(out, blk)
    for blk in params["block2"]:
        out = basic_block(out, blk)
    for blk in params["block3"]:
        out = basic_block(out, blk)
    N, H, W, C = out.shape
    scale, bias = _bn_affine(params["bn1"])
    # relu(bn1) + F.avg_pool2d(out, out.size()[2:]) + flatten, fused.
    feat = pallas_bn_relu_gap(out.reshape(N, H * W, C), scale, bias)
    return feat


# ----------------------------------- main -------------------------------------

if __name__ == "__main__":
    key = jax.random.PRNGKey(0)
    kp, kx = jax.random.split(key)

    # Small config consistent with the module: depth=10 -> 1 block per stage,
    # widen_factor=2 -> channels [16, 32, 64, 128].
    params = build_wrn_params(kp, depth=10, widen_factor=2)

    # Input is NCHW like the PyTorch module: batch=2, 3 channels, 16x16 spatial.
    x = jax.random.normal(kx, (2, 3, 16, 16), jnp.float32)

    # jit the whole forward; params are closed over so weight transposes / BN folds /
    # bf16 casts constant-fold and static flags (stride/equal) stay Python values.
    fwd = jax.jit(lambda inp: wide_resnet_forward(params, inp))

    feat = fwd(x)
    jax.block_until_ready(feat)

    assert feat.shape == (2, params["nChannels"]), feat.shape
    assert bool(jnp.all(jnp.isfinite(feat)))
    print("KERNEL_OK")
</pallas_src>

<mosaic_0001>
module attributes {stable_mosaic.version = 11 : i64} {
  func.func @_bn_relu_kernel(%arg0: i32, %arg1: memref<32x128xf32, #tpu.memory_space<vmem>>, %arg2: memref<1x128xf32, #tpu.memory_space<vmem>>, %arg3: memref<1x128xf32, #tpu.memory_space<vmem>>, %arg4: memref<32x128xbf16, #tpu.memory_space<vmem>>) attributes {dimension_semantics = [#tpu.dimension_semantics<parallel>], iteration_bounds = array<i64: 2>, scalar_prefetch = 0 : i64, scratch_operands = 0 : i64, tpu.core_type = #tpu.core_type<tc>, window_params = [{transform_indices = @transform_0, window_bounds = array<i64: 32, 128>}, {pipeline_mode = #tpu.pipeline_mode<synchronous>, transform_indices = @transform_1, window_bounds = array<i64: 1, 128>}, {pipeline_mode = #tpu.pipeline_mode<synchronous>, transform_indices = @transform_2, window_bounds = array<i64: 1, 128>}, {transform_indices = @transform_3, window_bounds = array<i64: 32, 128>}]} {
    %c0 = arith.constant 0 : index
    %c0_0 = arith.constant 0 : index
    %0 = vector.load %arg1[%c0, %c0_0] : memref<32x128xf32, #tpu.memory_space<vmem>>, vector<32x128xf32>
    %c0_1 = arith.constant 0 : index
    %c0_2 = arith.constant 0 : index
    %1 = vector.load %arg2[%c0_1, %c0_2] : memref<1x128xf32, #tpu.memory_space<vmem>>, vector<1x128xf32>
    %2 = vector.broadcast %1 : vector<1x128xf32> to vector<32x128xf32>
    %3 = arith.mulf %0, %2 : vector<32x128xf32>
    %c0_3 = arith.constant 0 : index
    %c0_4 = arith.constant 0 : index
    %4 = vector.load %arg3[%c0_3, %c0_4] : memref<1x128xf32, #tpu.memory_space<vmem>>, vector<1x128xf32>
    %5 = vector.broadcast %4 : vector<1x128xf32> to vector<32x128xf32>
    %6 = arith.addf %3, %5 : vector<32x128xf32>
    %cst = arith.constant 0.000000e+00 : f32
    %7 = vector.broadcast %cst : f32 to vector<32x128xf32>
    %8 = arith.maximumf %6, %7 : vector<32x128xf32>
    %9 = arith.truncf %8 : vector<32x128xf32> to vector<32x128xbf16>
    %c0_5 = arith.constant 0 : index
    %c0_6 = arith.constant 0 : index
    %10 = vector.load %arg4[%c0_5, %c0_6] : memref<32x128xbf16, #tpu.memory_space<vmem>>, vector<32x128xbf16>
    tpu.vector_store %arg4[%c0_5, %c0_6], %9 {strides = array<i32>} : memref<32x128xbf16, #tpu.memory_space<vmem>>, vector<32x128xbf16>,
    return
  }
  func.func @transform_0(%arg0: i32) -> (i32, i32) {
    %c0_i32 = arith.constant 0 : i32
    %c0_i32_0 = arith.constant 0 : i32
    return %arg0, %c0_i32 : i32, i32
  }
  func.func @transform_1(%arg0: i32) -> (i32, i32) {
    %c0_i32 = arith.constant 0 : i32
    %c0_i32_0 = arith.constant 0 : i32
    %c0_i32_1 = arith.constant 0 : i32
    return %c0_i32, %c0_i32_0 : i32, i32
  }
  func.func @transform_2(%arg0: i32) -> (i32, i32) {
    %c0_i32 = arith.constant 0 : i32
    %c0_i32_0 = arith.constant 0 : i32
    %c0_i32_1 = arith.constant 0 : i32
    return %c0_i32, %c0_i32_0 : i32, i32
  }
  func.func @transform_3(%arg0: i32) -> (i32, i32) {
    %c0_i32 = arith.constant 0 : i32
    %c0_i32_0 = arith.constant 0 : i32
    return %arg0, %c0_i32 : i32, i32
  }
}

module attributes {stable_mosaic.version = 11 : i64} {
  func.func @_matmul_kernel(%arg0: i32, %arg1: i32, %arg2: memref<256x27xbf16, #tpu.memory_space<vmem>>, %arg3: memref<27x16xbf16, #tpu.memory_space<vmem>>, %arg4: memref<256x16xf32, #tpu.memory_space<vmem>>, %arg5: memref<256x16xf32, #tpu.memory_space<vmem>>) attributes {dimension_semantics = [#tpu.dimension_semantics<parallel>, #tpu.dimension_semantics<arbitrary>], iteration_bounds = array<i64: 2, 1>, scalar_prefetch = 0 : i64, scratch_operands = 1 : i64, tpu.core_type = #tpu.core_type<tc>, window_params = [{transform_indices = @transform_0, window_bounds = array<i64: 256, 27>}, {transform_indices = @transform_1, window_bounds = array<i64: 27, 16>}, {transform_indices = @transform_2, window_bounds = array<i64: 256, 16>}]} {
    %c0_i32 = arith.constant 0 : i32
    %0 = arith.cmpi eq, %arg1, %c0_i32 : i32
    %1 = arith.extui %0 : i1 to i32
    %c0_i32_0 = arith.constant 0 : i32
    %2 = arith.cmpi ne, %1, %c0_i32_0 : i32
    scf.if %2 {
      %cst_10 = arith.constant 0.000000e+00 : f32
      %12 = vector.broadcast %cst_10 : f32 to vector<256x16xf32>
      %c0_11 = arith.constant 0 : index
      %c0_12 = arith.constant 0 : index
      %13 = vector.load %arg5[%c0_11, %c0_12] : memref<256x16xf32, #tpu.memory_space<vmem>>, vector<256x16xf32>
      tpu.vector_store %arg5[%c0_11, %c0_12], %12 {strides = array<i32>} : memref<256x16xf32, #tpu.memory_space<vmem>>, vector<256x16xf32>,
    } else {
    }
    %c0 = arith.constant 0 : index
    %c0_1 = arith.constant 0 : index
    %3 = vector.load %arg5[%c0, %c0_1] : memref<256x16xf32, #tpu.memory_space<vmem>>, vector<256x16xf32>
    %c0_2 = arith.constant 0 : index
    %c0_3 = arith.constant 0 : index
    %4 = vector.load %arg2[%c0_2, %c0_3] : memref<256x27xbf16, #tpu.memory_space<vmem>>, vector<256x27xbf16>
    %c0_4 = arith.constant 0 : index
    %c0_5 = arith.constant 0 : index
    %5 = vector.load %arg3[%c0_4, %c0_5] : memref<27x16xbf16, #tpu.memory_space<vmem>>, vector<27x16xbf16>
    %cst = arith.constant dense<0.000000e+00> : vector<256x16xf32>
    %6 = tpu.matmul %4, %5, %cst {dimension_numbers = #tpu.dot_dimension_numbers<[1], [0], [0], [1], [0, 0, 1, 1], [], []>} : vector<256x27xbf16>, vector<27x16xbf16>, vector<256x16xf32> -> vector<256x16xf32>
    %7 = arith.addf %3, %6 : vector<256x16xf32>
    %c0_6 = arith.constant 0 : index
    %c0_7 = arith.constant 0 : index
    %8 = vector.load %arg5[%c0_6, %c0_7] : memref<256x16xf32, #tpu.memory_space<vmem>>, vector<256x16xf32>
    tpu.vector_store %arg5[%c0_6, %c0_7], %7 {strides = array<i32>} : memref<256x16xf32, #tpu.memory_space<vmem>>, vector<256x16xf32>,
    %c0_i32_8 = arith.constant 0 : i32
    %9 = arith.cmpi eq, %arg1, %c0_i32_8 : i32
    %10 = arith.extui %9 : i1 to i32
    %c0_i32_9 = arith.constant 0 : i32
    %11 = arith.cmpi ne, %10, %c0_i32_9 : i32
    scf.if %11 {
      %c0_10 = arith.constant 0 : index
      %c0_11 = arith.constant 0 : index
      %12 = vector.load %arg5[%c0_10, %c0_11] : memref<256x16xf32, #tpu.memory_space<vmem>>, vector<256x16xf32>
      %c0_12 = arith.constant 0 : index
      %c0_13 = arith.constant 0 : index
      %13 = vector.load %arg4[%c0_12, %c0_13] : memref<256x16xf32, #tpu.memory_space<vmem>>, vector<256x16xf32>
      tpu.vector_store %arg4[%c0_12, %c0_13], %12 {strides = array<i32>} : memref<256x16xf32, #tpu.memory_space<vmem>>, vector<256x16xf32>,
    } else {
    }
    return
  }
  func.func @transform_0(%arg0: i32, %arg1: i32) -> (i32, i32) {
    %c0_i32 = arith.constant 0 : i32
    return %arg0, %arg1 : i32, i32
  }
  func.func @transform_1(%arg0: i32, %arg1: i32) -> (i32, i32) {
    %c0_i32 = arith.constant 0 : i32
    %c0_i32_0 = arith.constant 0 : i32
    return %arg1, %c0_i32 : i32, i32
  }
  func.func @transform_2(%arg0: i32, %arg1: i32) -> (i32, i32) {
    %c0_i32 = arith.constant 0 : i32
    %c0_i32_0 = arith.constant 0 : i32
    return %arg0, %c0_i32 : i32, i32
  }
}

module attributes {stable_mosaic.version = 11 : i64} {
  func.func @_bn_relu_kernel(%arg0: i32, %arg1: memref<64x128xf32, #tpu.memory_space<vmem>>, %arg2: memref<1x128xf32, #tpu.memory_space<vmem>>, %arg3: memref<1x128xf32, #tpu.memory_space<vmem>>, %arg4: memref<64x128xbf16, #tpu.memory_space<vmem>>) attributes {dimension_semantics = [#tpu.dimension_semantics<parallel>], iteration_bounds = array<i64: 2>, scalar_prefetch = 0 : i64, scratch_operands = 0 : i64, tpu.core_type = #tpu.core_type<tc>, window_params = [{transform_indices = @transform_0, window_bounds = array<i64: 64, 128>}, {pipeline_mode = #tpu.pipeline_mode<synchronous>, transform_indices = @transform_1, window_bounds = array<i64: 1, 128>}, {pipeline_mode = #tpu.pipeline_mode<synchronous>, transform_indices = @transform_2, window_bounds = array<i64: 1, 128>}, {transform_indices = @transform_3, window_bounds = array<i64: 64, 128>}]} {
    %c0 = arith.constant 0 : index
    %c0_0 = arith.constant 0 : index
    %0 = vector.load %arg1[%c0, %c0_0] : memref<64x128xf32, #tpu.memory_space<vmem>>, vector<64x128xf32>
    %c0_1 = arith.constant 0 : index
    %c0_2 = arith.constant 0 : index
    %1 = vector.load %arg2[%c0_1, %c0_2] : memref<1x128xf32, #tpu.memory_space<vmem>>, vector<1x128xf32>
    %2 = vector.broadcast %1 : vector<1x128xf32> to vector<64x128xf32>
    %3 = arith.mulf %0, %2 : vector<64x128xf32>
    %c0_3 = arith.constant 0 : index
    %c0_4 = arith.constant 0 : index
    %4 = vector.load %arg3[%c0_3, %c0_4] : memref<1x128xf32, #tpu.memory_space<vmem>>, vector<1x128xf32>
    %5 = vector.broadcast %4 : vector<1x128xf32> to vector<64x128xf32>
    %6 = arith.addf %3, %5 : vector<64x128xf32>
    %cst = arith.constant 0.000000e+00 : f32
    %7 = vector.broadcast %cst : f32 to vector<64x128xf32>
    %8 = arith.maximumf %6, %7 : vector<64x128xf32>
    %9 = arith.truncf %8 : vector<64x128xf32> to vector<64x128xbf16>
    %c0_5 = arith.constant 0 : index
    %c0_6 = arith.constant 0 : index
    %10 = vector.load %arg4[%c0_5, %c0_6] : memref<64x128xbf16, #tpu.memory_space<vmem>>, vector<64x128xbf16>
    tpu.vector_store %arg4[%c0_5, %c0_6], %9 {strides = array<i32>} : memref<64x128xbf16, #tpu.memory_space<vmem>>, vector<64x128xbf16>,
    return
  }
  func.func @transform_0(%arg0: i32) -> (i32, i32) {
    %c0_i32 = arith.constant 0 : i32
    %c0_i32_0 = arith.constant 0 : i32
    return %arg0, %c0_i32 : i32, i32
  }
  func.func @transform_1(%arg0: i32) -> (i32, i32) {
    %c0_i32 = arith.constant 0 : i32
    %c0_i32_0 = arith.constant 0 : i32
    %c0_i32_1 = arith.constant 0 : i32
    return %c0_i32, %c0_i32_0 : i32, i32
  }
  func.func @transform_2(%arg0: i32) -> (i32, i32) {
    %c0_i32 = arith.constant 0 : i32
    %c0_i32_0 = arith.constant 0 : i32
    %c0_i32_1 = arith.constant 0 : i32
    return %c0_i32, %c0_i32_0 : i32, i32
  }
  func.func @transform_3(%arg0: i32) -> (i32, i32) {
    %c0_i32 = arith.constant 0 : i32
    %c0_i32_0 = arith.constant 0 : i32
    return %arg0, %c0_i32 : i32, i32
  }
}

module attributes {stable_mosaic.version = 11 : i64} {
  func.func @_matmul_kernel(%arg0: i32, %arg1: i32, %arg2: memref<256x144xbf16, #tpu.memory_space<vmem>>, %arg3: memref<144x32xbf16, #tpu.memory_space<vmem>>, %arg4: memref<256x32xf32, #tpu.memory_space<vmem>>, %arg5: memref<256x32xf32, #tpu.memory_space<vmem>>) attributes {dimension_semantics = [#tpu.dimension_semantics<parallel>, #tpu.dimension_semantics<arbitrary>], iteration_bounds = array<i64: 2, 1>, scalar_prefetch = 0 : i64, scratch_operands = 1 : i64, tpu.core_type = #tpu.core_type<tc>, window_params = [{transform_indices = @transform_0, window_bounds = array<i64: 256, 144>}, {transform_indices = @transform_1, window_bounds = array<i64: 144, 32>}, {transform_indices = @transform_2, window_bounds = array<i64: 256, 32>}]} {
    %c0_i32 = arith.constant 0 : i32
    %0 = arith.cmpi eq, %arg1, %c0_i32 : i32
    %1 = arith.extui %0 : i1 to i32
    %c0_i32_0 = arith.constant 0 : i32
    %2 = arith.cmpi ne, %1, %c0_i32_0 : i32
    scf.if %2 {
      %cst_10 = arith.constant 0.000000e+00 : f32
      %12 = vector.broadcast %cst_10 : f32 to vector<256x32xf32>
      %c0_11 = arith.constant 0 : index
      %c0_12 = arith.constant 0 : index
      %13 = vector.load %arg5[%c0_11, %c0_12] : memref<256x32xf32, #tpu.memory_space<vmem>>, vector<256x32xf32>
      tpu.vector_store %arg5[%c0_11, %c0_12], %12 {strides = array<i32>} : memref<256x32xf32, #tpu.memory_space<vmem>>, vector<256x32xf32>,
    } else {
    }
    %c0 = arith.constant 0 : index
    %c0_1 = arith.constant 0 : index
    %3 = vector.load %arg5[%c0, %c0_1] : memref<256x32xf32, #tpu.memory_space<vmem>>, vector<256x32xf32>
    %c0_2 = arith.constant 0 : index
    %c0_3 = arith.constant 0 : index
    %4 = vector.load %arg2[%c0_2, %c0_3] : memref<256x144xbf16, #tpu.memory_space<vmem>>, vector<256x144xbf16>
    %c0_4 = arith.constant 0 : index
    %c0_5 = arith.constant 0 : index
    %5 = vector.load %arg3[%c0_4, %c0_5] : memref<144x32xbf16, #tpu.memory_space<vmem>>, vector<144x32xbf16>
    %cst = arith.constant dense<0.000000e+00> : vector<256x32xf32>
    %6 = tpu.matmul %4, %5, %cst {dimension_numbers = #tpu.dot_dimension_numbers<[1], [0], [0], [1], [0, 0, 1, 1], [], []>} : vector<256x144xbf16>, vector<144x32xbf16>, vector<256x32xf32> -> vector<256x32xf32>
    %7 = arith.addf %3, %6 : vector<256x32xf32>
    %c0_6 = arith.constant 0 : index
    %c0_7 = arith.constant 0 : index
    %8 = vector.load %arg5[%c0_6, %c0_7] : memref<256x32xf32, #tpu.memory_space<vmem>>, vector<256x32xf32>
    tpu.vector_store %arg5[%c0_6, %c0_7], %7 {strides = array<i32>} : memref<256x32xf32, #tpu.memory_space<vmem>>, vector<256x32xf32>,
    %c0_i32_8 = arith.constant 0 : i32
    %9 = arith.cmpi eq, %arg1, %c0_i32_8 : i32
    %10 = arith.extui %9 : i1 to i32
    %c0_i32_9 = arith.constant 0 : i32
    %11 = arith.cmpi ne, %10, %c0_i32_9 : i32
    scf.if %11 {
      %c0_10 = arith.constant 0 : index
      %c0_11 = arith.constant 0 : index
      %12 = vector.load %arg5[%c0_10, %c0_11] : memref<256x32xf32, #tpu.memory_space<vmem>>, vector<256x32xf32>
      %c0_12 = arith.constant 0 : index
      %c0_13 = arith.constant 0 : index
      %13 = vector.load %arg4[%c0_12, %c0_13] : memref<256x32xf32, #tpu.memory_space<vmem>>, vector<256x32xf32>
      tpu.vector_store %arg4[%c0_12, %c0_13], %12 {strides = array<i32>} : memref<256x32xf32, #tpu.memory_space<vmem>>, vector<256x32xf32>,
    } else {
    }
    return
  }
  func.func @transform_0(%arg0: i32, %arg1: i32) -> (i32, i32) {
    %c0_i32 = arith.constant 0 : i32
    return %arg0, %arg1 : i32, i32
  }
  func.func @transform_1(%arg0: i32, %arg1: i32) -> (i32, i32) {
    %c0_i32 = arith.constant 0 : i32
    %c0_i32_0 = arith.constant 0 : i32
    return %arg1, %c0_i32 : i32, i32
  }
  func.func @transform_2(%arg0: i32, %arg1: i32) -> (i32, i32) {
    %c0_i32 = arith.constant 0 : i32
    %c0_i32_0 = arith.constant 0 : i32
    return %arg0, %c0_i32 : i32, i32
  }
}

module attributes {stable_mosaic.version = 11 : i64} {
  func.func @_matmul_kernel(%arg0: i32, %arg1: i32, %arg2: memref<256x16xbf16, #tpu.memory_space<vmem>>, %arg3: memref<16x32xbf16, #tpu.memory_space<vmem>>, %arg4: memref<256x32xf32, #tpu.memory_space<vmem>>, %arg5: memref<256x32xf32, #tpu.memory_space<vmem>>) attributes {dimension_semantics = [#tpu.dimension_semantics<parallel>, #tpu.dimension_semantics<arbitrary>], iteration_bounds = array<i64: 2, 1>, scalar_prefetch = 0 : i64, scratch_operands = 1 : i64, tpu.core_type = #tpu.core_type<tc>, window_params = [{transform_indices = @transform_0, window_bounds = array<i64: 256, 16>}, {transform_indices = @transform_1, window_bounds = array<i64: 16, 32>}, {transform_indices = @transform_2, window_bounds = array<i64: 256, 32>}]} {
    %c0_i32 = arith.constant 0 : i32
    %0 = arith.cmpi eq, %arg1, %c0_i32 : i32
    %1 = arith.extui %0 : i1 to i32
    %c0_i32_0 = arith.constant 0 : i32
    %2 = arith.cmpi ne, %1, %c0_i32_0 : i32
    scf.if %2 {
      %cst_10 = arith.constant 0.000000e+00 : f32
      %12 = vector.broadcast %cst_10 : f32 to vector<256x32xf32>
      %c0_11 = arith.constant 0 : index
      %c0_12 = arith.constant 0 : index
      %13 = vector.load %arg5[%c0_11, %c0_12] : memref<256x32xf32, #tpu.memory_space<vmem>>, vector<256x32xf32>
      tpu.vector_store %arg5[%c0_11, %c0_12], %12 {strides = array<i32>} : memref<256x32xf32, #tpu.memory_space<vmem>>, vector<256x32xf32>,
    } else {
    }
    %c0 = arith.constant 0 : index
    %c0_1 = arith.constant 0 : index
    %3 = vector.load %arg5[%c0, %c0_1] : memref<256x32xf32, #tpu.memory_space<vmem>>, vector<256x32xf32>
    %c0_2 = arith.constant 0 : index
    %c0_3 = arith.constant 0 : index
    %4 = vector.load %arg2[%c0_2, %c0_3] : memref<256x16xbf16, #tpu.memory_space<vmem>>, vector<256x16xbf16>
    %c0_4 = arith.constant 0 : index
    %c0_5 = arith.constant 0 : index
    %5 = vector.load %arg3[%c0_4, %c0_5] : memref<16x32xbf16, #tpu.memory_space<vmem>>, vector<16x32xbf16>
    %cst = arith.constant dense<0.000000e+00> : vector<256x32xf32>
    %6 = tpu.matmul %4, %5, %cst {dimension_numbers = #tpu.dot_dimension_numbers<[1], [0], [0], [1], [0, 0, 1, 1], [], []>} : vector<256x16xbf16>, vector<16x32xbf16>, vector<256x32xf32> -> vector<256x32xf32>
    %7 = arith.addf %3, %6 : vector<256x32xf32>
    %c0_6 = arith.constant 0 : index
    %c0_7 = arith.constant 0 : index
    %8 = vector.load %arg5[%c0_6, %c0_7] : memref<256x32xf32, #tpu.memory_space<vmem>>, vector<256x32xf32>
    tpu.vector_store %arg5[%c0_6, %c0_7], %7 {strides = array<i32>} : memref<256x32xf32, #tpu.memory_space<vmem>>, vector<256x32xf32>,
    %c0_i32_8 = arith.constant 0 : i32
    %9 = arith.cmpi eq, %arg1, %c0_i32_8 : i32
    %10 = arith.extui %9 : i1 to i32
    %c0_i32_9 = arith.constant 0 : i32
    %11 = arith.cmpi ne, %10, %c0_i32_9 : i32
    scf.if %11 {
      %c0_10 = arith.constant 0 : index
      %c0_11 = arith.constant 0 : index
      %12 = vector.load %arg5[%c0_10, %c0_11] : memref<256x32xf32, #tpu.memory_space<vmem>>, vector<256x32xf32>
      %c0_12 = arith.constant 0 : index
      %c0_13 = arith.constant 0 : index
      %13 = vector.load %arg4[%c0_12, %c0_13] : memref<256x32xf32, #tpu.memory_space<vmem>>, vector<256x32xf32>
      tpu.vector_store %arg4[%c0_12, %c0_13], %12 {strides = array<i32>} : memref<256x32xf32, #tpu.memory_space<vmem>>, vector<256x32xf32>,
    } else {
    }
    return
  }
  func.func @transform_0(%arg0: i32, %arg1: i32) -> (i32, i32) {
    %c0_i32 = arith.constant 0 : i32
    return %arg0, %arg1 : i32, i32
  }
  func.func @transform_1(%arg0: i32, %arg1: i32) -> (i32, i32) {
    %c0_i32 = arith.constant 0 : i32
    %c0_i32_0 = arith.constant 0 : i32
    return %arg1, %c0_i32 : i32, i32
  }
  func.func @transform_2(%arg0: i32, %arg1: i32) -> (i32, i32) {
    %c0_i32 = arith.constant 0 : i32
    %c0_i32_0 = arith.constant 0 : i32
    return %arg0, %c0_i32 : i32, i32
  }
}

module attributes {stable_mosaic.version = 11 : i64} {
  func.func @_matmul_add_kernel(%arg0: i32, %arg1: i32, %arg2: memref<256x288xbf16, #tpu.memory_space<vmem>>, %arg3: memref<288x32xbf16, #tpu.memory_space<vmem>>, %arg4: memref<256x32xf32, #tpu.memory_space<vmem>>, %arg5: memref<256x32xf32, #tpu.memory_space<vmem>>, %arg6: memref<256x32xf32, #tpu.memory_space<vmem>>) attributes {dimension_semantics = [#tpu.dimension_semantics<parallel>, #tpu.dimension_semantics<arbitrary>], iteration_bounds = array<i64: 2, 1>, scalar_prefetch = 0 : i64, scratch_operands = 1 : i64, tpu.core_type = #tpu.core_type<tc>, window_params = [{transform_indices = @transform_0, window_bounds = array<i64: 256, 288>}, {transform_indices = @transform_1, window_bounds = array<i64: 288, 32>}, {transform_indices = @transform_2, window_bounds = array<i64: 256, 32>}, {transform_indices = @transform_3, window_bounds = array<i64: 256, 32>}]} {
    %c0_i32 = arith.constant 0 : i32
    %0 = arith.cmpi eq, %arg1, %c0_i32 : i32
    %1 = arith.extui %0 : i1 to i32
    %c0_i32_0 = arith.constant 0 : i32
    %2 = arith.cmpi ne, %1, %c0_i32_0 : i32
    scf.if %2 {
      %cst_10 = arith.constant 0.000000e+00 : f32
      %12 = vector.broadcast %cst_10 : f32 to vector<256x32xf32>
      %c0_11 = arith.constant 0 : index
      %c0_12 = arith.constant 0 : index
      %13 = vector.load %arg6[%c0_11, %c0_12] : memref<256x32xf32, #tpu.memory_space<vmem>>, vector<256x32xf32>
      tpu.vector_store %arg6[%c0_11, %c0_12], %12 {strides = array<i32>} : memref<256x32xf32, #tpu.memory_space<vmem>>, vector<256x32xf32>,
    } else {
    }
    %c0 = arith.constant 0 : index
    %c0_1 = arith.constant 0 : index
    %3 = vector.load %arg6[%c0, %c0_1] : memref<256x32xf32, #tpu.memory_space<vmem>>, vector<256x32xf32>
    %c0_2 = arith.constant 0 : index
    %c0_3 = arith.constant 0 : index
    %4 = vector.load %arg2[%c0_2, %c0_3] : memref<256x288xbf16, #tpu.memory_space<vmem>>, vector<256x288xbf16>
    %c0_4 = arith.constant 0 : index
    %c0_5 = arith.constant 0 : index
    %5 = vector.load %arg3[%c0_4, %c0_5] : memref<288x32xbf16, #tpu.memory_space<vmem>>, vector<288x32xbf16>
    %cst = arith.constant dense<0.000000e+00> : vector<256x32xf32>
    %6 = tpu.matmul %4, %5, %cst {dimension_numbers = #tpu.dot_dimension_numbers<[1], [0], [0], [1], [0, 0, 1, 1], [], []>} : vector<256x288xbf16>, vector<288x32xbf16>, vector<256x32xf32> -> vector<256x32xf32>
    %7 = arith.addf %3, %6 : vector<256x32xf32>
    %c0_6 = arith.constant 0 : index
    %c0_7 = arith.constant 0 : index
    %8 = vector.load %arg6[%c0_6, %c0_7] : memref<256x32xf32, #tpu.memory_space<vmem>>, vector<256x32xf32>
    tpu.vector_store %arg6[%c0_6, %c0_7], %7 {strides = array<i32>} : memref<256x32xf32, #tpu.memory_space<vmem>>, vector<256x32xf32>,
    %c0_i32_8 = arith.constant 0 : i32
    %9 = arith.cmpi eq, %arg1, %c0_i32_8 : i32
    %10 = arith.extui %9 : i1 to i32
    %c0_i32_9 = arith.constant 0 : i32
    %11 = arith.cmpi ne, %10, %c0_i32_9 : i32
    scf.if %11 {
      %c0_10 = arith.constant 0 : index
      %c0_11 = arith.constant 0 : index
      %12 = vector.load %arg6[%c0_10, %c0_11] : memref<256x32xf32, #tpu.memory_space<vmem>>, vector<256x32xf32>
      %c0_12 = arith.constant 0 : index
      %c0_13 = arith.constant 0 : index
      %13 = vector.load %arg4[%c0_12, %c0_13] : memref<256x32xf32, #tpu.memory_space<vmem>>, vector<256x32xf32>
      %14 = arith.addf %12, %13 : vector<256x32xf32>
      %c0_14 = arith.constant 0 : index
      %c0_15 = arith.constant 0 : index
      %15 = vector.load %arg5[%c0_14, %c0_15] : memref<256x32xf32, #tpu.memory_space<vmem>>, vector<256x32xf32>
      tpu.vector_store %arg5[%c0_14, %c0_15], %14 {strides = array<i32>} : memref<256x32xf32, #tpu.memory_space<vmem>>, vector<256x32xf32>,
    } else {
    }
    return
  }
  func.func @transform_0(%arg0: i32, %arg1: i32) -> (i32, i32) {
    %c0_i32 = arith.constant 0 : i32
    return %arg0, %arg1 : i32, i32
  }
  func.func @transform_1(%arg0: i32, %arg1: i32) -> (i32, i32) {
    %c0_i32 = arith.constant 0 : i32
    %c0_i32_0 = arith.constant 0 : i32
    return %arg1, %c0_i32 : i32, i32
  }
  func.func @transform_2(%arg0: i32, %arg1: i32) -> (i32, i32) {
    %c0_i32 = arith.constant 0 : i32
    %c0_i32_0 = arith.constant 0 : i32
    return %arg0, %c0_i32 : i32, i32
  }
  func.func @transform_3(%arg0: i32, %arg1: i32) -> (i32, i32) {
    %c0_i32 = arith.constant 0 : i32
    %c0_i32_0 = arith.constant 0 : i32
    return %arg0, %c0_i32 : i32, i32
  }
}

module attributes {stable_mosaic.version = 11 : i64} {
  func.func @_matmul_kernel(%arg0: i32, %arg1: i32, %arg2: memref<64x288xbf16, #tpu.memory_space<vmem>>, %arg3: memref<288x64xbf16, #tpu.memory_space<vmem>>, %arg4: memref<64x64xf32, #tpu.memory_space<vmem>>, %arg5: memref<64x64xf32, #tpu.memory_space<vmem>>) attributes {dimension_semantics = [#tpu.dimension_semantics<parallel>, #tpu.dimension_semantics<arbitrary>], iteration_bounds = array<i64: 2, 1>, scalar_prefetch = 0 : i64, scratch_operands = 1 : i64, tpu.core_type = #tpu.core_type<tc>, window_params = [{transform_indices = @transform_0, window_bounds = array<i64: 64, 288>}, {transform_indices = @transform_1, window_bounds = array<i64: 288, 64>}, {transform_indices = @transform_2, window_bounds = array<i64: 64, 64>}]} {
    %c0_i32 = arith.constant 0 : i32
    %0 = arith.cmpi eq, %arg1, %c0_i32 : i32
    %1 = arith.extui %0 : i1 to i32
    %c0_i32_0 = arith.constant 0 : i32
    %2 = arith.cmpi ne, %1, %c0_i32_0 : i32
    scf.if %2 {
      %cst_10 = arith.constant 0.000000e+00 : f32
      %12 = vector.broadcast %cst_10 : f32 to vector<64x64xf32>
      %c0_11 = arith.constant 0 : index
      %c0_12 = arith.constant 0 : index
      %13 = vector.load %arg5[%c0_11, %c0_12] : memref<64x64xf32, #tpu.memory_space<vmem>>, vector<64x64xf32>
      tpu.vector_store %arg5[%c0_11, %c0_12], %12 {strides = array<i32>} : memref<64x64xf32, #tpu.memory_space<vmem>>, vector<64x64xf32>,
    } else {
    }
    %c0 = arith.constant 0 : index
    %c0_1 = arith.constant 0 : index
    %3 = vector.load %arg5[%c0, %c0_1] : memref<64x64xf32, #tpu.memory_space<vmem>>, vector<64x64xf32>
    %c0_2 = arith.constant 0 : index
    %c0_3 = arith.constant 0 : index
    %4 = vector.load %arg2[%c0_2, %c0_3] : memref<64x288xbf16, #tpu.memory_space<vmem>>, vector<64x288xbf16>
    %c0_4 = arith.constant 0 : index
    %c0_5 = arith.constant 0 : index
    %5 = vector.load %arg3[%c0_4, %c0_5] : memref<288x64xbf16, #tpu.memory_space<vmem>>, vector<288x64xbf16>
    %cst = arith.constant dense<0.000000e+00> : vector<64x64xf32>
    %6 = tpu.matmul %4, %5, %cst {dimension_numbers = #tpu.dot_dimension_numbers<[1], [0], [0], [1], [0, 0, 1, 1], [], []>} : vector<64x288xbf16>, vector<288x64xbf16>, vector<64x64xf32> -> vector<64x64xf32>
    %7 = arith.addf %3, %6 : vector<64x64xf32>
    %c0_6 = arith.constant 0 : index
    %c0_7 = arith.constant 0 : index
    %8 = vector.load %arg5[%c0_6, %c0_7] : memref<64x64xf32, #tpu.memory_space<vmem>>, vector<64x64xf32>
    tpu.vector_store %arg5[%c0_6, %c0_7], %7 {strides = array<i32>} : memref<64x64xf32, #tpu.memory_space<vmem>>, vector<64x64xf32>,
    %c0_i32_8 = arith.constant 0 : i32
    %9 = arith.cmpi eq, %arg1, %c0_i32_8 : i32
    %10 = arith.extui %9 : i1 to i32
    %c0_i32_9 = arith.constant 0 : i32
    %11 = arith.cmpi ne, %10, %c0_i32_9 : i32
    scf.if %11 {
      %c0_10 = arith.constant 0 : index
      %c0_11 = arith.constant 0 : index
      %12 = vector.load %arg5[%c0_10, %c0_11] : memref<64x64xf32, #tpu.memory_space<vmem>>, vector<64x64xf32>
      %c0_12 = arith.constant 0 : index
      %c0_13 = arith.constant 0 : index
      %13 = vector.load %arg4[%c0_12, %c0_13] : memref<64x64xf32, #tpu.memory_space<vmem>>, vector<64x64xf32>
      tpu.vector_store %arg4[%c0_12, %c0_13], %12 {strides = array<i32>} : memref<64x64xf32, #tpu.memory_space<vmem>>, vector<64x64xf32>,
    } else {
    }
    return
  }
  func.func @transform_0(%arg0: i32, %arg1: i32) -> (i32, i32) {
    %c0_i32 = arith.constant 0 : i32
    return %arg0, %arg1 : i32, i32
  }
  func.func @transform_1(%arg0: i32, %arg1: i32) -> (i32, i32) {
    %c0_i32 = arith.constant 0 : i32
    %c0_i32_0 = arith.constant 0 : i32
    return %arg1, %c0_i32 : i32, i32
  }
  func.func @transform_2(%arg0: i32, %arg1: i32) -> (i32, i32) {
    %c0_i32 = arith.constant 0 : i32
    %c0_i32_0 = arith.constant 0 : i32
    return %arg0, %c0_i32 : i32, i32
  }
}

module attributes {stable_mosaic.version = 11 : i64} {
  func.func @_matmul_add_kernel(%arg0: i32, %arg1: i32, %arg2: memref<64x576xbf16, #tpu.memory_space<vmem>>, %arg3: memref<576x64xbf16, #tpu.memory_space<vmem>>, %arg4: memref<64x64xf32, #tpu.memory_space<vmem>>, %arg5: memref<64x64xf32, #tpu.memory_space<vmem>>, %arg6: memref<64x64xf32, #tpu.memory_space<vmem>>) attributes {dimension_semantics = [#tpu.dimension_semantics<parallel>, #tpu.dimension_semantics<arbitrary>], iteration_bounds = array<i64: 2, 1>, scalar_prefetch = 0 : i64, scratch_operands = 1 : i64, tpu.core_type = #tpu.core_type<tc>, window_params = [{transform_indices = @transform_0, window_bounds = array<i64: 64, 576>}, {transform_indices = @transform_1, window_bounds = array<i64: 576, 64>}, {transform_indices = @transform_2, window_bounds = array<i64: 64, 64>}, {transform_indices = @transform_3, window_bounds = array<i64: 64, 64>}]} {
    %c0_i32 = arith.constant 0 : i32
    %0 = arith.cmpi eq, %arg1, %c0_i32 : i32
    %1 = arith.extui %0 : i1 to i32
    %c0_i32_0 = arith.constant 0 : i32
    %2 = arith.cmpi ne, %1, %c0_i32_0 : i32
    scf.if %2 {
      %cst_10 = arith.constant 0.000000e+00 : f32
      %12 = vector.broadcast %cst_10 : f32 to vector<64x64xf32>
      %c0_11 = arith.constant 0 : index
      %c0_12 = arith.constant 0 : index
      %13 = vector.load %arg6[%c0_11, %c0_12] : memref<64x64xf32, #tpu.memory_space<vmem>>, vector<64x64xf32>
      tpu.vector_store %arg6[%c0_11, %c0_12], %12 {strides = array<i32>} : memref<64x64xf32, #tpu.memory_space<vmem>>, vector<64x64xf32>,
    } else {
    }
    %c0 = arith.constant 0 : index
    %c0_1 = arith.constant 0 : index
    %3 = vector.load %arg6[%c0, %c0_1] : memref<64x64xf32, #tpu.memory_space<vmem>>, vector<64x64xf32>
    %c0_2 = arith.constant 0 : index
    %c0_3 = arith.constant 0 : index
    %4 = vector.load %arg2[%c0_2, %c0_3] : memref<64x576xbf16, #tpu.memory_space<vmem>>, vector<64x576xbf16>
    %c0_4 = arith.constant 0 : index
    %c0_5 = arith.constant 0 : index
    %5 = vector.load %arg3[%c0_4, %c0_5] : memref<576x64xbf16, #tpu.memory_space<vmem>>, vector<576x64xbf16>
    %cst = arith.constant dense<0.000000e+00> : vector<64x64xf32>
    %6 = tpu.matmul %4, %5, %cst {dimension_numbers = #tpu.dot_dimension_numbers<[1], [0], [0], [1], [0, 0, 1, 1], [], []>} : vector<64x576xbf16>, vector<576x64xbf16>, vector<64x64xf32> -> vector<64x64xf32>
    %7 = arith.addf %3, %6 : vector<64x64xf32>
    %c0_6 = arith.constant 0 : index
    %c0_7 = arith.constant 0 : index
    %8 = vector.load %arg6[%c0_6, %c0_7] : memref<64x64xf32, #tpu.memory_space<vmem>>, vector<64x64xf32>
    tpu.vector_store %arg6[%c0_6, %c0_7], %7 {strides = array<i32>} : memref<64x64xf32, #tpu.memory_space<vmem>>, vector<64x64xf32>,
    %c0_i32_8 = arith.constant 0 : i32
    %9 = arith.cmpi eq, %arg1, %c0_i32_8 : i32
    %10 = arith.extui %9 : i1 to i32
    %c0_i32_9 = arith.constant 0 : i32
    %11 = arith.cmpi ne, %10, %c0_i32_9 : i32
    scf.if %11 {
      %c0_10 = arith.constant 0 : index
      %c0_11 = arith.constant 0 : index
      %12 = vector.load %arg6[%c0_10, %c0_11] : memref<64x64xf32, #tpu.memory_space<vmem>>, vector<64x64xf32>
      %c0_12 = arith.constant 0 : index
      %c0_13 = arith.constant 0 : index
      %13 = vector.load %arg4[%c0_12, %c0_13] : memref<64x64xf32, #tpu.memory_space<vmem>>, vector<64x64xf32>
      %14 = arith.addf %12, %13 : vector<64x64xf32>
      %c0_14 = arith.constant 0 : index
      %c0_15 = arith.constant 0 : index
      %15 = vector.load %arg5[%c0_14, %c0_15] : memref<64x64xf32, #tpu.memory_space<vmem>>, vector<64x64xf32>
      tpu.vector_store %arg5[%c0_14, %c0_15], %14 {strides = array<i32>} : memref<64x64xf32, #tpu.memory_space<vmem>>, vector<64x64xf32>,
    } else {
    }
    return
  }
  func.func @transform_0(%arg0: i32, %arg1: i32) -> (i32, i32) {
    %c0_i32 = arith.constant 0 : i32
    return %arg0, %arg1 : i32, i32
  }
  func.func @transform_1(%arg0: i32, %arg1: i32) -> (i32, i32) {
    %c0_i32 = arith.constant 0 : i32
    %c0_i32_0 = arith.constant 0 : i32
    return %arg1, %c0_i32 : i32, i32
  }
  func.func @transform_2(%arg0: i32, %arg1: i32) -> (i32, i32) {
    %c0_i32 = arith.constant 0 : i32
    %c0_i32_0 = arith.constant 0 : i32
    return %arg0, %c0_i32 : i32, i32
  }
  func.func @transform_3(%arg0: i32, %arg1: i32) -> (i32, i32) {
    %c0_i32 = arith.constant 0 : i32
    %c0_i32_0 = arith.constant 0 : i32
    return %arg0, %c0_i32 : i32, i32
  }
}

module attributes {stable_mosaic.version = 11 : i64} {
  func.func @_matmul_kernel(%arg0: i32, %arg1: i32, %arg2: memref<64x32xbf16, #tpu.memory_space<vmem>>, %arg3: memref<32x64xbf16, #tpu.memory_space<vmem>>, %arg4: memref<64x64xf32, #tpu.memory_space<vmem>>, %arg5: memref<64x64xf32, #tpu.memory_space<vmem>>) attributes {dimension_semantics = [#tpu.dimension_semantics<parallel>, #tpu.dimension_semantics<arbitrary>], iteration_bounds = array<i64: 2, 1>, scalar_prefetch = 0 : i64, scratch_operands = 1 : i64, tpu.core_type = #tpu.core_type<tc>, window_params = [{transform_indices = @transform_0, window_bounds = array<i64: 64, 32>}, {transform_indices = @transform_1, window_bounds = array<i64: 32, 64>}, {transform_indices = @transform_2, window_bounds = array<i64: 64, 64>}]} {
    %c0_i32 = arith.constant 0 : i32
    %0 = arith.cmpi eq, %arg1, %c0_i32 : i32
    %1 = arith.extui %0 : i1 to i32
    %c0_i32_0 = arith.constant 0 : i32
    %2 = arith.cmpi ne, %1, %c0_i32_0 : i32
    scf.if %2 {
      %cst_10 = arith.constant 0.000000e+00 : f32
      %12 = vector.broadcast %cst_10 : f32 to vector<64x64xf32>
      %c0_11 = arith.constant 0 : index
      %c0_12 = arith.constant 0 : index
      %13 = vector.load %arg5[%c0_11, %c0_12] : memref<64x64xf32, #tpu.memory_space<vmem>>, vector<64x64xf32>
      tpu.vector_store %arg5[%c0_11, %c0_12], %12 {strides = array<i32>} : memref<64x64xf32, #tpu.memory_space<vmem>>, vector<64x64xf32>,
    } else {
    }
    %c0 = arith.constant 0 : index
    %c0_1 = arith.constant 0 : index
    %3 = vector.load %arg5[%c0, %c0_1] : memref<64x64xf32, #tpu.memory_space<vmem>>, vector<64x64xf32>
    %c0_2 = arith.constant 0 : index
    %c0_3 = arith.constant 0 : index
    %4 = vector.load %arg2[%c0_2, %c0_3] : memref<64x32xbf16, #tpu.memory_space<vmem>>, vector<64x32xbf16>
    %c0_4 = arith.constant 0 : index
    %c0_5 = arith.constant 0 : index
    %5 = vector.load %arg3[%c0_4, %c0_5] : memref<32x64xbf16, #tpu.memory_space<vmem>>, vector<32x64xbf16>
    %cst = arith.constant dense<0.000000e+00> : vector<64x64xf32>
    %6 = tpu.matmul %4, %5, %cst {dimension_numbers = #tpu.dot_dimension_numbers<[1], [0], [0], [1], [0, 0, 1, 1], [], []>} : vector<64x32xbf16>, vector<32x64xbf16>, vector<64x64xf32> -> vector<64x64xf32>
    %7 = arith.addf %3, %6 : vector<64x64xf32>
    %c0_6 = arith.constant 0 : index
    %c0_7 = arith.constant 0 : index
    %8 = vector.load %arg5[%c0_6, %c0_7] : memref<64x64xf32, #tpu.memory_space<vmem>>, vector<64x64xf32>
    tpu.vector_store %arg5[%c0_6, %c0_7], %7 {strides = array<i32>} : memref<64x64xf32, #tpu.memory_space<vmem>>, vector<64x64xf32>,
    %c0_i32_8 = arith.constant 0 : i32
    %9 = arith.cmpi eq, %arg1, %c0_i32_8 : i32
    %10 = arith.extui %9 : i1 to i32
    %c0_i32_9 = arith.constant 0 : i32
    %11 = arith.cmpi ne, %10, %c0_i32_9 : i32
    scf.if %11 {
      %c0_10 = arith.constant 0 : index
      %c0_11 = arith.constant 0 : index
      %12 = vector.load %arg5[%c0_10, %c0_11] : memref<64x64xf32, #tpu.memory_space<vmem>>, vector<64x64xf32>
      %c0_12 = arith.constant 0 : index
      %c0_13 = arith.constant 0 : index
      %13 = vector.load %arg4[%c0_12, %c0_13] : memref<64x64xf32, #tpu.memory_space<vmem>>, vector<64x64xf32>
      tpu.vector_store %arg4[%c0_12, %c0_13], %12 {strides = array<i32>} : memref<64x64xf32, #tpu.memory_space<vmem>>, vector<64x64xf32>,
    } else {
    }
    return
  }
  func.func @transform_0(%arg0: i32, %arg1: i32) -> (i32, i32) {
    %c0_i32 = arith.constant 0 : i32
    return %arg0, %arg1 : i32, i32
  }
  func.func @transform_1(%arg0: i32, %arg1: i32) -> (i32, i32) {
    %c0_i32 = arith.constant 0 : i32
    %c0_i32_0 = arith.constant 0 : i32
    return %arg1, %c0_i32 : i32, i32
  }
  func.func @transform_2(%arg0: i32, %arg1: i32) -> (i32, i32) {
    %c0_i32 = arith.constant 0 : i32
    %c0_i32_0 = arith.constant 0 : i32
    return %arg0, %c0_i32 : i32, i32
  }
}

module attributes {stable_mosaic.version = 11 : i64} {
  func.func @_matmul_kernel(%arg0: i32, %arg1: i32, %arg2: memref<16x576xbf16, #tpu.memory_space<vmem>>, %arg3: memref<576x128xbf16, #tpu.memory_space<vmem>>, %arg4: memref<16x128xf32, #tpu.memory_space<vmem>>, %arg5: memref<16x128xf32, #tpu.memory_space<vmem>>) attributes {dimension_semantics = [#tpu.dimension_semantics<parallel>, #tpu.dimension_semantics<arbitrary>], iteration_bounds = array<i64: 2, 1>, scalar_prefetch = 0 : i64, scratch_operands = 1 : i64, tpu.core_type = #tpu.core_type<tc>, window_params = [{transform_indices = @transform_0, window_bounds = array<i64: 16, 576>}, {transform_indices = @transform_1, window_bounds = array<i64: 576, 128>}, {transform_indices = @transform_2, window_bounds = array<i64: 16, 128>}]} {
    %c0_i32 = arith.constant 0 : i32
    %0 = arith.cmpi eq, %arg1, %c0_i32 : i32
    %1 = arith.extui %0 : i1 to i32
    %c0_i32_0 = arith.constant 0 : i32
    %2 = arith.cmpi ne, %1, %c0_i32_0 : i32
    scf.if %2 {
      %cst_10 = arith.constant 0.000000e+00 : f32
      %12 = vector.broadcast %cst_10 : f32 to vector<16x128xf32>
      %c0_11 = arith.constant 0 : index
      %c0_12 = arith.constant 0 : index
      %13 = vector.load %arg5[%c0_11, %c0_12] : memref<16x128xf32, #tpu.memory_space<vmem>>, vector<16x128xf32>
      tpu.vector_store %arg5[%c0_11, %c0_12], %12 {strides = array<i32>} : memref<16x128xf32, #tpu.memory_space<vmem>>, vector<16x128xf32>,
    } else {
    }
    %c0 = arith.constant 0 : index
    %c0_1 = arith.constant 0 : index
    %3 = vector.load %arg5[%c0, %c0_1] : memref<16x128xf32, #tpu.memory_space<vmem>>, vector<16x128xf32>
    %c0_2 = arith.constant 0 : index
    %c0_3 = arith.constant 0 : index
    %4 = vector.load %arg2[%c0_2, %c0_3] : memref<16x576xbf16, #tpu.memory_space<vmem>>, vector<16x576xbf16>
    %c0_4 = arith.constant 0 : index
    %c0_5 = arith.constant 0 : index
    %5 = vector.load %arg3[%c0_4, %c0_5] : memref<576x128xbf16, #tpu.memory_space<vmem>>, vector<576x128xbf16>
    %cst = arith.constant dense<0.000000e+00> : vector<16x128xf32>
    %6 = tpu.matmul %4, %5, %cst {dimension_numbers = #tpu.dot_dimension_numbers<[1], [0], [0], [1], [0, 0, 1, 1], [], []>} : vector<16x576xbf16>, vector<576x128xbf16>, vector<16x128xf32> -> vector<16x128xf32>
    %7 = arith.addf %3, %6 : vector<16x128xf32>
    %c0_6 = arith.constant 0 : index
    %c0_7 = arith.constant 0 : index
    %8 = vector.load %arg5[%c0_6, %c0_7] : memref<16x128xf32, #tpu.memory_space<vmem>>, vector<16x128xf32>
    tpu.vector_store %arg5[%c0_6, %c0_7], %7 {strides = array<i32>} : memref<16x128xf32, #tpu.memory_space<vmem>>, vector<16x128xf32>,
    %c0_i32_8 = arith.constant 0 : i32
    %9 = arith.cmpi eq, %arg1, %c0_i32_8 : i32
    %10 = arith.extui %9 : i1 to i32
    %c0_i32_9 = arith.constant 0 : i32
    %11 = arith.cmpi ne, %10, %c0_i32_9 : i32
    scf.if %11 {
      %c0_10 = arith.constant 0 : index
      %c0_11 = arith.constant 0 : index
      %12 = vector.load %arg5[%c0_10, %c0_11] : memref<16x128xf32, #tpu.memory_space<vmem>>, vector<16x128xf32>
      %c0_12 = arith.constant 0 : index
      %c0_13 = arith.constant 0 : index
      %13 = vector.load %arg4[%c0_12, %c0_13] : memref<16x128xf32, #tpu.memory_space<vmem>>, vector<16x128xf32>
      tpu.vector_store %arg4[%c0_12, %c0_13], %12 {strides = array<i32>} : memref<16x128xf32, #tpu.memory_space<vmem>>, vector<16x128xf32>,
    } else {
    }
    return
  }
  func.func @transform_0(%arg0: i32, %arg1: i32) -> (i32, i32) {
    %c0_i32 = arith.constant 0 : i32
    return %arg0, %arg1 : i32, i32
  }
  func.func @transform_1(%arg0: i32, %arg1: i32) -> (i32, i32) {
    %c0_i32 = arith.constant 0 : i32
    %c0_i32_0 = arith.constant 0 : i32
    return %arg1, %c0_i32 : i32, i32
  }
  func.func @transform_2(%arg0: i32, %arg1: i32) -> (i32, i32) {
    %c0_i32 = arith.constant 0 : i32
    %c0_i32_0 = arith.constant 0 : i32
    return %arg0, %c0_i32 : i32, i32
  }
}

module attributes {stable_mosaic.version = 11 : i64} {
  func.func @_bn_relu_kernel(%arg0: i32, %arg1: memref<16x128xf32, #tpu.memory_space<vmem>>, %arg2: memref<1x128xf32, #tpu.memory_space<vmem>>, %arg3: memref<1x128xf32, #tpu.memory_space<vmem>>, %arg4: memref<16x128xbf16, #tpu.memory_space<vmem>>) attributes {dimension_semantics = [#tpu.dimension_semantics<parallel>], iteration_bounds = array<i64: 2>, scalar_prefetch = 0 : i64, scratch_operands = 0 : i64, tpu.core_type = #tpu.core_type<tc>, window_params = [{transform_indices = @transform_0, window_bounds = array<i64: 16, 128>}, {pipeline_mode = #tpu.pipeline_mode<synchronous>, transform_indices = @transform_1, window_bounds = array<i64: 1, 128>}, {pipeline_mode = #tpu.pipeline_mode<synchronous>, transform_indices = @transform_2, window_bounds = array<i64: 1, 128>}, {transform_indices = @transform_3, window_bounds = array<i64: 16, 128>}]} {
    %c0 = arith.constant 0 : index
    %c0_0 = arith.constant 0 : index
    %0 = vector.load %arg1[%c0, %c0_0] : memref<16x128xf32, #tpu.memory_space<vmem>>, vector<16x128xf32>
    %c0_1 = arith.constant 0 : index
    %c0_2 = arith.constant 0 : index
    %1 = vector.load %arg2[%c0_1, %c0_2] : memref<1x128xf32, #tpu.memory_space<vmem>>, vector<1x128xf32>
    %2 = vector.broadcast %1 : vector<1x128xf32> to vector<16x128xf32>
    %3 = arith.mulf %0, %2 : vector<16x128xf32>
    %c0_3 = arith.constant 0 : index
    %c0_4 = arith.constant 0 : index
    %4 = vector.load %arg3[%c0_3, %c0_4] : memref<1x128xf32, #tpu.memory_space<vmem>>, vector<1x128xf32>
    %5 = vector.broadcast %4 : vector<1x128xf32> to vector<16x128xf32>
    %6 = arith.addf %3, %5 : vector<16x128xf32>
    %cst = arith.constant 0.000000e+00 : f32
    %7 = vector.broadcast %cst : f32 to vector<16x128xf32>
    %8 = arith.maximumf %6, %7 : vector<16x128xf32>
    %9 = arith.truncf %8 : vector<16x128xf32> to vector<16x128xbf16>
    %c0_5 = arith.constant 0 : index
    %c0_6 = arith.constant 0 : index
    %10 = vector.load %arg4[%c0_5, %c0_6] : memref<16x128xbf16, #tpu.memory_space<vmem>>, vector<16x128xbf16>
    tpu.vector_store %arg4[%c0_5, %c0_6], %9 {strides = array<i32>} : memref<16x128xbf16, #tpu.memory_space<vmem>>, vector<16x128xbf16>,
    return
  }
  func.func @transform_0(%arg0: i32) -> (i32, i32) {
    %c0_i32 = arith.constant 0 : i32
    %c0_i32_0 = arith.constant 0 : i32
    return %arg0, %c0_i32 : i32, i32
  }
  func.func @transform_1(%arg0: i32) -> (i32, i32) {
    %c0_i32 = arith.constant 0 : i32
    %c0_i32_0 = arith.constant 0 : i32
    %c0_i32_1 = arith.constant 0 : i32
    return %c0_i32, %c0_i32_0 : i32, i32
  }
  func.func @transform_2(%arg0: i32) -> (i32, i32) {
    %c0_i32 = arith.constant 0 : i32
    %c0_i32_0 = arith.constant 0 : i32
    %c0_i32_1 = arith.constant 0 : i32
    return %c0_i32, %c0_i32_0 : i32, i32
  }
  func.func @transform_3(%arg0: i32) -> (i32, i32) {
    %c0_i32 = arith.constant 0 : i32
    %c0_i32_0 = arith.constant 0 : i32
    return %arg0, %c0_i32 : i32, i32
  }
}

module attributes {stable_mosaic.version = 11 : i64} {
  func.func @_matmul_kernel(%arg0: i32, %arg1: i32, %arg2: memref<16x64xbf16, #tpu.memory_space<vmem>>, %arg3: memref<64x128xbf16, #tpu.memory_space<vmem>>, %arg4: memref<16x128xf32, #tpu.memory_space<vmem>>, %arg5: memref<16x128xf32, #tpu.memory_space<vmem>>) attributes {dimension_semantics = [#tpu.dimension_semantics<parallel>, #tpu.dimension_semantics<arbitrary>], iteration_bounds = array<i64: 2, 1>, scalar_prefetch = 0 : i64, scratch_operands = 1 : i64, tpu.core_type = #tpu.core_type<tc>, window_params = [{transform_indices = @transform_0, window_bounds = array<i64: 16, 64>}, {transform_indices = @transform_1, window_bounds = array<i64: 64, 128>}, {transform_indices = @transform_2, window_bounds = array<i64: 16, 128>}]} {
    %c0_i32 = arith.constant 0 : i32
    %0 = arith.cmpi eq, %arg1, %c0_i32 : i32
    %1 = arith.extui %0 : i1 to i32
    %c0_i32_0 = arith.constant 0 : i32
    %2 = arith.cmpi ne, %1, %c0_i32_0 : i32
    scf.if %2 {
      %cst_10 = arith.constant 0.000000e+00 : f32
      %12 = vector.broadcast %cst_10 : f32 to vector<16x128xf32>
      %c0_11 = arith.constant 0 : index
      %c0_12 = arith.constant 0 : index
      %13 = vector.load %arg5[%c0_11, %c0_12] : memref<16x128xf32, #tpu.memory_space<vmem>>, vector<16x128xf32>
      tpu.vector_store %arg5[%c0_11, %c0_12], %12 {strides = array<i32>} : memref<16x128xf32, #tpu.memory_space<vmem>>, vector<16x128xf32>,
    } else {
    }
    %c0 = arith.constant 0 : index
    %c0_1 = arith.constant 0 : index
    %3 = vector.load %arg5[%c0, %c0_1] : memref<16x128xf32, #tpu.memory_space<vmem>>, vector<16x128xf32>
    %c0_2 = arith.constant 0 : index
    %c0_3 = arith.constant 0 : index
    %4 = vector.load %arg2[%c0_2, %c0_3] : memref<16x64xbf16, #tpu.memory_space<vmem>>, vector<16x64xbf16>
    %c0_4 = arith.constant 0 : index
    %c0_5 = arith.constant 0 : index
    %5 = vector.load %arg3[%c0_4, %c0_5] : memref<64x128xbf16, #tpu.memory_space<vmem>>, vector<64x128xbf16>
    %cst = arith.constant dense<0.000000e+00> : vector<16x128xf32>
    %6 = tpu.matmul %4, %5, %cst {dimension_numbers = #tpu.dot_dimension_numbers<[1], [0], [0], [1], [0, 0, 1, 1], [], []>} : vector<16x64xbf16>, vector<64x128xbf16>, vector<16x128xf32> -> vector<16x128xf32>
    %7 = arith.addf %3, %6 : vector<16x128xf32>
    %c0_6 = arith.constant 0 : index
    %c0_7 = arith.constant 0 : index
    %8 = vector.load %arg5[%c0_6, %c0_7] : memref<16x128xf32, #tpu.memory_space<vmem>>, vector<16x128xf32>
    tpu.vector_store %arg5[%c0_6, %c0_7], %7 {strides = array<i32>} : memref<16x128xf32, #tpu.memory_space<vmem>>, vector<16x128xf32>,
    %c0_i32_8 = arith.constant 0 : i32
    %9 = arith.cmpi eq, %arg1, %c0_i32_8 : i32
    %10 = arith.extui %9 : i1 to i32
    %c0_i32_9 = arith.constant 0 : i32
    %11 = arith.cmpi ne, %10, %c0_i32_9 : i32
    scf.if %11 {
      %c0_10 = arith.constant 0 : index
      %c0_11 = arith.constant 0 : index
      %12 = vector.load %arg5[%c0_10, %c0_11] : memref<16x128xf32, #tpu.memory_space<vmem>>, vector<16x128xf32>
      %c0_12 = arith.constant 0 : index
      %c0_13 = arith.constant 0 : index
      %13 = vector.load %arg4[%c0_12, %c0_13] : memref<16x128xf32, #tpu.memory_space<vmem>>, vector<16x128xf32>
      tpu.vector_store %arg4[%c0_12, %c0_13], %12 {strides = array<i32>} : memref<16x128xf32, #tpu.memory_space<vmem>>, vector<16x128xf32>,
    } else {
    }
    return
  }
  func.func @transform_0(%arg0: i32, %arg1: i32) -> (i32, i32) {
    %c0_i32 = arith.constant 0 : i32
    return %arg0, %arg1 : i32, i32
  }
  func.func @transform_1(%arg0: i32, %arg1: i32) -> (i32, i32) {
    %c0_i32 = arith.constant 0 : i32
    %c0_i32_0 = arith.constant 0 : i32
    return %arg1, %c0_i32 : i32, i32
  }
  func.func @transform_2(%arg0: i32, %arg1: i32) -> (i32, i32) {
    %c0_i32 = arith.constant 0 : i32
    %c0_i32_0 = arith.constant 0 : i32
    return %arg0, %c0_i32 : i32, i32
  }
}

module attributes {stable_mosaic.version = 11 : i64} {
  func.func @_matmul_add_kernel(%arg0: i32, %arg1: i32, %arg2: memref<16x384xbf16, #tpu.memory_space<vmem>>, %arg3: memref<384x128xbf16, #tpu.memory_space<vmem>>, %arg4: memref<16x128xf32, #tpu.memory_space<vmem>>, %arg5: memref<16x128xf32, #tpu.memory_space<vmem>>, %arg6: memref<16x128xf32, #tpu.memory_space<vmem>>) attributes {dimension_semantics = [#tpu.dimension_semantics<parallel>, #tpu.dimension_semantics<arbitrary>], iteration_bounds = array<i64: 2, 3>, scalar_prefetch = 0 : i64, scratch_operands = 1 : i64, tpu.core_type = #tpu.core_type<tc>, window_params = [{transform_indices = @transform_0, window_bounds = array<i64: 16, 384>}, {transform_indices = @transform_1, window_bounds = array<i64: 384, 128>}, {transform_indices = @transform_2, window_bounds = array<i64: 16, 128>}, {transform_indices = @transform_3, window_bounds = array<i64: 16, 128>}]} {
    %c0_i32 = arith.constant 0 : i32
    %0 = arith.cmpi eq, %arg1, %c0_i32 : i32
    %1 = arith.extui %0 : i1 to i32
    %c0_i32_0 = arith.constant 0 : i32
    %2 = arith.cmpi ne, %1, %c0_i32_0 : i32
    scf.if %2 {
      %cst_9 = arith.constant 0.000000e+00 : f32
      %12 = vector.broadcast %cst_9 : f32 to vector<16x128xf32>
      %c0_10 = arith.constant 0 : index
      %c0_11 = arith.constant 0 : index
      %13 = vector.load %arg6[%c0_10, %c0_11] : memref<16x128xf32, #tpu.memory_space<vmem>>, vector<16x128xf32>
      tpu.vector_store %arg6[%c0_10, %c0_11], %12 {strides = array<i32>} : memref<16x128xf32, #tpu.memory_space<vmem>>, vector<16x128xf32>,
    } else {
    }
    %c0 = arith.constant 0 : index
    %c0_1 = arith.constant 0 : index
    %3 = vector.load %arg6[%c0, %c0_1] : memref<16x128xf32, #tpu.memory_space<vmem>>, vector<16x128xf32>
    %c0_2 = arith.constant 0 : index
    %c0_3 = arith.constant 0 : index
    %4 = vector.load %arg2[%c0_2, %c0_3] : memref<16x384xbf16, #tpu.memory_space<vmem>>, vector<16x384xbf16>
    %c0_4 = arith.constant 0 : index
    %c0_5 = arith.constant 0 : index
    %5 = vector.load %arg3[%c0_4, %c0_5] : memref<384x128xbf16, #tpu.memory_space<vmem>>, vector<384x128xbf16>
    %cst = arith.constant dense<0.000000e+00> : vector<16x128xf32>
    %6 = tpu.matmul %4, %5, %cst {dimension_numbers = #tpu.dot_dimension_numbers<[1], [0], [0], [1], [0, 0, 1, 1], [], []>} : vector<16x384xbf16>, vector<384x128xbf16>, vector<16x128xf32> -> vector<16x128xf32>
    %7 = arith.addf %3, %6 : vector<16x128xf32>
    %c0_6 = arith.constant 0 : index
    %c0_7 = arith.constant 0 : index
    %8 = vector.load %arg6[%c0_6, %c0_7] : memref<16x128xf32, #tpu.memory_space<vmem>>, vector<16x128xf32>
    tpu.vector_store %arg6[%c0_6, %c0_7], %7 {strides = array<i32>} : memref<16x128xf32, #tpu.memory_space<vmem>>, vector<16x128xf32>,
    %c2_i32 = arith.constant 2 : i32
    %9 = arith.cmpi eq, %arg1, %c2_i32 : i32
    %10 = arith.extui %9 : i1 to i32
    %c0_i32_8 = arith.constant 0 : i32
    %11 = arith.cmpi ne, %10, %c0_i32_8 : i32
    scf.if %11 {
      %c0_9 = arith.constant 0 : index
      %c0_10 = arith.constant 0 : index
      %12 = vector.load %arg6[%c0_9, %c0_10] : memref<16x128xf32, #tpu.memory_space<vmem>>, vector<16x128xf32>
      %c0_11 = arith.constant 0 : index
      %c0_12 = arith.constant 0 : index
      %13 = vector.load %arg4[%c0_11, %c0_12] : memref<16x128xf32, #tpu.memory_space<vmem>>, vector<16x128xf32>
      %14 = arith.addf %12, %13 : vector<16x128xf32>
      %c0_13 = arith.constant 0 : index
      %c0_14 = arith.constant 0 : index
      %15 = vector.load %arg5[%c0_13, %c0_14] : memref<16x128xf32, #tpu.memory_space<vmem>>, vector<16x128xf32>
      tpu.vector_store %arg5[%c0_13, %c0_14], %14 {strides = array<i32>} : memref<16x128xf32, #tpu.memory_space<vmem>>, vector<16x128xf32>,
    } else {
    }
    return
  }
  func.func @transform_0(%arg0: i32, %arg1: i32) -> (i32, i32) {
    %c0_i32 = arith.constant 0 : i32
    return %arg0, %arg1 : i32, i32
  }
  func.func @transform_1(%arg0: i32, %arg1: i32) -> (i32, i32) {
    %c0_i32 = arith.constant 0 : i32
    %c0_i32_0 = arith.constant 0 : i32
    return %arg1, %c0_i32 : i32, i32
  }
  func.func @transform_2(%arg0: i32, %arg1: i32) -> (i32, i32) {
    %c0_i32 = arith.constant 0 : i32
    %c0_i32_0 = arith.constant 0 : i32
    return %arg0, %c0_i32 : i32, i32
  }
  func.func @transform_3(%arg0: i32, %arg1: i32) -> (i32, i32) {
    %c0_i32 = arith.constant 0 : i32
    %c0_i32_0 = arith.constant 0 : i32
    return %arg0, %c0_i32 : i32, i32
  }
}

module attributes {stable_mosaic.version = 11 : i64} {
  func.func @_bn_relu_gap_kernel(%arg0: memref<2x16x128xf32, #tpu.memory_space<vmem>>, %arg1: memref<1x1x128xf32, #tpu.memory_space<vmem>>, %arg2: memref<1x1x128xf32, #tpu.memory_space<vmem>>, %arg3: memref<2x128xf32, #tpu.memory_space<vmem>>) attributes {dimension_semantics = [], scalar_prefetch = 0 : i64, scratch_operands = 0 : i64, tpu.core_type = #tpu.core_type<tc>} {
    %c0 = arith.constant 0 : index
    %c0_0 = arith.constant 0 : index
    %c0_1 = arith.constant 0 : index
    %0 = vector.load %arg0[%c0, %c0_0, %c0_1] : memref<2x16x128xf32, #tpu.memory_space<vmem>>, vector<2x16x128xf32>
    %c0_2 = arith.constant 0 : index
    %c0_3 = arith.constant 0 : index
    %c0_4 = arith.constant 0 : index
    %1 = vector.load %arg1[%c0_2, %c0_3, %c0_4] : memref<1x1x128xf32, #tpu.memory_space<vmem>>, vector<1x1x128xf32>
    %2 = vector.broadcast %1 : vector<1x1x128xf32> to vector<2x16x128xf32>
    %3 = arith.mulf %0, %2 : vector<2x16x128xf32>
    %c0_5 = arith.constant 0 : index
    %c0_6 = arith.constant 0 : index
    %c0_7 = arith.constant 0 : index
    %4 = vector.load %arg2[%c0_5, %c0_6, %c0_7] : memref<1x1x128xf32, #tpu.memory_space<vmem>>, vector<1x1x128xf32>
    %5 = vector.broadcast %4 : vector<1x1x128xf32> to vector<2x16x128xf32>
    %6 = arith.addf %3, %5 : vector<2x16x128xf32>
    %cst = arith.constant 0.000000e+00 : f32
    %7 = vector.broadcast %cst : f32 to vector<2x16x128xf32>
    %8 = arith.maximumf %6, %7 : vector<2x16x128xf32>
    %cst_8 = arith.constant dense<0.000000e+00> : vector<2x128xf32>
    %9 = vector.multi_reduction <add>, %8, %cst_8 [1] : vector<2x16x128xf32> to vector<2x128xf32>
    %cst_9 = arith.constant 1.600000e+01 : f32
    %10 = vector.broadcast %cst_9 : f32 to vector<2x128xf32>
    %11 = arith.divf %9, %10 : vector<2x128xf32>
    %c0_10 = arith.constant 0 : index
    %c0_11 = arith.constant 0 : index
    %12 = vector.load %arg3[%c0_10, %c0_11] : memref<2x128xf32, #tpu.memory_space<vmem>>, vector<2x128xf32>
    tpu.vector_store %arg3[%c0_10, %c0_11], %11 {strides = array<i32>} : memref<2x128xf32, #tpu.memory_space<vmem>>, vector<2x128xf32>,
    return
  }
}

</mosaic_0001>

<llo_original>
// kernel: _lambda_.18
$region0: #{_lambda_.18}
  #allocation0 [shape = 'u32[]', space=smem, size = 0x4, offset = 0x4, fixed_abs, tag = 'smem constant byte address 0x4 - core index']
  #allocation1 [shape = 'u32[72,128]{1,0:T(1,128)}', space=vmem, size = 0x9000, scoped, tag = 'internal scratch']
  %s0 = inlined_call_operand.vmem [shape: f32[64,128], index: 0, kind: input, shape index: {}]
  %s1 = inlined_call_operand.vmem [shape: f32[1,128], index: 1, kind: input, shape index: {}]
  %s2 = inlined_call_operand.vmem [shape: f32[1,128], index: 2, kind: input, shape index: {}]
  %s3 = inlined_call_operand.vmem [shape: bf16[64,128], index: 3, kind: output, shape index: {}]
  %s4 = sld [smem:[#allocation0]]
  $region45: #{_lambda_.18} parent=0
    _
  %s6 = ssub.s32 1, %s4
  %s7 = scalar_select 0, %s6, %s4
  loop: start=0, step=1, limit=4
  $region2: #{_lambda_.18} parent=0 // loop_pre_header
    _
  $region3: #{_lambda_.18} parent=0 // loop_header
    %s9 = sphi 0, %s13
    %p10 = scmp.ge.s32.totalorder %s9, 4
    %s19 = sphi 0, %s21
    %s22 = sphi 0, %s19
    %s23 = sphi 0, %s22
    %s39 = sphi 0, %s23
    %s43 = sphi 0, %s43
    %s45 = sphi 0, %s43
    %s46 = sphi 0, %s45
    %s60 = sphi 0, %s46
    %s64 = sphi 0, %s64
    %s66 = sphi 0, %s64
    %s67 = sphi 0, %s66
    %s81 = sphi 0, %s67
    %s87 = sphi 0, %s89
    %s90 = sphi 0, %s87
    %s91 = sphi 0, %s90
    %s107 = sphi 0, %s91
  $region4: #{_lambda_.18} parent=0 // loop_header_branch
    %12 = sbr.rel (%p10) target = $region8
  $region5: #{_lambda_.18} parent=0 // loop_body
    %s14 = ssub.s32 %s9, 1
    %s15 = ssub.s32 %s9, 2
    %s16 = sadd.s32 %s9, 1
    %s17 = ssub.s32 %s9, %s16
    %p18 = scmp.eq.s32.totalorder %s17, 0
    %s20 = sadd.s32 %s19, 1
    %s21 = scalar_select %p18, %s19, %s20
    %p24 = pneg %p18
    %p25 = scmp.eq.s32.totalorder %s9, 1
    %p26 = por %p24, %p25
    %p27 = scmp.ne.s32.totalorder %s19, %s22
    %p28 = scmp.eq.s32.totalorder %s9, 0
    %p29 = por %p27, %p28
    %p30 = scmp.ne.s32.totalorder %s19, %s22
    %p31 = scmp.eq.s32.totalorder %s14, 1
    %p32 = por %p30, %p31
    %p33 = scmp.ne.s32.totalorder %s22, %s23
    %p34 = scmp.eq.s32.totalorder %s14, 0
    %p35 = por %p33, %p34
    %p36 = scmp.ne.s32.totalorder %s22, %s23
    %p37 = scmp.eq.s32.totalorder %s15, 1
    %p38 = por %p36, %p37
    %p40 = scmp.ne.s32.totalorder %s23, %s39
    %p41 = scmp.eq.s32.totalorder %s15, 0
    %p42 = por %p40, %p41
    %s44 = sadd.s32 %s43, 1
    %p47 = scmp.eq.s32.totalorder %s9, 1
    %p48 = scmp.ne.s32.totalorder %s43, %s45
    %p49 = scmp.eq.s32.totalorder %s9, 0
    %p50 = por %p48, %p49
    %p51 = scmp.ne.s32.totalorder %s43, %s45
    %p52 = scmp.eq.s32.totalorder %s14, 1
    %p53 = por %p51, %p52
    %p54 = scmp.ne.s32.totalorder %s45, %s46
    %p55 = scmp.eq.s32.totalorder %s14, 0
    %p56 = por %p54, %p55
    %p57 = scmp.ne.s32.totalorder %s45, %s46
    %p58 = scmp.eq.s32.totalorder %s15, 1
    %p59 = por %p57, %p58
    %p61 = scmp.ne.s32.totalorder %s46, %s60
    %p62 = scmp.eq.s32.totalorder %s15, 0
    %p63 = por %p61, %p62
    %s65 = sadd.s32 %s64, 1
    %p68 = scmp.eq.s32.totalorder %s9, 1
    %p69 = scmp.ne.s32.totalorder %s64, %s66
    %p70 = scmp.eq.s32.totalorder %s9, 0
    %p71 = por %p69, %p70
    %p72 = scmp.ne.s32.totalorder %s64, %s66
    %p73 = scmp.eq.s32.totalorder %s14, 1
    %p74 = por %p72, %p73
    %p75 = scmp.ne.s32.totalorder %s66, %s67
    %p76 = scmp.eq.s32.totalorder %s14, 0
    %p77 = por %p75, %p76
    %p78 = scmp.ne.s32.totalorder %s66, %s67
    %p79 = scmp.eq.s32.totalorder %s15, 1
    %p80 = por %p78, %p79
    %p82 = scmp.ne.s32.totalorder %s67, %s81
    %p83 = scmp.eq.s32.totalorder %s15, 0
    %p84 = por %p82, %p83
    %s85 = ssub.s32 %s9, %s16
    %p86 = scmp.eq.s32.totalorder %s85, 0
    %s88 = sadd.s32 %s87, 1
    %s89 = scalar_select %p86, %s87, %s88
    %p92 = pneg %p86
    %p93 = scmp.eq.s32.totalorder %s9, 1
    %p94 = por %p92, %p93
    %p95 = scmp.ne.s32.totalorder %s87, %s90
    %p96 = scmp.eq.s32.totalorder %s9, 0
    %p97 = por %p95, %p96
    %p98 = scmp.ne.s32.totalorder %s87, %s90
    %p99 = scmp.eq.s32.totalorder %s14, 1
    %p100 = por %p98, %p99
    %p101 = scmp.ne.s32.totalorder %s90, %s91
    %p102 = scmp.eq.s32.totalorder %s14, 0
    %p103 = por %p101, %p102
    %p104 = scmp.ne.s32.totalorder %s90, %s91
    %p105 = scmp.eq.s32.totalorder %s15, 1
    %p106 = por %p104, %p105
    %p108 = scmp.ne.s32.totalorder %s91, %s107
    %p109 = scmp.eq.s32.totalorder %s15, 0
    %p110 = por %p108, %p109
    %p111 = scmp.le.s32.totalorder 1, %s9
    %p112 = scmp.lt.s32.totalorder %s9, 3
    %p113 = pnand %p111, %p112
    %p114 = pneg %p113
    // Predicated region
    $region9: #{_lambda_.18} parent=5 // pred_check
      _
    $region10: #{_lambda_.18} parent=5 // pred_check_branch
      %116 = sbr.rel (%p113) target = $region12
    $region11: #{_lambda_.18} parent=5 // pred_region
      %s117 = ssub.s32 %s9, 1
      // Predicated region
      $region13: #{_lambda_.18} parent=11 // pred_check
        %p118 = pneg %p56
      $region14: #{_lambda_.18} parent=11 // pred_check_branch
        %120 = sbr.rel (%p118) target = $region16
      $region15: #{_lambda_.18} parent=11 // pred_region
        _
      $region16: #{_lambda_.18} parent=11 // pred_fallthru
        _
      // Predicated region
      $region17: #{_lambda_.18} parent=11 // pred_check
        %p121 = pneg %p77
      $region18: #{_lambda_.18} parent=11 // pred_check_branch
        %123 = sbr.rel (%p121) target = $region20
      $region19: #{_lambda_.18} parent=11 // pred_region
        _
      $region20: #{_lambda_.18} parent=11 // pred_fallthru
        _
    $region12: #{_lambda_.18} parent=5 // pred_fallthru
      _
    %p124 = scmp.lt.s32.totalorder %s9, 2
    // Predicated region
    $region21: #{_lambda_.18} parent=5 // pred_check
      %p125 = pneg %p124
    $region22: #{_lambda_.18} parent=5 // pred_check_branch
      %127 = sbr.rel (%p125) target = $region24
    $region23: #{_lambda_.18} parent=5 // pred_region
      // Predicated region
      $region25: #{_lambda_.18} parent=23 // pred_check
        %p128 = pneg %p29
      $region26: #{_lambda_.18} parent=23 // pred_check_branch
        %130 = sbr.rel (%p128) target = $region28
      $region27: #{_lambda_.18} parent=23 // pred_region
        %s131 = smul.u32 4, %s9
        %p132 = scmp.lt.s32.totalorder %s131, 7
        %s133 = scalar_select %p132, %s131, 7
        %s134 = smul.addr %s133, 8
        %s135 = scalar_lea.vmem %s0, %s134
        %s136 = smul.u32 4, %s9
      $region28: #{_lambda_.18} parent=23 // pred_fallthru
        _
    $region24: #{_lambda_.18} parent=5 // pred_fallthru
      _
    %p137 = scmp.le.s32.totalorder 1, %s9
    %p138 = scmp.lt.s32.totalorder %s9, 3
    %p139 = pnand %p137, %p138
    %p140 = pneg %p139
    // Predicated region
    $region29: #{_lambda_.18} parent=5 // pred_check
      _
    $region30: #{_lambda_.18} parent=5 // pred_check_branch
      %142 = sbr.rel (%p139) target = $region32
    $region31: #{_lambda_.18} parent=5 // pred_region
      %s143 = ssub.s32 %s9, 1
      %s144 = smul.u32 4, %s14
      %p145 = scmp.lt.s32.totalorder %s144, 7
      %s146 = scalar_select %p145, %s144, 7
      %s147 = smul.addr %s146, 8
      %s148 = scalar_lea.vmem %s0, %s147
      %p149 = pneg %p35
      %p150 = pneg %p32
      %p151 = pneg %p56
      %p152 = pneg %p53
      %p153 = pneg %p77
      %p154 = pneg %p74
      %p155 = pneg %p103
      %p156 = pneg %p100
      %s157 = smul.u32 4, %s14
      %p158 = scmp.lt.s32.totalorder %s157, 7
      %s159 = scalar_select %p158, %s157, 7
      %s160 = smul.addr %s159, 4
      %s161 = scalar_lea.vmem %s3, %s160
      %s162 = smul.u32 4, %s14
      %p163 = scmp.lt.s32.totalorder %s162, 7
      %s164 = scalar_select %p163, %s162, 7
      %s165 = smul.addr %s164, 8
      %s166 = scalar_lea.vmem %s0, %s165
      %s167 = smul.u32 4, %s14
      %s168 = smul.u32 4, %s14
      %p169 = scmp.lt.s32.totalorder %s168, 7
      %s170 = scalar_select %p169, %s168, 7
      %s171 = smul.addr %s170, 4
      %s172 = scalar_lea.vmem %s3, %s171
      %s173 = smul.u32 4, %s14
      %v174 = vld [vmem:[%s166] sm:$0xff]
      %v175 = vld [vmem:[%s166 + $0x8] sm:$0xff]
      %v176 = vld [vmem:[%s166 + $0x10] sm:$0xff]
      %v177 = vld [vmem:[%s166 + $0x18] sm:$0xff]
      %v178 = vld [vmem:[%s1] sm:$0x1]
      %v180 = vperm.slane %v178, 0
      %v182 = vmul.f32 %v174, %v180
      %v183 = vmul.f32 %v175, %v180
      %v184 = vmul.f32 %v176, %v180
      %v185 = vmul.f32 %v177, %v180
      %v186 = vld [vmem:[%s2] sm:$0x1]
      %v188 = vperm.slane %v186, 0
      %v190 = vadd.f32 %v182, %v188
      %v191 = vadd.f32 %v183, %v188
      %v192 = vadd.f32 %v184, %v188
      %v193 = vadd.f32 %v185, %v188
      %v194 = vmax.f32 %v190, 0.0
      %v195 = vmax.f32 %v191, 0.0
      %v196 = vmax.f32 %v192, 0.0
      %v197 = vmax.f32 %v193, 0.0
      %v198 = vpack.c.bf16 %v194, %v194
      %v199 = vpack.c.bf16 %v195, %v195
      %v200 = vpack.c.bf16 %v196, %v196
      %v201 = vpack.c.bf16 %v197, %v197
      %202 = vst [vmem:[%s172] sm:$0xf] %v198
      %203 = vst [vmem:[%s172 + $0x4] sm:$0xf] %v199
      %204 = vst [vmem:[%s172 + $0x8] sm:$0xf] %v200
      %205 = vst [vmem:[%s172 + $0xc] sm:$0xf] %v201
      %s206 = smul.u32 4, %s14
      %p207 = scmp.lt.s32.totalorder %s206, 7
      %s208 = scalar_select %p207, %s206, 7
      %s209 = smul.addr %s208, 4
      %s210 = scalar_lea.vmem %s3, %s209
      // Predicated region
      $region33: #{_lambda_.18} parent=31 // pred_check
        %p211 = pneg %p100
      $region34: #{_lambda_.18} parent=31 // pred_check_branch
        %213 = sbr.rel (%p211) target = $region36
      $region35: #{_lambda_.18} parent=31 // pred_region
        %s214 = smul.u32 4, %s14
      $region36: #{_lambda_.18} parent=31 // pred_fallthru
        _
    $region32: #{_lambda_.18} parent=5 // pred_fallthru
      _
    %p215 = scmp.le.s32.totalorder 2, %s9
    // Predicated region
    $region37: #{_lambda_.18} parent=5 // pred_check
      %p216 = pneg %p215
    $region38: #{_lambda_.18} parent=5 // pred_check_branch
      %218 = sbr.rel (%p216) target = $region40
    $region39: #{_lambda_.18} parent=5 // pred_region
      %s219 = ssub.s32 %s9, 2
      // Predicated region
      $region41: #{_lambda_.18} parent=39 // pred_check
        %p220 = pneg %p106
      $region42: #{_lambda_.18} parent=39 // pred_check_branch
        %222 = sbr.rel (%p220) target = $region44
      $region43: #{_lambda_.18} parent=39 // pred_region
        %s223 = smul.u32 4, %s15
        %p224 = scmp.lt.s32.totalorder %s223, 7
        %s225 = scalar_select %p224, %s223, 7
        %s226 = smul.addr %s225, 4
        %s227 = scalar_lea.vmem %s3, %s226
      $region44: #{_lambda_.18} parent=39 // pred_fallthru
        _
    $region40: #{_lambda_.18} parent=5 // pred_fallthru
      _
  $region6: #{_lambda_.18} parent=0 // loop_footer
    %s13 = sadd.s32 1, %s9
  $region7: #{_lambda_.18} parent=0 // loop_footer_branch
    %8 = sbr.rel target = $region3
  $region8: #{_lambda_.18} parent=0 // loop_exit
    _

// kernel: _lambda_.17
$region0: #{_lambda_.17}
  #allocation0 [shape = 'u32[]', space=smem, size = 0x4, offset = 0x4, fixed_abs, tag = 'smem constant byte address 0x4 - core index']
  #allocation1 [shape = 'u32[72,128]{1,0:T(1,128)}', space=vmem, size = 0x9000, scoped, tag = 'internal scratch']
  #allocation2 [shape = 'f32[256,16]{1,0:T(8,128)}', space=vmem, size = 0x20000, scoped, tag = 'scratch operand']
  %s0 = inlined_call_operand.vmem [shape: bf16[512,27], index: 0, kind: input, shape index: {}]
  %s1 = inlined_call_operand.vmem [shape: bf16[27,16], index: 1, kind: input, shape index: {}]
  %s2 = inlined_call_operand.vmem [shape: f32[512,16], index: 2, kind: output, shape index: {}]
  %s3 = sld [smem:[#allocation0]]
  $region49: #{_lambda_.17} parent=0
    _
  %s5 = ssub.s32 1, %s3
  %s6 = scalar_select 0, %s5, %s3
  loop: start=0, step=1, limit=4
  $region2: #{_lambda_.17} parent=0 // loop_pre_header
    _
  $region3: #{_lambda_.17} parent=0 // loop_header
    %s8 = sphi 0, %s12
    %p9 = scmp.ge.s32.totalorder %s8, 4
    %s15 = sphi 0, %s27
    %s16 = sphi 0, %s23
    %s17 = sphi 0, %s15
    %s18 = sphi 0, %s16
    %s19 = sphi 0, %s17
    %s20 = sphi 0, %s18
    %s32 = sphi 0, %s34
    %s35 = sphi 0, %s32
    %s36 = sphi 0, %s35
    %s52 = sphi 0, %s36
    %s58 = sphi 0, %s60
    %s61 = sphi 0, %s58
    %s62 = sphi 0, %s61
    %s78 = sphi 0, %s62
    %s84 = sphi 0, %s86
    %s87 = sphi 0, %s84
    %s88 = sphi 0, %s87
    %s104 = sphi 0, %s88
  $region4: #{_lambda_.17} parent=0 // loop_header_branch
    %11 = sbr.rel (%p9) target = $region8
  $region5: #{_lambda_.17} parent=0 // loop_body
    %s13 = ssub.s32 %s8, 1
    %s14 = ssub.s32 %s8, 2
    %s21 = sadd.s32 1, %s16
    %p22 = scmp.ge.s32.totalorder %s21, 1
    %s23 = scalar_select %p22, 0, %s21
    %s24 = sadd.s32 1, %s15
    %s25 = scalar_select %p22, %s24, %s15
    %p26 = scmp.ge.s32.totalorder %s25, 2
    %s27 = scalar_select %p26, 0, %s25
    %s28 = ssub.s32 %s15, %s27
    %s29 = ssub.s32 %s16, %s23
    %s30 = sor.u32 %s28, %s29
    %p31 = scmp.eq.s32.totalorder %s30, 0
    %s33 = sadd.s32 %s32, 1
    %s34 = scalar_select %p31, %s32, %s33
    %p37 = pneg %p31
    %p38 = scmp.eq.s32.totalorder %s8, 1
    %p39 = por %p37, %p38
    %p40 = scmp.ne.s32.totalorder %s32, %s35
    %p41 = scmp.eq.s32.totalorder %s8, 0
    %p42 = por %p40, %p41
    %p43 = scmp.ne.s32.totalorder %s32, %s35
    %p44 = scmp.eq.s32.totalorder %s13, 1
    %p45 = por %p43, %p44
    %p46 = scmp.ne.s32.totalorder %s35, %s36
    %p47 = scmp.eq.s32.totalorder %s13, 0
    %p48 = por %p46, %p47
    %p49 = scmp.ne.s32.totalorder %s35, %s36
    %p50 = scmp.eq.s32.totalorder %s14, 1
    %p51 = por %p49, %p50
    %p53 = scmp.ne.s32.totalorder %s36, %s52
    %p54 = scmp.eq.s32.totalorder %s14, 0
    %p55 = por %p53, %p54
    %s56 = ssub.s32 %s16, %s23
    %p57 = scmp.eq.s32.totalorder %s56, 0
    %s59 = sadd.s32 %s58, 1
    %s60 = scalar_select %p57, %s58, %s59
    %p63 = pneg %p57
    %p64 = scmp.eq.s32.totalorder %s8, 1
    %p65 = por %p63, %p64
    %p66 = scmp.ne.s32.totalorder %s58, %s61
    %p67 = scmp.eq.s32.totalorder %s8, 0
    %p68 = por %p66, %p67
    %p69 = scmp.ne.s32.totalorder %s58, %s61
    %p70 = scmp.eq.s32.totalorder %s13, 1
    %p71 = por %p69, %p70
    %p72 = scmp.ne.s32.totalorder %s61, %s62
    %p73 = scmp.eq.s32.totalorder %s13, 0
    %p74 = por %p72, %p73
    %p75 = scmp.ne.s32.totalorder %s61, %s62
    %p76 = scmp.eq.s32.totalorder %s14, 1
    %p77 = por %p75, %p76
    %p79 = scmp.ne.s32.totalorder %s62, %s78
    %p80 = scmp.eq.s32.totalorder %s14, 0
    %p81 = por %p79, %p80
    %s82 = ssub.s32 %s15, %s27
    %p83 = scmp.eq.s32.totalorder %s82, 0
    %s85 = sadd.s32 %s84, 1
    %s86 = scalar_select %p83, %s84, %s85
    %p89 = pneg %p83
    %p90 = scmp.eq.s32.totalorder %s8, 1
    %p91 = por %p89, %p90
    %p92 = scmp.ne.s32.totalorder %s84, %s87
    %p93 = scmp.eq.s32.totalorder %s8, 0
    %p94 = por %p92, %p93
    %p95 = scmp.ne.s32.totalorder %s84, %s87
    %p96 = scmp.eq.s32.totalorder %s13, 1
    %p97 = por %p95, %p96
    %p98 = scmp.ne.s32.totalorder %s87, %s88
    %p99 = scmp.eq.s32.totalorder %s13, 0
    %p100 = por %p98, %p99
    %p101 = scmp.ne.s32.totalorder %s87, %s88
    %p102 = scmp.eq.s32.totalorder %s14, 1
    %p103 = por %p101, %p102
    %p105 = scmp.ne.s32.totalorder %s88, %s104
    %p106 = scmp.eq.s32.totalorder %s14, 0
    %p107 = por %p105, %p106
    %p108 = scmp.le.s32.totalorder 1, %s8
    %p109 = scmp.lt.s32.totalorder %s8, 3
    %p110 = pnand %p108, %p109
    %p111 = pneg %p110
    // Predicated region
    $region9: #{_lambda_.17} parent=5 // pred_check
      _
    $region10: #{_lambda_.17} parent=5 // pred_check_branch
      %113 = sbr.rel (%p110) target = $region12
    $region11: #{_lambda_.17} parent=5 // pred_region
      %s114 = ssub.s32 %s8, 1
      // Predicated region
      $region13: #{_lambda_.17} parent=11 // pred_check
        %p115 = pneg %p74
      $region14: #{_lambda_.17} parent=11 // pred_check_branch
        %117 = sbr.rel (%p115) target = $region16
      $region15: #{_lambda_.17} parent=11 // pred_region
        %s118 = smul.u32 4, %s18
        %p119 = scmp.lt.s32.totalorder %s118, 3
        %s120 = scalar_select %p119, %s118, 3
        %s121 = smul.addr %s120, 4
        %s122 = scalar_lea.vmem %s1, %s121
        %s123 = smul.u32 4, %s18
      $region16: #{_lambda_.17} parent=11 // pred_fallthru
        _
    $region12: #{_lambda_.17} parent=5 // pred_fallthru
      _
    %p124 = scmp.lt.s32.totalorder %s8, 2
    // Predicated region
    $region17: #{_lambda_.17} parent=5 // pred_check
      %p125 = pneg %p124
    $region18: #{_lambda_.17} parent=5 // pred_check_branch
      %127 = sbr.rel (%p125) target = $region20
    $region19: #{_lambda_.17} parent=5 // pred_region
      // Predicated region
      $region21: #{_lambda_.17} parent=19 // pred_check
        %p128 = pneg %p42
      $region22: #{_lambda_.17} parent=19 // pred_check_branch
        %130 = sbr.rel (%p128) target = $region24
      $region23: #{_lambda_.17} parent=19 // pred_region
        %s131 = smul.u32 32, %s15
        %p132 = scmp.lt.s32.totalorder %s131, 63
        %s133 = scalar_select %p132, %s131, 63
        %p134 = scmp.lt.s32.totalorder %s16, 0
        %s135 = scalar_select %p134, %s16, 0
        %s136 = sadd.s32 %s135, %s133
        %s137 = smul.addr %s136, 4
        %s138 = scalar_lea.vmem %s0, %s137
        %s139 = smul.u32 32, %s15
      $region24: #{_lambda_.17} parent=19 // pred_fallthru
        _
    $region20: #{_lambda_.17} parent=5 // pred_fallthru
      _
    %p140 = scmp.le.s32.totalorder 1, %s8
    %p141 = scmp.lt.s32.totalorder %s8, 3
    %p142 = pnand %p140, %p141
    %p143 = pneg %p142
    // Predicated region
    $region25: #{_lambda_.17} parent=5 // pred_check
      _
    $region26: #{_lambda_.17} parent=5 // pred_check_branch
      %145 = sbr.rel (%p142) target = $region28
    $region27: #{_lambda_.17} parent=5 // pred_region
      %s146 = ssub.s32 %s8, 1
      %s147 = smul.u32 32, %s17
      %p148 = scmp.lt.s32.totalorder %s147, 63
      %s149 = scalar_select %p148, %s147, 63
      %p150 = scmp.lt.s32.totalorder %s18, 0
      %s151 = scalar_select %p150, %s18, 0
      %s152 = sadd.s32 %s151, %s149
      %s153 = smul.addr %s152, 4
      %s154 = scalar_lea.vmem %s0, %s153
      %p155 = pneg %p48
      %p156 = pneg %p45
      %s157 = smul.u32 4, %s18
      %p158 = scmp.lt.s32.totalorder %s157, 3
      %s159 = scalar_select %p158, %s157, 3
      %s160 = smul.addr %s159, 4
      %s161 = scalar_lea.vmem %s1, %s160
      %p162 = pneg %p74
      %p163 = pneg %p71
      %p164 = pneg %p100
      %p165 = pneg %p97
      %s166 = smul.u32 32, %s17
      %p167 = scmp.lt.s32.totalorder %s166, 63
      %s168 = scalar_select %p167, %s166, 63
      %s169 = smul.addr %s168, 8
      %s170 = scalar_lea.vmem %s2, %s169
      %s171 = smul.u32 32, %s17
      %p172 = scmp.lt.s32.totalorder %s171, 63
      %s173 = scalar_select %p172, %s171, 63
      %p174 = scmp.lt.s32.totalorder %s18, 0
      %s175 = scalar_select %p174, %s18, 0
      %s176 = sadd.s32 %s175, %s173
      %s177 = smul.addr %s176, 4
      %s178 = scalar_lea.vmem %s0, %s177
      %s179 = smul.u32 32, %s17
      %s180 = smul.u32 4, %s18
      %p181 = scmp.lt.s32.totalorder %s180, 3
      %s182 = scalar_select %p181, %s180, 3
      %s183 = smul.addr %s182, 4
      %s184 = scalar_lea.vmem %s1, %s183
      %s185 = smul.u32 4, %s18
      %s186 = smul.u32 32, %s17
      %p187 = scmp.lt.s32.totalorder %s186, 63
      %s188 = scalar_select %p187, %s186, 63
      %s189 = smul.addr %s188, 8
      %s190 = scalar_lea.vmem %s2, %s189
      %s191 = smul.u32 32, %s17
      %p193 = scmp.eq.s32.totalorder %s18, 0
      // Predicated region
      $region29: #{_lambda_.17} parent=27 // pred_check
        %p194 = pneg %p193
      $region30: #{_lambda_.17} parent=27 // pred_check_branch
        %196 = sbr.rel (%p194) target = $region32
      $region31: #{_lambda_.17} parent=27 // pred_region
        %vm197 = vcmask 130048
        %198 = vst.msk [vmem:[#allocation2] sm:$0xff] %vm197, 0.0
        %199 = vst.msk [vmem:[#allocation2 + $0x8] sm:$0xff] %vm197, 0.0
        %200 = vst.msk [vmem:[#allocation2 + $0x10] sm:$0xff] %vm197, 0.0
        %201 = vst.msk [vmem:[#allocation2 + $0x18] sm:$0xff] %vm197, 0.0
        %202 = vst.msk [vmem:[#allocation2 + $0x20] sm:$0xff] %vm197, 0.0
        %203 = vst.msk [vmem:[#allocation2 + $0x28] sm:$0xff] %vm197, 0.0
        %204 = vst.msk [vmem:[#allocation2 + $0x30] sm:$0xff] %vm197, 0.0
        %205 = vst.msk [vmem:[#allocation2 + $0x38] sm:$0xff] %vm197, 0.0
        %206 = vst.msk [vmem:[#allocation2 + $0x40] sm:$0xff] %vm197, 0.0
        %207 = vst.msk [vmem:[#allocation2 + $0x48] sm:$0xff] %vm197, 0.0
        %208 = vst.msk [vmem:[#allocation2 + $0x50] sm:$0xff] %vm197, 0.0
        %209 = vst.msk [vmem:[#allocation2 + $0x58] sm:$0xff] %vm197, 0.0
        %210 = vst.msk [vmem:[#allocation2 + $0x60] sm:$0xff] %vm197, 0.0
        %211 = vst.msk [vmem:[#allocation2 + $0x68] sm:$0xff] %vm197, 0.0
        %212 = vst.msk [vmem:[#allocation2 + $0x70] sm:$0xff] %vm197, 0.0
        %213 = vst.msk [vmem:[#allocation2 + $0x78] sm:$0xff] %vm197, 0.0
        %214 = vst.msk [vmem:[#allocation2 + $0x80] sm:$0xff] %vm197, 0.0
        %215 = vst.msk [vmem:[#allocation2 + $0x88] sm:$0xff] %vm197, 0.0
        %216 = vst.msk [vmem:[#allocation2 + $0x90] sm:$0xff] %vm197, 0.0
        %217 = vst.msk [vmem:[#allocation2 + $0x98] sm:$0xff] %vm197, 0.0
        %218 = vst.msk [vmem:[#allocation2 + $0xa0] sm:$0xff] %vm197, 0.0
        %219 = vst.msk [vmem:[#allocation2 + $0xa8] sm:$0xff] %vm197, 0.0
        %220 = vst.msk [vmem:[#allocation2 + $0xb0] sm:$0xff] %vm197, 0.0
        %221 = vst.msk [vmem:[#allocation2 + $0xb8] sm:$0xff] %vm197, 0.0
        %222 = vst.msk [vmem:[#allocation2 + $0xc0] sm:$0xff] %vm197, 0.0
        %223 = vst.msk [vmem:[#allocation2 + $0xc8] sm:$0xff] %vm197, 0.0
        %224 = vst.msk [vmem:[#allocation2 + $0xd0] sm:$0xff] %vm197, 0.0
        %225 = vst.msk [vmem:[#allocation2 + $0xd8] sm:$0xff] %vm197, 0.0
        %226 = vst.msk [vmem:[#allocation2 + $0xe0] sm:$0xff] %vm197, 0.0
        %227 = vst.msk [vmem:[#allocation2 + $0xe8] sm:$0xff] %vm197, 0.0
        %228 = vst.msk [vmem:[#allocation2 + $0xf0] sm:$0xff] %vm197, 0.0
        %229 = vst.msk [vmem:[#allocation2 + $0xf8] sm:$0xff] %vm197, 0.0
      $region32: #{_lambda_.17} parent=27 // pred_fallthru
        _
      %v230 = vld [vmem:[#allocation2] sm:$0xff]
      %v231 = vld [vmem:[#allocation2 + $0x8] sm:$0xff]
      %v232 = vld [vmem:[#allocation2 + $0x10] sm:$0xff]
      %v233 = vld [vmem:[#allocation2 + $0x18] sm:$0xff]
      %v234 = vld [vmem:[#allocation2 + $0x20] sm:$0xff]
      %v235 = vld [vmem:[#allocation2 + $0x28] sm:$0xff]
      %v236 = vld [vmem:[#allocation2 + $0x30] sm:$0xff]
      %v237 = vld [vmem:[#allocation2 + $0x38] sm:$0xff]
      %v238 = vld [vmem:[#allocation2 + $0x40] sm:$0xff]
      %v239 = vld [vmem:[#allocation2 + $0x48] sm:$0xff]
      %v240 = vld [vmem:[#allocation2 + $0x50] sm:$0xff]
      %v241 = vld [vmem:[#allocation2 + $0x58] sm:$0xff]
      %v242 = vld [vmem:[#allocation2 + $0x60] sm:$0xff]
      %v243 = vld [vmem:[#allocation2 + $0x68] sm:$0xff]
      %v244 = vld [vmem:[#allocation2 + $0x70] sm:$0xff]
      %v245 = vld [vmem:[#allocation2 + $0x78] sm:$0xff]
      %v246 = vld [vmem:[#allocation2 + $0x80] sm:$0xff]
      %v247 = vld [vmem:[#allocation2 + $0x88] sm:$0xff]
      %v248 = vld [vmem:[#allocation2 + $0x90] sm:$0xff]
      %v249 = vld [vmem:[#allocation2 + $0x98] sm:$0xff]
      %v250 = vld [vmem:[#allocation2 + $0xa0] sm:$0xff]
      %v251 = vld [vmem:[#allocation2 + $0xa8] sm:$0xff]
      %v252 = vld [vmem:[#allocation2 + $0xb0] sm:$0xff]
      %v253 = vld [vmem:[#allocation2 + $0xb8] sm:$0xff]
      %v254 = vld [vmem:[#allocation2 + $0xc0] sm:$0xff]
      %v255 = vld [vmem:[#allocation2 + $0xc8] sm:$0xff]
      %v256 = vld [vmem:[#allocation2 + $0xd0] sm:$0xff]
      %v257 = vld [vmem:[#allocation2 + $0xd8] sm:$0xff]
      %v258 = vld [vmem:[#allocation2 + $0xe0] sm:$0xff]
      %v259 = vld [vmem:[#allocation2 + $0xe8] sm:$0xff]
      %v260 = vld [vmem:[#allocation2 + $0xf0] sm:$0xff]
      %v261 = vld [vmem:[#allocation2 + $0xf8] sm:$0xff]
      %v262 = vld [vmem:[%s178] sm:$0xf]
      %v263 = vld [vmem:[%s178 + $0x4] sm:$0xf]
      %v264 = vld [vmem:[%s178 + $0x8] sm:$0xf]
      %v265 = vld [vmem:[%s178 + $0xc] sm:$0xf]
      %v266 = vld [vmem:[%s178 + $0x10] sm:$0xf]
      %v267 = vld [vmem:[%s178 + $0x14] sm:$0xf]
      %v268 = vld [vmem:[%s178 + $0x18] sm:$0xf]
      %v269 = vld [vmem:[%s178 + $0x1c] sm:$0xf]
      %v270 = vld [vmem:[%s178 + $0x20] sm:$0xf]
      %v271 = vld [vmem:[%s178 + $0x24] sm:$0xf]
      %v272 = vld [vmem:[%s178 + $0x28] sm:$0xf]
      %v273 = vld [vmem:[%s178 + $0x2c] sm:$0xf]
      %v274 = vld [vmem:[%s178 + $0x30] sm:$0xf]
      %v275 = vld [vmem:[%s178 + $0x34] sm:$0xf]
      %v276 = vld [vmem:[%s178 + $0x38] sm:$0xf]
      %v277 = vld [vmem:[%s178 + $0x3c] sm:$0xf]
      %v278 = vld [vmem:[%s178 + $0x40] sm:$0xf]
      %v279 = vld [vmem:[%s178 + $0x44] sm:$0xf]
      %v280 = vld [vmem:[%s178 + $0x48] sm:$0xf]
      %v281 = vld [vmem:[%s178 + $0x4c] sm:$0xf]
      %v282 = vld [vmem:[%s178 + $0x50] sm:$0xf]
      %v283 = vld [vmem:[%s178 + $0x54] sm:$0xf]
      %v284 = vld [vmem:[%s178 + $0x58] sm:$0xf]
      %v285 = vld [vmem:[%s178 + $0x5c] sm:$0xf]
      %v286 = vld [vmem:[%s178 + $0x60] sm:$0xf]
      %v287 = vld [vmem:[%s178 + $0x64] sm:$0xf]
      %v288 = vld [vmem:[%s178 + $0x68] sm:$0xf]
      %v289 = vld [vmem:[%s178 + $0x6c] sm:$0xf]
      %v290 = vld [vmem:[%s178 + $0x70] sm:$0xf]
      %v291 = vld [vmem:[%s178 + $0x74] sm:$0xf]
      %v292 = vld [vmem:[%s178 + $0x78] sm:$0xf]
      %v293 = vld [vmem:[%s178 + $0x7c] sm:$0xf]
      %v294 = vld [vmem:[%s184] sm:$0xf]
      %v295 = vld [vmem:[%s184 + $0x4] sm:$0xf]
      %v296 = vld [vmem:[%s184 + $0x8] sm:$0xf]
      %v297 = vld [vmem:[%s184 + $0xc] sm:$0x3]
      %v330 = vunpack.c.l.b16 %v262
      %v331 = vunpack.c.l.b16 %v263
      %v332 = vunpack.c.l.b16 %v264
      %v333 = vunpack.c.l.b16 %v265
      %v334 = vunpack.c.l.b16 %v266
      %v335 = vunpack.c.l.b16 %v267
      %v336 = vunpack.c.l.b16 %v268
      %v337 = vunpack.c.l.b16 %v269
      %v338 = vunpack.c.l.b16 %v270
      %v339 = vunpack.c.l.b16 %v271
      %v340 = vunpack.c.l.b16 %v272
      %v341 = vunpack.c.l.b16 %v273
      %v342 = vunpack.c.l.b16 %v274
      %v343 = vunpack.c.l.b16 %v275
      %v344 = vunpack.c.l.b16 %v276
      %v345 = vunpack.c.l.b16 %v277
      %v346 = vunpack.c.l.b16 %v278
      %v347 = vunpack.c.l.b16 %v279
      %v348 = vunpack.c.l.b16 %v280
      %v349 = vunpack.c.l.b16 %v281
      %v350 = vunpack.c.l.b16 %v282
      %v351 = vunpack.c.l.b16 %v283
      %v352 = vunpack.c.l.b16 %v284
      %v353 = vunpack.c.l.b16 %v285
      %v354 = vunpack.c.l.b16 %v286
      %v355 = vunpack.c.l.b16 %v287
      %v356 = vunpack.c.l.b16 %v288
      %v357 = vunpack.c.l.b16 %v289
      %v358 = vunpack.c.l.b16 %v290
      %v359 = vunpack.c.l.b16 %v291
      %v360 = vunpack.c.l.b16 %v292
      %v361 = vunpack.c.l.b16 %v293
      %v362 = vpack.c.b16 %v331, %v330
      %v363 = vpack.c.b16 %v333, %v332
      %v364 = vpack.c.b16 %v335, %v334
      %v365 = vpack.c.b16 %v337, %v336
      %v366 = vpack.c.b16 %v339, %v338
      %v367 = vpack.c.b16 %v341, %v340
      %v368 = vpack.c.b16 %v343, %v342
      %v369 = vpack.c.b16 %v345, %v344
      %v370 = vpack.c.b16 %v347, %v346
      %v371 = vpack.c.b16 %v349, %v348
      %v372 = vpack.c.b16 %v351, %v350
      %v373 = vpack.c.b16 %v353, %v352
      %v374 = vpack.c.b16 %v355, %v354
      %v375 = vpack.c.b16 %v357, %v356
      %v376 = vpack.c.b16 %v359, %v358
      %v377 = vpack.c.b16 %v361, %v360
      %v382 = vunpack.c.l.b16 %v294
      %v383 = vunpack.c.l.b16 %v295
      %v384 = vunpack.c.l.b16 %v296
      %v385 = vunpack.c.l.b16 %v297
      %v386 = vpack.c.b16 %v383, %v382
      %v387 = vpack.c.b16 %v385, %v384
      %vm389 = vcmask 220160
      %v391 = vsel %vm389, %v362, 0
      %v394 = vsel %vm389, %v363, 0
      %v397 = vsel %vm389, %v364, 0
      %v400 = vsel %vm389, %v365, 0
      %v403 = vsel %vm389, %v366, 0
      %v406 = vsel %vm389, %v367, 0
      %v409 = vsel %vm389, %v368, 0
      %v412 = vsel %vm389, %v369, 0
      %v415 = vsel %vm389, %v370, 0
      %v418 = vsel %vm389, %v371, 0
      %v421 = vsel %vm389, %v372, 0
      %v424 = vsel %vm389, %v373, 0
      %v427 = vsel %vm389, %v374, 0
      %v430 = vsel %vm389, %v375, 0
      %v433 = vsel %vm389, %v376, 0
      %v436 = vsel %vm389, %v377, 0
      %vm438 = vcmask 1044480
      %vm439 = vcmask 1045504
      %v440 = vsel %vm438, 4294967295, 65535
      %v441 = vsel %vm439, %v440, 0
      %v443 = vand.u32 %v387, %v441
      %445 = vmatpush.bf16.msra.mxu0 0
      %446 = vmatpush.bf16.msra.mxu0 0
      %447 = vmatpush.bf16.msra.mxu0 0
      %448 = vmatpush.bf16.msra.mxu0 0
      %449 = vmatpush.bf16.msra.mxu0 0
      %450 = vmatpush.bf16.msra.mxu0 0
      %451 = vmatpush.bf16.msra.mxu0 %v443
      %452 = vmatpush.bf16.msra.mxu0 %v386
      %453 = vmatmul.bf16.gmra.mxu0 %v391
      %v454 = vpop.f32.mrf.mxu0
      %v455 = vadd.f32 0.0, %v454
      %v456 = vpop.f32.mrf.mxu0
      %v457 = vadd.f32 0.0, %v456
      %458 = vmatmul.bf16.gmra.mxu0 %v394
      %v459 = vpop.f32.mrf.mxu0
      %v460 = vadd.f32 0.0, %v459
      %v461 = vpop.f32.mrf.mxu0
      %v462 = vadd.f32 0.0, %v461
      %463 = vmatmul.bf16.gmra.mxu0 %v397
      %v464 = vpop.f32.mrf.mxu0
      %v465 = vadd.f32 0.0, %v464
      %v466 = vpop.f32.mrf.mxu0
      %v467 = vadd.f32 0.0, %v466
      %468 = vmatmul.bf16.gmra.mxu0 %v400
      %v469 = vpop.f32.mrf.mxu0
      %v470 = vadd.f32 0.0, %v469
      %v471 = vpop.f32.mrf.mxu0
      %v472 = vadd.f32 0.0, %v471
      %473 = vmatmul.bf16.gmra.mxu0 %v403
      %v474 = vpop.f32.mrf.mxu0
      %v475 = vadd.f32 0.0, %v474
      %v476 = vpop.f32.mrf.mxu0
      %v477 = vadd.f32 0.0, %v476
      %478 = vmatmul.bf16.gmra.mxu0 %v406
      %v479 = vpop.f32.mrf.mxu0
      %v480 = vadd.f32 0.0, %v479
      %v481 = vpop.f32.mrf.mxu0
      %v482 = vadd.f32 0.0, %v481
      %483 = vmatmul.bf16.gmra.mxu0 %v409
      %v484 = vpop.f32.mrf.mxu0
      %v485 = vadd.f32 0.0, %v484
      %v486 = vpop.f32.mrf.mxu0
      %v487 = vadd.f32 0.0, %v486
      %488 = vmatmul.bf16.gmra.mxu0 %v412
      %v489 = vpop.f32.mrf.mxu0
      %v490 = vadd.f32 0.0, %v489
      %v491 = vpop.f32.mrf.mxu0
      %v492 = vadd.f32 0.0, %v491
      %493 = vmatmul.bf16.gmra.mxu0 %v415
      %v494 = vpop.f32.mrf.mxu0
      %v495 = vadd.f32 0.0, %v494
      %v496 = vpop.f32.mrf.mxu0
      %v497 = vadd.f32 0.0, %v496
      %498 = vmatmul.bf16.gmra.mxu0 %v418
      %v499 = vpop.f32.mrf.mxu0
      %v500 = vadd.f32 0.0, %v499
      %v501 = vpop.f32.mrf.mxu0
      %v502 = vadd.f32 0.0, %v501
      %503 = vmatmul.bf16.gmra.mxu0 %v421
      %v504 = vpop.f32.mrf.mxu0
      %v505 = vadd.f32 0.0, %v504
      %v506 = vpop.f32.mrf.mxu0
      %v507 = vadd.f32 0.0, %v506
      %508 = vmatmul.bf16.gmra.mxu0 %v424
      %v509 = vpop.f32.mrf.mxu0
      %v510 = vadd.f32 0.0, %v509
      %v511 = vpop.f32.mrf.mxu0
      %v512 = vadd.f32 0.0, %v511
      %513 = vmatmul.bf16.gmra.mxu0 %v427
      %v514 = vpop.f32.mrf.mxu0
      %v515 = vadd.f32 0.0, %v514
      %v516 = vpop.f32.mrf.mxu0
      %v517 = vadd.f32 0.0, %v516
      %518 = vmatmul.bf16.gmra.mxu0 %v430
      %v519 = vpop.f32.mrf.mxu0
      %v520 = vadd.f32 0.0, %v519
      %v521 = vpop.f32.mrf.mxu0
      %v522 = vadd.f32 0.0, %v521
      %523 = vmatmul.bf16.gmra.mxu0 %v433
      %v524 = vpop.f32.mrf.mxu0
      %v525 = vadd.f32 0.0, %v524
      %v526 = vpop.f32.mrf.mxu0
      %v527 = vadd.f32 0.0, %v526
      %528 = vmatmul.bf16.gmra.mxu0 %v436
      %v529 = vpop.f32.mrf.mxu0
      %v530 = vadd.f32 0.0, %v529
      %v531 = vpop.f32.mrf.mxu0
      %v532 = vadd.f32 0.0, %v531
      %533 = vdwg.mxu0
      %v534 = vadd.f32 %v230, %v455
      %v535 = vadd.f32 %v231, %v457
      %v536 = vadd.f32 %v232, %v460
      %v537 = vadd.f32 %v233, %v462
      %v538 = vadd.f32 %v234, %v465
      %v539 = vadd.f32 %v235, %v467
      %v540 = vadd.f32 %v236, %v470
      %v541 = vadd.f32 %v237, %v472
      %v542 = vadd.f32 %v238, %v475
      %v543 = vadd.f32 %v239, %v477
      %v544 = vadd.f32 %v240, %v480
      %v545 = vadd.f32 %v241, %v482
      %v546 = vadd.f32 %v242, %v485
      %v547 = vadd.f32 %v243, %v487
      %v548 = vadd.f32 %v244, %v490
      %v549 = vadd.f32 %v245, %v492
      %v550 = vadd.f32 %v246, %v495
      %v551 = vadd.f32 %v247, %v497
      %v552 = vadd.f32 %v248, %v500
      %v553 = vadd.f32 %v249, %v502
      %v554 = vadd.f32 %v250, %v505
      %v555 = vadd.f32 %v251, %v507
      %v556 = vadd.f32 %v252, %v510
      %v557 = vadd.f32 %v253, %v512
      %v558 = vadd.f32 %v254, %v515
      %v559 = vadd.f32 %v255, %v517
      %v560 = vadd.f32 %v256, %v520
      %v561 = vadd.f32 %v257, %v522
      %v562 = vadd.f32 %v258, %v525
      %v563 = vadd.f32 %v259, %v527
      %v564 = vadd.f32 %v260, %v530
      %v565 = vadd.f32 %v261, %v532
      %vm566 = vcmask 130048
      %567 = vst.msk [vmem:[#allocation2] sm:$0xff] %vm566, %v534
      %568 = vst.msk [vmem:[#allocation2 + $0x8] sm:$0xff] %vm566, %v535
      %569 = vst.msk [vmem:[#allocation2 + $0x10] sm:$0xff] %vm566, %v536
      %570 = vst.msk [vmem:[#allocation2 + $0x18] sm:$0xff] %vm566, %v537
      %571 = vst.msk [vmem:[#allocation2 + $0x20] sm:$0xff] %vm566, %v538
      %572 = vst.msk [vmem:[#allocation2 + $0x28] sm:$0xff] %vm566, %v539
      %573 = vst.msk [vmem:[#allocation2 + $0x30] sm:$0xff] %vm566, %v540
      %574 = vst.msk [vmem:[#allocation2 + $0x38] sm:$0xff] %vm566, %v541
      %575 = vst.msk [vmem:[#allocation2 + $0x40] sm:$0xff] %vm566, %v542
      %576 = vst.msk [vmem:[#allocation2 + $0x48] sm:$0xff] %vm566, %v543
      %577 = vst.msk [vmem:[#allocation2 + $0x50] sm:$0xff] %vm566, %v544
      %578 = vst.msk [vmem:[#allocation2 + $0x58] sm:$0xff] %vm566, %v545
      %579 = vst.msk [vmem:[#allocation2 + $0x60] sm:$0xff] %vm566, %v546
      %580 = vst.msk [vmem:[#allocation2 + $0x68] sm:$0xff] %vm566, %v547
      %581 = vst.msk [vmem:[#allocation2 + $0x70] sm:$0xff] %vm566, %v548
      %582 = vst.msk [vmem:[#allocation2 + $0x78] sm:$0xff] %vm566, %v549
      %583 = vst.msk [vmem:[#allocation2 + $0x80] sm:$0xff] %vm566, %v550
      %584 = vst.msk [vmem:[#allocation2 + $0x88] sm:$0xff] %vm566, %v551
      %585 = vst.msk [vmem:[#allocation2 + $0x90] sm:$0xff] %vm566, %v552
      %586 = vst.msk [vmem:[#allocation2 + $0x98] sm:$0xff] %vm566, %v553
      %587 = vst.msk [vmem:[#allocation2 + $0xa0] sm:$0xff] %vm566, %v554
      %588 = vst.msk [vmem:[#allocation2 + $0xa8] sm:$0xff] %vm566, %v555
      %589 = vst.msk [vmem:[#allocation2 + $0xb0] sm:$0xff] %vm566, %v556
      %590 = vst.msk [vmem:[#allocation2 + $0xb8] sm:$0xff] %vm566, %v557
      %591 = vst.msk [vmem:[#allocation2 + $0xc0] sm:$0xff] %vm566, %v558
      %592 = vst.msk [vmem:[#allocation2 + $0xc8] sm:$0xff] %vm566, %v559
      %593 = vst.msk [vmem:[#allocation2 + $0xd0] sm:$0xff] %vm566, %v560
      %594 = vst.msk [vmem:[#allocation2 + $0xd8] sm:$0xff] %vm566, %v561
      %595 = vst.msk [vmem:[#allocation2 + $0xe0] sm:$0xff] %vm566, %v562
      %596 = vst.msk [vmem:[#allocation2 + $0xe8] sm:$0xff] %vm566, %v563
      %597 = vst.msk [vmem:[#allocation2 + $0xf0] sm:$0xff] %vm566, %v564
      %598 = vst.msk [vmem:[#allocation2 + $0xf8] sm:$0xff] %vm566, %v565
      // Predicated region
      $region33: #{_lambda_.17} parent=27 // pred_check
        %p599 = pneg %p193
      $region34: #{_lambda_.17} parent=27 // pred_check_branch
        %601 = sbr.rel (%p599) target = $region36
      $region35: #{_lambda_.17} parent=27 // pred_region
        %v602 = vld [vmem:[#allocation2] sm:$0xff]
        %v603 = vld [vmem:[#allocation2 + $0x8] sm:$0xff]
        %v604 = vld [vmem:[#allocation2 + $0x10] sm:$0xff]
        %v605 = vld [vmem:[#allocation2 + $0x18] sm:$0xff]
        %v606 = vld [vmem:[#allocation2 + $0x20] sm:$0xff]
        %v607 = vld [vmem:[#allocation2 + $0x28] sm:$0xff]
        %v608 = vld [vmem:[#allocation2 + $0x30] sm:$0xff]
        %v609 = vld [vmem:[#allocation2 + $0x38] sm:$0xff]
        %v610 = vld [vmem:[#allocation2 + $0x40] sm:$0xff]
        %v611 = vld [vmem:[#allocation2 + $0x48] sm:$0xff]
        %v612 = vld [vmem:[#allocation2 + $0x50] sm:$0xff]
        %v613 = vld [vmem:[#allocation2 + $0x58] sm:$0xff]
        %v614 = vld [vmem:[#allocation2 + $0x60] sm:$0xff]
        %v615 = vld [vmem:[#allocation2 + $0x68] sm:$0xff]
        %v616 = vld [vmem:[#allocation2 + $0x70] sm:$0xff]
        %v617 = vld [vmem:[#allocation2 + $0x78] sm:$0xff]
        %v618 = vld [vmem:[#allocation2 + $0x80] sm:$0xff]
        %v619 = vld [vmem:[#allocation2 + $0x88] sm:$0xff]
        %v620 = vld [vmem:[#allocation2 + $0x90] sm:$0xff]
        %v621 = vld [vmem:[#allocation2 + $0x98] sm:$0xff]
        %v622 = vld [vmem:[#allocation2 + $0xa0] sm:$0xff]
        %v623 = vld [vmem:[#allocation2 + $0xa8] sm:$0xff]
        %v624 = vld [vmem:[#allocation2 + $0xb0] sm:$0xff]
        %v625 = vld [vmem:[#allocation2 + $0xb8] sm:$0xff]
        %v626 = vld [vmem:[#allocation2 + $0xc0] sm:$0xff]
        %v627 = vld [vmem:[#allocation2 + $0xc8] sm:$0xff]
        %v628 = vld [vmem:[#allocation2 + $0xd0] sm:$0xff]
        %v629 = vld [vmem:[#allocation2 + $0xd8] sm:$0xff]
        %v630 = vld [vmem:[#allocation2 + $0xe0] sm:$0xff]
        %v631 = vld [vmem:[#allocation2 + $0xe8] sm:$0xff]
        %v632 = vld [vmem:[#allocation2 + $0xf0] sm:$0xff]
        %v633 = vld [vmem:[#allocation2 + $0xf8] sm:$0xff]
        %634 = vst.msk [vmem:[%s190] sm:$0xff] %vm566, %v602
        %635 = vst.msk [vmem:[%s190 + $0x8] sm:$0xff] %vm566, %v603
        %636 = vst.msk [vmem:[%s190 + $0x10] sm:$0xff] %vm566, %v604
        %637 = vst.msk [vmem:[%s190 + $0x18] sm:$0xff] %vm566, %v605
        %638 = vst.msk [vmem:[%s190 + $0x20] sm:$0xff] %vm566, %v606
        %639 = vst.msk [vmem:[%s190 + $0x28] sm:$0xff] %vm566, %v607
        %640 = vst.msk [vmem:[%s190 + $0x30] sm:$0xff] %vm566, %v608
        %641 = vst.msk [vmem:[%s190 + $0x38] sm:$0xff] %vm566, %v609
        %642 = vst.msk [vmem:[%s190 + $0x40] sm:$0xff] %vm566, %v610
        %643 = vst.msk [vmem:[%s190 + $0x48] sm:$0xff] %vm566, %v611
        %644 = vst.msk [vmem:[%s190 + $0x50] sm:$0xff] %vm566, %v612
        %645 = vst.msk [vmem:[%s190 + $0x58] sm:$0xff] %vm566, %v613
        %646 = vst.msk [vmem:[%s190 + $0x60] sm:$0xff] %vm566, %v614
        %647 = vst.msk [vmem:[%s190 + $0x68] sm:$0xff] %vm566, %v615
        %648 = vst.msk [vmem:[%s190 + $0x70] sm:$0xff] %vm566, %v616
        %649 = vst.msk [vmem:[%s190 + $0x78] sm:$0xff] %vm566, %v617
        %650 = vst.msk [vmem:[%s190 + $0x80] sm:$0xff] %vm566, %v618
        %651 = vst.msk [vmem:[%s190 + $0x88] sm:$0xff] %vm566, %v619
        %652 = vst.msk [vmem:[%s190 + $0x90] sm:$0xff] %vm566, %v620
        %653 = vst.msk [vmem:[%s190 + $0x98] sm:$0xff] %vm566, %v621
        %654 = vst.msk [vmem:[%s190 + $0xa0] sm:$0xff] %vm566, %v622
        %655 = vst.msk [vmem:[%s190 + $0xa8] sm:$0xff] %vm566, %v623
        %656 = vst.msk [vmem:[%s190 + $0xb0] sm:$0xff] %vm566, %v624
        %657 = vst.msk [vmem:[%s190 + $0xb8] sm:$0xff] %vm566, %v625
        %658 = vst.msk [vmem:[%s190 + $0xc0] sm:$0xff] %vm566, %v626
        %659 = vst.msk [vmem:[%s190 + $0xc8] sm:$0xff] %vm566, %v627
        %660 = vst.msk [vmem:[%s190 + $0xd0] sm:$0xff] %vm566, %v628
        %661 = vst.msk [vmem:[%s190 + $0xd8] sm:$0xff] %vm566, %v629
        %662 = vst.msk [vmem:[%s190 + $0xe0] sm:$0xff] %vm566, %v630
        %663 = vst.msk [vmem:[%s190 + $0xe8] sm:$0xff] %vm566, %v631
        %664 = vst.msk [vmem:[%s190 + $0xf0] sm:$0xff] %vm566, %v632
        %665 = vst.msk [vmem:[%s190 + $0xf8] sm:$0xff] %vm566, %v633
      $region36: #{_lambda_.17} parent=27 // pred_fallthru
        _
      %s666 = smul.u32 32, %s17
      %p667 = scmp.lt.s32.totalorder %s666, 63
      %s668 = scalar_select %p667, %s666, 63
      %s669 = smul.addr %s668, 8
      %s670 = scalar_lea.vmem %s2, %s669
      // Predicated region
      $region37: #{_lambda_.17} parent=27 // pred_check
        %p671 = pneg %p97
      $region38: #{_lambda_.17} parent=27 // pred_check_branch
        %673 = sbr.rel (%p671) target = $region40
      $region39: #{_lambda_.17} parent=27 // pred_region
        %s674 = smul.u32 32, %s17
      $region40: #{_lambda_.17} parent=27 // pred_fallthru
        _
    $region28: #{_lambda_.17} parent=5 // pred_fallthru
      _
    %p675 = scmp.le.s32.totalorder 2, %s8
    // Predicated region
    $region41: #{_lambda_.17} parent=5 // pred_check
      %p676 = pneg %p675
    $region42: #{_lambda_.17} parent=5 // pred_check_branch
      %678 = sbr.rel (%p676) target = $region44
    $region43: #{_lambda_.17} parent=5 // pred_region
      %s679 = ssub.s32 %s8, 2
      // Predicated region
      $region45: #{_lambda_.17} parent=43 // pred_check
        %p680 = pneg %p103
      $region46: #{_lambda_.17} parent=43 // pred_check_branch
        %682 = sbr.rel (%p680) target = $region48
      $region47: #{_lambda_.17} parent=43 // pred_region
        %s683 = smul.u32 32, %s19
        %p684 = scmp.lt.s32.totalorder %s683, 63
        %s685 = scalar_select %p684, %s683, 63
        %s686 = smul.addr %s685, 8
        %s687 = scalar_lea.vmem %s2, %s686
      $region48: #{_lambda_.17} parent=43 // pred_fallthru
        _
    $region44: #{_lambda_.17} parent=5 // pred_fallthru
      _
  $region6: #{_lambda_.17} parent=0 // loop_footer
    %s12 = sadd.s32 1, %s8
  $region7: #{_lambda_.17} parent=0 // loop_footer_branch
    %7 = sbr.rel target = $region3
  $region8: #{_lambda_.17} parent=0 // loop_exit
    _

// kernel: _lambda_.21
$region0: #{_lambda_.21}
  #allocation0 [shape = 'u32[]', space=smem, size = 0x4, offset = 0x4, fixed_abs, tag = 'smem constant byte address 0x4 - core index']
  #allocation1 [shape = 'u32[72,128]{1,0:T(1,128)}', space=vmem, size = 0x9000, scoped, tag = 'internal scratch']
  %s0 = inlined_call_operand.vmem [shape: f32[128,128], index: 0, kind: input, shape index: {}]
  %s1 = inlined_call_operand.vmem [shape: f32[1,128], index: 1, kind: input, shape index: {}]
  %s2 = inlined_call_operand.vmem [shape: f32[1,128], index: 2, kind: input, shape index: {}]
  %s3 = inlined_call_operand.vmem [shape: bf16[128,128], index: 3, kind: output, shape index: {}]
  %s4 = sld [smem:[#allocation0]]
  $region45: #{_lambda_.21} parent=0
    _
  %s6 = ssub.s32 1, %s4
  %s7 = scalar_select 0, %s6, %s4
  loop: start=0, step=1, limit=4
  $region2: #{_lambda_.21} parent=0 // loop_pre_header
    _
  $region3: #{_lambda_.21} parent=0 // loop_header
    %s9 = sphi 0, %s13
    %p10 = scmp.ge.s32.totalorder %s9, 4
    %s19 = sphi 0, %s21
    %s22 = sphi 0, %s19
    %s23 = sphi 0, %s22
    %s39 = sphi 0, %s23
    %s43 = sphi 0, %s43
    %s45 = sphi 0, %s43
    %s46 = sphi 0, %s45
    %s60 = sphi 0, %s46
    %s64 = sphi 0, %s64
    %s66 = sphi 0, %s64
    %s67 = sphi 0, %s66
    %s81 = sphi 0, %s67
    %s87 = sphi 0, %s89
    %s90 = sphi 0, %s87
    %s91 = sphi 0, %s90
    %s107 = sphi 0, %s91
  $region4: #{_lambda_.21} parent=0 // loop_header_branch
    %12 = sbr.rel (%p10) target = $region8
  $region5: #{_lambda_.21} parent=0 // loop_body
    %s14 = ssub.s32 %s9, 1
    %s15 = ssub.s32 %s9, 2
    %s16 = sadd.s32 %s9, 1
    %s17 = ssub.s32 %s9, %s16
    %p18 = scmp.eq.s32.totalorder %s17, 0
    %s20 = sadd.s32 %s19, 1
    %s21 = scalar_select %p18, %s19, %s20
    %p24 = pneg %p18
    %p25 = scmp.eq.s32.totalorder %s9, 1
    %p26 = por %p24, %p25
    %p27 = scmp.ne.s32.totalorder %s19, %s22
    %p28 = scmp.eq.s32.totalorder %s9, 0
    %p29 = por %p27, %p28
    %p30 = scmp.ne.s32.totalorder %s19, %s22
    %p31 = scmp.eq.s32.totalorder %s14, 1
    %p32 = por %p30, %p31
    %p33 = scmp.ne.s32.totalorder %s22, %s23
    %p34 = scmp.eq.s32.totalorder %s14, 0
    %p35 = por %p33, %p34
    %p36 = scmp.ne.s32.totalorder %s22, %s23
    %p37 = scmp.eq.s32.totalorder %s15, 1
    %p38 = por %p36, %p37
    %p40 = scmp.ne.s32.totalorder %s23, %s39
    %p41 = scmp.eq.s32.totalorder %s15, 0
    %p42 = por %p40, %p41
    %s44 = sadd.s32 %s43, 1
    %p47 = scmp.eq.s32.totalorder %s9, 1
    %p48 = scmp.ne.s32.totalorder %s43, %s45
    %p49 = scmp.eq.s32.totalorder %s9, 0
    %p50 = por %p48, %p49
    %p51 = scmp.ne.s32.totalorder %s43, %s45
    %p52 = scmp.eq.s32.totalorder %s14, 1
    %p53 = por %p51, %p52
    %p54 = scmp.ne.s32.totalorder %s45, %s46
    %p55 = scmp.eq.s32.totalorder %s14, 0
    %p56 = por %p54, %p55
    %p57 = scmp.ne.s32.totalorder %s45, %s46
    %p58 = scmp.eq.s32.totalorder %s15, 1
    %p59 = por %p57, %p58
    %p61 = scmp.ne.s32.totalorder %s46, %s60
    %p62 = scmp.eq.s32.totalorder %s15, 0
    %p63 = por %p61, %p62
    %s65 = sadd.s32 %s64, 1
    %p68 = scmp.eq.s32.totalorder %s9, 1
    %p69 = scmp.ne.s32.totalorder %s64, %s66
    %p70 = scmp.eq.s32.totalorder %s9, 0
    %p71 = por %p69, %p70
    %p72 = scmp.ne.s32.totalorder %s64, %s66
    %p73 = scmp.eq.s32.totalorder %s14, 1
    %p74 = por %p72, %p73
    %p75 = scmp.ne.s32.totalorder %s66, %s67
    %p76 = scmp.eq.s32.totalorder %s14, 0
    %p77 = por %p75, %p76
    %p78 = scmp.ne.s32.totalorder %s66, %s67
    %p79 = scmp.eq.s32.totalorder %s15, 1
    %p80 = por %p78, %p79
    %p82 = scmp.ne.s32.totalorder %s67, %s81
    %p83 = scmp.eq.s32.totalorder %s15, 0
    %p84 = por %p82, %p83
    %s85 = ssub.s32 %s9, %s16
    %p86 = scmp.eq.s32.totalorder %s85, 0
    %s88 = sadd.s32 %s87, 1
    %s89 = scalar_select %p86, %s87, %s88
    %p92 = pneg %p86
    %p93 = scmp.eq.s32.totalorder %s9, 1
    %p94 = por %p92, %p93
    %p95 = scmp.ne.s32.totalorder %s87, %s90
    %p96 = scmp.eq.s32.totalorder %s9, 0
    %p97 = por %p95, %p96
    %p98 = scmp.ne.s32.totalorder %s87, %s90
    %p99 = scmp.eq.s32.totalorder %s14, 1
    %p100 = por %p98, %p99
    %p101 = scmp.ne.s32.totalorder %s90, %s91
    %p102 = scmp.eq.s32.totalorder %s14, 0
    %p103 = por %p101, %p102
    %p104 = scmp.ne.s32.totalorder %s90, %s91
    %p105 = scmp.eq.s32.totalorder %s15, 1
    %p106 = por %p104, %p105
    %p108 = scmp.ne.s32.totalorder %s91, %s107
    %p109 = scmp.eq.s32.totalorder %s15, 0
    %p110 = por %p108, %p109
    %p111 = scmp.le.s32.totalorder 1, %s9
    %p112 = scmp.lt.s32.totalorder %s9, 3
    %p113 = pnand %p111, %p112
    %p114 = pneg %p113
    // Predicated region
    $region9: #{_lambda_.21} parent=5 // pred_check
      _
    $region10: #{_lambda_.21} parent=5 // pred_check_branch
      %116 = sbr.rel (%p113) target = $region12
    $region11: #{_lambda_.21} parent=5 // pred_region
      %s117 = ssub.s32 %s9, 1
      // Predicated region
      $region13: #{_lambda_.21} parent=11 // pred_check
        %p118 = pneg %p56
      $region14: #{_lambda_.21} parent=11 // pred_check_branch
        %120 = sbr.rel (%p118) target = $region16
      $region15: #{_lambda_.21} parent=11 // pred_region
        _
      $region16: #{_lambda_.21} parent=11 // pred_fallthru
        _
      // Predicated region
      $region17: #{_lambda_.21} parent=11 // pred_check
        %p121 = pneg %p77
      $region18: #{_lambda_.21} parent=11 // pred_check_branch
        %123 = sbr.rel (%p121) target = $region20
      $region19: #{_lambda_.21} parent=11 // pred_region
        _
      $region20: #{_lambda_.21} parent=11 // pred_fallthru
        _
    $region12: #{_lambda_.21} parent=5 // pred_fallthru
      _
    %p124 = scmp.lt.s32.totalorder %s9, 2
    // Predicated region
    $region21: #{_lambda_.21} parent=5 // pred_check
      %p125 = pneg %p124
    $region22: #{_lambda_.21} parent=5 // pred_check_branch
      %127 = sbr.rel (%p125) target = $region24
    $region23: #{_lambda_.21} parent=5 // pred_region
      // Predicated region
      $region25: #{_lambda_.21} parent=23 // pred_check
        %p128 = pneg %p29
      $region26: #{_lambda_.21} parent=23 // pred_check_branch
        %130 = sbr.rel (%p128) target = $region28
      $region27: #{_lambda_.21} parent=23 // pred_region
        %s131 = smul.u32 8, %s9
        %p132 = scmp.lt.s32.totalorder %s131, 15
        %s133 = scalar_select %p132, %s131, 15
        %s134 = smul.addr %s133, 8
        %s135 = scalar_lea.vmem %s0, %s134
        %s136 = smul.u32 8, %s9
      $region28: #{_lambda_.21} parent=23 // pred_fallthru
        _
    $region24: #{_lambda_.21} parent=5 // pred_fallthru
      _
    %p137 = scmp.le.s32.totalorder 1, %s9
    %p138 = scmp.lt.s32.totalorder %s9, 3
    %p139 = pnand %p137, %p138
    %p140 = pneg %p139
    // Predicated region
    $region29: #{_lambda_.21} parent=5 // pred_check
      _
    $region30: #{_lambda_.21} parent=5 // pred_check_branch
      %142 = sbr.rel (%p139) target = $region32
    $region31: #{_lambda_.21} parent=5 // pred_region
      %s143 = ssub.s32 %s9, 1
      %s144 = smul.u32 8, %s14
      %p145 = scmp.lt.s32.totalorder %s144, 15
      %s146 = scalar_select %p145, %s144, 15
      %s147 = smul.addr %s146, 8
      %s148 = scalar_lea.vmem %s0, %s147
      %p149 = pneg %p35
      %p150 = pneg %p32
      %p151 = pneg %p56
      %p152 = pneg %p53
      %p153 = pneg %p77
      %p154 = pneg %p74
      %p155 = pneg %p103
      %p156 = pneg %p100
      %s157 = smul.u32 8, %s14
      %p158 = scmp.lt.s32.totalorder %s157, 15
      %s159 = scalar_select %p158, %s157, 15
      %s160 = smul.addr %s159, 4
      %s161 = scalar_lea.vmem %s3, %s160
      %s162 = smul.u32 8, %s14
      %p163 = scmp.lt.s32.totalorder %s162, 15
      %s164 = scalar_select %p163, %s162, 15
      %s165 = smul.addr %s164, 8
      %s166 = scalar_lea.vmem %s0, %s165
      %s167 = smul.u32 8, %s14
      %s168 = smul.u32 8, %s14
      %p169 = scmp.lt.s32.totalorder %s168, 15
      %s170 = scalar_select %p169, %s168, 15
      %s171 = smul.addr %s170, 4
      %s172 = scalar_lea.vmem %s3, %s171
      %s173 = smul.u32 8, %s14
      %v174 = vld [vmem:[%s166] sm:$0xff]
      %v175 = vld [vmem:[%s166 + $0x8] sm:$0xff]
      %v176 = vld [vmem:[%s166 + $0x10] sm:$0xff]
      %v177 = vld [vmem:[%s166 + $0x18] sm:$0xff]
      %v178 = vld [vmem:[%s166 + $0x20] sm:$0xff]
      %v179 = vld [vmem:[%s166 + $0x28] sm:$0xff]
      %v180 = vld [vmem:[%s166 + $0x30] sm:$0xff]
      %v181 = vld [vmem:[%s166 + $0x38] sm:$0xff]
      %v182 = vld [vmem:[%s1] sm:$0x1]
      %v184 = vperm.slane %v182, 0
      %v186 = vmul.f32 %v174, %v184
      %v187 = vmul.f32 %v175, %v184
      %v188 = vmul.f32 %v176, %v184
      %v189 = vmul.f32 %v177, %v184
      %v190 = vmul.f32 %v178, %v184
      %v191 = vmul.f32 %v179, %v184
      %v192 = vmul.f32 %v180, %v184
      %v193 = vmul.f32 %v181, %v184
      %v194 = vld [vmem:[%s2] sm:$0x1]
      %v196 = vperm.slane %v194, 0
      %v198 = vadd.f32 %v186, %v196
      %v199 = vadd.f32 %v187, %v196
      %v200 = vadd.f32 %v188, %v196
      %v201 = vadd.f32 %v189, %v196
      %v202 = vadd.f32 %v190, %v196
      %v203 = vadd.f32 %v191, %v196
      %v204 = vadd.f32 %v192, %v196
      %v205 = vadd.f32 %v193, %v196
      %v206 = vmax.f32 %v198, 0.0
      %v207 = vmax.f32 %v199, 0.0
      %v208 = vmax.f32 %v200, 0.0
      %v209 = vmax.f32 %v201, 0.0
      %v210 = vmax.f32 %v202, 0.0
      %v211 = vmax.f32 %v203, 0.0
      %v212 = vmax.f32 %v204, 0.0
      %v213 = vmax.f32 %v205, 0.0
      %v214 = vpack.c.bf16 %v206, %v206
      %v215 = vpack.c.bf16 %v207, %v207
      %v216 = vpack.c.bf16 %v208, %v208
      %v217 = vpack.c.bf16 %v209, %v209
      %v218 = vpack.c.bf16 %v210, %v210
      %v219 = vpack.c.bf16 %v211, %v211
      %v220 = vpack.c.bf16 %v212, %v212
      %v221 = vpack.c.bf16 %v213, %v213
      %222 = vst [vmem:[%s172] sm:$0xf] %v214
      %223 = vst [vmem:[%s172 + $0x4] sm:$0xf] %v215
      %224 = vst [vmem:[%s172 + $0x8] sm:$0xf] %v216
      %225 = vst [vmem:[%s172 + $0xc] sm:$0xf] %v217
      %226 = vst [vmem:[%s172 + $0x10] sm:$0xf] %v218
      %227 = vst [vmem:[%s172 + $0x14] sm:$0xf] %v219
      %228 = vst [vmem:[%s172 + $0x18] sm:$0xf] %v220
      %229 = vst [vmem:[%s172 + $0x1c] sm:$0xf] %v221
      %s230 = smul.u32 8, %s14
      %p231 = scmp.lt.s32.totalorder %s230, 15
      %s232 = scalar_select %p231, %s230, 15
      %s233 = smul.addr %s232, 4
      %s234 = scalar_lea.vmem %s3, %s233
      // Predicated region
      $region33: #{_lambda_.21} parent=31 // pred_check
        %p235 = pneg %p100
      $region34: #{_lambda_.21} parent=31 // pred_check_branch
        %237 = sbr.rel (%p235) target = $region36
      $region35: #{_lambda_.21} parent=31 // pred_region
        %s238 = smul.u32 8, %s14
      $region36: #{_lambda_.21} parent=31 // pred_fallthru
        _
    $region32: #{_lambda_.21} parent=5 // pred_fallthru
      _
    %p239 = scmp.le.s32.totalorder 2, %s9
    // Predicated region
    $region37: #{_lambda_.21} parent=5 // pred_check
      %p240 = pneg %p239
    $region38: #{_lambda_.21} parent=5 // pred_check_branch
      %242 = sbr.rel (%p240) target = $region40
    $region39: #{_lambda_.21} parent=5 // pred_region
      %s243 = ssub.s32 %s9, 2
      // Predicated region
      $region41: #{_lambda_.21} parent=39 // pred_check
        %p244 = pneg %p106
      $region42: #{_lambda_.21} parent=39 // pred_check_branch
        %246 = sbr.rel (%p244) target = $region44
      $region43: #{_lambda_.21} parent=39 // pred_region
        %s247 = smul.u32 8, %s15
        %p248 = scmp.lt.s32.totalorder %s247, 15
        %s249 = scalar_select %p248, %s247, 15
        %s250 = smul.addr %s249, 4
        %s251 = scalar_lea.vmem %s3, %s250
      $region44: #{_lambda_.21} parent=39 // pred_fallthru
        _
    $region40: #{_lambda_.21} parent=5 // pred_fallthru
      _
  $region6: #{_lambda_.21} parent=0 // loop_footer
    %s13 = sadd.s32 1, %s9
  $region7: #{_lambda_.21} parent=0 // loop_footer_branch
    %8 = sbr.rel target = $region3
  $region8: #{_lambda_.21} parent=0 // loop_exit
    _

// kernel: _lambda_.20
$region0: #{_lambda_.20}
  #allocation0 [shape = 'u32[]', space=smem, size = 0x4, offset = 0x4, fixed_abs, tag = 'smem constant byte address 0x4 - core index']
  #allocation1 [shape = 'u32[72,128]{1,0:T(1,128)}', space=vmem, size = 0x9000, scoped, tag = 'internal scratch']
  #allocation2 [shape = 'f32[256,32]{1,0:T(8,128)}', space=vmem, size = 0x20000, scoped, tag = 'scratch operand']
  %s0 = inlined_call_operand.vmem [shape: bf16[512,144], index: 0, kind: input, shape index: {}]
  %s1 = inlined_call_operand.vmem [shape: bf16[144,32], index: 1, kind: input, shape index: {}]
  %s2 = inlined_call_operand.vmem [shape: f32[512,32], index: 2, kind: output, shape index: {}]
  %s3 = sld [smem:[#allocation0]]
  $region49: #{_lambda_.20} parent=0
    _
  %s5 = ssub.s32 1, %s3
  %s6 = scalar_select 0, %s5, %s3
  loop: start=0, step=1, limit=4
  $region2: #{_lambda_.20} parent=0 // loop_pre_header
    _
  $region3: #{_lambda_.20} parent=0 // loop_header
    %s8 = sphi 0, %s12
    %p9 = scmp.ge.s32.totalorder %s8, 4
    %s15 = sphi 0, %s27
    %s16 = sphi 0, %s23
    %s17 = sphi 0, %s15
    %s18 = sphi 0, %s16
    %s19 = sphi 0, %s17
    %s20 = sphi 0, %s18
    %s32 = sphi 0, %s34
    %s35 = sphi 0, %s32
    %s36 = sphi 0, %s35
    %s52 = sphi 0, %s36
    %s58 = sphi 0, %s60
    %s61 = sphi 0, %s58
    %s62 = sphi 0, %s61
    %s78 = sphi 0, %s62
    %s84 = sphi 0, %s86
    %s87 = sphi 0, %s84
    %s88 = sphi 0, %s87
    %s104 = sphi 0, %s88
  $region4: #{_lambda_.20} parent=0 // loop_header_branch
    %11 = sbr.rel (%p9) target = $region8
  $region5: #{_lambda_.20} parent=0 // loop_body
    %s13 = ssub.s32 %s8, 1
    %s14 = ssub.s32 %s8, 2
    %s21 = sadd.s32 1, %s16
    %p22 = scmp.ge.s32.totalorder %s21, 1
    %s23 = scalar_select %p22, 0, %s21
    %s24 = sadd.s32 1, %s15
    %s25 = scalar_select %p22, %s24, %s15
    %p26 = scmp.ge.s32.totalorder %s25, 2
    %s27 = scalar_select %p26, 0, %s25
    %s28 = ssub.s32 %s15, %s27
    %s29 = ssub.s32 %s16, %s23
    %s30 = sor.u32 %s28, %s29
    %p31 = scmp.eq.s32.totalorder %s30, 0
    %s33 = sadd.s32 %s32, 1
    %s34 = scalar_select %p31, %s32, %s33
    %p37 = pneg %p31
    %p38 = scmp.eq.s32.totalorder %s8, 1
    %p39 = por %p37, %p38
    %p40 = scmp.ne.s32.totalorder %s32, %s35
    %p41 = scmp.eq.s32.totalorder %s8, 0
    %p42 = por %p40, %p41
    %p43 = scmp.ne.s32.totalorder %s32, %s35
    %p44 = scmp.eq.s32.totalorder %s13, 1
    %p45 = por %p43, %p44
    %p46 = scmp.ne.s32.totalorder %s35, %s36
    %p47 = scmp.eq.s32.totalorder %s13, 0
    %p48 = por %p46, %p47
    %p49 = scmp.ne.s32.totalorder %s35, %s36
    %p50 = scmp.eq.s32.totalorder %s14, 1
    %p51 = por %p49, %p50
    %p53 = scmp.ne.s32.totalorder %s36, %s52
    %p54 = scmp.eq.s32.totalorder %s14, 0
    %p55 = por %p53, %p54
    %s56 = ssub.s32 %s16, %s23
    %p57 = scmp.eq.s32.totalorder %s56, 0
    %s59 = sadd.s32 %s58, 1
    %s60 = scalar_select %p57, %s58, %s59
    %p63 = pneg %p57
    %p64 = scmp.eq.s32.totalorder %s8, 1
    %p65 = por %p63, %p64
    %p66 = scmp.ne.s32.totalorder %s58, %s61
    %p67 = scmp.eq.s32.totalorder %s8, 0
    %p68 = por %p66, %p67
    %p69 = scmp.ne.s32.totalorder %s58, %s61
    %p70 = scmp.eq.s32.totalorder %s13, 1
    %p71 = por %p69, %p70
    %p72 = scmp.ne.s32.totalorder %s61, %s62
    %p73 = scmp.eq.s32.totalorder %s13, 0
    %p74 = por %p72, %p73
    %p75 = scmp.ne.s32.totalorder %s61, %s62
    %p76 = scmp.eq.s32.totalorder %s14, 1
    %p77 = por %p75, %p76
    %p79 = scmp.ne.s32.totalorder %s62, %s78
    %p80 = scmp.eq.s32.totalorder %s14, 0
    %p81 = por %p79, %p80
    %s82 = ssub.s32 %s15, %s27
    %p83 = scmp.eq.s32.totalorder %s82, 0
    %s85 = sadd.s32 %s84, 1
    %s86 = scalar_select %p83, %s84, %s85
    %p89 = pneg %p83
    %p90 = scmp.eq.s32.totalorder %s8, 1
    %p91 = por %p89, %p90
    %p92 = scmp.ne.s32.totalorder %s84, %s87
    %p93 = scmp.eq.s32.totalorder %s8, 0
    %p94 = por %p92, %p93
    %p95 = scmp.ne.s32.totalorder %s84, %s87
    %p96 = scmp.eq.s32.totalorder %s13, 1
    %p97 = por %p95, %p96
    %p98 = scmp.ne.s32.totalorder %s87, %s88
    %p99 = scmp.eq.s32.totalorder %s13, 0
    %p100 = por %p98, %p99
    %p101 = scmp.ne.s32.totalorder %s87, %s88
    %p102 = scmp.eq.s32.totalorder %s14, 1
    %p103 = por %p101, %p102
    %p105 = scmp.ne.s32.totalorder %s88, %s104
    %p106 = scmp.eq.s32.totalorder %s14, 0
    %p107 = por %p105, %p106
    %p108 = scmp.le.s32.totalorder 1, %s8
    %p109 = scmp.lt.s32.totalorder %s8, 3
    %p110 = pnand %p108, %p109
    %p111 = pneg %p110
    // Predicated region
    $region9: #{_lambda_.20} parent=5 // pred_check
      _
    $region10: #{_lambda_.20} parent=5 // pred_check_branch
      %113 = sbr.rel (%p110) target = $region12
    $region11: #{_lambda_.20} parent=5 // pred_region
      %s114 = ssub.s32 %s8, 1
      // Predicated region
      $region13: #{_lambda_.20} parent=11 // pred_check
        %p115 = pneg %p74
      $region14: #{_lambda_.20} parent=11 // pred_check_branch
        %117 = sbr.rel (%p115) target = $region16
      $region15: #{_lambda_.20} parent=11 // pred_region
        %s118 = smul.u32 18, %s18
        %p119 = scmp.lt.s32.totalorder %s118, 17
        %s120 = scalar_select %p119, %s118, 17
        %s121 = smul.addr %s120, 4
        %s122 = scalar_lea.vmem %s1, %s121
        %s123 = smul.u32 18, %s18
      $region16: #{_lambda_.20} parent=11 // pred_fallthru
        _
    $region12: #{_lambda_.20} parent=5 // pred_fallthru
      _
    %p124 = scmp.lt.s32.totalorder %s8, 2
    // Predicated region
    $region17: #{_lambda_.20} parent=5 // pred_check
      %p125 = pneg %p124
    $region18: #{_lambda_.20} parent=5 // pred_check_branch
      %127 = sbr.rel (%p125) target = $region20
    $region19: #{_lambda_.20} parent=5 // pred_region
      // Predicated region
      $region21: #{_lambda_.20} parent=19 // pred_check
        %p128 = pneg %p42
      $region22: #{_lambda_.20} parent=19 // pred_check_branch
        %130 = sbr.rel (%p128) target = $region24
      $region23: #{_lambda_.20} parent=19 // pred_region
        %s131 = smul.u32 32, %s15
        %s132 = smul.u32 2, %s16
        %p133 = scmp.lt.s32.totalorder %s131, 63
        %s134 = scalar_select %p133, %s131, 63
        %p135 = scmp.lt.s32.totalorder %s132, 1
        %s136 = scalar_select %p135, %s132, 1
        %s137 = smul.addr %s134, 2
        %s138 = sadd.s32 %s136, %s137
        %s139 = smul.addr %s138, 4
        %s140 = scalar_lea.vmem %s0, %s139
        %s141 = smul.u32 32, %s15
        %s142 = smul.u32 2, %s16
      $region24: #{_lambda_.20} parent=19 // pred_fallthru
        _
    $region20: #{_lambda_.20} parent=5 // pred_fallthru
      _
    %p143 = scmp.le.s32.totalorder 1, %s8
    %p144 = scmp.lt.s32.totalorder %s8, 3
    %p145 = pnand %p143, %p144
    %p146 = pneg %p145
    // Predicated region
    $region25: #{_lambda_.20} parent=5 // pred_check
      _
    $region26: #{_lambda_.20} parent=5 // pred_check_branch
      %148 = sbr.rel (%p145) target = $region28
    $region27: #{_lambda_.20} parent=5 // pred_region
      %s149 = ssub.s32 %s8, 1
      %s150 = smul.u32 32, %s17
      %s151 = smul.u32 2, %s18
      %p152 = scmp.lt.s32.totalorder %s150, 63
      %s153 = scalar_select %p152, %s150, 63
      %p154 = scmp.lt.s32.totalorder %s151, 1
      %s155 = scalar_select %p154, %s151, 1
      %s156 = smul.addr %s153, 2
      %s157 = sadd.s32 %s155, %s156
      %s158 = smul.addr %s157, 4
      %s159 = scalar_lea.vmem %s0, %s158
      %p160 = pneg %p48
      %p161 = pneg %p45
      %s162 = smul.u32 18, %s18
      %p163 = scmp.lt.s32.totalorder %s162, 17
      %s164 = scalar_select %p163, %s162, 17
      %s165 = smul.addr %s164, 4
      %s166 = scalar_lea.vmem %s1, %s165
      %p167 = pneg %p74
      %p168 = pneg %p71
      %p169 = pneg %p100
      %p170 = pneg %p97
      %s171 = smul.u32 32, %s17
      %p172 = scmp.lt.s32.totalorder %s171, 63
      %s173 = scalar_select %p172, %s171, 63
      %s174 = smul.addr %s173, 8
      %s175 = scalar_lea.vmem %s2, %s174
      %s176 = smul.u32 32, %s17
      %s177 = smul.u32 2, %s18
      %p178 = scmp.lt.s32.totalorder %s176, 63
      %s179 = scalar_select %p178, %s176, 63
      %p180 = scmp.lt.s32.totalorder %s177, 1
      %s181 = scalar_select %p180, %s177, 1
      %s182 = smul.addr %s179, 2
      %s183 = sadd.s32 %s181, %s182
      %s184 = smul.addr %s183, 4
      %s185 = scalar_lea.vmem %s0, %s184
      %s186 = smul.u32 32, %s17
      %s187 = smul.u32 2, %s18
      %s188 = smul.u32 18, %s18
      %p189 = scmp.lt.s32.totalorder %s188, 17
      %s190 = scalar_select %p189, %s188, 17
      %s191 = smul.addr %s190, 4
      %s192 = scalar_lea.vmem %s1, %s191
      %s193 = smul.u32 18, %s18
      %s194 = smul.u32 32, %s17
      %p195 = scmp.lt.s32.totalorder %s194, 63
      %s196 = scalar_select %p195, %s194, 63
      %s197 = smul.addr %s196, 8
      %s198 = scalar_lea.vmem %s2, %s197
      %s199 = smul.u32 32, %s17
      %p201 = scmp.eq.s32.totalorder %s18, 0
      // Predicated region
      $region29: #{_lambda_.20} parent=27 // pred_check
        %p202 = pneg %p201
      $region30: #{_lambda_.20} parent=27 // pred_check_branch
        %204 = sbr.rel (%p202) target = $region32
      $region31: #{_lambda_.20} parent=27 // pred_region
        %vm205 = vcmask 261120
        %206 = vst.msk [vmem:[#allocation2] sm:$0xff] %vm205, 0.0
        %207 = vst.msk [vmem:[#allocation2 + $0x8] sm:$0xff] %vm205, 0.0
        %208 = vst.msk [vmem:[#allocation2 + $0x10] sm:$0xff] %vm205, 0.0
        %209 = vst.msk [vmem:[#allocation2 + $0x18] sm:$0xff] %vm205, 0.0
        %210 = vst.msk [vmem:[#allocation2 + $0x20] sm:$0xff] %vm205, 0.0
        %211 = vst.msk [vmem:[#allocation2 + $0x28] sm:$0xff] %vm205, 0.0
        %212 = vst.msk [vmem:[#allocation2 + $0x30] sm:$0xff] %vm205, 0.0
        %213 = vst.msk [vmem:[#allocation2 + $0x38] sm:$0xff] %vm205, 0.0
        %214 = vst.msk [vmem:[#allocation2 + $0x40] sm:$0xff] %vm205, 0.0
        %215 = vst.msk [vmem:[#allocation2 + $0x48] sm:$0xff] %vm205, 0.0
        %216 = vst.msk [vmem:[#allocation2 + $0x50] sm:$0xff] %vm205, 0.0
        %217 = vst.msk [vmem:[#allocation2 + $0x58] sm:$0xff] %vm205, 0.0
        %218 = vst.msk [vmem:[#allocation2 + $0x60] sm:$0xff] %vm205, 0.0
        %219 = vst.msk [vmem:[#allocation2 + $0x68] sm:$0xff] %vm205, 0.0
        %220 = vst.msk [vmem:[#allocation2 + $0x70] sm:$0xff] %vm205, 0.0
        %221 = vst.msk [vmem:[#allocation2 + $0x78] sm:$0xff] %vm205, 0.0
        %222 = vst.msk [vmem:[#allocation2 + $0x80] sm:$0xff] %vm205, 0.0
        %223 = vst.msk [vmem:[#allocation2 + $0x88] sm:$0xff] %vm205, 0.0
        %224 = vst.msk [vmem:[#allocation2 + $0x90] sm:$0xff] %vm205, 0.0
        %225 = vst.msk [vmem:[#allocation2 + $0x98] sm:$0xff] %vm205, 0.0
        %226 = vst.msk [vmem:[#allocation2 + $0xa0] sm:$0xff] %vm205, 0.0
        %227 = vst.msk [vmem:[#allocation2 + $0xa8] sm:$0xff] %vm205, 0.0
        %228 = vst.msk [vmem:[#allocation2 + $0xb0] sm:$0xff] %vm205, 0.0
        %229 = vst.msk [vmem:[#allocation2 + $0xb8] sm:$0xff] %vm205, 0.0
        %230 = vst.msk [vmem:[#allocation2 + $0xc0] sm:$0xff] %vm205, 0.0
        %231 = vst.msk [vmem:[#allocation2 + $0xc8] sm:$0xff] %vm205, 0.0
        %232 = vst.msk [vmem:[#allocation2 + $0xd0] sm:$0xff] %vm205, 0.0
        %233 = vst.msk [vmem:[#allocation2 + $0xd8] sm:$0xff] %vm205, 0.0
        %234 = vst.msk [vmem:[#allocation2 + $0xe0] sm:$0xff] %vm205, 0.0
        %235 = vst.msk [vmem:[#allocation2 + $0xe8] sm:$0xff] %vm205, 0.0
        %236 = vst.msk [vmem:[#allocation2 + $0xf0] sm:$0xff] %vm205, 0.0
        %237 = vst.msk [vmem:[#allocation2 + $0xf8] sm:$0xff] %vm205, 0.0
      $region32: #{_lambda_.20} parent=27 // pred_fallthru
        _
      %v238 = vld [vmem:[#allocation2] sm:$0xff]
      %v239 = vld [vmem:[#allocation2 + $0x8] sm:$0xff]
      %v240 = vld [vmem:[#allocation2 + $0x10] sm:$0xff]
      %v241 = vld [vmem:[#allocation2 + $0x18] sm:$0xff]
      %v242 = vld [vmem:[#allocation2 + $0x20] sm:$0xff]
      %v243 = vld [vmem:[#allocation2 + $0x28] sm:$0xff]
      %v244 = vld [vmem:[#allocation2 + $0x30] sm:$0xff]
      %v245 = vld [vmem:[#allocation2 + $0x38] sm:$0xff]
      %v246 = vld [vmem:[#allocation2 + $0x40] sm:$0xff]
      %v247 = vld [vmem:[#allocation2 + $0x48] sm:$0xff]
      %v248 = vld [vmem:[#allocation2 + $0x50] sm:$0xff]
      %v249 = vld [vmem:[#allocation2 + $0x58] sm:$0xff]
      %v250 = vld [vmem:[#allocation2 + $0x60] sm:$0xff]
      %v251 = vld [vmem:[#allocation2 + $0x68] sm:$0xff]
      %v252 = vld [vmem:[#allocation2 + $0x70] sm:$0xff]
      %v253 = vld [vmem:[#allocation2 + $0x78] sm:$0xff]
      %v254 = vld [vmem:[#allocation2 + $0x80] sm:$0xff]
      %v255 = vld [vmem:[#allocation2 + $0x88] sm:$0xff]
      %v256 = vld [vmem:[#allocation2 + $0x90] sm:$0xff]
      %v257 = vld [vmem:[#allocation2 + $0x98] sm:$0xff]
      %v258 = vld [vmem:[#allocation2 + $0xa0] sm:$0xff]
      %v259 = vld [vmem:[#allocation2 + $0xa8] sm:$0xff]
      %v260 = vld [vmem:[#allocation2 + $0xb0] sm:$0xff]
      %v261 = vld [vmem:[#allocation2 + $0xb8] sm:$0xff]
      %v262 = vld [vmem:[#allocation2 + $0xc0] sm:$0xff]
      %v263 = vld [vmem:[#allocation2 + $0xc8] sm:$0xff]
      %v264 = vld [vmem:[#allocation2 + $0xd0] sm:$0xff]
      %v265 = vld [vmem:[#allocation2 + $0xd8] sm:$0xff]
      %v266 = vld [vmem:[#allocation2 + $0xe0] sm:$0xff]
      %v267 = vld [vmem:[#allocation2 + $0xe8] sm:$0xff]
      %v268 = vld [vmem:[#allocation2 + $0xf0] sm:$0xff]
      %v269 = vld [vmem:[#allocation2 + $0xf8] sm:$0xff]
      %v270 = vld [vmem:[%s185] sm:$0xff]
      %v271 = vld [vmem:[%s185 + $0x8] sm:$0xff]
      %v272 = vld [vmem:[%s185 + $0x10] sm:$0xff]
      %v273 = vld [vmem:[%s185 + $0x18] sm:$0xff]
      %v274 = vld [vmem:[%s185 + $0x20] sm:$0xff]
      %v275 = vld [vmem:[%s185 + $0x28] sm:$0xff]
      %v276 = vld [vmem:[%s185 + $0x30] sm:$0xff]
      %v277 = vld [vmem:[%s185 + $0x38] sm:$0xff]
      %v278 = vld [vmem:[%s185 + $0x40] sm:$0xff]
      %v279 = vld [vmem:[%s185 + $0x48] sm:$0xff]
      %v280 = vld [vmem:[%s185 + $0x50] sm:$0xff]
      %v281 = vld [vmem:[%s185 + $0x58] sm:$0xff]
      %v282 = vld [vmem:[%s185 + $0x60] sm:$0xff]
      %v283 = vld [vmem:[%s185 + $0x68] sm:$0xff]
      %v284 = vld [vmem:[%s185 + $0x70] sm:$0xff]
      %v285 = vld [vmem:[%s185 + $0x78] sm:$0xff]
      %v286 = vld [vmem:[%s185 + $0x80] sm:$0xff]
      %v287 = vld [vmem:[%s185 + $0x88] sm:$0xff]
      %v288 = vld [vmem:[%s185 + $0x90] sm:$0xff]
      %v289 = vld [vmem:[%s185 + $0x98] sm:$0xff]
      %v290 = vld [vmem:[%s185 + $0xa0] sm:$0xff]
      %v291 = vld [vmem:[%s185 + $0xa8] sm:$0xff]
      %v292 = vld [vmem:[%s185 + $0xb0] sm:$0xff]
      %v293 = vld [vmem:[%s185 + $0xb8] sm:$0xff]
      %v294 = vld [vmem:[%s185 + $0xc0] sm:$0xff]
      %v295 = vld [vmem:[%s185 + $0xc8] sm:$0xff]
      %v296 = vld [vmem:[%s185 + $0xd0] sm:$0xff]
      %v297 = vld [vmem:[%s185 + $0xd8] sm:$0xff]
      %v298 = vld [vmem:[%s185 + $0xe0] sm:$0xff]
      %v299 = vld [vmem:[%s185 + $0xe8] sm:$0xff]
      %v300 = vld [vmem:[%s185 + $0xf0] sm:$0xff]
      %v301 = vld [vmem:[%s185 + $0xf8] sm:$0xff]
      %v302 = vld [vmem:[%s192] sm:$0xf]
      %v303 = vld [vmem:[%s192 + $0x4] sm:$0xf]
      %v304 = vld [vmem:[%s192 + $0x8] sm:$0xf]
      %v305 = vld [vmem:[%s192 + $0xc] sm:$0xf]
      %v306 = vld [vmem:[%s192 + $0x10] sm:$0xf]
      %v307 = vld [vmem:[%s192 + $0x14] sm:$0xf]
      %v308 = vld [vmem:[%s192 + $0x18] sm:$0xf]
      %v309 = vld [vmem:[%s192 + $0x1c] sm:$0xf]
      %v310 = vld [vmem:[%s192 + $0x20] sm:$0xf]
      %v311 = vld [vmem:[%s192 + $0x24] sm:$0xf]
      %v312 = vld [vmem:[%s192 + $0x28] sm:$0xf]
      %v313 = vld [vmem:[%s192 + $0x2c] sm:$0xf]
      %v314 = vld [vmem:[%s192 + $0x30] sm:$0xf]
      %v315 = vld [vmem:[%s192 + $0x34] sm:$0xf]
      %v316 = vld [vmem:[%s192 + $0x38] sm:$0xf]
      %v317 = vld [vmem:[%s192 + $0x3c] sm:$0xf]
      %v318 = vld [vmem:[%s192 + $0x40] sm:$0xf]
      %v319 = vld [vmem:[%s192 + $0x44] sm:$0xf]
      %v352 = vunpack.c.l.b16 %v270
      %v353 = vunpack.c.h.b16 %v270
      %v354 = vunpack.c.l.b16 %v271
      %v355 = vunpack.c.h.b16 %v271
      %v356 = vunpack.c.l.b16 %v272
      %v357 = vunpack.c.h.b16 %v272
      %v358 = vunpack.c.l.b16 %v273
      %v359 = vunpack.c.h.b16 %v273
      %v360 = vunpack.c.l.b16 %v274
      %v361 = vunpack.c.h.b16 %v274
      %v362 = vunpack.c.l.b16 %v275
      %v363 = vunpack.c.h.b16 %v275
      %v364 = vunpack.c.l.b16 %v276
      %v365 = vunpack.c.h.b16 %v276
      %v366 = vunpack.c.l.b16 %v277
      %v367 = vunpack.c.h.b16 %v277
      %v368 = vunpack.c.l.b16 %v278
      %v369 = vunpack.c.h.b16 %v278
      %v370 = vunpack.c.l.b16 %v279
      %v371 = vunpack.c.h.b16 %v279
      %v372 = vunpack.c.l.b16 %v280
      %v373 = vunpack.c.h.b16 %v280
      %v374 = vunpack.c.l.b16 %v281
      %v375 = vunpack.c.h.b16 %v281
      %v376 = vunpack.c.l.b16 %v282
      %v377 = vunpack.c.h.b16 %v282
      %v378 = vunpack.c.l.b16 %v283
      %v379 = vunpack.c.h.b16 %v283
      %v380 = vunpack.c.l.b16 %v284
      %v381 = vunpack.c.h.b16 %v284
      %v382 = vunpack.c.l.b16 %v285
      %v383 = vunpack.c.h.b16 %v285
      %v384 = vunpack.c.l.b16 %v286
      %v385 = vunpack.c.h.b16 %v286
      %v386 = vunpack.c.l.b16 %v287
      %v387 = vunpack.c.h.b16 %v287
      %v388 = vunpack.c.l.b16 %v288
      %v389 = vunpack.c.h.b16 %v288
      %v390 = vunpack.c.l.b16 %v289
      %v391 = vunpack.c.h.b16 %v289
      %v392 = vunpack.c.l.b16 %v290
      %v393 = vunpack.c.h.b16 %v290
      %v394 = vunpack.c.l.b16 %v291
      %v395 = vunpack.c.h.b16 %v291
      %v396 = vunpack.c.l.b16 %v292
      %v397 = vunpack.c.h.b16 %v292
      %v398 = vunpack.c.l.b16 %v293
      %v399 = vunpack.c.h.b16 %v293
      %v400 = vunpack.c.l.b16 %v294
      %v401 = vunpack.c.h.b16 %v294
      %v402 = vunpack.c.l.b16 %v295
      %v403 = vunpack.c.h.b16 %v295
      %v404 = vunpack.c.l.b16 %v296
      %v405 = vunpack.c.h.b16 %v296
      %v406 = vunpack.c.l.b16 %v297
      %v407 = vunpack.c.h.b16 %v297
      %v408 = vunpack.c.l.b16 %v298
      %v409 = vunpack.c.h.b16 %v298
      %v410 = vunpack.c.l.b16 %v299
      %v411 = vunpack.c.h.b16 %v299
      %v412 = vunpack.c.l.b16 %v300
      %v413 = vunpack.c.h.b16 %v300
      %v414 = vunpack.c.l.b16 %v301
      %v415 = vunpack.c.h.b16 %v301
      %v416 = vpack.c.b16 %v354, %v352
      %v417 = vpack.c.b16 %v355, %v353
      %v418 = vpack.c.b16 %v358, %v356
      %v419 = vpack.c.b16 %v359, %v357
      %v420 = vpack.c.b16 %v362, %v360
      %v421 = vpack.c.b16 %v363, %v361
      %v422 = vpack.c.b16 %v366, %v364
      %v423 = vpack.c.b16 %v367, %v365
      %v424 = vpack.c.b16 %v370, %v368
      %v425 = vpack.c.b16 %v371, %v369
      %v426 = vpack.c.b16 %v374, %v372
      %v427 = vpack.c.b16 %v375, %v373
      %v428 = vpack.c.b16 %v378, %v376
      %v429 = vpack.c.b16 %v379, %v377
      %v430 = vpack.c.b16 %v382, %v380
      %v431 = vpack.c.b16 %v383, %v381
      %v432 = vpack.c.b16 %v386, %v384
      %v433 = vpack.c.b16 %v387, %v385
      %v434 = vpack.c.b16 %v390, %v388
      %v435 = vpack.c.b16 %v391, %v389
      %v436 = vpack.c.b16 %v394, %v392
      %v437 = vpack.c.b16 %v395, %v393
      %v438 = vpack.c.b16 %v398, %v396
      %v439 = vpack.c.b16 %v399, %v397
      %v440 = vpack.c.b16 %v402, %v400
      %v441 = vpack.c.b16 %v403, %v401
      %v442 = vpack.c.b16 %v406, %v404
      %v443 = vpack.c.b16 %v407, %v405
      %v444 = vpack.c.b16 %v410, %v408
      %v445 = vpack.c.b16 %v411, %v409
      %v446 = vpack.c.b16 %v414, %v412
      %v447 = vpack.c.b16 %v415, %v413
      %v482 = vunpack.c.l.b16 %v302
      %v483 = vunpack.c.l.b16 %v303
      %v484 = vunpack.c.l.b16 %v304
      %v485 = vunpack.c.l.b16 %v305
      %v486 = vunpack.c.l.b16 %v306
      %v487 = vunpack.c.l.b16 %v307
      %v488 = vunpack.c.l.b16 %v308
      %v489 = vunpack.c.l.b16 %v309
      %v490 = vunpack.c.l.b16 %v310
      %v491 = vunpack.c.l.b16 %v311
      %v492 = vunpack.c.l.b16 %v312
      %v493 = vunpack.c.l.b16 %v313
      %v494 = vunpack.c.l.b16 %v314
      %v495 = vunpack.c.l.b16 %v315
      %v496 = vunpack.c.l.b16 %v316
      %v497 = vunpack.c.l.b16 %v317
      %v498 = vunpack.c.l.b16 %v318
      %v499 = vunpack.c.l.b16 %v319
      %v500 = vpack.c.b16 %v483, %v482
      %v501 = vpack.c.b16 %v485, %v484
      %v502 = vpack.c.b16 %v487, %v486
      %v503 = vpack.c.b16 %v489, %v488
      %v504 = vpack.c.b16 %v491, %v490
      %v505 = vpack.c.b16 %v493, %v492
      %v506 = vpack.c.b16 %v495, %v494
      %v507 = vpack.c.b16 %v497, %v496
      %v508 = vpack.c.b16 %v499, %v498
      %vm518 = vcmask 130048
      %v520 = vsel %vm518, %v417, 0
      %v523 = vsel %vm518, %v419, 0
      %v526 = vsel %vm518, %v421, 0
      %v529 = vsel %vm518, %v423, 0
      %v532 = vsel %vm518, %v425, 0
      %v535 = vsel %vm518, %v427, 0
      %v538 = vsel %vm518, %v429, 0
      %v541 = vsel %vm518, %v431, 0
      %v544 = vsel %vm518, %v433, 0
      %v547 = vsel %vm518, %v435, 0
      %v550 = vsel %vm518, %v437, 0
      %v553 = vsel %vm518, %v439, 0
      %v556 = vsel %vm518, %v441, 0
      %v559 = vsel %vm518, %v443, 0
      %v562 = vsel %vm518, %v445, 0
      %v565 = vsel %vm518, %v447, 0
      %567 = vmatpush.bf16.msra.mxu0 %v507
      %568 = vmatpush.bf16.msra.mxu0 %v506
      %569 = vmatpush.bf16.msra.mxu0 %v505
      %570 = vmatpush.bf16.msra.mxu0 %v504
      %571 = vmatpush.bf16.msra.mxu0 %v503
      %572 = vmatpush.bf16.msra.mxu0 %v502
      %573 = vmatpush.bf16.msra.mxu0 %v501
      %574 = vmatpush.bf16.msra.mxu0 %v500
      %575 = vmatmul.bf16.gmra.mxu0 %v416
      %v576 = vpop.f32.mrf.mxu0
      %v577 = vadd.f32 0.0, %v576
      %v578 = vpop.f32.mrf.mxu0
      %v579 = vadd.f32 0.0, %v578
      %580 = vmatmul.bf16.gmra.mxu0 %v418
      %v581 = vpop.f32.mrf.mxu0
      %v582 = vadd.f32 0.0, %v581
      %v583 = vpop.f32.mrf.mxu0
      %v584 = vadd.f32 0.0, %v583
      %585 = vmatmul.bf16.gmra.mxu0 %v420
      %v586 = vpop.f32.mrf.mxu0
      %v587 = vadd.f32 0.0, %v586
      %v588 = vpop.f32.mrf.mxu0
      %v589 = vadd.f32 0.0, %v588
      %590 = vmatmul.bf16.gmra.mxu0 %v422
      %v591 = vpop.f32.mrf.mxu0
      %v592 = vadd.f32 0.0, %v591
      %v593 = vpop.f32.mrf.mxu0
      %v594 = vadd.f32 0.0, %v593
      %595 = vmatmul.bf16.gmra.mxu0 %v424
      %v596 = vpop.f32.mrf.mxu0
      %v597 = vadd.f32 0.0, %v596
      %v598 = vpop.f32.mrf.mxu0
      %v599 = vadd.f32 0.0, %v598
      %600 = vmatmul.bf16.gmra.mxu0 %v426
      %v601 = vpop.f32.mrf.mxu0
      %v602 = vadd.f32 0.0, %v601
      %v603 = vpop.f32.mrf.mxu0
      %v604 = vadd.f32 0.0, %v603
      %605 = vmatmul.bf16.gmra.mxu0 %v428
      %v606 = vpop.f32.mrf.mxu0
      %v607 = vadd.f32 0.0, %v606
      %v608 = vpop.f32.mrf.mxu0
      %v609 = vadd.f32 0.0, %v608
      %610 = vmatmul.bf16.gmra.mxu0 %v430
      %v611 = vpop.f32.mrf.mxu0
      %v612 = vadd.f32 0.0, %v611
      %v613 = vpop.f32.mrf.mxu0
      %v614 = vadd.f32 0.0, %v613
      %615 = vmatmul.bf16.gmra.mxu0 %v432
      %v616 = vpop.f32.mrf.mxu0
      %v617 = vadd.f32 0.0, %v616
      %v618 = vpop.f32.mrf.mxu0
      %v619 = vadd.f32 0.0, %v618
      %620 = vmatmul.bf16.gmra.mxu0 %v434
      %v621 = vpop.f32.mrf.mxu0
      %v622 = vadd.f32 0.0, %v621
      %v623 = vpop.f32.mrf.mxu0
      %v624 = vadd.f32 0.0, %v623
      %625 = vmatmul.bf16.gmra.mxu0 %v436
      %v626 = vpop.f32.mrf.mxu0
      %v627 = vadd.f32 0.0, %v626
      %v628 = vpop.f32.mrf.mxu0
      %v629 = vadd.f32 0.0, %v628
      %630 = vmatmul.bf16.gmra.mxu0 %v438
      %v631 = vpop.f32.mrf.mxu0
      %v632 = vadd.f32 0.0, %v631
      %v633 = vpop.f32.mrf.mxu0
      %v634 = vadd.f32 0.0, %v633
      %635 = vmatmul.bf16.gmra.mxu0 %v440
      %v636 = vpop.f32.mrf.mxu0
      %v637 = vadd.f32 0.0, %v636
      %v638 = vpop.f32.mrf.mxu0
      %v639 = vadd.f32 0.0, %v638
      %640 = vmatmul.bf16.gmra.mxu0 %v442
      %v641 = vpop.f32.mrf.mxu0
      %v642 = vadd.f32 0.0, %v641
      %v643 = vpop.f32.mrf.mxu0
      %v644 = vadd.f32 0.0, %v643
      %645 = vmatmul.bf16.gmra.mxu0 %v444
      %v646 = vpop.f32.mrf.mxu0
      %v647 = vadd.f32 0.0, %v646
      %v648 = vpop.f32.mrf.mxu0
      %v649 = vadd.f32 0.0, %v648
      %650 = vmatmul.bf16.gmra.mxu0 %v446
      %v651 = vpop.f32.mrf.mxu0
      %v652 = vadd.f32 0.0, %v651
      %v653 = vpop.f32.mrf.mxu0
      %v654 = vadd.f32 0.0, %v653
      %655 = vdwg.mxu0
      %656 = vmatpush.bf16.msra.mxu0 0
      %657 = vmatpush.bf16.msra.mxu0 0
      %658 = vmatpush.bf16.msra.mxu0 0
      %659 = vmatpush.bf16.msra.mxu0 0
      %660 = vmatpush.bf16.msra.mxu0 0
      %661 = vmatpush.bf16.msra.mxu0 0
      %662 = vmatpush.bf16.msra.mxu0 0
      %663 = vmatpush.bf16.msra.mxu0 %v508
      %664 = vmatmul.bf16.gmra.mxu0 %v520
      %v665 = vpop.f32.mrf.mxu0
      %v666 = vadd.f32 %v577, %v665
      %v667 = vpop.f32.mrf.mxu0
      %v668 = vadd.f32 %v579, %v667
      %669 = vmatmul.bf16.gmra.mxu0 %v523
      %v670 = vpop.f32.mrf.mxu0
      %v671 = vadd.f32 %v582, %v670
      %v672 = vpop.f32.mrf.mxu0
      %v673 = vadd.f32 %v584, %v672
      %674 = vmatmul.bf16.gmra.mxu0 %v526
      %v675 = vpop.f32.mrf.mxu0
      %v676 = vadd.f32 %v587, %v675
      %v677 = vpop.f32.mrf.mxu0
      %v678 = vadd.f32 %v589, %v677
      %679 = vmatmul.bf16.gmra.mxu0 %v529
      %v680 = vpop.f32.mrf.mxu0
      %v681 = vadd.f32 %v592, %v680
      %v682 = vpop.f32.mrf.mxu0
      %v683 = vadd.f32 %v594, %v682
      %684 = vmatmul.bf16.gmra.mxu0 %v532
      %v685 = vpop.f32.mrf.mxu0
      %v686 = vadd.f32 %v597, %v685
      %v687 = vpop.f32.mrf.mxu0
      %v688 = vadd.f32 %v599, %v687
      %689 = vmatmul.bf16.gmra.mxu0 %v535
      %v690 = vpop.f32.mrf.mxu0
      %v691 = vadd.f32 %v602, %v690
      %v692 = vpop.f32.mrf.mxu0
      %v693 = vadd.f32 %v604, %v692
      %694 = vmatmul.bf16.gmra.mxu0 %v538
      %v695 = vpop.f32.mrf.mxu0
      %v696 = vadd.f32 %v607, %v695
      %v697 = vpop.f32.mrf.mxu0
      %v698 = vadd.f32 %v609, %v697
      %699 = vmatmul.bf16.gmra.mxu0 %v541
      %v700 = vpop.f32.mrf.mxu0
      %v701 = vadd.f32 %v612, %v700
      %v702 = vpop.f32.mrf.mxu0
      %v703 = vadd.f32 %v614, %v702
      %704 = vmatmul.bf16.gmra.mxu0 %v544
      %v705 = vpop.f32.mrf.mxu0
      %v706 = vadd.f32 %v617, %v705
      %v707 = vpop.f32.mrf.mxu0
      %v708 = vadd.f32 %v619, %v707
      %709 = vmatmul.bf16.gmra.mxu0 %v547
      %v710 = vpop.f32.mrf.mxu0
      %v711 = vadd.f32 %v622, %v710
      %v712 = vpop.f32.mrf.mxu0
      %v713 = vadd.f32 %v624, %v712
      %714 = vmatmul.bf16.gmra.mxu0 %v550
      %v715 = vpop.f32.mrf.mxu0
      %v716 = vadd.f32 %v627, %v715
      %v717 = vpop.f32.mrf.mxu0
      %v718 = vadd.f32 %v629, %v717
      %719 = vmatmul.bf16.gmra.mxu0 %v553
      %v720 = vpop.f32.mrf.mxu0
      %v721 = vadd.f32 %v632, %v720
      %v722 = vpop.f32.mrf.mxu0
      %v723 = vadd.f32 %v634, %v722
      %724 = vmatmul.bf16.gmra.mxu0 %v556
      %v725 = vpop.f32.mrf.mxu0
      %v726 = vadd.f32 %v637, %v725
      %v727 = vpop.f32.mrf.mxu0
      %v728 = vadd.f32 %v639, %v727
      %729 = vmatmul.bf16.gmra.mxu0 %v559
      %v730 = vpop.f32.mrf.mxu0
      %v731 = vadd.f32 %v642, %v730
      %v732 = vpop.f32.mrf.mxu0
      %v733 = vadd.f32 %v644, %v732
      %734 = vmatmul.bf16.gmra.mxu0 %v562
      %v735 = vpop.f32.mrf.mxu0
      %v736 = vadd.f32 %v647, %v735
      %v737 = vpop.f32.mrf.mxu0
      %v738 = vadd.f32 %v649, %v737
      %739 = vmatmul.bf16.gmra.mxu0 %v565
      %v740 = vpop.f32.mrf.mxu0
      %v741 = vadd.f32 %v652, %v740
      %v742 = vpop.f32.mrf.mxu0
      %v743 = vadd.f32 %v654, %v742
      %744 = vdwg.mxu0
      %v745 = vadd.f32 %v238, %v666
      %v746 = vadd.f32 %v239, %v668
      %v747 = vadd.f32 %v240, %v671
      %v748 = vadd.f32 %v241, %v673
      %v749 = vadd.f32 %v242, %v676
      %v750 = vadd.f32 %v243, %v678
      %v751 = vadd.f32 %v244, %v681
      %v752 = vadd.f32 %v245, %v683
      %v753 = vadd.f32 %v246, %v686
      %v754 = vadd.f32 %v247, %v688
      %v755 = vadd.f32 %v248, %v691
      %v756 = vadd.f32 %v249, %v693
      %v757 = vadd.f32 %v250, %v696
      %v758 = vadd.f32 %v251, %v698
      %v759 = vadd.f32 %v252, %v701
      %v760 = vadd.f32 %v253, %v703
      %v761 = vadd.f32 %v254, %v706
      %v762 = vadd.f32 %v255, %v708
      %v763 = vadd.f32 %v256, %v711
      %v764 = vadd.f32 %v257, %v713
      %v765 = vadd.f32 %v258, %v716
      %v766 = vadd.f32 %v259, %v718
      %v767 = vadd.f32 %v260, %v721
      %v768 = vadd.f32 %v261, %v723
      %v769 = vadd.f32 %v262, %v726
      %v770 = vadd.f32 %v263, %v728
      %v771 = vadd.f32 %v264, %v731
      %v772 = vadd.f32 %v265, %v733
      %v773 = vadd.f32 %v266, %v736
      %v774 = vadd.f32 %v267, %v738
      %v775 = vadd.f32 %v268, %v741
      %v776 = vadd.f32 %v269, %v743
      %vm777 = vcmask 261120
      %778 = vst.msk [vmem:[#allocation2] sm:$0xff] %vm777, %v745
      %779 = vst.msk [vmem:[#allocation2 + $0x8] sm:$0xff] %vm777, %v746
      %780 = vst.msk [vmem:[#allocation2 + $0x10] sm:$0xff] %vm777, %v747
      %781 = vst.msk [vmem:[#allocation2 + $0x18] sm:$0xff] %vm777, %v748
      %782 = vst.msk [vmem:[#allocation2 + $0x20] sm:$0xff] %vm777, %v749
      %783 = vst.msk [vmem:[#allocation2 + $0x28] sm:$0xff] %vm777, %v750
      %784 = vst.msk [vmem:[#allocation2 + $0x30] sm:$0xff] %vm777, %v751
      %785 = vst.msk [vmem:[#allocation2 + $0x38] sm:$0xff] %vm777, %v752
      %786 = vst.msk [vmem:[#allocation2 + $0x40] sm:$0xff] %vm777, %v753
      %787 = vst.msk [vmem:[#allocation2 + $0x48] sm:$0xff] %vm777, %v754
      %788 = vst.msk [vmem:[#allocation2 + $0x50] sm:$0xff] %vm777, %v755
      %789 = vst.msk [vmem:[#allocation2 + $0x58] sm:$0xff] %vm777, %v756
      %790 = vst.msk [vmem:[#allocation2 + $0x60] sm:$0xff] %vm777, %v757
      %791 = vst.msk [vmem:[#allocation2 + $0x68] sm:$0xff] %vm777, %v758
      %792 = vst.msk [vmem:[#allocation2 + $0x70] sm:$0xff] %vm777, %v759
      %793 = vst.msk [vmem:[#allocation2 + $0x78] sm:$0xff] %vm777, %v760
      %794 = vst.msk [vmem:[#allocation2 + $0x80] sm:$0xff] %vm777, %v761
      %795 = vst.msk [vmem:[#allocation2 + $0x88] sm:$0xff] %vm777, %v762
      %796 = vst.msk [vmem:[#allocation2 + $0x90] sm:$0xff] %vm777, %v763
      %797 = vst.msk [vmem:[#allocation2 + $0x98] sm:$0xff] %vm777, %v764
      %798 = vst.msk [vmem:[#allocation2 + $0xa0] sm:$0xff] %vm777, %v765
      %799 = vst.msk [vmem:[#allocation2 + $0xa8] sm:$0xff] %vm777, %v766
      %800 = vst.msk [vmem:[#allocation2 + $0xb0] sm:$0xff] %vm777, %v767
      %801 = vst.msk [vmem:[#allocation2 + $0xb8] sm:$0xff] %vm777, %v768
      %802 = vst.msk [vmem:[#allocation2 + $0xc0] sm:$0xff] %vm777, %v769
      %803 = vst.msk [vmem:[#allocation2 + $0xc8] sm:$0xff] %vm777, %v770
      %804 = vst.msk [vmem:[#allocation2 + $0xd0] sm:$0xff] %vm777, %v771
      %805 = vst.msk [vmem:[#allocation2 + $0xd8] sm:$0xff] %vm777, %v772
      %806 = vst.msk [vmem:[#allocation2 + $0xe0] sm:$0xff] %vm777, %v773
      %807 = vst.msk [vmem:[#allocation2 + $0xe8] sm:$0xff] %vm777, %v774
      %808 = vst.msk [vmem:[#allocation2 + $0xf0] sm:$0xff] %vm777, %v775
      %809 = vst.msk [vmem:[#allocation2 + $0xf8] sm:$0xff] %vm777, %v776
      // Predicated region
      $region33: #{_lambda_.20} parent=27 // pred_check
        %p810 = pneg %p201
      $region34: #{_lambda_.20} parent=27 // pred_check_branch
        %812 = sbr.rel (%p810) target = $region36
      $region35: #{_lambda_.20} parent=27 // pred_region
        %v813 = vld [vmem:[#allocation2] sm:$0xff]
        %v814 = vld [vmem:[#allocation2 + $0x8] sm:$0xff]
        %v815 = vld [vmem:[#allocation2 + $0x10] sm:$0xff]
        %v816 = vld [vmem:[#allocation2 + $0x18] sm:$0xff]
        %v817 = vld [vmem:[#allocation2 + $0x20] sm:$0xff]
        %v818 = vld [vmem:[#allocation2 + $0x28] sm:$0xff]
        %v819 = vld [vmem:[#allocation2 + $0x30] sm:$0xff]
        %v820 = vld [vmem:[#allocation2 + $0x38] sm:$0xff]
        %v821 = vld [vmem:[#allocation2 + $0x40] sm:$0xff]
        %v822 = vld [vmem:[#allocation2 + $0x48] sm:$0xff]
        %v823 = vld [vmem:[#allocation2 + $0x50] sm:$0xff]
        %v824 = vld [vmem:[#allocation2 + $0x58] sm:$0xff]
        %v825 = vld [vmem:[#allocation2 + $0x60] sm:$0xff]
        %v826 = vld [vmem:[#allocation2 + $0x68] sm:$0xff]
        %v827 = vld [vmem:[#allocation2 + $0x70] sm:$0xff]
        %v828 = vld [vmem:[#allocation2 + $0x78] sm:$0xff]
        %v829 = vld [vmem:[#allocation2 + $0x80] sm:$0xff]
        %v830 = vld [vmem:[#allocation2 + $0x88] sm:$0xff]
        %v831 = vld [vmem:[#allocation2 + $0x90] sm:$0xff]
        %v832 = vld [vmem:[#allocation2 + $0x98] sm:$0xff]
        %v833 = vld [vmem:[#allocation2 + $0xa0] sm:$0xff]
        %v834 = vld [vmem:[#allocation2 + $0xa8] sm:$0xff]
        %v835 = vld [vmem:[#allocation2 + $0xb0] sm:$0xff]
        %v836 = vld [vmem:[#allocation2 + $0xb8] sm:$0xff]
        %v837 = vld [vmem:[#allocation2 + $0xc0] sm:$0xff]
        %v838 = vld [vmem:[#allocation2 + $0xc8] sm:$0xff]
        %v839 = vld [vmem:[#allocation2 + $0xd0] sm:$0xff]
        %v840 = vld [vmem:[#allocation2 + $0xd8] sm:$0xff]
        %v841 = vld [vmem:[#allocation2 + $0xe0] sm:$0xff]
        %v842 = vld [vmem:[#allocation2 + $0xe8] sm:$0xff]
        %v843 = vld [vmem:[#allocation2 + $0xf0] sm:$0xff]
        %v844 = vld [vmem:[#allocation2 + $0xf8] sm:$0xff]
        %845 = vst.msk [vmem:[%s198] sm:$0xff] %vm777, %v813
        %846 = vst.msk [vmem:[%s198 + $0x8] sm:$0xff] %vm777, %v814
        %847 = vst.msk [vmem:[%s198 + $0x10] sm:$0xff] %vm777, %v815
        %848 = vst.msk [vmem:[%s198 + $0x18] sm:$0xff] %vm777, %v816
        %849 = vst.msk [vmem:[%s198 + $0x20] sm:$0xff] %vm777, %v817
        %850 = vst.msk [vmem:[%s198 + $0x28] sm:$0xff] %vm777, %v818
        %851 = vst.msk [vmem:[%s198 + $0x30] sm:$0xff] %vm777, %v819
        %852 = vst.msk [vmem:[%s198 + $0x38] sm:$0xff] %vm777, %v820
        %853 = vst.msk [vmem:[%s198 + $0x40] sm:$0xff] %vm777, %v821
        %854 = vst.msk [vmem:[%s198 + $0x48] sm:$0xff] %vm777, %v822
        %855 = vst.msk [vmem:[%s198 + $0x50] sm:$0xff] %vm777, %v823
        %856 = vst.msk [vmem:[%s198 + $0x58] sm:$0xff] %vm777, %v824
        %857 = vst.msk [vmem:[%s198 + $0x60] sm:$0xff] %vm777, %v825
        %858 = vst.msk [vmem:[%s198 + $0x68] sm:$0xff] %vm777, %v826
        %859 = vst.msk [vmem:[%s198 + $0x70] sm:$0xff] %vm777, %v827
        %860 = vst.msk [vmem:[%s198 + $0x78] sm:$0xff] %vm777, %v828
        %861 = vst.msk [vmem:[%s198 + $0x80] sm:$0xff] %vm777, %v829
        %862 = vst.msk [vmem:[%s198 + $0x88] sm:$0xff] %vm777, %v830
        %863 = vst.msk [vmem:[%s198 + $0x90] sm:$0xff] %vm777, %v831
        %864 = vst.msk [vmem:[%s198 + $0x98] sm:$0xff] %vm777, %v832
        %865 = vst.msk [vmem:[%s198 + $0xa0] sm:$0xff] %vm777, %v833
        %866 = vst.msk [vmem:[%s198 + $0xa8] sm:$0xff] %vm777, %v834
        %867 = vst.msk [vmem:[%s198 + $0xb0] sm:$0xff] %vm777, %v835
        %868 = vst.msk [vmem:[%s198 + $0xb8] sm:$0xff] %vm777, %v836
        %869 = vst.msk [vmem:[%s198 + $0xc0] sm:$0xff] %vm777, %v837
        %870 = vst.msk [vmem:[%s198 + $0xc8] sm:$0xff] %vm777, %v838
        %871 = vst.msk [vmem:[%s198 + $0xd0] sm:$0xff] %vm777, %v839
        %872 = vst.msk [vmem:[%s198 + $0xd8] sm:$0xff] %vm777, %v840
        %873 = vst.msk [vmem:[%s198 + $0xe0] sm:$0xff] %vm777, %v841
        %874 = vst.msk [vmem:[%s198 + $0xe8] sm:$0xff] %vm777, %v842
        %875 = vst.msk [vmem:[%s198 + $0xf0] sm:$0xff] %vm777, %v843
        %876 = vst.msk [vmem:[%s198 + $0xf8] sm:$0xff] %vm777, %v844
      $region36: #{_lambda_.20} parent=27 // pred_fallthru
        _
      %s877 = smul.u32 32, %s17
      %p878 = scmp.lt.s32.totalorder %s877, 63
      %s879 = scalar_select %p878, %s877, 63
      %s880 = smul.addr %s879, 8
      %s881 = scalar_lea.vmem %s2, %s880
      // Predicated region
      $region37: #{_lambda_.20} parent=27 // pred_check
        %p882 = pneg %p97
      $region38: #{_lambda_.20} parent=27 // pred_check_branch
        %884 = sbr.rel (%p882) target = $region40
      $region39: #{_lambda_.20} parent=27 // pred_region
        %s885 = smul.u32 32, %s17
      $region40: #{_lambda_.20} parent=27 // pred_fallthru
        _
    $region28: #{_lambda_.20} parent=5 // pred_fallthru
      _
    %p886 = scmp.le.s32.totalorder 2, %s8
    // Predicated region
    $region41: #{_lambda_.20} parent=5 // pred_check
      %p887 = pneg %p886
    $region42: #{_lambda_.20} parent=5 // pred_check_branch
      %889 = sbr.rel (%p887) target = $region44
    $region43: #{_lambda_.20} parent=5 // pred_region
      %s890 = ssub.s32 %s8, 2
      // Predicated region
      $region45: #{_lambda_.20} parent=43 // pred_check
        %p891 = pneg %p103
      $region46: #{_lambda_.20} parent=43 // pred_check_branch
        %893 = sbr.rel (%p891) target = $region48
      $region47: #{_lambda_.20} parent=43 // pred_region
        %s894 = smul.u32 32, %s19
        %p895 = scmp.lt.s32.totalorder %s894, 63
        %s896 = scalar_select %p895, %s894, 63
        %s897 = smul.addr %s896, 8
        %s898 = scalar_lea.vmem %s2, %s897
      $region48: #{_lambda_.20} parent=43 // pred_fallthru
        _
    $region44: #{_lambda_.20} parent=5 // pred_fallthru
      _
  $region6: #{_lambda_.20} parent=0 // loop_footer
    %s12 = sadd.s32 1, %s8
  $region7: #{_lambda_.20} parent=0 // loop_footer_branch
    %7 = sbr.rel target = $region3
  $region8: #{_lambda_.20} parent=0 // loop_exit
    _

// kernel: _lambda_.19
$region0: #{_lambda_.19}
  #allocation0 [shape = 'u32[]', space=smem, size = 0x4, offset = 0x4, fixed_abs, tag = 'smem constant byte address 0x4 - core index']
  #allocation1 [shape = 'u32[72,128]{1,0:T(1,128)}', space=vmem, size = 0x9000, scoped, tag = 'internal scratch']
  #allocation2 [shape = 'f32[256,32]{1,0:T(8,128)}', space=vmem, size = 0x20000, scoped, tag = 'scratch operand']
  %s0 = inlined_call_operand.vmem [shape: bf16[512,16], index: 0, kind: input, shape index: {}]
  %s1 = inlined_call_operand.vmem [shape: bf16[16,32], index: 1, kind: input, shape index: {}]
  %s2 = inlined_call_operand.vmem [shape: f32[512,32], index: 2, kind: output, shape index: {}]
  %s3 = sld [smem:[#allocation0]]
  $region49: #{_lambda_.19} parent=0
    _
  %s5 = ssub.s32 1, %s3
  %s6 = scalar_select 0, %s5, %s3
  loop: start=0, step=1, limit=4
  $region2: #{_lambda_.19} parent=0 // loop_pre_header
    _
  $region3: #{_lambda_.19} parent=0 // loop_header
    %s8 = sphi 0, %s12
    %p9 = scmp.ge.s32.totalorder %s8, 4
    %s15 = sphi 0, %s27
    %s16 = sphi 0, %s23
    %s17 = sphi 0, %s15
    %s18 = sphi 0, %s16
    %s19 = sphi 0, %s17
    %s20 = sphi 0, %s18
    %s32 = sphi 0, %s34
    %s35 = sphi 0, %s32
    %s36 = sphi 0, %s35
    %s52 = sphi 0, %s36
    %s58 = sphi 0, %s60
    %s61 = sphi 0, %s58
    %s62 = sphi 0, %s61
    %s78 = sphi 0, %s62
    %s84 = sphi 0, %s86
    %s87 = sphi 0, %s84
    %s88 = sphi 0, %s87
    %s104 = sphi 0, %s88
  $region4: #{_lambda_.19} parent=0 // loop_header_branch
    %11 = sbr.rel (%p9) target = $region8
  $region5: #{_lambda_.19} parent=0 // loop_body
    %s13 = ssub.s32 %s8, 1
    %s14 = ssub.s32 %s8, 2
    %s21 = sadd.s32 1, %s16
    %p22 = scmp.ge.s32.totalorder %s21, 1
    %s23 = scalar_select %p22, 0, %s21
    %s24 = sadd.s32 1, %s15
    %s25 = scalar_select %p22, %s24, %s15
    %p26 = scmp.ge.s32.totalorder %s25, 2
    %s27 = scalar_select %p26, 0, %s25
    %s28 = ssub.s32 %s15, %s27
    %s29 = ssub.s32 %s16, %s23
    %s30 = sor.u32 %s28, %s29
    %p31 = scmp.eq.s32.totalorder %s30, 0
    %s33 = sadd.s32 %s32, 1
    %s34 = scalar_select %p31, %s32, %s33
    %p37 = pneg %p31
    %p38 = scmp.eq.s32.totalorder %s8, 1
    %p39 = por %p37, %p38
    %p40 = scmp.ne.s32.totalorder %s32, %s35
    %p41 = scmp.eq.s32.totalorder %s8, 0
    %p42 = por %p40, %p41
    %p43 = scmp.ne.s32.totalorder %s32, %s35
    %p44 = scmp.eq.s32.totalorder %s13, 1
    %p45 = por %p43, %p44
    %p46 = scmp.ne.s32.totalorder %s35, %s36
    %p47 = scmp.eq.s32.totalorder %s13, 0
    %p48 = por %p46, %p47
    %p49 = scmp.ne.s32.totalorder %s35, %s36
    %p50 = scmp.eq.s32.totalorder %s14, 1
    %p51 = por %p49, %p50
    %p53 = scmp.ne.s32.totalorder %s36, %s52
    %p54 = scmp.eq.s32.totalorder %s14, 0
    %p55 = por %p53, %p54
    %s56 = ssub.s32 %s16, %s23
    %p57 = scmp.eq.s32.totalorder %s56, 0
    %s59 = sadd.s32 %s58, 1
    %s60 = scalar_select %p57, %s58, %s59
    %p63 = pneg %p57
    %p64 = scmp.eq.s32.totalorder %s8, 1
    %p65 = por %p63, %p64
    %p66 = scmp.ne.s32.totalorder %s58, %s61
    %p67 = scmp.eq.s32.totalorder %s8, 0
    %p68 = por %p66, %p67
    %p69 = scmp.ne.s32.totalorder %s58, %s61
    %p70 = scmp.eq.s32.totalorder %s13, 1
    %p71 = por %p69, %p70
    %p72 = scmp.ne.s32.totalorder %s61, %s62
    %p73 = scmp.eq.s32.totalorder %s13, 0
    %p74 = por %p72, %p73
    %p75 = scmp.ne.s32.totalorder %s61, %s62
    %p76 = scmp.eq.s32.totalorder %s14, 1
    %p77 = por %p75, %p76
    %p79 = scmp.ne.s32.totalorder %s62, %s78
    %p80 = scmp.eq.s32.totalorder %s14, 0
    %p81 = por %p79, %p80
    %s82 = ssub.s32 %s15, %s27
    %p83 = scmp.eq.s32.totalorder %s82, 0
    %s85 = sadd.s32 %s84, 1
    %s86 = scalar_select %p83, %s84, %s85
    %p89 = pneg %p83
    %p90 = scmp.eq.s32.totalorder %s8, 1
    %p91 = por %p89, %p90
    %p92 = scmp.ne.s32.totalorder %s84, %s87
    %p93 = scmp.eq.s32.totalorder %s8, 0
    %p94 = por %p92, %p93
    %p95 = scmp.ne.s32.totalorder %s84, %s87
    %p96 = scmp.eq.s32.totalorder %s13, 1
    %p97 = por %p95, %p96
    %p98 = scmp.ne.s32.totalorder %s87, %s88
    %p99 = scmp.eq.s32.totalorder %s13, 0
    %p100 = por %p98, %p99
    %p101 = scmp.ne.s32.totalorder %s87, %s88
    %p102 = scmp.eq.s32.totalorder %s14, 1
    %p103 = por %p101, %p102
    %p105 = scmp.ne.s32.totalorder %s88, %s104
    %p106 = scmp.eq.s32.totalorder %s14, 0
    %p107 = por %p105, %p106
    %p108 = scmp.le.s32.totalorder 1, %s8
    %p109 = scmp.lt.s32.totalorder %s8, 3
    %p110 = pnand %p108, %p109
    %p111 = pneg %p110
    // Predicated region
    $region9: #{_lambda_.19} parent=5 // pred_check
      _
    $region10: #{_lambda_.19} parent=5 // pred_check_branch
      %113 = sbr.rel (%p110) target = $region12
    $region11: #{_lambda_.19} parent=5 // pred_region
      %s114 = ssub.s32 %s8, 1
      // Predicated region
      $region13: #{_lambda_.19} parent=11 // pred_check
        %p115 = pneg %p74
      $region14: #{_lambda_.19} parent=11 // pred_check_branch
        %117 = sbr.rel (%p115) target = $region16
      $region15: #{_lambda_.19} parent=11 // pred_region
        %s118 = smul.u32 2, %s18
        %p119 = scmp.lt.s32.totalorder %s118, 1
        %s120 = scalar_select %p119, %s118, 1
        %s121 = smul.addr %s120, 4
        %s122 = scalar_lea.vmem %s1, %s121
        %s123 = smul.u32 2, %s18
      $region16: #{_lambda_.19} parent=11 // pred_fallthru
        _
    $region12: #{_lambda_.19} parent=5 // pred_fallthru
      _
    %p124 = scmp.lt.s32.totalorder %s8, 2
    // Predicated region
    $region17: #{_lambda_.19} parent=5 // pred_check
      %p125 = pneg %p124
    $region18: #{_lambda_.19} parent=5 // pred_check_branch
      %127 = sbr.rel (%p125) target = $region20
    $region19: #{_lambda_.19} parent=5 // pred_region
      // Predicated region
      $region21: #{_lambda_.19} parent=19 // pred_check
        %p128 = pneg %p42
      $region22: #{_lambda_.19} parent=19 // pred_check_branch
        %130 = sbr.rel (%p128) target = $region24
      $region23: #{_lambda_.19} parent=19 // pred_region
        %s131 = smul.u32 32, %s15
        %p132 = scmp.lt.s32.totalorder %s131, 63
        %s133 = scalar_select %p132, %s131, 63
        %p134 = scmp.lt.s32.totalorder %s16, 0
        %s135 = scalar_select %p134, %s16, 0
        %s136 = sadd.s32 %s135, %s133
        %s137 = smul.addr %s136, 4
        %s138 = scalar_lea.vmem %s0, %s137
        %s139 = smul.u32 32, %s15
      $region24: #{_lambda_.19} parent=19 // pred_fallthru
        _
    $region20: #{_lambda_.19} parent=5 // pred_fallthru
      _
    %p140 = scmp.le.s32.totalorder 1, %s8
    %p141 = scmp.lt.s32.totalorder %s8, 3
    %p142 = pnand %p140, %p141
    %p143 = pneg %p142
    // Predicated region
    $region25: #{_lambda_.19} parent=5 // pred_check
      _
    $region26: #{_lambda_.19} parent=5 // pred_check_branch
      %145 = sbr.rel (%p142) target = $region28
    $region27: #{_lambda_.19} parent=5 // pred_region
      %s146 = ssub.s32 %s8, 1
      %s147 = smul.u32 32, %s17
      %p148 = scmp.lt.s32.totalorder %s147, 63
      %s149 = scalar_select %p148, %s147, 63
      %p150 = scmp.lt.s32.totalorder %s18, 0
      %s151 = scalar_select %p150, %s18, 0
      %s152 = sadd.s32 %s151, %s149
      %s153 = smul.addr %s152, 4
      %s154 = scalar_lea.vmem %s0, %s153
      %p155 = pneg %p48
      %p156 = pneg %p45
      %s157 = smul.u32 2, %s18
      %p158 = scmp.lt.s32.totalorder %s157, 1
      %s159 = scalar_select %p158, %s157, 1
      %s160 = smul.addr %s159, 4
      %s161 = scalar_lea.vmem %s1, %s160
      %p162 = pneg %p74
      %p163 = pneg %p71
      %p164 = pneg %p100
      %p165 = pneg %p97
      %s166 = smul.u32 32, %s17
      %p167 = scmp.lt.s32.totalorder %s166, 63
      %s168 = scalar_select %p167, %s166, 63
      %s169 = smul.addr %s168, 8
      %s170 = scalar_lea.vmem %s2, %s169
      %s171 = smul.u32 32, %s17
      %p172 = scmp.lt.s32.totalorder %s171, 63
      %s173 = scalar_select %p172, %s171, 63
      %p174 = scmp.lt.s32.totalorder %s18, 0
      %s175 = scalar_select %p174, %s18, 0
      %s176 = sadd.s32 %s175, %s173
      %s177 = smul.addr %s176, 4
      %s178 = scalar_lea.vmem %s0, %s177
      %s179 = smul.u32 32, %s17
      %s180 = smul.u32 2, %s18
      %p181 = scmp.lt.s32.totalorder %s180, 1
      %s182 = scalar_select %p181, %s180, 1
      %s183 = smul.addr %s182, 4
      %s184 = scalar_lea.vmem %s1, %s183
      %s185 = smul.u32 2, %s18
      %s186 = smul.u32 32, %s17
      %p187 = scmp.lt.s32.totalorder %s186, 63
      %s188 = scalar_select %p187, %s186, 63
      %s189 = smul.addr %s188, 8
      %s190 = scalar_lea.vmem %s2, %s189
      %s191 = smul.u32 32, %s17
      %p193 = scmp.eq.s32.totalorder %s18, 0
      // Predicated region
      $region29: #{_lambda_.19} parent=27 // pred_check
        %p194 = pneg %p193
      $region30: #{_lambda_.19} parent=27 // pred_check_branch
        %196 = sbr.rel (%p194) target = $region32
      $region31: #{_lambda_.19} parent=27 // pred_region
        %vm197 = vcmask 261120
        %198 = vst.msk [vmem:[#allocation2] sm:$0xff] %vm197, 0.0
        %199 = vst.msk [vmem:[#allocation2 + $0x8] sm:$0xff] %vm197, 0.0
        %200 = vst.msk [vmem:[#allocation2 + $0x10] sm:$0xff] %vm197, 0.0
        %201 = vst.msk [vmem:[#allocation2 + $0x18] sm:$0xff] %vm197, 0.0
        %202 = vst.msk [vmem:[#allocation2 + $0x20] sm:$0xff] %vm197, 0.0
        %203 = vst.msk [vmem:[#allocation2 + $0x28] sm:$0xff] %vm197, 0.0
        %204 = vst.msk [vmem:[#allocation2 + $0x30] sm:$0xff] %vm197, 0.0
        %205 = vst.msk [vmem:[#allocation2 + $0x38] sm:$0xff] %vm197, 0.0
        %206 = vst.msk [vmem:[#allocation2 + $0x40] sm:$0xff] %vm197, 0.0
        %207 = vst.msk [vmem:[#allocation2 + $0x48] sm:$0xff] %vm197, 0.0
        %208 = vst.msk [vmem:[#allocation2 + $0x50] sm:$0xff] %vm197, 0.0
        %209 = vst.msk [vmem:[#allocation2 + $0x58] sm:$0xff] %vm197, 0.0
        %210 = vst.msk [vmem:[#allocation2 + $0x60] sm:$0xff] %vm197, 0.0
        %211 = vst.msk [vmem:[#allocation2 + $0x68] sm:$0xff] %vm197, 0.0
        %212 = vst.msk [vmem:[#allocation2 + $0x70] sm:$0xff] %vm197, 0.0
        %213 = vst.msk [vmem:[#allocation2 + $0x78] sm:$0xff] %vm197, 0.0
        %214 = vst.msk [vmem:[#allocation2 + $0x80] sm:$0xff] %vm197, 0.0
        %215 = vst.msk [vmem:[#allocation2 + $0x88] sm:$0xff] %vm197, 0.0
        %216 = vst.msk [vmem:[#allocation2 + $0x90] sm:$0xff] %vm197, 0.0
        %217 = vst.msk [vmem:[#allocation2 + $0x98] sm:$0xff] %vm197, 0.0
        %218 = vst.msk [vmem:[#allocation2 + $0xa0] sm:$0xff] %vm197, 0.0
        %219 = vst.msk [vmem:[#allocation2 + $0xa8] sm:$0xff] %vm197, 0.0
        %220 = vst.msk [vmem:[#allocation2 + $0xb0] sm:$0xff] %vm197, 0.0
        %221 = vst.msk [vmem:[#allocation2 + $0xb8] sm:$0xff] %vm197, 0.0
        %222 = vst.msk [vmem:[#allocation2 + $0xc0] sm:$0xff] %vm197, 0.0
        %223 = vst.msk [vmem:[#allocation2 + $0xc8] sm:$0xff] %vm197, 0.0
        %224 = vst.msk [vmem:[#allocation2 + $0xd0] sm:$0xff] %vm197, 0.0
        %225 = vst.msk [vmem:[#allocation2 + $0xd8] sm:$0xff] %vm197, 0.0
        %226 = vst.msk [vmem:[#allocation2 + $0xe0] sm:$0xff] %vm197, 0.0
        %227 = vst.msk [vmem:[#allocation2 + $0xe8] sm:$0xff] %vm197, 0.0
        %228 = vst.msk [vmem:[#allocation2 + $0xf0] sm:$0xff] %vm197, 0.0
        %229 = vst.msk [vmem:[#allocation2 + $0xf8] sm:$0xff] %vm197, 0.0
      $region32: #{_lambda_.19} parent=27 // pred_fallthru
        _
      %v230 = vld [vmem:[#allocation2] sm:$0xff]
      %v231 = vld [vmem:[#allocation2 + $0x8] sm:$0xff]
      %v232 = vld [vmem:[#allocation2 + $0x10] sm:$0xff]
      %v233 = vld [vmem:[#allocation2 + $0x18] sm:$0xff]
      %v234 = vld [vmem:[#allocation2 + $0x20] sm:$0xff]
      %v235 = vld [vmem:[#allocation2 + $0x28] sm:$0xff]
      %v236 = vld [vmem:[#allocation2 + $0x30] sm:$0xff]
      %v237 = vld [vmem:[#allocation2 + $0x38] sm:$0xff]
      %v238 = vld [vmem:[#allocation2 + $0x40] sm:$0xff]
      %v239 = vld [vmem:[#allocation2 + $0x48] sm:$0xff]
      %v240 = vld [vmem:[#allocation2 + $0x50] sm:$0xff]
      %v241 = vld [vmem:[#allocation2 + $0x58] sm:$0xff]
      %v242 = vld [vmem:[#allocation2 + $0x60] sm:$0xff]
      %v243 = vld [vmem:[#allocation2 + $0x68] sm:$0xff]
      %v244 = vld [vmem:[#allocation2 + $0x70] sm:$0xff]
      %v245 = vld [vmem:[#allocation2 + $0x78] sm:$0xff]
      %v246 = vld [vmem:[#allocation2 + $0x80] sm:$0xff]
      %v247 = vld [vmem:[#allocation2 + $0x88] sm:$0xff]
      %v248 = vld [vmem:[#allocation2 + $0x90] sm:$0xff]
      %v249 = vld [vmem:[#allocation2 + $0x98] sm:$0xff]
      %v250 = vld [vmem:[#allocation2 + $0xa0] sm:$0xff]
      %v251 = vld [vmem:[#allocation2 + $0xa8] sm:$0xff]
      %v252 = vld [vmem:[#allocation2 + $0xb0] sm:$0xff]
      %v253 = vld [vmem:[#allocation2 + $0xb8] sm:$0xff]
      %v254 = vld [vmem:[#allocation2 + $0xc0] sm:$0xff]
      %v255 = vld [vmem:[#allocation2 + $0xc8] sm:$0xff]
      %v256 = vld [vmem:[#allocation2 + $0xd0] sm:$0xff]
      %v257 = vld [vmem:[#allocation2 + $0xd8] sm:$0xff]
      %v258 = vld [vmem:[#allocation2 + $0xe0] sm:$0xff]
      %v259 = vld [vmem:[#allocation2 + $0xe8] sm:$0xff]
      %v260 = vld [vmem:[#allocation2 + $0xf0] sm:$0xff]
      %v261 = vld [vmem:[#allocation2 + $0xf8] sm:$0xff]
      %v262 = vld [vmem:[%s178] sm:$0xf]
      %v263 = vld [vmem:[%s178 + $0x4] sm:$0xf]
      %v264 = vld [vmem:[%s178 + $0x8] sm:$0xf]
      %v265 = vld [vmem:[%s178 + $0xc] sm:$0xf]
      %v266 = vld [vmem:[%s178 + $0x10] sm:$0xf]
      %v267 = vld [vmem:[%s178 + $0x14] sm:$0xf]
      %v268 = vld [vmem:[%s178 + $0x18] sm:$0xf]
      %v269 = vld [vmem:[%s178 + $0x1c] sm:$0xf]
      %v270 = vld [vmem:[%s178 + $0x20] sm:$0xf]
      %v271 = vld [vmem:[%s178 + $0x24] sm:$0xf]
      %v272 = vld [vmem:[%s178 + $0x28] sm:$0xf]
      %v273 = vld [vmem:[%s178 + $0x2c] sm:$0xf]
      %v274 = vld [vmem:[%s178 + $0x30] sm:$0xf]
      %v275 = vld [vmem:[%s178 + $0x34] sm:$0xf]
      %v276 = vld [vmem:[%s178 + $0x38] sm:$0xf]
      %v277 = vld [vmem:[%s178 + $0x3c] sm:$0xf]
      %v278 = vld [vmem:[%s178 + $0x40] sm:$0xf]
      %v279 = vld [vmem:[%s178 + $0x44] sm:$0xf]
      %v280 = vld [vmem:[%s178 + $0x48] sm:$0xf]
      %v281 = vld [vmem:[%s178 + $0x4c] sm:$0xf]
      %v282 = vld [vmem:[%s178 + $0x50] sm:$0xf]
      %v283 = vld [vmem:[%s178 + $0x54] sm:$0xf]
      %v284 = vld [vmem:[%s178 + $0x58] sm:$0xf]
      %v285 = vld [vmem:[%s178 + $0x5c] sm:$0xf]
      %v286 = vld [vmem:[%s178 + $0x60] sm:$0xf]
      %v287 = vld [vmem:[%s178 + $0x64] sm:$0xf]
      %v288 = vld [vmem:[%s178 + $0x68] sm:$0xf]
      %v289 = vld [vmem:[%s178 + $0x6c] sm:$0xf]
      %v290 = vld [vmem:[%s178 + $0x70] sm:$0xf]
      %v291 = vld [vmem:[%s178 + $0x74] sm:$0xf]
      %v292 = vld [vmem:[%s178 + $0x78] sm:$0xf]
      %v293 = vld [vmem:[%s178 + $0x7c] sm:$0xf]
      %v294 = vld [vmem:[%s184] sm:$0xf]
      %v295 = vld [vmem:[%s184 + $0x4] sm:$0xf]
      %v328 = vunpack.c.l.b16 %v262
      %v329 = vunpack.c.l.b16 %v263
      %v330 = vunpack.c.l.b16 %v264
      %v331 = vunpack.c.l.b16 %v265
      %v332 = vunpack.c.l.b16 %v266
      %v333 = vunpack.c.l.b16 %v267
      %v334 = vunpack.c.l.b16 %v268
      %v335 = vunpack.c.l.b16 %v269
      %v336 = vunpack.c.l.b16 %v270
      %v337 = vunpack.c.l.b16 %v271
      %v338 = vunpack.c.l.b16 %v272
      %v339 = vunpack.c.l.b16 %v273
      %v340 = vunpack.c.l.b16 %v274
      %v341 = vunpack.c.l.b16 %v275
      %v342 = vunpack.c.l.b16 %v276
      %v343 = vunpack.c.l.b16 %v277
      %v344 = vunpack.c.l.b16 %v278
      %v345 = vunpack.c.l.b16 %v279
      %v346 = vunpack.c.l.b16 %v280
      %v347 = vunpack.c.l.b16 %v281
      %v348 = vunpack.c.l.b16 %v282
      %v349 = vunpack.c.l.b16 %v283
      %v350 = vunpack.c.l.b16 %v284
      %v351 = vunpack.c.l.b16 %v285
      %v352 = vunpack.c.l.b16 %v286
      %v353 = vunpack.c.l.b16 %v287
      %v354 = vunpack.c.l.b16 %v288
      %v355 = vunpack.c.l.b16 %v289
      %v356 = vunpack.c.l.b16 %v290
      %v357 = vunpack.c.l.b16 %v291
      %v358 = vunpack.c.l.b16 %v292
      %v359 = vunpack.c.l.b16 %v293
      %v360 = vpack.c.b16 %v329, %v328
      %v361 = vpack.c.b16 %v331, %v330
      %v362 = vpack.c.b16 %v333, %v332
      %v363 = vpack.c.b16 %v335, %v334
      %v364 = vpack.c.b16 %v337, %v336
      %v365 = vpack.c.b16 %v339, %v338
      %v366 = vpack.c.b16 %v341, %v340
      %v367 = vpack.c.b16 %v343, %v342
      %v368 = vpack.c.b16 %v345, %v344
      %v369 = vpack.c.b16 %v347, %v346
      %v370 = vpack.c.b16 %v349, %v348
      %v371 = vpack.c.b16 %v351, %v350
      %v372 = vpack.c.b16 %v353, %v352
      %v373 = vpack.c.b16 %v355, %v354
      %v374 = vpack.c.b16 %v357, %v356
      %v375 = vpack.c.b16 %v359, %v358
      %v378 = vunpack.c.l.b16 %v294
      %v379 = vunpack.c.l.b16 %v295
      %v380 = vpack.c.b16 %v379, %v378
      %vm382 = vcmask 130048
      %v384 = vsel %vm382, %v360, 0
      %v387 = vsel %vm382, %v361, 0
      %v390 = vsel %vm382, %v362, 0
      %v393 = vsel %vm382, %v363, 0
      %v396 = vsel %vm382, %v364, 0
      %v399 = vsel %vm382, %v365, 0
      %v402 = vsel %vm382, %v366, 0
      %v405 = vsel %vm382, %v367, 0
      %v408 = vsel %vm382, %v368, 0
      %v411 = vsel %vm382, %v369, 0
      %v414 = vsel %vm382, %v370, 0
      %v417 = vsel %vm382, %v371, 0
      %v420 = vsel %vm382, %v372, 0
      %v423 = vsel %vm382, %v373, 0
      %v426 = vsel %vm382, %v374, 0
      %v429 = vsel %vm382, %v375, 0
      %431 = vmatpush.bf16.msra.mxu0 0
      %432 = vmatpush.bf16.msra.mxu0 0
      %433 = vmatpush.bf16.msra.mxu0 0
      %434 = vmatpush.bf16.msra.mxu0 0
      %435 = vmatpush.bf16.msra.mxu0 0
      %436 = vmatpush.bf16.msra.mxu0 0
      %437 = vmatpush.bf16.msra.mxu0 0
      %438 = vmatpush.bf16.msra.mxu0 %v380
      %439 = vmatmul.bf16.gmra.mxu0 %v384
      %v440 = vpop.f32.mrf.mxu0
      %v441 = vadd.f32 0.0, %v440
      %v442 = vpop.f32.mrf.mxu0
      %v443 = vadd.f32 0.0, %v442
      %444 = vmatmul.bf16.gmra.mxu0 %v387
      %v445 = vpop.f32.mrf.mxu0
      %v446 = vadd.f32 0.0, %v445
      %v447 = vpop.f32.mrf.mxu0
      %v448 = vadd.f32 0.0, %v447
      %449 = vmatmul.bf16.gmra.mxu0 %v390
      %v450 = vpop.f32.mrf.mxu0
      %v451 = vadd.f32 0.0, %v450
      %v452 = vpop.f32.mrf.mxu0
      %v453 = vadd.f32 0.0, %v452
      %454 = vmatmul.bf16.gmra.mxu0 %v393
      %v455 = vpop.f32.mrf.mxu0
      %v456 = vadd.f32 0.0, %v455
      %v457 = vpop.f32.mrf.mxu0
      %v458 = vadd.f32 0.0, %v457
      %459 = vmatmul.bf16.gmra.mxu0 %v396
      %v460 = vpop.f32.mrf.mxu0
      %v461 = vadd.f32 0.0, %v460
      %v462 = vpop.f32.mrf.mxu0
      %v463 = vadd.f32 0.0, %v462
      %464 = vmatmul.bf16.gmra.mxu0 %v399
      %v465 = vpop.f32.mrf.mxu0
      %v466 = vadd.f32 0.0, %v465
      %v467 = vpop.f32.mrf.mxu0
      %v468 = vadd.f32 0.0, %v467
      %469 = vmatmul.bf16.gmra.mxu0 %v402
      %v470 = vpop.f32.mrf.mxu0
      %v471 = vadd.f32 0.0, %v470
      %v472 = vpop.f32.mrf.mxu0
      %v473 = vadd.f32 0.0, %v472
      %474 = vmatmul.bf16.gmra.mxu0 %v405
      %v475 = vpop.f32.mrf.mxu0
      %v476 = vadd.f32 0.0, %v475
      %v477 = vpop.f32.mrf.mxu0
      %v478 = vadd.f32 0.0, %v477
      %479 = vmatmul.bf16.gmra.mxu0 %v408
      %v480 = vpop.f32.mrf.mxu0
      %v481 = vadd.f32 0.0, %v480
      %v482 = vpop.f32.mrf.mxu0
      %v483 = vadd.f32 0.0, %v482
      %484 = vmatmul.bf16.gmra.mxu0 %v411
      %v485 = vpop.f32.mrf.mxu0
      %v486 = vadd.f32 0.0, %v485
      %v487 = vpop.f32.mrf.mxu0
      %v488 = vadd.f32 0.0, %v487
      %489 = vmatmul.bf16.gmra.mxu0 %v414
      %v490 = vpop.f32.mrf.mxu0
      %v491 = vadd.f32 0.0, %v490
      %v492 = vpop.f32.mrf.mxu0
      %v493 = vadd.f32 0.0, %v492
      %494 = vmatmul.bf16.gmra.mxu0 %v417
      %v495 = vpop.f32.mrf.mxu0
      %v496 = vadd.f32 0.0, %v495
      %v497 = vpop.f32.mrf.mxu0
      %v498 = vadd.f32 0.0, %v497
      %499 = vmatmul.bf16.gmra.mxu0 %v420
      %v500 = vpop.f32.mrf.mxu0
      %v501 = vadd.f32 0.0, %v500
      %v502 = vpop.f32.mrf.mxu0
      %v503 = vadd.f32 0.0, %v502
      %504 = vmatmul.bf16.gmra.mxu0 %v423
      %v505 = vpop.f32.mrf.mxu0
      %v506 = vadd.f32 0.0, %v505
      %v507 = vpop.f32.mrf.mxu0
      %v508 = vadd.f32 0.0, %v507
      %509 = vmatmul.bf16.gmra.mxu0 %v426
      %v510 = vpop.f32.mrf.mxu0
      %v511 = vadd.f32 0.0, %v510
      %v512 = vpop.f32.mrf.mxu0
      %v513 = vadd.f32 0.0, %v512
      %514 = vmatmul.bf16.gmra.mxu0 %v429
      %v515 = vpop.f32.mrf.mxu0
      %v516 = vadd.f32 0.0, %v515
      %v517 = vpop.f32.mrf.mxu0
      %v518 = vadd.f32 0.0, %v517
      %519 = vdwg.mxu0
      %v520 = vadd.f32 %v230, %v441
      %v521 = vadd.f32 %v231, %v443
      %v522 = vadd.f32 %v232, %v446
      %v523 = vadd.f32 %v233, %v448
      %v524 = vadd.f32 %v234, %v451
      %v525 = vadd.f32 %v235, %v453
      %v526 = vadd.f32 %v236, %v456
      %v527 = vadd.f32 %v237, %v458
      %v528 = vadd.f32 %v238, %v461
      %v529 = vadd.f32 %v239, %v463
      %v530 = vadd.f32 %v240, %v466
      %v531 = vadd.f32 %v241, %v468
      %v532 = vadd.f32 %v242, %v471
      %v533 = vadd.f32 %v243, %v473
      %v534 = vadd.f32 %v244, %v476
      %v535 = vadd.f32 %v245, %v478
      %v536 = vadd.f32 %v246, %v481
      %v537 = vadd.f32 %v247, %v483
      %v538 = vadd.f32 %v248, %v486
      %v539 = vadd.f32 %v249, %v488
      %v540 = vadd.f32 %v250, %v491
      %v541 = vadd.f32 %v251, %v493
      %v542 = vadd.f32 %v252, %v496
      %v543 = vadd.f32 %v253, %v498
      %v544 = vadd.f32 %v254, %v501
      %v545 = vadd.f32 %v255, %v503
      %v546 = vadd.f32 %v256, %v506
      %v547 = vadd.f32 %v257, %v508
      %v548 = vadd.f32 %v258, %v511
      %v549 = vadd.f32 %v259, %v513
      %v550 = vadd.f32 %v260, %v516
      %v551 = vadd.f32 %v261, %v518
      %vm552 = vcmask 261120
      %553 = vst.msk [vmem:[#allocation2] sm:$0xff] %vm552, %v520
      %554 = vst.msk [vmem:[#allocation2 + $0x8] sm:$0xff] %vm552, %v521
      %555 = vst.msk [vmem:[#allocation2 + $0x10] sm:$0xff] %vm552, %v522
      %556 = vst.msk [vmem:[#allocation2 + $0x18] sm:$0xff] %vm552, %v523
      %557 = vst.msk [vmem:[#allocation2 + $0x20] sm:$0xff] %vm552, %v524
      %558 = vst.msk [vmem:[#allocation2 + $0x28] sm:$0xff] %vm552, %v525
      %559 = vst.msk [vmem:[#allocation2 + $0x30] sm:$0xff] %vm552, %v526
      %560 = vst.msk [vmem:[#allocation2 + $0x38] sm:$0xff] %vm552, %v527
      %561 = vst.msk [vmem:[#allocation2 + $0x40] sm:$0xff] %vm552, %v528
      %562 = vst.msk [vmem:[#allocation2 + $0x48] sm:$0xff] %vm552, %v529
      %563 = vst.msk [vmem:[#allocation2 + $0x50] sm:$0xff] %vm552, %v530
      %564 = vst.msk [vmem:[#allocation2 + $0x58] sm:$0xff] %vm552, %v531
      %565 = vst.msk [vmem:[#allocation2 + $0x60] sm:$0xff] %vm552, %v532
      %566 = vst.msk [vmem:[#allocation2 + $0x68] sm:$0xff] %vm552, %v533
      %567 = vst.msk [vmem:[#allocation2 + $0x70] sm:$0xff] %vm552, %v534
      %568 = vst.msk [vmem:[#allocation2 + $0x78] sm:$0xff] %vm552, %v535
      %569 = vst.msk [vmem:[#allocation2 + $0x80] sm:$0xff] %vm552, %v536
      %570 = vst.msk [vmem:[#allocation2 + $0x88] sm:$0xff] %vm552, %v537
      %571 = vst.msk [vmem:[#allocation2 + $0x90] sm:$0xff] %vm552, %v538
      %572 = vst.msk [vmem:[#allocation2 + $0x98] sm:$0xff] %vm552, %v539
      %573 = vst.msk [vmem:[#allocation2 + $0xa0] sm:$0xff] %vm552, %v540
      %574 = vst.msk [vmem:[#allocation2 + $0xa8] sm:$0xff] %vm552, %v541
      %575 = vst.msk [vmem:[#allocation2 + $0xb0] sm:$0xff] %vm552, %v542
      %576 = vst.msk [vmem:[#allocation2 + $0xb8] sm:$0xff] %vm552, %v543
      %577 = vst.msk [vmem:[#allocation2 + $0xc0] sm:$0xff] %vm552, %v544
      %578 = vst.msk [vmem:[#allocation2 + $0xc8] sm:$0xff] %vm552, %v545
      %579 = vst.msk [vmem:[#allocation2 + $0xd0] sm:$0xff] %vm552, %v546
      %580 = vst.msk [vmem:[#allocation2 + $0xd8] sm:$0xff] %vm552, %v547
      %581 = vst.msk [vmem:[#allocation2 + $0xe0] sm:$0xff] %vm552, %v548
      %582 = vst.msk [vmem:[#allocation2 + $0xe8] sm:$0xff] %vm552, %v549
      %583 = vst.msk [vmem:[#allocation2 + $0xf0] sm:$0xff] %vm552, %v550
      %584 = vst.msk [vmem:[#allocation2 + $0xf8] sm:$0xff] %vm552, %v551
      // Predicated region
      $region33: #{_lambda_.19} parent=27 // pred_check
        %p585 = pneg %p193
      $region34: #{_lambda_.19} parent=27 // pred_check_branch
        %587 = sbr.rel (%p585) target = $region36
      $region35: #{_lambda_.19} parent=27 // pred_region
        %v588 = vld [vmem:[#allocation2] sm:$0xff]
        %v589 = vld [vmem:[#allocation2 + $0x8] sm:$0xff]
        %v590 = vld [vmem:[#allocation2 + $0x10] sm:$0xff]
        %v591 = vld [vmem:[#allocation2 + $0x18] sm:$0xff]
        %v592 = vld [vmem:[#allocation2 + $0x20] sm:$0xff]
        %v593 = vld [vmem:[#allocation2 + $0x28] sm:$0xff]
        %v594 = vld [vmem:[#allocation2 + $0x30] sm:$0xff]
        %v595 = vld [vmem:[#allocation2 + $0x38] sm:$0xff]
        %v596 = vld [vmem:[#allocation2 + $0x40] sm:$0xff]
        %v597 = vld [vmem:[#allocation2 + $0x48] sm:$0xff]
        %v598 = vld [vmem:[#allocation2 + $0x50] sm:$0xff]
        %v599 = vld [vmem:[#allocation2 + $0x58] sm:$0xff]
        %v600 = vld [vmem:[#allocation2 + $0x60] sm:$0xff]
        %v601 = vld [vmem:[#allocation2 + $0x68] sm:$0xff]
        %v602 = vld [vmem:[#allocation2 + $0x70] sm:$0xff]
        %v603 = vld [vmem:[#allocation2 + $0x78] sm:$0xff]
        %v604 = vld [vmem:[#allocation2 + $0x80] sm:$0xff]
        %v605 = vld [vmem:[#allocation2 + $0x88] sm:$0xff]
        %v606 = vld [vmem:[#allocation2 + $0x90] sm:$0xff]
        %v607 = vld [vmem:[#allocation2 + $0x98] sm:$0xff]
        %v608 = vld [vmem:[#allocation2 + $0xa0] sm:$0xff]
        %v609 = vld [vmem:[#allocation2 + $0xa8] sm:$0xff]
        %v610 = vld [vmem:[#allocation2 + $0xb0] sm:$0xff]
        %v611 = vld [vmem:[#allocation2 + $0xb8] sm:$0xff]
        %v612 = vld [vmem:[#allocation2 + $0xc0] sm:$0xff]
        %v613 = vld [vmem:[#allocation2 + $0xc8] sm:$0xff]
        %v614 = vld [vmem:[#allocation2 + $0xd0] sm:$0xff]
        %v615 = vld [vmem:[#allocation2 + $0xd8] sm:$0xff]
        %v616 = vld [vmem:[#allocation2 + $0xe0] sm:$0xff]
        %v617 = vld [vmem:[#allocation2 + $0xe8] sm:$0xff]
        %v618 = vld [vmem:[#allocation2 + $0xf0] sm:$0xff]
        %v619 = vld [vmem:[#allocation2 + $0xf8] sm:$0xff]
        %620 = vst.msk [vmem:[%s190] sm:$0xff] %vm552, %v588
        %621 = vst.msk [vmem:[%s190 + $0x8] sm:$0xff] %vm552, %v589
        %622 = vst.msk [vmem:[%s190 + $0x10] sm:$0xff] %vm552, %v590
        %623 = vst.msk [vmem:[%s190 + $0x18] sm:$0xff] %vm552, %v591
        %624 = vst.msk [vmem:[%s190 + $0x20] sm:$0xff] %vm552, %v592
        %625 = vst.msk [vmem:[%s190 + $0x28] sm:$0xff] %vm552, %v593
        %626 = vst.msk [vmem:[%s190 + $0x30] sm:$0xff] %vm552, %v594
        %627 = vst.msk [vmem:[%s190 + $0x38] sm:$0xff] %vm552, %v595
        %628 = vst.msk [vmem:[%s190 + $0x40] sm:$0xff] %vm552, %v596
        %629 = vst.msk [vmem:[%s190 + $0x48] sm:$0xff] %vm552, %v597
        %630 = vst.msk [vmem:[%s190 + $0x50] sm:$0xff] %vm552, %v598
        %631 = vst.msk [vmem:[%s190 + $0x58] sm:$0xff] %vm552, %v599
        %632 = vst.msk [vmem:[%s190 + $0x60] sm:$0xff] %vm552, %v600
        %633 = vst.msk [vmem:[%s190 + $0x68] sm:$0xff] %vm552, %v601
        %634 = vst.msk [vmem:[%s190 + $0x70] sm:$0xff] %vm552, %v602
        %635 = vst.msk [vmem:[%s190 + $0x78] sm:$0xff] %vm552, %v603
        %636 = vst.msk [vmem:[%s190 + $0x80] sm:$0xff] %vm552, %v604
        %637 = vst.msk [vmem:[%s190 + $0x88] sm:$0xff] %vm552, %v605
        %638 = vst.msk [vmem:[%s190 + $0x90] sm:$0xff] %vm552, %v606
        %639 = vst.msk [vmem:[%s190 + $0x98] sm:$0xff] %vm552, %v607
        %640 = vst.msk [vmem:[%s190 + $0xa0] sm:$0xff] %vm552, %v608
        %641 = vst.msk [vmem:[%s190 + $0xa8] sm:$0xff] %vm552, %v609
        %642 = vst.msk [vmem:[%s190 + $0xb0] sm:$0xff] %vm552, %v610
        %643 = vst.msk [vmem:[%s190 + $0xb8] sm:$0xff] %vm552, %v611
        %644 = vst.msk [vmem:[%s190 + $0xc0] sm:$0xff] %vm552, %v612
        %645 = vst.msk [vmem:[%s190 + $0xc8] sm:$0xff] %vm552, %v613
        %646 = vst.msk [vmem:[%s190 + $0xd0] sm:$0xff] %vm552, %v614
        %647 = vst.msk [vmem:[%s190 + $0xd8] sm:$0xff] %vm552, %v615
        %648 = vst.msk [vmem:[%s190 + $0xe0] sm:$0xff] %vm552, %v616
        %649 = vst.msk [vmem:[%s190 + $0xe8] sm:$0xff] %vm552, %v617
        %650 = vst.msk [vmem:[%s190 + $0xf0] sm:$0xff] %vm552, %v618
        %651 = vst.msk [vmem:[%s190 + $0xf8] sm:$0xff] %vm552, %v619
      $region36: #{_lambda_.19} parent=27 // pred_fallthru
        _
      %s652 = smul.u32 32, %s17
      %p653 = scmp.lt.s32.totalorder %s652, 63
      %s654 = scalar_select %p653, %s652, 63
      %s655 = smul.addr %s654, 8
      %s656 = scalar_lea.vmem %s2, %s655
      // Predicated region
      $region37: #{_lambda_.19} parent=27 // pred_check
        %p657 = pneg %p97
      $region38: #{_lambda_.19} parent=27 // pred_check_branch
        %659 = sbr.rel (%p657) target = $region40
      $region39: #{_lambda_.19} parent=27 // pred_region
        %s660 = smul.u32 32, %s17
      $region40: #{_lambda_.19} parent=27 // pred_fallthru
        _
    $region28: #{_lambda_.19} parent=5 // pred_fallthru
      _
    %p661 = scmp.le.s32.totalorder 2, %s8
    // Predicated region
    $region41: #{_lambda_.19} parent=5 // pred_check
      %p662 = pneg %p661
    $region42: #{_lambda_.19} parent=5 // pred_check_branch
      %664 = sbr.rel (%p662) target = $region44
    $region43: #{_lambda_.19} parent=5 // pred_region
      %s665 = ssub.s32 %s8, 2
      // Predicated region
      $region45: #{_lambda_.19} parent=43 // pred_check
        %p666 = pneg %p103
      $region46: #{_lambda_.19} parent=43 // pred_check_branch
        %668 = sbr.rel (%p666) target = $region48
      $region47: #{_lambda_.19} parent=43 // pred_region
        %s669 = smul.u32 32, %s19
        %p670 = scmp.lt.s32.totalorder %s669, 63
        %s671 = scalar_select %p670, %s669, 63
        %s672 = smul.addr %s671, 8
        %s673 = scalar_lea.vmem %s2, %s672
      $region48: #{_lambda_.19} parent=43 // pred_fallthru
        _
    $region44: #{_lambda_.19} parent=5 // pred_fallthru
      _
  $region6: #{_lambda_.19} parent=0 // loop_footer
    %s12 = sadd.s32 1, %s8
  $region7: #{_lambda_.19} parent=0 // loop_footer_branch
    %7 = sbr.rel target = $region3
  $region8: #{_lambda_.19} parent=0 // loop_exit
    _

// kernel: _lambda_.22
$region0: #{_lambda_.22}
  #allocation0 [shape = 'u32[]', space=smem, size = 0x4, offset = 0x4, fixed_abs, tag = 'smem constant byte address 0x4 - core index']
  #allocation1 [shape = 'u32[72,128]{1,0:T(1,128)}', space=vmem, size = 0x9000, scoped, tag = 'internal scratch']
  #allocation2 [shape = 'f32[256,32]{1,0:T(8,128)}', space=vmem, size = 0x20000, scoped, tag = 'scratch operand']
  %s0 = inlined_call_operand.vmem [shape: bf16[512,288], index: 0, kind: input, shape index: {}]
  %s1 = inlined_call_operand.vmem [shape: bf16[288,32], index: 1, kind: input, shape index: {}]
  %s2 = inlined_call_operand.vmem [shape: f32[512,32], index: 2, kind: input, shape index: {}]
  %s3 = inlined_call_operand.vmem [shape: f32[512,32], index: 3, kind: output, shape index: {}]
  %s4 = sld [smem:[#allocation0]]
  $region53: #{_lambda_.22} parent=0
    _
  %s6 = ssub.s32 1, %s4
  %s7 = scalar_select 0, %s6, %s4
  loop: start=0, step=1, limit=4
  $region2: #{_lambda_.22} parent=0 // loop_pre_header
    _
  $region3: #{_lambda_.22} parent=0 // loop_header
    %s9 = sphi 0, %s13
    %p10 = scmp.ge.s32.totalorder %s9, 4
    %s16 = sphi 0, %s28
    %s17 = sphi 0, %s24
    %s18 = sphi 0, %s16
    %s19 = sphi 0, %s17
    %s20 = sphi 0, %s18
    %s21 = sphi 0, %s19
    %s33 = sphi 0, %s35
    %s36 = sphi 0, %s33
    %s37 = sphi 0, %s36
    %s53 = sphi 0, %s37
    %s59 = sphi 0, %s61
    %s62 = sphi 0, %s59
    %s63 = sphi 0, %s62
    %s79 = sphi 0, %s63
    %s85 = sphi 0, %s87
    %s88 = sphi 0, %s85
    %s89 = sphi 0, %s88
    %s105 = sphi 0, %s89
    %s111 = sphi 0, %s113
    %s114 = sphi 0, %s111
    %s115 = sphi 0, %s114
    %s131 = sphi 0, %s115
  $region4: #{_lambda_.22} parent=0 // loop_header_branch
    %12 = sbr.rel (%p10) target = $region8
  $region5: #{_lambda_.22} parent=0 // loop_body
    %s14 = ssub.s32 %s9, 1
    %s15 = ssub.s32 %s9, 2
    %s22 = sadd.s32 1, %s17
    %p23 = scmp.ge.s32.totalorder %s22, 1
    %s24 = scalar_select %p23, 0, %s22
    %s25 = sadd.s32 1, %s16
    %s26 = scalar_select %p23, %s25, %s16
    %p27 = scmp.ge.s32.totalorder %s26, 2
    %s28 = scalar_select %p27, 0, %s26
    %s29 = ssub.s32 %s16, %s28
    %s30 = ssub.s32 %s17, %s24
    %s31 = sor.u32 %s29, %s30
    %p32 = scmp.eq.s32.totalorder %s31, 0
    %s34 = sadd.s32 %s33, 1
    %s35 = scalar_select %p32, %s33, %s34
    %p38 = pneg %p32
    %p39 = scmp.eq.s32.totalorder %s9, 1
    %p40 = por %p38, %p39
    %p41 = scmp.ne.s32.totalorder %s33, %s36
    %p42 = scmp.eq.s32.totalorder %s9, 0
    %p43 = por %p41, %p42
    %p44 = scmp.ne.s32.totalorder %s33, %s36
    %p45 = scmp.eq.s32.totalorder %s14, 1
    %p46 = por %p44, %p45
    %p47 = scmp.ne.s32.totalorder %s36, %s37
    %p48 = scmp.eq.s32.totalorder %s14, 0
    %p49 = por %p47, %p48
    %p50 = scmp.ne.s32.totalorder %s36, %s37
    %p51 = scmp.eq.s32.totalorder %s15, 1
    %p52 = por %p50, %p51
    %p54 = scmp.ne.s32.totalorder %s37, %s53
    %p55 = scmp.eq.s32.totalorder %s15, 0
    %p56 = por %p54, %p55
    %s57 = ssub.s32 %s17, %s24
    %p58 = scmp.eq.s32.totalorder %s57, 0
    %s60 = sadd.s32 %s59, 1
    %s61 = scalar_select %p58, %s59, %s60
    %p64 = pneg %p58
    %p65 = scmp.eq.s32.totalorder %s9, 1
    %p66 = por %p64, %p65
    %p67 = scmp.ne.s32.totalorder %s59, %s62
    %p68 = scmp.eq.s32.totalorder %s9, 0
    %p69 = por %p67, %p68
    %p70 = scmp.ne.s32.totalorder %s59, %s62
    %p71 = scmp.eq.s32.totalorder %s14, 1
    %p72 = por %p70, %p71
    %p73 = scmp.ne.s32.totalorder %s62, %s63
    %p74 = scmp.eq.s32.totalorder %s14, 0
    %p75 = por %p73, %p74
    %p76 = scmp.ne.s32.totalorder %s62, %s63
    %p77 = scmp.eq.s32.totalorder %s15, 1
    %p78 = por %p76, %p77
    %p80 = scmp.ne.s32.totalorder %s63, %s79
    %p81 = scmp.eq.s32.totalorder %s15, 0
    %p82 = por %p80, %p81
    %s83 = ssub.s32 %s16, %s28
    %p84 = scmp.eq.s32.totalorder %s83, 0
    %s86 = sadd.s32 %s85, 1
    %s87 = scalar_select %p84, %s85, %s86
    %p90 = pneg %p84
    %p91 = scmp.eq.s32.totalorder %s9, 1
    %p92 = por %p90, %p91
    %p93 = scmp.ne.s32.totalorder %s85, %s88
    %p94 = scmp.eq.s32.totalorder %s9, 0
    %p95 = por %p93, %p94
    %p96 = scmp.ne.s32.totalorder %s85, %s88
    %p97 = scmp.eq.s32.totalorder %s14, 1
    %p98 = por %p96, %p97
    %p99 = scmp.ne.s32.totalorder %s88, %s89
    %p100 = scmp.eq.s32.totalorder %s14, 0
    %p101 = por %p99, %p100
    %p102 = scmp.ne.s32.totalorder %s88, %s89
    %p103 = scmp.eq.s32.totalorder %s15, 1
    %p104 = por %p102, %p103
    %p106 = scmp.ne.s32.totalorder %s89, %s105
    %p107 = scmp.eq.s32.totalorder %s15, 0
    %p108 = por %p106, %p107
    %s109 = ssub.s32 %s16, %s28
    %p110 = scmp.eq.s32.totalorder %s109, 0
    %s112 = sadd.s32 %s111, 1
    %s113 = scalar_select %p110, %s111, %s112
    %p116 = pneg %p110
    %p117 = scmp.eq.s32.totalorder %s9, 1
    %p118 = por %p116, %p117
    %p119 = scmp.ne.s32.totalorder %s111, %s114
    %p120 = scmp.eq.s32.totalorder %s9, 0
    %p121 = por %p119, %p120
    %p122 = scmp.ne.s32.totalorder %s111, %s114
    %p123 = scmp.eq.s32.totalorder %s14, 1
    %p124 = por %p122, %p123
    %p125 = scmp.ne.s32.totalorder %s114, %s115
    %p126 = scmp.eq.s32.totalorder %s14, 0
    %p127 = por %p125, %p126
    %p128 = scmp.ne.s32.totalorder %s114, %s115
    %p129 = scmp.eq.s32.totalorder %s15, 1
    %p130 = por %p128, %p129
    %p132 = scmp.ne.s32.totalorder %s115, %s131
    %p133 = scmp.eq.s32.totalorder %s15, 0
    %p134 = por %p132, %p133
    %p135 = scmp.le.s32.totalorder 1, %s9
    %p136 = scmp.lt.s32.totalorder %s9, 3
    %p137 = pnand %p135, %p136
    %p138 = pneg %p137
    // Predicated region
    $region9: #{_lambda_.22} parent=5 // pred_check
      _
    $region10: #{_lambda_.22} parent=5 // pred_check_branch
      %140 = sbr.rel (%p137) target = $region12
    $region11: #{_lambda_.22} parent=5 // pred_region
      %s141 = ssub.s32 %s9, 1
      // Predicated region
      $region13: #{_lambda_.22} parent=11 // pred_check
        %p142 = pneg %p75
      $region14: #{_lambda_.22} parent=11 // pred_check_branch
        %144 = sbr.rel (%p142) target = $region16
      $region15: #{_lambda_.22} parent=11 // pred_region
        %s145 = smul.u32 36, %s19
        %p146 = scmp.lt.s32.totalorder %s145, 35
        %s147 = scalar_select %p146, %s145, 35
        %s148 = smul.addr %s147, 4
        %s149 = scalar_lea.vmem %s1, %s148
        %s150 = smul.u32 36, %s19
      $region16: #{_lambda_.22} parent=11 // pred_fallthru
        _
    $region12: #{_lambda_.22} parent=5 // pred_fallthru
      _
    %p151 = scmp.lt.s32.totalorder %s9, 2
    // Predicated region
    $region17: #{_lambda_.22} parent=5 // pred_check
      %p152 = pneg %p151
    $region18: #{_lambda_.22} parent=5 // pred_check_branch
      %154 = sbr.rel (%p152) target = $region20
    $region19: #{_lambda_.22} parent=5 // pred_region
      // Predicated region
      $region21: #{_lambda_.22} parent=19 // pred_check
        %p155 = pneg %p43
      $region22: #{_lambda_.22} parent=19 // pred_check_branch
        %157 = sbr.rel (%p155) target = $region24
      $region23: #{_lambda_.22} parent=19 // pred_region
        %s158 = smul.u32 32, %s16
        %s159 = smul.u32 3, %s17
        %p160 = scmp.lt.s32.totalorder %s158, 63
        %s161 = scalar_select %p160, %s158, 63
        %p162 = scmp.lt.s32.totalorder %s159, 2
        %s163 = scalar_select %p162, %s159, 2
        %s164 = smul.addr %s161, 3
        %s165 = sadd.s32 %s163, %s164
        %s166 = smul.addr %s165, 4
        %s167 = scalar_lea.vmem %s0, %s166
        %s168 = smul.u32 32, %s16
        %s169 = smul.u32 3, %s17
      $region24: #{_lambda_.22} parent=19 // pred_fallthru
        _
      // Predicated region
      $region25: #{_lambda_.22} parent=19 // pred_check
        %p170 = pneg %p95
      $region26: #{_lambda_.22} parent=19 // pred_check_branch
        %172 = sbr.rel (%p170) target = $region28
      $region27: #{_lambda_.22} parent=19 // pred_region
        %s173 = smul.u32 32, %s16
        %p174 = scmp.lt.s32.totalorder %s173, 63
        %s175 = scalar_select %p174, %s173, 63
        %s176 = smul.addr %s175, 8
        %s177 = scalar_lea.vmem %s2, %s176
        %s178 = smul.u32 32, %s16
      $region28: #{_lambda_.22} parent=19 // pred_fallthru
        _
    $region20: #{_lambda_.22} parent=5 // pred_fallthru
      _
    %p179 = scmp.le.s32.totalorder 1, %s9
    %p180 = scmp.lt.s32.totalorder %s9, 3
    %p181 = pnand %p179, %p180
    %p182 = pneg %p181
    // Predicated region
    $region29: #{_lambda_.22} parent=5 // pred_check
      _
    $region30: #{_lambda_.22} parent=5 // pred_check_branch
      %184 = sbr.rel (%p181) target = $region32
    $region31: #{_lambda_.22} parent=5 // pred_region
      %s185 = ssub.s32 %s9, 1
      %s186 = smul.u32 32, %s18
      %s187 = smul.u32 3, %s19
      %p188 = scmp.lt.s32.totalorder %s186, 63
      %s189 = scalar_select %p188, %s186, 63
      %p190 = scmp.lt.s32.totalorder %s187, 2
      %s191 = scalar_select %p190, %s187, 2
      %s192 = smul.addr %s189, 3
      %s193 = sadd.s32 %s191, %s192
      %s194 = smul.addr %s193, 4
      %s195 = scalar_lea.vmem %s0, %s194
      %p196 = pneg %p49
      %p197 = pneg %p46
      %s198 = smul.u32 36, %s19
      %p199 = scmp.lt.s32.totalorder %s198, 35
      %s200 = scalar_select %p199, %s198, 35
      %s201 = smul.addr %s200, 4
      %s202 = scalar_lea.vmem %s1, %s201
      %p203 = pneg %p75
      %p204 = pneg %p72
      %s205 = smul.u32 32, %s18
      %p206 = scmp.lt.s32.totalorder %s205, 63
      %s207 = scalar_select %p206, %s205, 63
      %s208 = smul.addr %s207, 8
      %s209 = scalar_lea.vmem %s2, %s208
      %p210 = pneg %p101
      %p211 = pneg %p98
      %p212 = pneg %p127
      %p213 = pneg %p124
      %s214 = smul.u32 32, %s18
      %p215 = scmp.lt.s32.totalorder %s214, 63
      %s216 = scalar_select %p215, %s214, 63
      %s217 = smul.addr %s216, 8
      %s218 = scalar_lea.vmem %s3, %s217
      %s219 = smul.u32 32, %s18
      %s220 = smul.u32 3, %s19
      %p221 = scmp.lt.s32.totalorder %s219, 63
      %s222 = scalar_select %p221, %s219, 63
      %p223 = scmp.lt.s32.totalorder %s220, 2
      %s224 = scalar_select %p223, %s220, 2
      %s225 = smul.addr %s222, 3
      %s226 = sadd.s32 %s224, %s225
      %s227 = smul.addr %s226, 4
      %s228 = scalar_lea.vmem %s0, %s227
      %s229 = smul.u32 32, %s18
      %s230 = smul.u32 3, %s19
      %s231 = smul.u32 36, %s19
      %p232 = scmp.lt.s32.totalorder %s231, 35
      %s233 = scalar_select %p232, %s231, 35
      %s234 = smul.addr %s233, 4
      %s235 = scalar_lea.vmem %s1, %s234
      %s236 = smul.u32 36, %s19
      %s237 = smul.u32 32, %s18
      %p238 = scmp.lt.s32.totalorder %s237, 63
      %s239 = scalar_select %p238, %s237, 63
      %s240 = smul.addr %s239, 8
      %s241 = scalar_lea.vmem %s2, %s240
      %s242 = smul.u32 32, %s18
      %s243 = smul.u32 32, %s18
      %p244 = scmp.lt.s32.totalorder %s243, 63
      %s245 = scalar_select %p244, %s243, 63
      %s246 = smul.addr %s245, 8
      %s247 = scalar_lea.vmem %s3, %s246
      %s248 = smul.u32 32, %s18
      %p250 = scmp.eq.s32.totalorder %s19, 0
      // Predicated region
      $region33: #{_lambda_.22} parent=31 // pred_check
        %p251 = pneg %p250
      $region34: #{_lambda_.22} parent=31 // pred_check_branch
        %253 = sbr.rel (%p251) target = $region36
      $region35: #{_lambda_.22} parent=31 // pred_region
        %vm254 = vcmask 261120
        %255 = vst.msk [vmem:[#allocation2] sm:$0xff] %vm254, 0.0
        %256 = vst.msk [vmem:[#allocation2 + $0x8] sm:$0xff] %vm254, 0.0
        %257 = vst.msk [vmem:[#allocation2 + $0x10] sm:$0xff] %vm254, 0.0
        %258 = vst.msk [vmem:[#allocation2 + $0x18] sm:$0xff] %vm254, 0.0
        %259 = vst.msk [vmem:[#allocation2 + $0x20] sm:$0xff] %vm254, 0.0
        %260 = vst.msk [vmem:[#allocation2 + $0x28] sm:$0xff] %vm254, 0.0
        %261 = vst.msk [vmem:[#allocation2 + $0x30] sm:$0xff] %vm254, 0.0
        %262 = vst.msk [vmem:[#allocation2 + $0x38] sm:$0xff] %vm254, 0.0
        %263 = vst.msk [vmem:[#allocation2 + $0x40] sm:$0xff] %vm254, 0.0
        %264 = vst.msk [vmem:[#allocation2 + $0x48] sm:$0xff] %vm254, 0.0
        %265 = vst.msk [vmem:[#allocation2 + $0x50] sm:$0xff] %vm254, 0.0
        %266 = vst.msk [vmem:[#allocation2 + $0x58] sm:$0xff] %vm254, 0.0
        %267 = vst.msk [vmem:[#allocation2 + $0x60] sm:$0xff] %vm254, 0.0
        %268 = vst.msk [vmem:[#allocation2 + $0x68] sm:$0xff] %vm254, 0.0
        %269 = vst.msk [vmem:[#allocation2 + $0x70] sm:$0xff] %vm254, 0.0
        %270 = vst.msk [vmem:[#allocation2 + $0x78] sm:$0xff] %vm254, 0.0
        %271 = vst.msk [vmem:[#allocation2 + $0x80] sm:$0xff] %vm254, 0.0
        %272 = vst.msk [vmem:[#allocation2 + $0x88] sm:$0xff] %vm254, 0.0
        %273 = vst.msk [vmem:[#allocation2 + $0x90] sm:$0xff] %vm254, 0.0
        %274 = vst.msk [vmem:[#allocation2 + $0x98] sm:$0xff] %vm254, 0.0
        %275 = vst.msk [vmem:[#allocation2 + $0xa0] sm:$0xff] %vm254, 0.0
        %276 = vst.msk [vmem:[#allocation2 + $0xa8] sm:$0xff] %vm254, 0.0
        %277 = vst.msk [vmem:[#allocation2 + $0xb0] sm:$0xff] %vm254, 0.0
        %278 = vst.msk [vmem:[#allocation2 + $0xb8] sm:$0xff] %vm254, 0.0
        %279 = vst.msk [vmem:[#allocation2 + $0xc0] sm:$0xff] %vm254, 0.0
        %280 = vst.msk [vmem:[#allocation2 + $0xc8] sm:$0xff] %vm254, 0.0
        %281 = vst.msk [vmem:[#allocation2 + $0xd0] sm:$0xff] %vm254, 0.0
        %282 = vst.msk [vmem:[#allocation2 + $0xd8] sm:$0xff] %vm254, 0.0
        %283 = vst.msk [vmem:[#allocation2 + $0xe0] sm:$0xff] %vm254, 0.0
        %284 = vst.msk [vmem:[#allocation2 + $0xe8] sm:$0xff] %vm254, 0.0
        %285 = vst.msk [vmem:[#allocation2 + $0xf0] sm:$0xff] %vm254, 0.0
        %286 = vst.msk [vmem:[#allocation2 + $0xf8] sm:$0xff] %vm254, 0.0
      $region36: #{_lambda_.22} parent=31 // pred_fallthru
        _
      %v287 = vld [vmem:[#allocation2] sm:$0xff]
      %v288 = vld [vmem:[#allocation2 + $0x8] sm:$0xff]
      %v289 = vld [vmem:[#allocation2 + $0x10] sm:$0xff]
      %v290 = vld [vmem:[#allocation2 + $0x18] sm:$0xff]
      %v291 = vld [vmem:[#allocation2 + $0x20] sm:$0xff]
      %v292 = vld [vmem:[#allocation2 + $0x28] sm:$0xff]
      %v293 = vld [vmem:[#allocation2 + $0x30] sm:$0xff]
      %v294 = vld [vmem:[#allocation2 + $0x38] sm:$0xff]
      %v295 = vld [vmem:[#allocation2 + $0x40] sm:$0xff]
      %v296 = vld [vmem:[#allocation2 + $0x48] sm:$0xff]
      %v297 = vld [vmem:[#allocation2 + $0x50] sm:$0xff]
      %v298 = vld [vmem:[#allocation2 + $0x58] sm:$0xff]
      %v299 = vld [vmem:[#allocation2 + $0x60] sm:$0xff]
      %v300 = vld [vmem:[#allocation2 + $0x68] sm:$0xff]
      %v301 = vld [vmem:[#allocation2 + $0x70] sm:$0xff]
      %v302 = vld [vmem:[#allocation2 + $0x78] sm:$0xff]
      %v303 = vld [vmem:[#allocation2 + $0x80] sm:$0xff]
      %v304 = vld [vmem:[#allocation2 + $0x88] sm:$0xff]
      %v305 = vld [vmem:[#allocation2 + $0x90] sm:$0xff]
      %v306 = vld [vmem:[#allocation2 + $0x98] sm:$0xff]
      %v307 = vld [vmem:[#allocation2 + $0xa0] sm:$0xff]
      %v308 = vld [vmem:[#allocation2 + $0xa8] sm:$0xff]
      %v309 = vld [vmem:[#allocation2 + $0xb0] sm:$0xff]
      %v310 = vld [vmem:[#allocation2 + $0xb8] sm:$0xff]
      %v311 = vld [vmem:[#allocation2 + $0xc0] sm:$0xff]
      %v312 = vld [vmem:[#allocation2 + $0xc8] sm:$0xff]
      %v313 = vld [vmem:[#allocation2 + $0xd0] sm:$0xff]
      %v314 = vld [vmem:[#allocation2 + $0xd8] sm:$0xff]
      %v315 = vld [vmem:[#allocation2 + $0xe0] sm:$0xff]
      %v316 = vld [vmem:[#allocation2 + $0xe8] sm:$0xff]
      %v317 = vld [vmem:[#allocation2 + $0xf0] sm:$0xff]
      %v318 = vld [vmem:[#allocation2 + $0xf8] sm:$0xff]
      %v319 = vld [vmem:[%s228] sm:$0xff]
      %v320 = vld [vmem:[%s228 + $0x8] sm:$0xf]
      %v321 = vld [vmem:[%s228 + $0xc] sm:$0xff]
      %v322 = vld [vmem:[%s228 + $0x14] sm:$0xf]
      %v323 = vld [vmem:[%s228 + $0x18] sm:$0xff]
      %v324 = vld [vmem:[%s228 + $0x20] sm:$0xf]
      %v325 = vld [vmem:[%s228 + $0x24] sm:$0xff]
      %v326 = vld [vmem:[%s228 + $0x2c] sm:$0xf]
      %v327 = vld [vmem:[%s228 + $0x30] sm:$0xff]
      %v328 = vld [vmem:[%s228 + $0x38] sm:$0xf]
      %v329 = vld [vmem:[%s228 + $0x3c] sm:$0xff]
      %v330 = vld [vmem:[%s228 + $0x44] sm:$0xf]
      %v331 = vld [vmem:[%s228 + $0x48] sm:$0xff]
      %v332 = vld [vmem:[%s228 + $0x50] sm:$0xf]
      %v333 = vld [vmem:[%s228 + $0x54] sm:$0xff]
      %v334 = vld [vmem:[%s228 + $0x5c] sm:$0xf]
      %v335 = vld [vmem:[%s228 + $0x60] sm:$0xff]
      %v336 = vld [vmem:[%s228 + $0x68] sm:$0xf]
      %v337 = vld [vmem:[%s228 + $0x6c] sm:$0xff]
      %v338 = vld [vmem:[%s228 + $0x74] sm:$0xf]
      %v339 = vld [vmem:[%s228 + $0x78] sm:$0xff]
      %v340 = vld [vmem:[%s228 + $0x80] sm:$0xf]
      %v341 = vld [vmem:[%s228 + $0x84] sm:$0xff]
      %v342 = vld [vmem:[%s228 + $0x8c] sm:$0xf]
      %v343 = vld [vmem:[%s228 + $0x90] sm:$0xff]
      %v344 = vld [vmem:[%s228 + $0x98] sm:$0xf]
      %v345 = vld [vmem:[%s228 + $0x9c] sm:$0xff]
      %v346 = vld [vmem:[%s228 + $0xa4] sm:$0xf]
      %v347 = vld [vmem:[%s228 + $0xa8] sm:$0xff]
      %v348 = vld [vmem:[%s228 + $0xb0] sm:$0xf]
      %v349 = vld [vmem:[%s228 + $0xb4] sm:$0xff]
      %v350 = vld [vmem:[%s228 + $0xbc] sm:$0xf]
      %v351 = vld [vmem:[%s228 + $0xc0] sm:$0xff]
      %v352 = vld [vmem:[%s228 + $0xc8] sm:$0xf]
      %v353 = vld [vmem:[%s228 + $0xcc] sm:$0xff]
      %v354 = vld [vmem:[%s228 + $0xd4] sm:$0xf]
      %v355 = vld [vmem:[%s228 + $0xd8] sm:$0xff]
      %v356 = vld [vmem:[%s228 + $0xe0] sm:$0xf]
      %v357 = vld [vmem:[%s228 + $0xe4] sm:$0xff]
      %v358 = vld [vmem:[%s228 + $0xec] sm:$0xf]
      %v359 = vld [vmem:[%s228 + $0xf0] sm:$0xff]
      %v360 = vld [vmem:[%s228 + $0xf8] sm:$0xf]
      %v361 = vld [vmem:[%s228 + $0xfc] sm:$0xff]
      %v362 = vld [vmem:[%s228 + $0x104] sm:$0xf]
      %v363 = vld [vmem:[%s228 + $0x108] sm:$0xff]
      %v364 = vld [vmem:[%s228 + $0x110] sm:$0xf]
      %v365 = vld [vmem:[%s228 + $0x114] sm:$0xff]
      %v366 = vld [vmem:[%s228 + $0x11c] sm:$0xf]
      %v367 = vld [vmem:[%s228 + $0x120] sm:$0xff]
      %v368 = vld [vmem:[%s228 + $0x128] sm:$0xf]
      %v369 = vld [vmem:[%s228 + $0x12c] sm:$0xff]
      %v370 = vld [vmem:[%s228 + $0x134] sm:$0xf]
      %v371 = vld [vmem:[%s228 + $0x138] sm:$0xff]
      %v372 = vld [vmem:[%s228 + $0x140] sm:$0xf]
      %v373 = vld [vmem:[%s228 + $0x144] sm:$0xff]
      %v374 = vld [vmem:[%s228 + $0x14c] sm:$0xf]
      %v375 = vld [vmem:[%s228 + $0x150] sm:$0xff]
      %v376 = vld [vmem:[%s228 + $0x158] sm:$0xf]
      %v377 = vld [vmem:[%s228 + $0x15c] sm:$0xff]
      %v378 = vld [vmem:[%s228 + $0x164] sm:$0xf]
      %v379 = vld [vmem:[%s228 + $0x168] sm:$0xff]
      %v380 = vld [vmem:[%s228 + $0x170] sm:$0xf]
      %v381 = vld [vmem:[%s228 + $0x174] sm:$0xff]
      %v382 = vld [vmem:[%s228 + $0x17c] sm:$0xf]
      %v383 = vld [vmem:[%s235] sm:$0xf]
      %v384 = vld [vmem:[%s235 + $0x4] sm:$0xf]
      %v385 = vld [vmem:[%s235 + $0x8] sm:$0xf]
      %v386 = vld [vmem:[%s235 + $0xc] sm:$0xf]
      %v387 = vld [vmem:[%s235 + $0x10] sm:$0xf]
      %v388 = vld [vmem:[%s235 + $0x14] sm:$0xf]
      %v389 = vld [vmem:[%s235 + $0x18] sm:$0xf]
      %v390 = vld [vmem:[%s235 + $0x1c] sm:$0xf]
      %v391 = vld [vmem:[%s235 + $0x20] sm:$0xf]
      %v392 = vld [vmem:[%s235 + $0x24] sm:$0xf]
      %v393 = vld [vmem:[%s235 + $0x28] sm:$0xf]
      %v394 = vld [vmem:[%s235 + $0x2c] sm:$0xf]
      %v395 = vld [vmem:[%s235 + $0x30] sm:$0xf]
      %v396 = vld [vmem:[%s235 + $0x34] sm:$0xf]
      %v397 = vld [vmem:[%s235 + $0x38] sm:$0xf]
      %v398 = vld [vmem:[%s235 + $0x3c] sm:$0xf]
      %v399 = vld [vmem:[%s235 + $0x40] sm:$0xf]
      %v400 = vld [vmem:[%s235 + $0x44] sm:$0xf]
      %v401 = vld [vmem:[%s235 + $0x48] sm:$0xf]
      %v402 = vld [vmem:[%s235 + $0x4c] sm:$0xf]
      %v403 = vld [vmem:[%s235 + $0x50] sm:$0xf]
      %v404 = vld [vmem:[%s235 + $0x54] sm:$0xf]
      %v405 = vld [vmem:[%s235 + $0x58] sm:$0xf]
      %v406 = vld [vmem:[%s235 + $0x5c] sm:$0xf]
      %v407 = vld [vmem:[%s235 + $0x60] sm:$0xf]
      %v408 = vld [vmem:[%s235 + $0x64] sm:$0xf]
      %v409 = vld [vmem:[%s235 + $0x68] sm:$0xf]
      %v410 = vld [vmem:[%s235 + $0x6c] sm:$0xf]
      %v411 = vld [vmem:[%s235 + $0x70] sm:$0xf]
      %v412 = vld [vmem:[%s235 + $0x74] sm:$0xf]
      %v413 = vld [vmem:[%s235 + $0x78] sm:$0xf]
      %v414 = vld [vmem:[%s235 + $0x7c] sm:$0xf]
      %v415 = vld [vmem:[%s235 + $0x80] sm:$0xf]
      %v416 = vld [vmem:[%s235 + $0x84] sm:$0xf]
      %v417 = vld [vmem:[%s235 + $0x88] sm:$0xf]
      %v418 = vld [vmem:[%s235 + $0x8c] sm:$0xf]
      %v483 = vunpack.c.l.b16 %v319
      %v484 = vunpack.c.h.b16 %v319
      %v485 = vunpack.c.l.b16 %v320
      %v486 = vunpack.c.l.b16 %v321
      %v487 = vunpack.c.h.b16 %v321
      %v488 = vunpack.c.l.b16 %v322
      %v489 = vunpack.c.l.b16 %v323
      %v490 = vunpack.c.h.b16 %v323
      %v491 = vunpack.c.l.b16 %v324
      %v492 = vunpack.c.l.b16 %v325
      %v493 = vunpack.c.h.b16 %v325
      %v494 = vunpack.c.l.b16 %v326
      %v495 = vunpack.c.l.b16 %v327
      %v496 = vunpack.c.h.b16 %v327
      %v497 = vunpack.c.l.b16 %v328
      %v498 = vunpack.c.l.b16 %v329
      %v499 = vunpack.c.h.b16 %v329
      %v500 = vunpack.c.l.b16 %v330
      %v501 = vunpack.c.l.b16 %v331
      %v502 = vunpack.c.h.b16 %v331
      %v503 = vunpack.c.l.b16 %v332
      %v504 = vunpack.c.l.b16 %v333
      %v505 = vunpack.c.h.b16 %v333
      %v506 = vunpack.c.l.b16 %v334
      %v507 = vunpack.c.l.b16 %v335
      %v508 = vunpack.c.h.b16 %v335
      %v509 = vunpack.c.l.b16 %v336
      %v510 = vunpack.c.l.b16 %v337
      %v511 = vunpack.c.h.b16 %v337
      %v512 = vunpack.c.l.b16 %v338
      %v513 = vunpack.c.l.b16 %v339
      %v514 = vunpack.c.h.b16 %v339
      %v515 = vunpack.c.l.b16 %v340
      %v516 = vunpack.c.l.b16 %v341
      %v517 = vunpack.c.h.b16 %v341
      %v518 = vunpack.c.l.b16 %v342
      %v519 = vunpack.c.l.b16 %v343
      %v520 = vunpack.c.h.b16 %v343
      %v521 = vunpack.c.l.b16 %v344
      %v522 = vunpack.c.l.b16 %v345
      %v523 = vunpack.c.h.b16 %v345
      %v524 = vunpack.c.l.b16 %v346
      %v525 = vunpack.c.l.b16 %v347
      %v526 = vunpack.c.h.b16 %v347
      %v527 = vunpack.c.l.b16 %v348
      %v528 = vunpack.c.l.b16 %v349
      %v529 = vunpack.c.h.b16 %v349
      %v530 = vunpack.c.l.b16 %v350
      %v531 = vunpack.c.l.b16 %v351
      %v532 = vunpack.c.h.b16 %v351
      %v533 = vunpack.c.l.b16 %v352
      %v534 = vunpack.c.l.b16 %v353
      %v535 = vunpack.c.h.b16 %v353
      %v536 = vunpack.c.l.b16 %v354
      %v537 = vunpack.c.l.b16 %v355
      %v538 = vunpack.c.h.b16 %v355
      %v539 = vunpack.c.l.b16 %v356
      %v540 = vunpack.c.l.b16 %v357
      %v541 = vunpack.c.h.b16 %v357
      %v542 = vunpack.c.l.b16 %v358
      %v543 = vunpack.c.l.b16 %v359
      %v544 = vunpack.c.h.b16 %v359
      %v545 = vunpack.c.l.b16 %v360
      %v546 = vunpack.c.l.b16 %v361
      %v547 = vunpack.c.h.b16 %v361
      %v548 = vunpack.c.l.b16 %v362
      %v549 = vunpack.c.l.b16 %v363
      %v550 = vunpack.c.h.b16 %v363
      %v551 = vunpack.c.l.b16 %v364
      %v552 = vunpack.c.l.b16 %v365
      %v553 = vunpack.c.h.b16 %v365
      %v554 = vunpack.c.l.b16 %v366
      %v555 = vunpack.c.l.b16 %v367
      %v556 = vunpack.c.h.b16 %v367
      %v557 = vunpack.c.l.b16 %v368
      %v558 = vunpack.c.l.b16 %v369
      %v559 = vunpack.c.h.b16 %v369
      %v560 = vunpack.c.l.b16 %v370
      %v561 = vunpack.c.l.b16 %v371
      %v562 = vunpack.c.h.b16 %v371
      %v563 = vunpack.c.l.b16 %v372
      %v564 = vunpack.c.l.b16 %v373
      %v565 = vunpack.c.h.b16 %v373
      %v566 = vunpack.c.l.b16 %v374
      %v567 = vunpack.c.l.b16 %v375
      %v568 = vunpack.c.h.b16 %v375
      %v569 = vunpack.c.l.b16 %v376
      %v570 = vunpack.c.l.b16 %v377
      %v571 = vunpack.c.h.b16 %v377
      %v572 = vunpack.c.l.b16 %v378
      %v573 = vunpack.c.l.b16 %v379
      %v574 = vunpack.c.h.b16 %v379
      %v575 = vunpack.c.l.b16 %v380
      %v576 = vunpack.c.l.b16 %v381
      %v577 = vunpack.c.h.b16 %v381
      %v578 = vunpack.c.l.b16 %v382
      %v579 = vpack.c.b16 %v486, %v483
      %v580 = vpack.c.b16 %v487, %v484
      %v581 = vpack.c.b16 %v488, %v485
      %v582 = vpack.c.b16 %v492, %v489
      %v583 = vpack.c.b16 %v493, %v490
      %v584 = vpack.c.b16 %v494, %v491
      %v585 = vpack.c.b16 %v498, %v495
      %v586 = vpack.c.b16 %v499, %v496
      %v587 = vpack.c.b16 %v500, %v497
      %v588 = vpack.c.b16 %v504, %v501
      %v589 = vpack.c.b16 %v505, %v502
      %v590 = vpack.c.b16 %v506, %v503
      %v591 = vpack.c.b16 %v510, %v507
      %v592 = vpack.c.b16 %v511, %v508
      %v593 = vpack.c.b16 %v512, %v509
      %v594 = vpack.c.b16 %v516, %v513
      %v595 = vpack.c.b16 %v517, %v514
      %v596 = vpack.c.b16 %v518, %v515
      %v597 = vpack.c.b16 %v522, %v519
      %v598 = vpack.c.b16 %v523, %v520
      %v599 = vpack.c.b16 %v524, %v521
      %v600 = vpack.c.b16 %v528, %v525
      %v601 = vpack.c.b16 %v529, %v526
      %v602 = vpack.c.b16 %v530, %v527
      %v603 = vpack.c.b16 %v534, %v531
      %v604 = vpack.c.b16 %v535, %v532
      %v605 = vpack.c.b16 %v536, %v533
      %v606 = vpack.c.b16 %v540, %v537
      %v607 = vpack.c.b16 %v541, %v538
      %v608 = vpack.c.b16 %v542, %v539
      %v609 = vpack.c.b16 %v546, %v543
      %v610 = vpack.c.b16 %v547, %v544
      %v611 = vpack.c.b16 %v548, %v545
      %v612 = vpack.c.b16 %v552, %v549
      %v613 = vpack.c.b16 %v553, %v550
      %v614 = vpack.c.b16 %v554, %v551
      %v615 = vpack.c.b16 %v558, %v555
      %v616 = vpack.c.b16 %v559, %v556
      %v617 = vpack.c.b16 %v560, %v557
      %v618 = vpack.c.b16 %v564, %v561
      %v619 = vpack.c.b16 %v565, %v562
      %v620 = vpack.c.b16 %v566, %v563
      %v621 = vpack.c.b16 %v570, %v567
      %v622 = vpack.c.b16 %v571, %v568
      %v623 = vpack.c.b16 %v572, %v569
      %v624 = vpack.c.b16 %v576, %v573
      %v625 = vpack.c.b16 %v577, %v574
      %v626 = vpack.c.b16 %v578, %v575
      %v695 = vunpack.c.l.b16 %v383
      %v696 = vunpack.c.l.b16 %v384
      %v697 = vunpack.c.l.b16 %v385
      %v698 = vunpack.c.l.b16 %v386
      %v699 = vunpack.c.l.b16 %v387
      %v700 = vunpack.c.l.b16 %v388
      %v701 = vunpack.c.l.b16 %v389
      %v702 = vunpack.c.l.b16 %v390
      %v703 = vunpack.c.l.b16 %v391
      %v704 = vunpack.c.l.b16 %v392
      %v705 = vunpack.c.l.b16 %v393
      %v706 = vunpack.c.l.b16 %v394
      %v707 = vunpack.c.l.b16 %v395
      %v708 = vunpack.c.l.b16 %v396
      %v709 = vunpack.c.l.b16 %v397
      %v710 = vunpack.c.l.b16 %v398
      %v711 = vunpack.c.l.b16 %v399
      %v712 = vunpack.c.l.b16 %v400
      %v713 = vunpack.c.l.b16 %v401
      %v714 = vunpack.c.l.b16 %v402
      %v715 = vunpack.c.l.b16 %v403
      %v716 = vunpack.c.l.b16 %v404
      %v717 = vunpack.c.l.b16 %v405
      %v718 = vunpack.c.l.b16 %v406
      %v719 = vunpack.c.l.b16 %v407
      %v720 = vunpack.c.l.b16 %v408
      %v721 = vunpack.c.l.b16 %v409
      %v722 = vunpack.c.l.b16 %v410
      %v723 = vunpack.c.l.b16 %v411
      %v724 = vunpack.c.l.b16 %v412
      %v725 = vunpack.c.l.b16 %v413
      %v726 = vunpack.c.l.b16 %v414
      %v727 = vunpack.c.l.b16 %v415
      %v728 = vunpack.c.l.b16 %v416
      %v729 = vunpack.c.l.b16 %v417
      %v730 = vunpack.c.l.b16 %v418
      %v731 = vpack.c.b16 %v696, %v695
      %v732 = vpack.c.b16 %v698, %v697
      %v733 = vpack.c.b16 %v700, %v699
      %v734 = vpack.c.b16 %v702, %v701
      %v735 = vpack.c.b16 %v704, %v703
      %v736 = vpack.c.b16 %v706, %v705
      %v737 = vpack.c.b16 %v708, %v707
      %v738 = vpack.c.b16 %v710, %v709
      %v739 = vpack.c.b16 %v712, %v711
      %v740 = vpack.c.b16 %v714, %v713
      %v741 = vpack.c.b16 %v716, %v715
      %v742 = vpack.c.b16 %v718, %v717
      %v743 = vpack.c.b16 %v720, %v719
      %v744 = vpack.c.b16 %v722, %v721
      %v745 = vpack.c.b16 %v724, %v723
      %v746 = vpack.c.b16 %v726, %v725
      %v747 = vpack.c.b16 %v728, %v727
      %v748 = vpack.c.b16 %v730, %v729
      %vm767 = vcmask 261120
      %v769 = vsel %vm767, %v581, 0
      %v772 = vsel %vm767, %v584, 0
      %v775 = vsel %vm767, %v587, 0
      %v778 = vsel %vm767, %v590, 0
      %v781 = vsel %vm767, %v593, 0
      %v784 = vsel %vm767, %v596, 0
      %v787 = vsel %vm767, %v599, 0
      %v790 = vsel %vm767, %v602, 0
      %v793 = vsel %vm767, %v605, 0
      %v796 = vsel %vm767, %v608, 0
      %v799 = vsel %vm767, %v611, 0
      %v802 = vsel %vm767, %v614, 0
      %v805 = vsel %vm767, %v617, 0
      %v808 = vsel %vm767, %v620, 0
      %v811 = vsel %vm767, %v623, 0
      %v814 = vsel %vm767, %v626, 0
      %816 = vmatpush.bf16.msra.mxu0 %v738
      %817 = vmatpush.bf16.msra.mxu0 %v737
      %818 = vmatpush.bf16.msra.mxu0 %v736
      %819 = vmatpush.bf16.msra.mxu0 %v735
      %820 = vmatpush.bf16.msra.mxu0 %v734
      %821 = vmatpush.bf16.msra.mxu0 %v733
      %822 = vmatpush.bf16.msra.mxu0 %v732
      %823 = vmatpush.bf16.msra.mxu0 %v731
      %824 = vmatmul.bf16.gmra.mxu0 %v579
      %v825 = vpop.f32.mrf.mxu0
      %v826 = vadd.f32 0.0, %v825
      %v827 = vpop.f32.mrf.mxu0
      %v828 = vadd.f32 0.0, %v827
      %829 = vmatmul.bf16.gmra.mxu0 %v582
      %v830 = vpop.f32.mrf.mxu0
      %v831 = vadd.f32 0.0, %v830
      %v832 = vpop.f32.mrf.mxu0
      %v833 = vadd.f32 0.0, %v832
      %834 = vmatmul.bf16.gmra.mxu0 %v585
      %v835 = vpop.f32.mrf.mxu0
      %v836 = vadd.f32 0.0, %v835
      %v837 = vpop.f32.mrf.mxu0
      %v838 = vadd.f32 0.0, %v837
      %839 = vmatmul.bf16.gmra.mxu0 %v588
      %v840 = vpop.f32.mrf.mxu0
      %v841 = vadd.f32 0.0, %v840
      %v842 = vpop.f32.mrf.mxu0
      %v843 = vadd.f32 0.0, %v842
      %844 = vmatmul.bf16.gmra.mxu0 %v591
      %v845 = vpop.f32.mrf.mxu0
      %v846 = vadd.f32 0.0, %v845
      %v847 = vpop.f32.mrf.mxu0
      %v848 = vadd.f32 0.0, %v847
      %849 = vmatmul.bf16.gmra.mxu0 %v594
      %v850 = vpop.f32.mrf.mxu0
      %v851 = vadd.f32 0.0, %v850
      %v852 = vpop.f32.mrf.mxu0
      %v853 = vadd.f32 0.0, %v852
      %854 = vmatmul.bf16.gmra.mxu0 %v597
      %v855 = vpop.f32.mrf.mxu0
      %v856 = vadd.f32 0.0, %v855
      %v857 = vpop.f32.mrf.mxu0
      %v858 = vadd.f32 0.0, %v857
      %859 = vmatmul.bf16.gmra.mxu0 %v600
      %v860 = vpop.f32.mrf.mxu0
      %v861 = vadd.f32 0.0, %v860
      %v862 = vpop.f32.mrf.mxu0
      %v863 = vadd.f32 0.0, %v862
      %864 = vmatmul.bf16.gmra.mxu0 %v603
      %v865 = vpop.f32.mrf.mxu0
      %v866 = vadd.f32 0.0, %v865
      %v867 = vpop.f32.mrf.mxu0
      %v868 = vadd.f32 0.0, %v867
      %869 = vmatmul.bf16.gmra.mxu0 %v606
      %v870 = vpop.f32.mrf.mxu0
      %v871 = vadd.f32 0.0, %v870
      %v872 = vpop.f32.mrf.mxu0
      %v873 = vadd.f32 0.0, %v872
      %874 = vmatmul.bf16.gmra.mxu0 %v609
      %v875 = vpop.f32.mrf.mxu0
      %v876 = vadd.f32 0.0, %v875
      %v877 = vpop.f32.mrf.mxu0
      %v878 = vadd.f32 0.0, %v877
      %879 = vmatmul.bf16.gmra.mxu0 %v612
      %v880 = vpop.f32.mrf.mxu0
      %v881 = vadd.f32 0.0, %v880
      %v882 = vpop.f32.mrf.mxu0
      %v883 = vadd.f32 0.0, %v882
      %884 = vmatmul.bf16.gmra.mxu0 %v615
      %v885 = vpop.f32.mrf.mxu0
      %v886 = vadd.f32 0.0, %v885
      %v887 = vpop.f32.mrf.mxu0
      %v888 = vadd.f32 0.0, %v887
      %889 = vmatmul.bf16.gmra.mxu0 %v618
      %v890 = vpop.f32.mrf.mxu0
      %v891 = vadd.f32 0.0, %v890
      %v892 = vpop.f32.mrf.mxu0
      %v893 = vadd.f32 0.0, %v892
      %894 = vmatmul.bf16.gmra.mxu0 %v621
      %v895 = vpop.f32.mrf.mxu0
      %v896 = vadd.f32 0.0, %v895
      %v897 = vpop.f32.mrf.mxu0
      %v898 = vadd.f32 0.0, %v897
      %899 = vmatmul.bf16.gmra.mxu0 %v624
      %v900 = vpop.f32.mrf.mxu0
      %v901 = vadd.f32 0.0, %v900
      %v902 = vpop.f32.mrf.mxu0
      %v903 = vadd.f32 0.0, %v902
      %904 = vdwg.mxu0
      %905 = vmatpush.bf16.msra.mxu0 %v746
      %906 = vmatpush.bf16.msra.mxu0 %v745
      %907 = vmatpush.bf16.msra.mxu0 %v744
      %908 = vmatpush.bf16.msra.mxu0 %v743
      %909 = vmatpush.bf16.msra.mxu0 %v742
      %910 = vmatpush.bf16.msra.mxu0 %v741
      %911 = vmatpush.bf16.msra.mxu0 %v740
      %912 = vmatpush.bf16.msra.mxu0 %v739
      %913 = vmatmul.bf16.gmra.mxu0 %v580
      %v914 = vpop.f32.mrf.mxu0
      %v915 = vadd.f32 %v826, %v914
      %v916 = vpop.f32.mrf.mxu0
      %v917 = vadd.f32 %v828, %v916
      %918 = vmatmul.bf16.gmra.mxu0 %v583
      %v919 = vpop.f32.mrf.mxu0
      %v920 = vadd.f32 %v831, %v919
      %v921 = vpop.f32.mrf.mxu0
      %v922 = vadd.f32 %v833, %v921
      %923 = vmatmul.bf16.gmra.mxu0 %v586
      %v924 = vpop.f32.mrf.mxu0
      %v925 = vadd.f32 %v836, %v924
      %v926 = vpop.f32.mrf.mxu0
      %v927 = vadd.f32 %v838, %v926
      %928 = vmatmul.bf16.gmra.mxu0 %v589
      %v929 = vpop.f32.mrf.mxu0
      %v930 = vadd.f32 %v841, %v929
      %v931 = vpop.f32.mrf.mxu0
      %v932 = vadd.f32 %v843, %v931
      %933 = vmatmul.bf16.gmra.mxu0 %v592
      %v934 = vpop.f32.mrf.mxu0
      %v935 = vadd.f32 %v846, %v934
      %v936 = vpop.f32.mrf.mxu0
      %v937 = vadd.f32 %v848, %v936
      %938 = vmatmul.bf16.gmra.mxu0 %v595
      %v939 = vpop.f32.mrf.mxu0
      %v940 = vadd.f32 %v851, %v939
      %v941 = vpop.f32.mrf.mxu0
      %v942 = vadd.f32 %v853, %v941
      %943 = vmatmul.bf16.gmra.mxu0 %v598
      %v944 = vpop.f32.mrf.mxu0
      %v945 = vadd.f32 %v856, %v944
      %v946 = vpop.f32.mrf.mxu0
      %v947 = vadd.f32 %v858, %v946
      %948 = vmatmul.bf16.gmra.mxu0 %v601
      %v949 = vpop.f32.mrf.mxu0
      %v950 = vadd.f32 %v861, %v949
      %v951 = vpop.f32.mrf.mxu0
      %v952 = vadd.f32 %v863, %v951
      %953 = vmatmul.bf16.gmra.mxu0 %v604
      %v954 = vpop.f32.mrf.mxu0
      %v955 = vadd.f32 %v866, %v954
      %v956 = vpop.f32.mrf.mxu0
      %v957 = vadd.f32 %v868, %v956
      %958 = vmatmul.bf16.gmra.mxu0 %v607
      %v959 = vpop.f32.mrf.mxu0
      %v960 = vadd.f32 %v871, %v959
      %v961 = vpop.f32.mrf.mxu0
      %v962 = vadd.f32 %v873, %v961
      %963 = vmatmul.bf16.gmra.mxu0 %v610
      %v964 = vpop.f32.mrf.mxu0
      %v965 = vadd.f32 %v876, %v964
      %v966 = vpop.f32.mrf.mxu0
      %v967 = vadd.f32 %v878, %v966
      %968 = vmatmul.bf16.gmra.mxu0 %v613
      %v969 = vpop.f32.mrf.mxu0
      %v970 = vadd.f32 %v881, %v969
      %v971 = vpop.f32.mrf.mxu0
      %v972 = vadd.f32 %v883, %v971
      %973 = vmatmul.bf16.gmra.mxu0 %v616
      %v974 = vpop.f32.mrf.mxu0
      %v975 = vadd.f32 %v886, %v974
      %v976 = vpop.f32.mrf.mxu0
      %v977 = vadd.f32 %v888, %v976
      %978 = vmatmul.bf16.gmra.mxu0 %v619
      %v979 = vpop.f32.mrf.mxu0
      %v980 = vadd.f32 %v891, %v979
      %v981 = vpop.f32.mrf.mxu0
      %v982 = vadd.f32 %v893, %v981
      %983 = vmatmul.bf16.gmra.mxu0 %v622
      %v984 = vpop.f32.mrf.mxu0
      %v985 = vadd.f32 %v896, %v984
      %v986 = vpop.f32.mrf.mxu0
      %v987 = vadd.f32 %v898, %v986
      %988 = vmatmul.bf16.gmra.mxu0 %v625
      %v989 = vpop.f32.mrf.mxu0
      %v990 = vadd.f32 %v901, %v989
      %v991 = vpop.f32.mrf.mxu0
      %v992 = vadd.f32 %v903, %v991
      %993 = vdwg.mxu0
      %994 = vmatpush.bf16.msra.mxu0 0
      %995 = vmatpush.bf16.msra.mxu0 0
      %996 = vmatpush.bf16.msra.mxu0 0
      %997 = vmatpush.bf16.msra.mxu0 0
      %998 = vmatpush.bf16.msra.mxu0 0
      %999 = vmatpush.bf16.msra.mxu0 0
      %1000 = vmatpush.bf16.msra.mxu0 %v748
      %1001 = vmatpush.bf16.msra.mxu0 %v747
      %1002 = vmatmul.bf16.gmra.mxu0 %v769
      %v1003 = vpop.f32.mrf.mxu0
      %v1004 = vadd.f32 %v915, %v1003
      %v1005 = vpop.f32.mrf.mxu0
      %v1006 = vadd.f32 %v917, %v1005
      %1007 = vmatmul.bf16.gmra.mxu0 %v772
      %v1008 = vpop.f32.mrf.mxu0
      %v1009 = vadd.f32 %v920, %v1008
      %v1010 = vpop.f32.mrf.mxu0
      %v1011 = vadd.f32 %v922, %v1010
      %1012 = vmatmul.bf16.gmra.mxu0 %v775
      %v1013 = vpop.f32.mrf.mxu0
      %v1014 = vadd.f32 %v925, %v1013
      %v1015 = vpop.f32.mrf.mxu0
      %v1016 = vadd.f32 %v927, %v1015
      %1017 = vmatmul.bf16.gmra.mxu0 %v778
      %v1018 = vpop.f32.mrf.mxu0
      %v1019 = vadd.f32 %v930, %v1018
      %v1020 = vpop.f32.mrf.mxu0
      %v1021 = vadd.f32 %v932, %v1020
      %1022 = vmatmul.bf16.gmra.mxu0 %v781
      %v1023 = vpop.f32.mrf.mxu0
      %v1024 = vadd.f32 %v935, %v1023
      %v1025 = vpop.f32.mrf.mxu0
      %v1026 = vadd.f32 %v937, %v1025
      %1027 = vmatmul.bf16.gmra.mxu0 %v784
      %v1028 = vpop.f32.mrf.mxu0
      %v1029 = vadd.f32 %v940, %v1028
      %v1030 = vpop.f32.mrf.mxu0
      %v1031 = vadd.f32 %v942, %v1030
      %1032 = vmatmul.bf16.gmra.mxu0 %v787
      %v1033 = vpop.f32.mrf.mxu0
      %v1034 = vadd.f32 %v945, %v1033
      %v1035 = vpop.f32.mrf.mxu0
      %v1036 = vadd.f32 %v947, %v1035
      %1037 = vmatmul.bf16.gmra.mxu0 %v790
      %v1038 = vpop.f32.mrf.mxu0
      %v1039 = vadd.f32 %v950, %v1038
      %v1040 = vpop.f32.mrf.mxu0
      %v1041 = vadd.f32 %v952, %v1040
      %1042 = vmatmul.bf16.gmra.mxu0 %v793
      %v1043 = vpop.f32.mrf.mxu0
      %v1044 = vadd.f32 %v955, %v1043
      %v1045 = vpop.f32.mrf.mxu0
      %v1046 = vadd.f32 %v957, %v1045
      %1047 = vmatmul.bf16.gmra.mxu0 %v796
      %v1048 = vpop.f32.mrf.mxu0
      %v1049 = vadd.f32 %v960, %v1048
      %v1050 = vpop.f32.mrf.mxu0
      %v1051 = vadd.f32 %v962, %v1050
      %1052 = vmatmul.bf16.gmra.mxu0 %v799
      %v1053 = vpop.f32.mrf.mxu0
      %v1054 = vadd.f32 %v965, %v1053
      %v1055 = vpop.f32.mrf.mxu0
      %v1056 = vadd.f32 %v967, %v1055
      %1057 = vmatmul.bf16.gmra.mxu0 %v802
      %v1058 = vpop.f32.mrf.mxu0
      %v1059 = vadd.f32 %v970, %v1058
      %v1060 = vpop.f32.mrf.mxu0
      %v1061 = vadd.f32 %v972, %v1060
      %1062 = vmatmul.bf16.gmra.mxu0 %v805
      %v1063 = vpop.f32.mrf.mxu0
      %v1064 = vadd.f32 %v975, %v1063
      %v1065 = vpop.f32.mrf.mxu0
      %v1066 = vadd.f32 %v977, %v1065
      %1067 = vmatmul.bf16.gmra.mxu0 %v808
      %v1068 = vpop.f32.mrf.mxu0
      %v1069 = vadd.f32 %v980, %v1068
      %v1070 = vpop.f32.mrf.mxu0
      %v1071 = vadd.f32 %v982, %v1070
      %1072 = vmatmul.bf16.gmra.mxu0 %v811
      %v1073 = vpop.f32.mrf.mxu0
      %v1074 = vadd.f32 %v985, %v1073
      %v1075 = vpop.f32.mrf.mxu0
      %v1076 = vadd.f32 %v987, %v1075
      %1077 = vmatmul.bf16.gmra.mxu0 %v814
      %v1078 = vpop.f32.mrf.mxu0
      %v1079 = vadd.f32 %v990, %v1078
      %v1080 = vpop.f32.mrf.mxu0
      %v1081 = vadd.f32 %v992, %v1080
      %1082 = vdwg.mxu0
      %v1083 = vadd.f32 %v287, %v1004
      %v1084 = vadd.f32 %v288, %v1006
      %v1085 = vadd.f32 %v289, %v1009
      %v1086 = vadd.f32 %v290, %v1011
      %v1087 = vadd.f32 %v291, %v1014
      %v1088 = vadd.f32 %v292, %v1016
      %v1089 = vadd.f32 %v293, %v1019
      %v1090 = vadd.f32 %v294, %v1021
      %v1091 = vadd.f32 %v295, %v1024
      %v1092 = vadd.f32 %v296, %v1026
      %v1093 = vadd.f32 %v297, %v1029
      %v1094 = vadd.f32 %v298, %v1031
      %v1095 = vadd.f32 %v299, %v1034
      %v1096 = vadd.f32 %v300, %v1036
      %v1097 = vadd.f32 %v301, %v1039
      %v1098 = vadd.f32 %v302, %v1041
      %v1099 = vadd.f32 %v303, %v1044
      %v1100 = vadd.f32 %v304, %v1046
      %v1101 = vadd.f32 %v305, %v1049
      %v1102 = vadd.f32 %v306, %v1051
      %v1103 = vadd.f32 %v307, %v1054
      %v1104 = vadd.f32 %v308, %v1056
      %v1105 = vadd.f32 %v309, %v1059
      %v1106 = vadd.f32 %v310, %v1061
      %v1107 = vadd.f32 %v311, %v1064
      %v1108 = vadd.f32 %v312, %v1066
      %v1109 = vadd.f32 %v313, %v1069
      %v1110 = vadd.f32 %v314, %v1071
      %v1111 = vadd.f32 %v315, %v1074
      %v1112 = vadd.f32 %v316, %v1076
      %v1113 = vadd.f32 %v317, %v1079
      %v1114 = vadd.f32 %v318, %v1081
      %1115 = vst.msk [vmem:[#allocation2] sm:$0xff] %vm767, %v1083
      %1116 = vst.msk [vmem:[#allocation2 + $0x8] sm:$0xff] %vm767, %v1084
      %1117 = vst.msk [vmem:[#allocation2 + $0x10] sm:$0xff] %vm767, %v1085
      %1118 = vst.msk [vmem:[#allocation2 + $0x18] sm:$0xff] %vm767, %v1086
      %1119 = vst.msk [vmem:[#allocation2 + $0x20] sm:$0xff] %vm767, %v1087
      %1120 = vst.msk [vmem:[#allocation2 + $0x28] sm:$0xff] %vm767, %v1088
      %1121 = vst.msk [vmem:[#allocation2 + $0x30] sm:$0xff] %vm767, %v1089
      %1122 = vst.msk [vmem:[#allocation2 + $0x38] sm:$0xff] %vm767, %v1090
      %1123 = vst.msk [vmem:[#allocation2 + $0x40] sm:$0xff] %vm767, %v1091
      %1124 = vst.msk [vmem:[#allocation2 + $0x48] sm:$0xff] %vm767, %v1092
      %1125 = vst.msk [vmem:[#allocation2 + $0x50] sm:$0xff] %vm767, %v1093
      %1126 = vst.msk [vmem:[#allocation2 + $0x58] sm:$0xff] %vm767, %v1094
      %1127 = vst.msk [vmem:[#allocation2 + $0x60] sm:$0xff] %vm767, %v1095
      %1128 = vst.msk [vmem:[#allocation2 + $0x68] sm:$0xff] %vm767, %v1096
      %1129 = vst.msk [vmem:[#allocation2 + $0x70] sm:$0xff] %vm767, %v1097
      %1130 = vst.msk [vmem:[#allocation2 + $0x78] sm:$0xff] %vm767, %v1098
      %1131 = vst.msk [vmem:[#allocation2 + $0x80] sm:$0xff] %vm767, %v1099
      %1132 = vst.msk [vmem:[#allocation2 + $0x88] sm:$0xff] %vm767, %v1100
      %1133 = vst.msk [vmem:[#allocation2 + $0x90] sm:$0xff] %vm767, %v1101
      %1134 = vst.msk [vmem:[#allocation2 + $0x98] sm:$0xff] %vm767, %v1102
      %1135 = vst.msk [vmem:[#allocation2 + $0xa0] sm:$0xff] %vm767, %v1103
      %1136 = vst.msk [vmem:[#allocation2 + $0xa8] sm:$0xff] %vm767, %v1104
      %1137 = vst.msk [vmem:[#allocation2 + $0xb0] sm:$0xff] %vm767, %v1105
      %1138 = vst.msk [vmem:[#allocation2 + $0xb8] sm:$0xff] %vm767, %v1106
      %1139 = vst.msk [vmem:[#allocation2 + $0xc0] sm:$0xff] %vm767, %v1107
      %1140 = vst.msk [vmem:[#allocation2 + $0xc8] sm:$0xff] %vm767, %v1108
      %1141 = vst.msk [vmem:[#allocation2 + $0xd0] sm:$0xff] %vm767, %v1109
      %1142 = vst.msk [vmem:[#allocation2 + $0xd8] sm:$0xff] %vm767, %v1110
      %1143 = vst.msk [vmem:[#allocation2 + $0xe0] sm:$0xff] %vm767, %v1111
      %1144 = vst.msk [vmem:[#allocation2 + $0xe8] sm:$0xff] %vm767, %v1112
      %1145 = vst.msk [vmem:[#allocation2 + $0xf0] sm:$0xff] %vm767, %v1113
      %1146 = vst.msk [vmem:[#allocation2 + $0xf8] sm:$0xff] %vm767, %v1114
      // Predicated region
      $region37: #{_lambda_.22} parent=31 // pred_check
        %p1147 = pneg %p250
      $region38: #{_lambda_.22} parent=31 // pred_check_branch
        %1149 = sbr.rel (%p1147) target = $region40
      $region39: #{_lambda_.22} parent=31 // pred_region
        %v1150 = vld [vmem:[#allocation2] sm:$0xff]
        %v1151 = vld [vmem:[#allocation2 + $0x8] sm:$0xff]
        %v1152 = vld [vmem:[#allocation2 + $0x10] sm:$0xff]
        %v1153 = vld [vmem:[#allocation2 + $0x18] sm:$0xff]
        %v1154 = vld [vmem:[#allocation2 + $0x20] sm:$0xff]
        %v1155 = vld [vmem:[#allocation2 + $0x28] sm:$0xff]
        %v1156 = vld [vmem:[#allocation2 + $0x30] sm:$0xff]
        %v1157 = vld [vmem:[#allocation2 + $0x38] sm:$0xff]
        %v1158 = vld [vmem:[#allocation2 + $0x40] sm:$0xff]
        %v1159 = vld [vmem:[#allocation2 + $0x48] sm:$0xff]
        %v1160 = vld [vmem:[#allocation2 + $0x50] sm:$0xff]
        %v1161 = vld [vmem:[#allocation2 + $0x58] sm:$0xff]
        %v1162 = vld [vmem:[#allocation2 + $0x60] sm:$0xff]
        %v1163 = vld [vmem:[#allocation2 + $0x68] sm:$0xff]
        %v1164 = vld [vmem:[#allocation2 + $0x70] sm:$0xff]
        %v1165 = vld [vmem:[#allocation2 + $0x78] sm:$0xff]
        %v1166 = vld [vmem:[#allocation2 + $0x80] sm:$0xff]
        %v1167 = vld [vmem:[#allocation2 + $0x88] sm:$0xff]
        %v1168 = vld [vmem:[#allocation2 + $0x90] sm:$0xff]
        %v1169 = vld [vmem:[#allocation2 + $0x98] sm:$0xff]
        %v1170 = vld [vmem:[#allocation2 + $0xa0] sm:$0xff]
        %v1171 = vld [vmem:[#allocation2 + $0xa8] sm:$0xff]
        %v1172 = vld [vmem:[#allocation2 + $0xb0] sm:$0xff]
        %v1173 = vld [vmem:[#allocation2 + $0xb8] sm:$0xff]
        %v1174 = vld [vmem:[#allocation2 + $0xc0] sm:$0xff]
        %v1175 = vld [vmem:[#allocation2 + $0xc8] sm:$0xff]
        %v1176 = vld [vmem:[#allocation2 + $0xd0] sm:$0xff]
        %v1177 = vld [vmem:[#allocation2 + $0xd8] sm:$0xff]
        %v1178 = vld [vmem:[#allocation2 + $0xe0] sm:$0xff]
        %v1179 = vld [vmem:[#allocation2 + $0xe8] sm:$0xff]
        %v1180 = vld [vmem:[#allocation2 + $0xf0] sm:$0xff]
        %v1181 = vld [vmem:[#allocation2 + $0xf8] sm:$0xff]
        %v1182 = vld [vmem:[%s241] sm:$0xff]
        %v1183 = vld [vmem:[%s241 + $0x8] sm:$0xff]
        %v1184 = vld [vmem:[%s241 + $0x10] sm:$0xff]
        %v1185 = vld [vmem:[%s241 + $0x18] sm:$0xff]
        %v1186 = vld [vmem:[%s241 + $0x20] sm:$0xff]
        %v1187 = vld [vmem:[%s241 + $0x28] sm:$0xff]
        %v1188 = vld [vmem:[%s241 + $0x30] sm:$0xff]
        %v1189 = vld [vmem:[%s241 + $0x38] sm:$0xff]
        %v1190 = vld [vmem:[%s241 + $0x40] sm:$0xff]
        %v1191 = vld [vmem:[%s241 + $0x48] sm:$0xff]
        %v1192 = vld [vmem:[%s241 + $0x50] sm:$0xff]
        %v1193 = vld [vmem:[%s241 + $0x58] sm:$0xff]
        %v1194 = vld [vmem:[%s241 + $0x60] sm:$0xff]
        %v1195 = vld [vmem:[%s241 + $0x68] sm:$0xff]
        %v1196 = vld [vmem:[%s241 + $0x70] sm:$0xff]
        %v1197 = vld [vmem:[%s241 + $0x78] sm:$0xff]
        %v1198 = vld [vmem:[%s241 + $0x80] sm:$0xff]
        %v1199 = vld [vmem:[%s241 + $0x88] sm:$0xff]
        %v1200 = vld [vmem:[%s241 + $0x90] sm:$0xff]
        %v1201 = vld [vmem:[%s241 + $0x98] sm:$0xff]
        %v1202 = vld [vmem:[%s241 + $0xa0] sm:$0xff]
        %v1203 = vld [vmem:[%s241 + $0xa8] sm:$0xff]
        %v1204 = vld [vmem:[%s241 + $0xb0] sm:$0xff]
        %v1205 = vld [vmem:[%s241 + $0xb8] sm:$0xff]
        %v1206 = vld [vmem:[%s241 + $0xc0] sm:$0xff]
        %v1207 = vld [vmem:[%s241 + $0xc8] sm:$0xff]
        %v1208 = vld [vmem:[%s241 + $0xd0] sm:$0xff]
        %v1209 = vld [vmem:[%s241 + $0xd8] sm:$0xff]
        %v1210 = vld [vmem:[%s241 + $0xe0] sm:$0xff]
        %v1211 = vld [vmem:[%s241 + $0xe8] sm:$0xff]
        %v1212 = vld [vmem:[%s241 + $0xf0] sm:$0xff]
        %v1213 = vld [vmem:[%s241 + $0xf8] sm:$0xff]
        %v1214 = vadd.f32 %v1150, %v1182
        %v1215 = vadd.f32 %v1151, %v1183
        %v1216 = vadd.f32 %v1152, %v1184
        %v1217 = vadd.f32 %v1153, %v1185
        %v1218 = vadd.f32 %v1154, %v1186
        %v1219 = vadd.f32 %v1155, %v1187
        %v1220 = vadd.f32 %v1156, %v1188
        %v1221 = vadd.f32 %v1157, %v1189
        %v1222 = vadd.f32 %v1158, %v1190
        %v1223 = vadd.f32 %v1159, %v1191
        %v1224 = vadd.f32 %v1160, %v1192
        %v1225 = vadd.f32 %v1161, %v1193
        %v1226 = vadd.f32 %v1162, %v1194
        %v1227 = vadd.f32 %v1163, %v1195
        %v1228 = vadd.f32 %v1164, %v1196
        %v1229 = vadd.f32 %v1165, %v1197
        %v1230 = vadd.f32 %v1166, %v1198
        %v1231 = vadd.f32 %v1167, %v1199
        %v1232 = vadd.f32 %v1168, %v1200
        %v1233 = vadd.f32 %v1169, %v1201
        %v1234 = vadd.f32 %v1170, %v1202
        %v1235 = vadd.f32 %v1171, %v1203
        %v1236 = vadd.f32 %v1172, %v1204
        %v1237 = vadd.f32 %v1173, %v1205
        %v1238 = vadd.f32 %v1174, %v1206
        %v1239 = vadd.f32 %v1175, %v1207
        %v1240 = vadd.f32 %v1176, %v1208
        %v1241 = vadd.f32 %v1177, %v1209
        %v1242 = vadd.f32 %v1178, %v1210
        %v1243 = vadd.f32 %v1179, %v1211
        %v1244 = vadd.f32 %v1180, %v1212
        %v1245 = vadd.f32 %v1181, %v1213
        %1246 = vst.msk [vmem:[%s247] sm:$0xff] %vm767, %v1214
        %1247 = vst.msk [vmem:[%s247 + $0x8] sm:$0xff] %vm767, %v1215
        %1248 = vst.msk [vmem:[%s247 + $0x10] sm:$0xff] %vm767, %v1216
        %1249 = vst.msk [vmem:[%s247 + $0x18] sm:$0xff] %vm767, %v1217
        %1250 = vst.msk [vmem:[%s247 + $0x20] sm:$0xff] %vm767, %v1218
        %1251 = vst.msk [vmem:[%s247 + $0x28] sm:$0xff] %vm767, %v1219
        %1252 = vst.msk [vmem:[%s247 + $0x30] sm:$0xff] %vm767, %v1220
        %1253 = vst.msk [vmem:[%s247 + $0x38] sm:$0xff] %vm767, %v1221
        %1254 = vst.msk [vmem:[%s247 + $0x40] sm:$0xff] %vm767, %v1222
        %1255 = vst.msk [vmem:[%s247 + $0x48] sm:$0xff] %vm767, %v1223
        %1256 = vst.msk [vmem:[%s247 + $0x50] sm:$0xff] %vm767, %v1224
        %1257 = vst.msk [vmem:[%s247 + $0x58] sm:$0xff] %vm767, %v1225
        %1258 = vst.msk [vmem:[%s247 + $0x60] sm:$0xff] %vm767, %v1226
        %1259 = vst.msk [vmem:[%s247 + $0x68] sm:$0xff] %vm767, %v1227
        %1260 = vst.msk [vmem:[%s247 + $0x70] sm:$0xff] %vm767, %v1228
        %1261 = vst.msk [vmem:[%s247 + $0x78] sm:$0xff] %vm767, %v1229
        %1262 = vst.msk [vmem:[%s247 + $0x80] sm:$0xff] %vm767, %v1230
        %1263 = vst.msk [vmem:[%s247 + $0x88] sm:$0xff] %vm767, %v1231
        %1264 = vst.msk [vmem:[%s247 + $0x90] sm:$0xff] %vm767, %v1232
        %1265 = vst.msk [vmem:[%s247 + $0x98] sm:$0xff] %vm767, %v1233
        %1266 = vst.msk [vmem:[%s247 + $0xa0] sm:$0xff] %vm767, %v1234
        %1267 = vst.msk [vmem:[%s247 + $0xa8] sm:$0xff] %vm767, %v1235
        %1268 = vst.msk [vmem:[%s247 + $0xb0] sm:$0xff] %vm767, %v1236
        %1269 = vst.msk [vmem:[%s247 + $0xb8] sm:$0xff] %vm767, %v1237
        %1270 = vst.msk [vmem:[%s247 + $0xc0] sm:$0xff] %vm767, %v1238
        %1271 = vst.msk [vmem:[%s247 + $0xc8] sm:$0xff] %vm767, %v1239
        %1272 = vst.msk [vmem:[%s247 + $0xd0] sm:$0xff] %vm767, %v1240
        %1273 = vst.msk [vmem:[%s247 + $0xd8] sm:$0xff] %vm767, %v1241
        %1274 = vst.msk [vmem:[%s247 + $0xe0] sm:$0xff] %vm767, %v1242
        %1275 = vst.msk [vmem:[%s247 + $0xe8] sm:$0xff] %vm767, %v1243
        %1276 = vst.msk [vmem:[%s247 + $0xf0] sm:$0xff] %vm767, %v1244
        %1277 = vst.msk [vmem:[%s247 + $0xf8] sm:$0xff] %vm767, %v1245
      $region40: #{_lambda_.22} parent=31 // pred_fallthru
        _
      %s1278 = smul.u32 32, %s18
      %p1279 = scmp.lt.s32.totalorder %s1278, 63
      %s1280 = scalar_select %p1279, %s1278, 63
      %s1281 = smul.addr %s1280, 8
      %s1282 = scalar_lea.vmem %s3, %s1281
      // Predicated region
      $region41: #{_lambda_.22} parent=31 // pred_check
        %p1283 = pneg %p124
      $region42: #{_lambda_.22} parent=31 // pred_check_branch
        %1285 = sbr.rel (%p1283) target = $region44
      $region43: #{_lambda_.22} parent=31 // pred_region
        %s1286 = smul.u32 32, %s18
      $region44: #{_lambda_.22} parent=31 // pred_fallthru
        _
    $region32: #{_lambda_.22} parent=5 // pred_fallthru
      _
    %p1287 = scmp.le.s32.totalorder 2, %s9
    // Predicated region
    $region45: #{_lambda_.22} parent=5 // pred_check
      %p1288 = pneg %p1287
    $region46: #{_lambda_.22} parent=5 // pred_check_branch
      %1290 = sbr.rel (%p1288) target = $region48
    $region47: #{_lambda_.22} parent=5 // pred_region
      %s1291 = ssub.s32 %s9, 2
      // Predicated region
      $region49: #{_lambda_.22} parent=47 // pred_check
        %p1292 = pneg %p130
      $region50: #{_lambda_.22} parent=47 // pred_check_branch
        %1294 = sbr.rel (%p1292) target = $region52
      $region51: #{_lambda_.22} parent=47 // pred_region
        %s1295 = smul.u32 32, %s20
        %p1296 = scmp.lt.s32.totalorder %s1295, 63
        %s1297 = scalar_select %p1296, %s1295, 63
        %s1298 = smul.addr %s1297, 8
        %s1299 = scalar_lea.vmem %s3, %s1298
      $region52: #{_lambda_.22} parent=47 // pred_fallthru
        _
    $region48: #{_lambda_.22} parent=5 // pred_fallthru
      _
  $region6: #{_lambda_.22} parent=0 // loop_footer
    %s13 = sadd.s32 1, %s9
  $region7: #{_lambda_.22} parent=0 // loop_footer_branch
    %8 = sbr.rel target = $region3
  $region8: #{_lambda_.22} parent=0 // loop_exit
    _

// kernel: _lambda_.25
$region0: #{_lambda_.25}
  #allocation0 [shape = 'u32[]', space=smem, size = 0x4, offset = 0x4, fixed_abs, tag = 'smem constant byte address 0x4 - core index']
  #allocation1 [shape = 'u32[72,128]{1,0:T(1,128)}', space=vmem, size = 0x9000, scoped, tag = 'internal scratch']
  #allocation2 [shape = 'f32[64,64]{1,0:T(8,128)}', space=vmem, size = 0x8000, scoped, tag = 'scratch operand']
  %s0 = inlined_call_operand.vmem [shape: bf16[128,288], index: 0, kind: input, shape index: {}]
  %s1 = inlined_call_operand.vmem [shape: bf16[288,64], index: 1, kind: input, shape index: {}]
  %s2 = inlined_call_operand.vmem [shape: f32[128,64], index: 2, kind: output, shape index: {}]
  %s3 = sld [smem:[#allocation0]]
  $region49: #{_lambda_.25} parent=0
    _
  %s5 = ssub.s32 1, %s3
  %s6 = scalar_select 0, %s5, %s3
  loop: start=0, step=1, limit=4
  $region2: #{_lambda_.25} parent=0 // loop_pre_header
    _
  $region3: #{_lambda_.25} parent=0 // loop_header
    %s8 = sphi 0, %s12
    %p9 = scmp.ge.s32.totalorder %s8, 4
    %s15 = sphi 0, %s27
    %s16 = sphi 0, %s23
    %s17 = sphi 0, %s15
    %s18 = sphi 0, %s16
    %s19 = sphi 0, %s17
    %s20 = sphi 0, %s18
    %s32 = sphi 0, %s34
    %s35 = sphi 0, %s32
    %s36 = sphi 0, %s35
    %s52 = sphi 0, %s36
    %s58 = sphi 0, %s60
    %s61 = sphi 0, %s58
    %s62 = sphi 0, %s61
    %s78 = sphi 0, %s62
    %s84 = sphi 0, %s86
    %s87 = sphi 0, %s84
    %s88 = sphi 0, %s87
    %s104 = sphi 0, %s88
  $region4: #{_lambda_.25} parent=0 // loop_header_branch
    %11 = sbr.rel (%p9) target = $region8
  $region5: #{_lambda_.25} parent=0 // loop_body
    %s13 = ssub.s32 %s8, 1
    %s14 = ssub.s32 %s8, 2
    %s21 = sadd.s32 1, %s16
    %p22 = scmp.ge.s32.totalorder %s21, 1
    %s23 = scalar_select %p22, 0, %s21
    %s24 = sadd.s32 1, %s15
    %s25 = scalar_select %p22, %s24, %s15
    %p26 = scmp.ge.s32.totalorder %s25, 2
    %s27 = scalar_select %p26, 0, %s25
    %s28 = ssub.s32 %s15, %s27
    %s29 = ssub.s32 %s16, %s23
    %s30 = sor.u32 %s28, %s29
    %p31 = scmp.eq.s32.totalorder %s30, 0
    %s33 = sadd.s32 %s32, 1
    %s34 = scalar_select %p31, %s32, %s33
    %p37 = pneg %p31
    %p38 = scmp.eq.s32.totalorder %s8, 1
    %p39 = por %p37, %p38
    %p40 = scmp.ne.s32.totalorder %s32, %s35
    %p41 = scmp.eq.s32.totalorder %s8, 0
    %p42 = por %p40, %p41
    %p43 = scmp.ne.s32.totalorder %s32, %s35
    %p44 = scmp.eq.s32.totalorder %s13, 1
    %p45 = por %p43, %p44
    %p46 = scmp.ne.s32.totalorder %s35, %s36
    %p47 = scmp.eq.s32.totalorder %s13, 0
    %p48 = por %p46, %p47
    %p49 = scmp.ne.s32.totalorder %s35, %s36
    %p50 = scmp.eq.s32.totalorder %s14, 1
    %p51 = por %p49, %p50
    %p53 = scmp.ne.s32.totalorder %s36, %s52
    %p54 = scmp.eq.s32.totalorder %s14, 0
    %p55 = por %p53, %p54
    %s56 = ssub.s32 %s16, %s23
    %p57 = scmp.eq.s32.totalorder %s56, 0
    %s59 = sadd.s32 %s58, 1
    %s60 = scalar_select %p57, %s58, %s59
    %p63 = pneg %p57
    %p64 = scmp.eq.s32.totalorder %s8, 1
    %p65 = por %p63, %p64
    %p66 = scmp.ne.s32.totalorder %s58, %s61
    %p67 = scmp.eq.s32.totalorder %s8, 0
    %p68 = por %p66, %p67
    %p69 = scmp.ne.s32.totalorder %s58, %s61
    %p70 = scmp.eq.s32.totalorder %s13, 1
    %p71 = por %p69, %p70
    %p72 = scmp.ne.s32.totalorder %s61, %s62
    %p73 = scmp.eq.s32.totalorder %s13, 0
    %p74 = por %p72, %p73
    %p75 = scmp.ne.s32.totalorder %s61, %s62
    %p76 = scmp.eq.s32.totalorder %s14, 1
    %p77 = por %p75, %p76
    %p79 = scmp.ne.s32.totalorder %s62, %s78
    %p80 = scmp.eq.s32.totalorder %s14, 0
    %p81 = por %p79, %p80
    %s82 = ssub.s32 %s15, %s27
    %p83 = scmp.eq.s32.totalorder %s82, 0
    %s85 = sadd.s32 %s84, 1
    %s86 = scalar_select %p83, %s84, %s85
    %p89 = pneg %p83
    %p90 = scmp.eq.s32.totalorder %s8, 1
    %p91 = por %p89, %p90
    %p92 = scmp.ne.s32.totalorder %s84, %s87
    %p93 = scmp.eq.s32.totalorder %s8, 0
    %p94 = por %p92, %p93
    %p95 = scmp.ne.s32.totalorder %s84, %s87
    %p96 = scmp.eq.s32.totalorder %s13, 1
    %p97 = por %p95, %p96
    %p98 = scmp.ne.s32.totalorder %s87, %s88
    %p99 = scmp.eq.s32.totalorder %s13, 0
    %p100 = por %p98, %p99
    %p101 = scmp.ne.s32.totalorder %s87, %s88
    %p102 = scmp.eq.s32.totalorder %s14, 1
    %p103 = por %p101, %p102
    %p105 = scmp.ne.s32.totalorder %s88, %s104
    %p106 = scmp.eq.s32.totalorder %s14, 0
    %p107 = por %p105, %p106
    %p108 = scmp.le.s32.totalorder 1, %s8
    %p109 = scmp.lt.s32.totalorder %s8, 3
    %p110 = pnand %p108, %p109
    %p111 = pneg %p110
    // Predicated region
    $region9: #{_lambda_.25} parent=5 // pred_check
      _
    $region10: #{_lambda_.25} parent=5 // pred_check_branch
      %113 = sbr.rel (%p110) target = $region12
    $region11: #{_lambda_.25} parent=5 // pred_region
      %s114 = ssub.s32 %s8, 1
      // Predicated region
      $region13: #{_lambda_.25} parent=11 // pred_check
        %p115 = pneg %p74
      $region14: #{_lambda_.25} parent=11 // pred_check_branch
        %117 = sbr.rel (%p115) target = $region16
      $region15: #{_lambda_.25} parent=11 // pred_region
        %s118 = smul.u32 36, %s18
        %p119 = scmp.lt.s32.totalorder %s118, 35
        %s120 = scalar_select %p119, %s118, 35
        %s121 = smul.addr %s120, 4
        %s122 = scalar_lea.vmem %s1, %s121
        %s123 = smul.u32 36, %s18
      $region16: #{_lambda_.25} parent=11 // pred_fallthru
        _
    $region12: #{_lambda_.25} parent=5 // pred_fallthru
      _
    %p124 = scmp.lt.s32.totalorder %s8, 2
    // Predicated region
    $region17: #{_lambda_.25} parent=5 // pred_check
      %p125 = pneg %p124
    $region18: #{_lambda_.25} parent=5 // pred_check_branch
      %127 = sbr.rel (%p125) target = $region20
    $region19: #{_lambda_.25} parent=5 // pred_region
      // Predicated region
      $region21: #{_lambda_.25} parent=19 // pred_check
        %p128 = pneg %p42
      $region22: #{_lambda_.25} parent=19 // pred_check_branch
        %130 = sbr.rel (%p128) target = $region24
      $region23: #{_lambda_.25} parent=19 // pred_region
        %s131 = smul.u32 8, %s15
        %s132 = smul.u32 3, %s16
        %p133 = scmp.lt.s32.totalorder %s131, 15
        %s134 = scalar_select %p133, %s131, 15
        %p135 = scmp.lt.s32.totalorder %s132, 2
        %s136 = scalar_select %p135, %s132, 2
        %s137 = smul.addr %s134, 3
        %s138 = sadd.s32 %s136, %s137
        %s139 = smul.addr %s138, 4
        %s140 = scalar_lea.vmem %s0, %s139
        %s141 = smul.u32 8, %s15
        %s142 = smul.u32 3, %s16
      $region24: #{_lambda_.25} parent=19 // pred_fallthru
        _
    $region20: #{_lambda_.25} parent=5 // pred_fallthru
      _
    %p143 = scmp.le.s32.totalorder 1, %s8
    %p144 = scmp.lt.s32.totalorder %s8, 3
    %p145 = pnand %p143, %p144
    %p146 = pneg %p145
    // Predicated region
    $region25: #{_lambda_.25} parent=5 // pred_check
      _
    $region26: #{_lambda_.25} parent=5 // pred_check_branch
      %148 = sbr.rel (%p145) target = $region28
    $region27: #{_lambda_.25} parent=5 // pred_region
      %s149 = ssub.s32 %s8, 1
      %s150 = smul.u32 8, %s17
      %s151 = smul.u32 3, %s18
      %p152 = scmp.lt.s32.totalorder %s150, 15
      %s153 = scalar_select %p152, %s150, 15
      %p154 = scmp.lt.s32.totalorder %s151, 2
      %s155 = scalar_select %p154, %s151, 2
      %s156 = smul.addr %s153, 3
      %s157 = sadd.s32 %s155, %s156
      %s158 = smul.addr %s157, 4
      %s159 = scalar_lea.vmem %s0, %s158
      %p160 = pneg %p48
      %p161 = pneg %p45
      %s162 = smul.u32 36, %s18
      %p163 = scmp.lt.s32.totalorder %s162, 35
      %s164 = scalar_select %p163, %s162, 35
      %s165 = smul.addr %s164, 4
      %s166 = scalar_lea.vmem %s1, %s165
      %p167 = pneg %p74
      %p168 = pneg %p71
      %p169 = pneg %p100
      %p170 = pneg %p97
      %s171 = smul.u32 8, %s17
      %p172 = scmp.lt.s32.totalorder %s171, 15
      %s173 = scalar_select %p172, %s171, 15
      %s174 = smul.addr %s173, 8
      %s175 = scalar_lea.vmem %s2, %s174
      %s176 = smul.u32 8, %s17
      %s177 = smul.u32 3, %s18
      %p178 = scmp.lt.s32.totalorder %s176, 15
      %s179 = scalar_select %p178, %s176, 15
      %p180 = scmp.lt.s32.totalorder %s177, 2
      %s181 = scalar_select %p180, %s177, 2
      %s182 = smul.addr %s179, 3
      %s183 = sadd.s32 %s181, %s182
      %s184 = smul.addr %s183, 4
      %s185 = scalar_lea.vmem %s0, %s184
      %s186 = smul.u32 8, %s17
      %s187 = smul.u32 3, %s18
      %s188 = smul.u32 36, %s18
      %p189 = scmp.lt.s32.totalorder %s188, 35
      %s190 = scalar_select %p189, %s188, 35
      %s191 = smul.addr %s190, 4
      %s192 = scalar_lea.vmem %s1, %s191
      %s193 = smul.u32 36, %s18
      %s194 = smul.u32 8, %s17
      %p195 = scmp.lt.s32.totalorder %s194, 15
      %s196 = scalar_select %p195, %s194, 15
      %s197 = smul.addr %s196, 8
      %s198 = scalar_lea.vmem %s2, %s197
      %s199 = smul.u32 8, %s17
      %p201 = scmp.eq.s32.totalorder %s18, 0
      // Predicated region
      $region29: #{_lambda_.25} parent=27 // pred_check
        %p202 = pneg %p201
      $region30: #{_lambda_.25} parent=27 // pred_check_branch
        %204 = sbr.rel (%p202) target = $region32
      $region31: #{_lambda_.25} parent=27 // pred_region
        %vm205 = vcmask 523264
        %206 = vst.msk [vmem:[#allocation2] sm:$0xff] %vm205, 0.0
        %207 = vst.msk [vmem:[#allocation2 + $0x8] sm:$0xff] %vm205, 0.0
        %208 = vst.msk [vmem:[#allocation2 + $0x10] sm:$0xff] %vm205, 0.0
        %209 = vst.msk [vmem:[#allocation2 + $0x18] sm:$0xff] %vm205, 0.0
        %210 = vst.msk [vmem:[#allocation2 + $0x20] sm:$0xff] %vm205, 0.0
        %211 = vst.msk [vmem:[#allocation2 + $0x28] sm:$0xff] %vm205, 0.0
        %212 = vst.msk [vmem:[#allocation2 + $0x30] sm:$0xff] %vm205, 0.0
        %213 = vst.msk [vmem:[#allocation2 + $0x38] sm:$0xff] %vm205, 0.0
      $region32: #{_lambda_.25} parent=27 // pred_fallthru
        _
      %v214 = vld [vmem:[#allocation2] sm:$0xff]
      %v215 = vld [vmem:[#allocation2 + $0x8] sm:$0xff]
      %v216 = vld [vmem:[#allocation2 + $0x10] sm:$0xff]
      %v217 = vld [vmem:[#allocation2 + $0x18] sm:$0xff]
      %v218 = vld [vmem:[#allocation2 + $0x20] sm:$0xff]
      %v219 = vld [vmem:[#allocation2 + $0x28] sm:$0xff]
      %v220 = vld [vmem:[#allocation2 + $0x30] sm:$0xff]
      %v221 = vld [vmem:[#allocation2 + $0x38] sm:$0xff]
      %v222 = vld [vmem:[%s185] sm:$0xff]
      %v223 = vld [vmem:[%s185 + $0x8] sm:$0xf]
      %v224 = vld [vmem:[%s185 + $0xc] sm:$0xff]
      %v225 = vld [vmem:[%s185 + $0x14] sm:$0xf]
      %v226 = vld [vmem:[%s185 + $0x18] sm:$0xff]
      %v227 = vld [vmem:[%s185 + $0x20] sm:$0xf]
      %v228 = vld [vmem:[%s185 + $0x24] sm:$0xff]
      %v229 = vld [vmem:[%s185 + $0x2c] sm:$0xf]
      %v230 = vld [vmem:[%s185 + $0x30] sm:$0xff]
      %v231 = vld [vmem:[%s185 + $0x38] sm:$0xf]
      %v232 = vld [vmem:[%s185 + $0x3c] sm:$0xff]
      %v233 = vld [vmem:[%s185 + $0x44] sm:$0xf]
      %v234 = vld [vmem:[%s185 + $0x48] sm:$0xff]
      %v235 = vld [vmem:[%s185 + $0x50] sm:$0xf]
      %v236 = vld [vmem:[%s185 + $0x54] sm:$0xff]
      %v237 = vld [vmem:[%s185 + $0x5c] sm:$0xf]
      %v238 = vld [vmem:[%s192] sm:$0xf]
      %v239 = vld [vmem:[%s192 + $0x4] sm:$0xf]
      %v240 = vld [vmem:[%s192 + $0x8] sm:$0xf]
      %v241 = vld [vmem:[%s192 + $0xc] sm:$0xf]
      %v242 = vld [vmem:[%s192 + $0x10] sm:$0xf]
      %v243 = vld [vmem:[%s192 + $0x14] sm:$0xf]
      %v244 = vld [vmem:[%s192 + $0x18] sm:$0xf]
      %v245 = vld [vmem:[%s192 + $0x1c] sm:$0xf]
      %v246 = vld [vmem:[%s192 + $0x20] sm:$0xf]
      %v247 = vld [vmem:[%s192 + $0x24] sm:$0xf]
      %v248 = vld [vmem:[%s192 + $0x28] sm:$0xf]
      %v249 = vld [vmem:[%s192 + $0x2c] sm:$0xf]
      %v250 = vld [vmem:[%s192 + $0x30] sm:$0xf]
      %v251 = vld [vmem:[%s192 + $0x34] sm:$0xf]
      %v252 = vld [vmem:[%s192 + $0x38] sm:$0xf]
      %v253 = vld [vmem:[%s192 + $0x3c] sm:$0xf]
      %v254 = vld [vmem:[%s192 + $0x40] sm:$0xf]
      %v255 = vld [vmem:[%s192 + $0x44] sm:$0xf]
      %v256 = vld [vmem:[%s192 + $0x48] sm:$0xf]
      %v257 = vld [vmem:[%s192 + $0x4c] sm:$0xf]
      %v258 = vld [vmem:[%s192 + $0x50] sm:$0xf]
      %v259 = vld [vmem:[%s192 + $0x54] sm:$0xf]
      %v260 = vld [vmem:[%s192 + $0x58] sm:$0xf]
      %v261 = vld [vmem:[%s192 + $0x5c] sm:$0xf]
      %v262 = vld [vmem:[%s192 + $0x60] sm:$0xf]
      %v263 = vld [vmem:[%s192 + $0x64] sm:$0xf]
      %v264 = vld [vmem:[%s192 + $0x68] sm:$0xf]
      %v265 = vld [vmem:[%s192 + $0x6c] sm:$0xf]
      %v266 = vld [vmem:[%s192 + $0x70] sm:$0xf]
      %v267 = vld [vmem:[%s192 + $0x74] sm:$0xf]
      %v268 = vld [vmem:[%s192 + $0x78] sm:$0xf]
      %v269 = vld [vmem:[%s192 + $0x7c] sm:$0xf]
      %v270 = vld [vmem:[%s192 + $0x80] sm:$0xf]
      %v271 = vld [vmem:[%s192 + $0x84] sm:$0xf]
      %v272 = vld [vmem:[%s192 + $0x88] sm:$0xf]
      %v273 = vld [vmem:[%s192 + $0x8c] sm:$0xf]
      %v290 = vunpack.c.l.b16 %v222
      %v291 = vunpack.c.h.b16 %v222
      %v292 = vunpack.c.l.b16 %v223
      %v293 = vunpack.c.l.b16 %v224
      %v294 = vunpack.c.h.b16 %v224
      %v295 = vunpack.c.l.b16 %v225
      %v296 = vunpack.c.l.b16 %v226
      %v297 = vunpack.c.h.b16 %v226
      %v298 = vunpack.c.l.b16 %v227
      %v299 = vunpack.c.l.b16 %v228
      %v300 = vunpack.c.h.b16 %v228
      %v301 = vunpack.c.l.b16 %v229
      %v302 = vunpack.c.l.b16 %v230
      %v303 = vunpack.c.h.b16 %v230
      %v304 = vunpack.c.l.b16 %v231
      %v305 = vunpack.c.l.b16 %v232
      %v306 = vunpack.c.h.b16 %v232
      %v307 = vunpack.c.l.b16 %v233
      %v308 = vunpack.c.l.b16 %v234
      %v309 = vunpack.c.h.b16 %v234
      %v310 = vunpack.c.l.b16 %v235
      %v311 = vunpack.c.l.b16 %v236
      %v312 = vunpack.c.h.b16 %v236
      %v313 = vunpack.c.l.b16 %v237
      %v314 = vpack.c.b16 %v293, %v290
      %v315 = vpack.c.b16 %v294, %v291
      %v316 = vpack.c.b16 %v295, %v292
      %v317 = vpack.c.b16 %v299, %v296
      %v318 = vpack.c.b16 %v300, %v297
      %v319 = vpack.c.b16 %v301, %v298
      %v320 = vpack.c.b16 %v305, %v302
      %v321 = vpack.c.b16 %v306, %v303
      %v322 = vpack.c.b16 %v307, %v304
      %v323 = vpack.c.b16 %v311, %v308
      %v324 = vpack.c.b16 %v312, %v309
      %v325 = vpack.c.b16 %v313, %v310
      %v370 = vunpack.c.l.b16 %v238
      %v371 = vunpack.c.l.b16 %v239
      %v372 = vunpack.c.l.b16 %v240
      %v373 = vunpack.c.l.b16 %v241
      %v374 = vunpack.c.l.b16 %v242
      %v375 = vunpack.c.l.b16 %v243
      %v376 = vunpack.c.l.b16 %v244
      %v377 = vunpack.c.l.b16 %v245
      %v378 = vunpack.c.l.b16 %v246
      %v379 = vunpack.c.l.b16 %v247
      %v380 = vunpack.c.l.b16 %v248
      %v381 = vunpack.c.l.b16 %v249
      %v382 = vunpack.c.l.b16 %v250
      %v383 = vunpack.c.l.b16 %v251
      %v384 = vunpack.c.l.b16 %v252
      %v385 = vunpack.c.l.b16 %v253
      %v386 = vunpack.c.l.b16 %v254
      %v387 = vunpack.c.l.b16 %v255
      %v388 = vunpack.c.l.b16 %v256
      %v389 = vunpack.c.l.b16 %v257
      %v390 = vunpack.c.l.b16 %v258
      %v391 = vunpack.c.l.b16 %v259
      %v392 = vunpack.c.l.b16 %v260
      %v393 = vunpack.c.l.b16 %v261
      %v394 = vunpack.c.l.b16 %v262
      %v395 = vunpack.c.l.b16 %v263
      %v396 = vunpack.c.l.b16 %v264
      %v397 = vunpack.c.l.b16 %v265
      %v398 = vunpack.c.l.b16 %v266
      %v399 = vunpack.c.l.b16 %v267
      %v400 = vunpack.c.l.b16 %v268
      %v401 = vunpack.c.l.b16 %v269
      %v402 = vunpack.c.l.b16 %v270
      %v403 = vunpack.c.l.b16 %v271
      %v404 = vunpack.c.l.b16 %v272
      %v405 = vunpack.c.l.b16 %v273
      %v406 = vpack.c.b16 %v371, %v370
      %v407 = vpack.c.b16 %v373, %v372
      %v408 = vpack.c.b16 %v375, %v374
      %v409 = vpack.c.b16 %v377, %v376
      %v410 = vpack.c.b16 %v379, %v378
      %v411 = vpack.c.b16 %v381, %v380
      %v412 = vpack.c.b16 %v383, %v382
      %v413 = vpack.c.b16 %v385, %v384
      %v414 = vpack.c.b16 %v387, %v386
      %v415 = vpack.c.b16 %v389, %v388
      %v416 = vpack.c.b16 %v391, %v390
      %v417 = vpack.c.b16 %v393, %v392
      %v418 = vpack.c.b16 %v395, %v394
      %v419 = vpack.c.b16 %v397, %v396
      %v420 = vpack.c.b16 %v399, %v398
      %v421 = vpack.c.b16 %v401, %v400
      %v422 = vpack.c.b16 %v403, %v402
      %v423 = vpack.c.b16 %v405, %v404
      %vm442 = vcmask 261120
      %v444 = vsel %vm442, %v316, 0
      %v447 = vsel %vm442, %v319, 0
      %v450 = vsel %vm442, %v322, 0
      %v453 = vsel %vm442, %v325, 0
      %455 = vmatpush.bf16.msra.mxu0 %v413
      %456 = vmatpush.bf16.msra.mxu0 %v412
      %457 = vmatpush.bf16.msra.mxu0 %v411
      %458 = vmatpush.bf16.msra.mxu0 %v410
      %459 = vmatpush.bf16.msra.mxu0 %v409
      %460 = vmatpush.bf16.msra.mxu0 %v408
      %461 = vmatpush.bf16.msra.mxu0 %v407
      %462 = vmatpush.bf16.msra.mxu0 %v406
      %463 = vmatmul.bf16.gmra.mxu0 %v314
      %v464 = vpop.f32.mrf.mxu0
      %v465 = vadd.f32 0.0, %v464
      %v466 = vpop.f32.mrf.mxu0
      %v467 = vadd.f32 0.0, %v466
      %468 = vmatmul.bf16.gmra.mxu0 %v317
      %v469 = vpop.f32.mrf.mxu0
      %v470 = vadd.f32 0.0, %v469
      %v471 = vpop.f32.mrf.mxu0
      %v472 = vadd.f32 0.0, %v471
      %473 = vmatmul.bf16.gmra.mxu0 %v320
      %v474 = vpop.f32.mrf.mxu0
      %v475 = vadd.f32 0.0, %v474
      %v476 = vpop.f32.mrf.mxu0
      %v477 = vadd.f32 0.0, %v476
      %478 = vmatmul.bf16.gmra.mxu0 %v323
      %v479 = vpop.f32.mrf.mxu0
      %v480 = vadd.f32 0.0, %v479
      %v481 = vpop.f32.mrf.mxu0
      %v482 = vadd.f32 0.0, %v481
      %483 = vdwg.mxu0
      %484 = vmatpush.bf16.msra.mxu0 %v421
      %485 = vmatpush.bf16.msra.mxu0 %v420
      %486 = vmatpush.bf16.msra.mxu0 %v419
      %487 = vmatpush.bf16.msra.mxu0 %v418
      %488 = vmatpush.bf16.msra.mxu0 %v417
      %489 = vmatpush.bf16.msra.mxu0 %v416
      %490 = vmatpush.bf16.msra.mxu0 %v415
      %491 = vmatpush.bf16.msra.mxu0 %v414
      %492 = vmatmul.bf16.gmra.mxu0 %v315
      %v493 = vpop.f32.mrf.mxu0
      %v494 = vadd.f32 %v465, %v493
      %v495 = vpop.f32.mrf.mxu0
      %v496 = vadd.f32 %v467, %v495
      %497 = vmatmul.bf16.gmra.mxu0 %v318
      %v498 = vpop.f32.mrf.mxu0
      %v499 = vadd.f32 %v470, %v498
      %v500 = vpop.f32.mrf.mxu0
      %v501 = vadd.f32 %v472, %v500
      %502 = vmatmul.bf16.gmra.mxu0 %v321
      %v503 = vpop.f32.mrf.mxu0
      %v504 = vadd.f32 %v475, %v503
      %v505 = vpop.f32.mrf.mxu0
      %v506 = vadd.f32 %v477, %v505
      %507 = vmatmul.bf16.gmra.mxu0 %v324
      %v508 = vpop.f32.mrf.mxu0
      %v509 = vadd.f32 %v480, %v508
      %v510 = vpop.f32.mrf.mxu0
      %v511 = vadd.f32 %v482, %v510
      %512 = vdwg.mxu0
      %513 = vmatpush.bf16.msra.mxu0 0
      %514 = vmatpush.bf16.msra.mxu0 0
      %515 = vmatpush.bf16.msra.mxu0 0
      %516 = vmatpush.bf16.msra.mxu0 0
      %517 = vmatpush.bf16.msra.mxu0 0
      %518 = vmatpush.bf16.msra.mxu0 0
      %519 = vmatpush.bf16.msra.mxu0 %v423
      %520 = vmatpush.bf16.msra.mxu0 %v422
      %521 = vmatmul.bf16.gmra.mxu0 %v444
      %v522 = vpop.f32.mrf.mxu0
      %v523 = vadd.f32 %v494, %v522
      %v524 = vpop.f32.mrf.mxu0
      %v525 = vadd.f32 %v496, %v524
      %526 = vmatmul.bf16.gmra.mxu0 %v447
      %v527 = vpop.f32.mrf.mxu0
      %v528 = vadd.f32 %v499, %v527
      %v529 = vpop.f32.mrf.mxu0
      %v530 = vadd.f32 %v501, %v529
      %531 = vmatmul.bf16.gmra.mxu0 %v450
      %v532 = vpop.f32.mrf.mxu0
      %v533 = vadd.f32 %v504, %v532
      %v534 = vpop.f32.mrf.mxu0
      %v535 = vadd.f32 %v506, %v534
      %536 = vmatmul.bf16.gmra.mxu0 %v453
      %v537 = vpop.f32.mrf.mxu0
      %v538 = vadd.f32 %v509, %v537
      %v539 = vpop.f32.mrf.mxu0
      %v540 = vadd.f32 %v511, %v539
      %541 = vdwg.mxu0
      %v542 = vadd.f32 %v214, %v523
      %v543 = vadd.f32 %v215, %v525
      %v544 = vadd.f32 %v216, %v528
      %v545 = vadd.f32 %v217, %v530
      %v546 = vadd.f32 %v218, %v533
      %v547 = vadd.f32 %v219, %v535
      %v548 = vadd.f32 %v220, %v538
      %v549 = vadd.f32 %v221, %v540
      %vm550 = vcmask 523264
      %551 = vst.msk [vmem:[#allocation2] sm:$0xff] %vm550, %v542
      %552 = vst.msk [vmem:[#allocation2 + $0x8] sm:$0xff] %vm550, %v543
      %553 = vst.msk [vmem:[#allocation2 + $0x10] sm:$0xff] %vm550, %v544
      %554 = vst.msk [vmem:[#allocation2 + $0x18] sm:$0xff] %vm550, %v545
      %555 = vst.msk [vmem:[#allocation2 + $0x20] sm:$0xff] %vm550, %v546
      %556 = vst.msk [vmem:[#allocation2 + $0x28] sm:$0xff] %vm550, %v547
      %557 = vst.msk [vmem:[#allocation2 + $0x30] sm:$0xff] %vm550, %v548
      %558 = vst.msk [vmem:[#allocation2 + $0x38] sm:$0xff] %vm550, %v549
      // Predicated region
      $region33: #{_lambda_.25} parent=27 // pred_check
        %p559 = pneg %p201
      $region34: #{_lambda_.25} parent=27 // pred_check_branch
        %561 = sbr.rel (%p559) target = $region36
      $region35: #{_lambda_.25} parent=27 // pred_region
        %v562 = vld [vmem:[#allocation2] sm:$0xff]
        %v563 = vld [vmem:[#allocation2 + $0x8] sm:$0xff]
        %v564 = vld [vmem:[#allocation2 + $0x10] sm:$0xff]
        %v565 = vld [vmem:[#allocation2 + $0x18] sm:$0xff]
        %v566 = vld [vmem:[#allocation2 + $0x20] sm:$0xff]
        %v567 = vld [vmem:[#allocation2 + $0x28] sm:$0xff]
        %v568 = vld [vmem:[#allocation2 + $0x30] sm:$0xff]
        %v569 = vld [vmem:[#allocation2 + $0x38] sm:$0xff]
        %570 = vst.msk [vmem:[%s198] sm:$0xff] %vm550, %v562
        %571 = vst.msk [vmem:[%s198 + $0x8] sm:$0xff] %vm550, %v563
        %572 = vst.msk [vmem:[%s198 + $0x10] sm:$0xff] %vm550, %v564
        %573 = vst.msk [vmem:[%s198 + $0x18] sm:$0xff] %vm550, %v565
        %574 = vst.msk [vmem:[%s198 + $0x20] sm:$0xff] %vm550, %v566
        %575 = vst.msk [vmem:[%s198 + $0x28] sm:$0xff] %vm550, %v567
        %576 = vst.msk [vmem:[%s198 + $0x30] sm:$0xff] %vm550, %v568
        %577 = vst.msk [vmem:[%s198 + $0x38] sm:$0xff] %vm550, %v569
      $region36: #{_lambda_.25} parent=27 // pred_fallthru
        _
      %s578 = smul.u32 8, %s17
      %p579 = scmp.lt.s32.totalorder %s578, 15
      %s580 = scalar_select %p579, %s578, 15
      %s581 = smul.addr %s580, 8
      %s582 = scalar_lea.vmem %s2, %s581
      // Predicated region
      $region37: #{_lambda_.25} parent=27 // pred_check
        %p583 = pneg %p97
      $region38: #{_lambda_.25} parent=27 // pred_check_branch
        %585 = sbr.rel (%p583) target = $region40
      $region39: #{_lambda_.25} parent=27 // pred_region
        %s586 = smul.u32 8, %s17
      $region40: #{_lambda_.25} parent=27 // pred_fallthru
        _
    $region28: #{_lambda_.25} parent=5 // pred_fallthru
      _
    %p587 = scmp.le.s32.totalorder 2, %s8
    // Predicated region
    $region41: #{_lambda_.25} parent=5 // pred_check
      %p588 = pneg %p587
    $region42: #{_lambda_.25} parent=5 // pred_check_branch
      %590 = sbr.rel (%p588) target = $region44
    $region43: #{_lambda_.25} parent=5 // pred_region
      %s591 = ssub.s32 %s8, 2
      // Predicated region
      $region45: #{_lambda_.25} parent=43 // pred_check
        %p592 = pneg %p103
      $region46: #{_lambda_.25} parent=43 // pred_check_branch
        %594 = sbr.rel (%p592) target = $region48
      $region47: #{_lambda_.25} parent=43 // pred_region
        %s595 = smul.u32 8, %s19
        %p596 = scmp.lt.s32.totalorder %s595, 15
        %s597 = scalar_select %p596, %s595, 15
        %s598 = smul.addr %s597, 8
        %s599 = scalar_lea.vmem %s2, %s598
      $region48: #{_lambda_.25} parent=43 // pred_fallthru
        _
    $region44: #{_lambda_.25} parent=5 // pred_fallthru
      _
  $region6: #{_lambda_.25} parent=0 // loop_footer
    %s12 = sadd.s32 1, %s8
  $region7: #{_lambda_.25} parent=0 // loop_footer_branch
    %7 = sbr.rel target = $region3
  $region8: #{_lambda_.25} parent=0 // loop_exit
    _

// kernel: _lambda_.24
$region0: #{_lambda_.24}
  #allocation0 [shape = 'u32[]', space=smem, size = 0x4, offset = 0x4, fixed_abs, tag = 'smem constant byte address 0x4 - core index']
  #allocation1 [shape = 'u32[72,128]{1,0:T(1,128)}', space=vmem, size = 0x9000, scoped, tag = 'internal scratch']
  #allocation2 [shape = 'f32[64,64]{1,0:T(8,128)}', space=vmem, size = 0x8000, scoped, tag = 'scratch operand']
  %s0 = inlined_call_operand.vmem [shape: bf16[128,32], index: 0, kind: input, shape index: {}]
  %s1 = inlined_call_operand.vmem [shape: bf16[32,64], index: 1, kind: input, shape index: {}]
  %s2 = inlined_call_operand.vmem [shape: f32[128,64], index: 2, kind: output, shape index: {}]
  %s3 = sld [smem:[#allocation0]]
  $region49: #{_lambda_.24} parent=0
    _
  %s5 = ssub.s32 1, %s3
  %s6 = scalar_select 0, %s5, %s3
  loop: start=0, step=1, limit=4
  $region2: #{_lambda_.24} parent=0 // loop_pre_header
    _
  $region3: #{_lambda_.24} parent=0 // loop_header
    %s8 = sphi 0, %s12
    %p9 = scmp.ge.s32.totalorder %s8, 4
    %s15 = sphi 0, %s27
    %s16 = sphi 0, %s23
    %s17 = sphi 0, %s15
    %s18 = sphi 0, %s16
    %s19 = sphi 0, %s17
    %s20 = sphi 0, %s18
    %s32 = sphi 0, %s34
    %s35 = sphi 0, %s32
    %s36 = sphi 0, %s35
    %s52 = sphi 0, %s36
    %s58 = sphi 0, %s60
    %s61 = sphi 0, %s58
    %s62 = sphi 0, %s61
    %s78 = sphi 0, %s62
    %s84 = sphi 0, %s86
    %s87 = sphi 0, %s84
    %s88 = sphi 0, %s87
    %s104 = sphi 0, %s88
  $region4: #{_lambda_.24} parent=0 // loop_header_branch
    %11 = sbr.rel (%p9) target = $region8
  $region5: #{_lambda_.24} parent=0 // loop_body
    %s13 = ssub.s32 %s8, 1
    %s14 = ssub.s32 %s8, 2
    %s21 = sadd.s32 1, %s16
    %p22 = scmp.ge.s32.totalorder %s21, 1
    %s23 = scalar_select %p22, 0, %s21
    %s24 = sadd.s32 1, %s15
    %s25 = scalar_select %p22, %s24, %s15
    %p26 = scmp.ge.s32.totalorder %s25, 2
    %s27 = scalar_select %p26, 0, %s25
    %s28 = ssub.s32 %s15, %s27
    %s29 = ssub.s32 %s16, %s23
    %s30 = sor.u32 %s28, %s29
    %p31 = scmp.eq.s32.totalorder %s30, 0
    %s33 = sadd.s32 %s32, 1
    %s34 = scalar_select %p31, %s32, %s33
    %p37 = pneg %p31
    %p38 = scmp.eq.s32.totalorder %s8, 1
    %p39 = por %p37, %p38
    %p40 = scmp.ne.s32.totalorder %s32, %s35
    %p41 = scmp.eq.s32.totalorder %s8, 0
    %p42 = por %p40, %p41
    %p43 = scmp.ne.s32.totalorder %s32, %s35
    %p44 = scmp.eq.s32.totalorder %s13, 1
    %p45 = por %p43, %p44
    %p46 = scmp.ne.s32.totalorder %s35, %s36
    %p47 = scmp.eq.s32.totalorder %s13, 0
    %p48 = por %p46, %p47
    %p49 = scmp.ne.s32.totalorder %s35, %s36
    %p50 = scmp.eq.s32.totalorder %s14, 1
    %p51 = por %p49, %p50
    %p53 = scmp.ne.s32.totalorder %s36, %s52
    %p54 = scmp.eq.s32.totalorder %s14, 0
    %p55 = por %p53, %p54
    %s56 = ssub.s32 %s16, %s23
    %p57 = scmp.eq.s32.totalorder %s56, 0
    %s59 = sadd.s32 %s58, 1
    %s60 = scalar_select %p57, %s58, %s59
    %p63 = pneg %p57
    %p64 = scmp.eq.s32.totalorder %s8, 1
    %p65 = por %p63, %p64
    %p66 = scmp.ne.s32.totalorder %s58, %s61
    %p67 = scmp.eq.s32.totalorder %s8, 0
    %p68 = por %p66, %p67
    %p69 = scmp.ne.s32.totalorder %s58, %s61
    %p70 = scmp.eq.s32.totalorder %s13, 1
    %p71 = por %p69, %p70
    %p72 = scmp.ne.s32.totalorder %s61, %s62
    %p73 = scmp.eq.s32.totalorder %s13, 0
    %p74 = por %p72, %p73
    %p75 = scmp.ne.s32.totalorder %s61, %s62
    %p76 = scmp.eq.s32.totalorder %s14, 1
    %p77 = por %p75, %p76
    %p79 = scmp.ne.s32.totalorder %s62, %s78
    %p80 = scmp.eq.s32.totalorder %s14, 0
    %p81 = por %p79, %p80
    %s82 = ssub.s32 %s15, %s27
    %p83 = scmp.eq.s32.totalorder %s82, 0
    %s85 = sadd.s32 %s84, 1
    %s86 = scalar_select %p83, %s84, %s85
    %p89 = pneg %p83
    %p90 = scmp.eq.s32.totalorder %s8, 1
    %p91 = por %p89, %p90
    %p92 = scmp.ne.s32.totalorder %s84, %s87
    %p93 = scmp.eq.s32.totalorder %s8, 0
    %p94 = por %p92, %p93
    %p95 = scmp.ne.s32.totalorder %s84, %s87
    %p96 = scmp.eq.s32.totalorder %s13, 1
    %p97 = por %p95, %p96
    %p98 = scmp.ne.s32.totalorder %s87, %s88
    %p99 = scmp.eq.s32.totalorder %s13, 0
    %p100 = por %p98, %p99
    %p101 = scmp.ne.s32.totalorder %s87, %s88
    %p102 = scmp.eq.s32.totalorder %s14, 1
    %p103 = por %p101, %p102
    %p105 = scmp.ne.s32.totalorder %s88, %s104
    %p106 = scmp.eq.s32.totalorder %s14, 0
    %p107 = por %p105, %p106
    %p108 = scmp.le.s32.totalorder 1, %s8
    %p109 = scmp.lt.s32.totalorder %s8, 3
    %p110 = pnand %p108, %p109
    %p111 = pneg %p110
    // Predicated region
    $region9: #{_lambda_.24} parent=5 // pred_check
      _
    $region10: #{_lambda_.24} parent=5 // pred_check_branch
      %113 = sbr.rel (%p110) target = $region12
    $region11: #{_lambda_.24} parent=5 // pred_region
      %s114 = ssub.s32 %s8, 1
      // Predicated region
      $region13: #{_lambda_.24} parent=11 // pred_check
        %p115 = pneg %p74
      $region14: #{_lambda_.24} parent=11 // pred_check_branch
        %117 = sbr.rel (%p115) target = $region16
      $region15: #{_lambda_.24} parent=11 // pred_region
        %s118 = smul.u32 4, %s18
        %p119 = scmp.lt.s32.totalorder %s118, 3
        %s120 = scalar_select %p119, %s118, 3
        %s121 = smul.addr %s120, 4
        %s122 = scalar_lea.vmem %s1, %s121
        %s123 = smul.u32 4, %s18
      $region16: #{_lambda_.24} parent=11 // pred_fallthru
        _
    $region12: #{_lambda_.24} parent=5 // pred_fallthru
      _
    %p124 = scmp.lt.s32.totalorder %s8, 2
    // Predicated region
    $region17: #{_lambda_.24} parent=5 // pred_check
      %p125 = pneg %p124
    $region18: #{_lambda_.24} parent=5 // pred_check_branch
      %127 = sbr.rel (%p125) target = $region20
    $region19: #{_lambda_.24} parent=5 // pred_region
      // Predicated region
      $region21: #{_lambda_.24} parent=19 // pred_check
        %p128 = pneg %p42
      $region22: #{_lambda_.24} parent=19 // pred_check_branch
        %130 = sbr.rel (%p128) target = $region24
      $region23: #{_lambda_.24} parent=19 // pred_region
        %s131 = smul.u32 8, %s15
        %p132 = scmp.lt.s32.totalorder %s131, 15
        %s133 = scalar_select %p132, %s131, 15
        %p134 = scmp.lt.s32.totalorder %s16, 0
        %s135 = scalar_select %p134, %s16, 0
        %s136 = sadd.s32 %s135, %s133
        %s137 = smul.addr %s136, 4
        %s138 = scalar_lea.vmem %s0, %s137
        %s139 = smul.u32 8, %s15
      $region24: #{_lambda_.24} parent=19 // pred_fallthru
        _
    $region20: #{_lambda_.24} parent=5 // pred_fallthru
      _
    %p140 = scmp.le.s32.totalorder 1, %s8
    %p141 = scmp.lt.s32.totalorder %s8, 3
    %p142 = pnand %p140, %p141
    %p143 = pneg %p142
    // Predicated region
    $region25: #{_lambda_.24} parent=5 // pred_check
      _
    $region26: #{_lambda_.24} parent=5 // pred_check_branch
      %145 = sbr.rel (%p142) target = $region28
    $region27: #{_lambda_.24} parent=5 // pred_region
      %s146 = ssub.s32 %s8, 1
      %s147 = smul.u32 8, %s17
      %p148 = scmp.lt.s32.totalorder %s147, 15
      %s149 = scalar_select %p148, %s147, 15
      %p150 = scmp.lt.s32.totalorder %s18, 0
      %s151 = scalar_select %p150, %s18, 0
      %s152 = sadd.s32 %s151, %s149
      %s153 = smul.addr %s152, 4
      %s154 = scalar_lea.vmem %s0, %s153
      %p155 = pneg %p48
      %p156 = pneg %p45
      %s157 = smul.u32 4, %s18
      %p158 = scmp.lt.s32.totalorder %s157, 3
      %s159 = scalar_select %p158, %s157, 3
      %s160 = smul.addr %s159, 4
      %s161 = scalar_lea.vmem %s1, %s160
      %p162 = pneg %p74
      %p163 = pneg %p71
      %p164 = pneg %p100
      %p165 = pneg %p97
      %s166 = smul.u32 8, %s17
      %p167 = scmp.lt.s32.totalorder %s166, 15
      %s168 = scalar_select %p167, %s166, 15
      %s169 = smul.addr %s168, 8
      %s170 = scalar_lea.vmem %s2, %s169
      %s171 = smul.u32 8, %s17
      %p172 = scmp.lt.s32.totalorder %s171, 15
      %s173 = scalar_select %p172, %s171, 15
      %p174 = scmp.lt.s32.totalorder %s18, 0
      %s175 = scalar_select %p174, %s18, 0
      %s176 = sadd.s32 %s175, %s173
      %s177 = smul.addr %s176, 4
      %s178 = scalar_lea.vmem %s0, %s177
      %s179 = smul.u32 8, %s17
      %s180 = smul.u32 4, %s18
      %p181 = scmp.lt.s32.totalorder %s180, 3
      %s182 = scalar_select %p181, %s180, 3
      %s183 = smul.addr %s182, 4
      %s184 = scalar_lea.vmem %s1, %s183
      %s185 = smul.u32 4, %s18
      %s186 = smul.u32 8, %s17
      %p187 = scmp.lt.s32.totalorder %s186, 15
      %s188 = scalar_select %p187, %s186, 15
      %s189 = smul.addr %s188, 8
      %s190 = scalar_lea.vmem %s2, %s189
      %s191 = smul.u32 8, %s17
      %p193 = scmp.eq.s32.totalorder %s18, 0
      // Predicated region
      $region29: #{_lambda_.24} parent=27 // pred_check
        %p194 = pneg %p193
      $region30: #{_lambda_.24} parent=27 // pred_check_branch
        %196 = sbr.rel (%p194) target = $region32
      $region31: #{_lambda_.24} parent=27 // pred_region
        %vm197 = vcmask 523264
        %198 = vst.msk [vmem:[#allocation2] sm:$0xff] %vm197, 0.0
        %199 = vst.msk [vmem:[#allocation2 + $0x8] sm:$0xff] %vm197, 0.0
        %200 = vst.msk [vmem:[#allocation2 + $0x10] sm:$0xff] %vm197, 0.0
        %201 = vst.msk [vmem:[#allocation2 + $0x18] sm:$0xff] %vm197, 0.0
        %202 = vst.msk [vmem:[#allocation2 + $0x20] sm:$0xff] %vm197, 0.0
        %203 = vst.msk [vmem:[#allocation2 + $0x28] sm:$0xff] %vm197, 0.0
        %204 = vst.msk [vmem:[#allocation2 + $0x30] sm:$0xff] %vm197, 0.0
        %205 = vst.msk [vmem:[#allocation2 + $0x38] sm:$0xff] %vm197, 0.0
      $region32: #{_lambda_.24} parent=27 // pred_fallthru
        _
      %v206 = vld [vmem:[#allocation2] sm:$0xff]
      %v207 = vld [vmem:[#allocation2 + $0x8] sm:$0xff]
      %v208 = vld [vmem:[#allocation2 + $0x10] sm:$0xff]
      %v209 = vld [vmem:[#allocation2 + $0x18] sm:$0xff]
      %v210 = vld [vmem:[#allocation2 + $0x20] sm:$0xff]
      %v211 = vld [vmem:[#allocation2 + $0x28] sm:$0xff]
      %v212 = vld [vmem:[#allocation2 + $0x30] sm:$0xff]
      %v213 = vld [vmem:[#allocation2 + $0x38] sm:$0xff]
      %v214 = vld [vmem:[%s178] sm:$0xf]
      %v215 = vld [vmem:[%s178 + $0x4] sm:$0xf]
      %v216 = vld [vmem:[%s178 + $0x8] sm:$0xf]
      %v217 = vld [vmem:[%s178 + $0xc] sm:$0xf]
      %v218 = vld [vmem:[%s178 + $0x10] sm:$0xf]
      %v219 = vld [vmem:[%s178 + $0x14] sm:$0xf]
      %v220 = vld [vmem:[%s178 + $0x18] sm:$0xf]
      %v221 = vld [vmem:[%s178 + $0x1c] sm:$0xf]
      %v222 = vld [vmem:[%s184] sm:$0xf]
      %v223 = vld [vmem:[%s184 + $0x4] sm:$0xf]
      %v224 = vld [vmem:[%s184 + $0x8] sm:$0xf]
      %v225 = vld [vmem:[%s184 + $0xc] sm:$0xf]
      %v234 = vunpack.c.l.b16 %v214
      %v235 = vunpack.c.l.b16 %v215
      %v236 = vunpack.c.l.b16 %v216
      %v237 = vunpack.c.l.b16 %v217
      %v238 = vunpack.c.l.b16 %v218
      %v239 = vunpack.c.l.b16 %v219
      %v240 = vunpack.c.l.b16 %v220
      %v241 = vunpack.c.l.b16 %v221
      %v242 = vpack.c.b16 %v235, %v234
      %v243 = vpack.c.b16 %v237, %v236
      %v244 = vpack.c.b16 %v239, %v238
      %v245 = vpack.c.b16 %v241, %v240
      %v250 = vunpack.c.l.b16 %v222
      %v251 = vunpack.c.l.b16 %v223
      %v252 = vunpack.c.l.b16 %v224
      %v253 = vunpack.c.l.b16 %v225
      %v254 = vpack.c.b16 %v251, %v250
      %v255 = vpack.c.b16 %v253, %v252
      %vm258 = vcmask 261120
      %v260 = vsel %vm258, %v242, 0
      %v263 = vsel %vm258, %v243, 0
      %v266 = vsel %vm258, %v244, 0
      %v269 = vsel %vm258, %v245, 0
      %271 = vmatpush.bf16.msra.mxu0 0
      %272 = vmatpush.bf16.msra.mxu0 0
      %273 = vmatpush.bf16.msra.mxu0 0
      %274 = vmatpush.bf16.msra.mxu0 0
      %275 = vmatpush.bf16.msra.mxu0 0
      %276 = vmatpush.bf16.msra.mxu0 0
      %277 = vmatpush.bf16.msra.mxu0 %v255
      %278 = vmatpush.bf16.msra.mxu0 %v254
      %279 = vmatmul.bf16.gmra.mxu0 %v260
      %v280 = vpop.f32.mrf.mxu0
      %v281 = vadd.f32 0.0, %v280
      %v282 = vpop.f32.mrf.mxu0
      %v283 = vadd.f32 0.0, %v282
      %284 = vmatmul.bf16.gmra.mxu0 %v263
      %v285 = vpop.f32.mrf.mxu0
      %v286 = vadd.f32 0.0, %v285
      %v287 = vpop.f32.mrf.mxu0
      %v288 = vadd.f32 0.0, %v287
      %289 = vmatmul.bf16.gmra.mxu0 %v266
      %v290 = vpop.f32.mrf.mxu0
      %v291 = vadd.f32 0.0, %v290
      %v292 = vpop.f32.mrf.mxu0
      %v293 = vadd.f32 0.0, %v292
      %294 = vmatmul.bf16.gmra.mxu0 %v269
      %v295 = vpop.f32.mrf.mxu0
      %v296 = vadd.f32 0.0, %v295
      %v297 = vpop.f32.mrf.mxu0
      %v298 = vadd.f32 0.0, %v297
      %299 = vdwg.mxu0
      %v300 = vadd.f32 %v206, %v281
      %v301 = vadd.f32 %v207, %v283
      %v302 = vadd.f32 %v208, %v286
      %v303 = vadd.f32 %v209, %v288
      %v304 = vadd.f32 %v210, %v291
      %v305 = vadd.f32 %v211, %v293
      %v306 = vadd.f32 %v212, %v296
      %v307 = vadd.f32 %v213, %v298
      %vm308 = vcmask 523264
      %309 = vst.msk [vmem:[#allocation2] sm:$0xff] %vm308, %v300
      %310 = vst.msk [vmem:[#allocation2 + $0x8] sm:$0xff] %vm308, %v301
      %311 = vst.msk [vmem:[#allocation2 + $0x10] sm:$0xff] %vm308, %v302
      %312 = vst.msk [vmem:[#allocation2 + $0x18] sm:$0xff] %vm308, %v303
      %313 = vst.msk [vmem:[#allocation2 + $0x20] sm:$0xff] %vm308, %v304
      %314 = vst.msk [vmem:[#allocation2 + $0x28] sm:$0xff] %vm308, %v305
      %315 = vst.msk [vmem:[#allocation2 + $0x30] sm:$0xff] %vm308, %v306
      %316 = vst.msk [vmem:[#allocation2 + $0x38] sm:$0xff] %vm308, %v307
      // Predicated region
      $region33: #{_lambda_.24} parent=27 // pred_check
        %p317 = pneg %p193
      $region34: #{_lambda_.24} parent=27 // pred_check_branch
        %319 = sbr.rel (%p317) target = $region36
      $region35: #{_lambda_.24} parent=27 // pred_region
        %v320 = vld [vmem:[#allocation2] sm:$0xff]
        %v321 = vld [vmem:[#allocation2 + $0x8] sm:$0xff]
        %v322 = vld [vmem:[#allocation2 + $0x10] sm:$0xff]
        %v323 = vld [vmem:[#allocation2 + $0x18] sm:$0xff]
        %v324 = vld [vmem:[#allocation2 + $0x20] sm:$0xff]
        %v325 = vld [vmem:[#allocation2 + $0x28] sm:$0xff]
        %v326 = vld [vmem:[#allocation2 + $0x30] sm:$0xff]
        %v327 = vld [vmem:[#allocation2 + $0x38] sm:$0xff]
        %328 = vst.msk [vmem:[%s190] sm:$0xff] %vm308, %v320
        %329 = vst.msk [vmem:[%s190 + $0x8] sm:$0xff] %vm308, %v321
        %330 = vst.msk [vmem:[%s190 + $0x10] sm:$0xff] %vm308, %v322
        %331 = vst.msk [vmem:[%s190 + $0x18] sm:$0xff] %vm308, %v323
        %332 = vst.msk [vmem:[%s190 + $0x20] sm:$0xff] %vm308, %v324
        %333 = vst.msk [vmem:[%s190 + $0x28] sm:$0xff] %vm308, %v325
        %334 = vst.msk [vmem:[%s190 + $0x30] sm:$0xff] %vm308, %v326
        %335 = vst.msk [vmem:[%s190 + $0x38] sm:$0xff] %vm308, %v327
      $region36: #{_lambda_.24} parent=27 // pred_fallthru
        _
      %s336 = smul.u32 8, %s17
      %p337 = scmp.lt.s32.totalorder %s336, 15
      %s338 = scalar_select %p337, %s336, 15
      %s339 = smul.addr %s338, 8
      %s340 = scalar_lea.vmem %s2, %s339
      // Predicated region
      $region37: #{_lambda_.24} parent=27 // pred_check
        %p341 = pneg %p97
      $region38: #{_lambda_.24} parent=27 // pred_check_branch
        %343 = sbr.rel (%p341) target = $region40
      $region39: #{_lambda_.24} parent=27 // pred_region
        %s344 = smul.u32 8, %s17
      $region40: #{_lambda_.24} parent=27 // pred_fallthru
        _
    $region28: #{_lambda_.24} parent=5 // pred_fallthru
      _
    %p345 = scmp.le.s32.totalorder 2, %s8
    // Predicated region
    $region41: #{_lambda_.24} parent=5 // pred_check
      %p346 = pneg %p345
    $region42: #{_lambda_.24} parent=5 // pred_check_branch
      %348 = sbr.rel (%p346) target = $region44
    $region43: #{_lambda_.24} parent=5 // pred_region
      %s349 = ssub.s32 %s8, 2
      // Predicated region
      $region45: #{_lambda_.24} parent=43 // pred_check
        %p350 = pneg %p103
      $region46: #{_lambda_.24} parent=43 // pred_check_branch
        %352 = sbr.rel (%p350) target = $region48
      $region47: #{_lambda_.24} parent=43 // pred_region
        %s353 = smul.u32 8, %s19
        %p354 = scmp.lt.s32.totalorder %s353, 15
        %s355 = scalar_select %p354, %s353, 15
        %s356 = smul.addr %s355, 8
        %s357 = scalar_lea.vmem %s2, %s356
      $region48: #{_lambda_.24} parent=43 // pred_fallthru
        _
    $region44: #{_lambda_.24} parent=5 // pred_fallthru
      _
  $region6: #{_lambda_.24} parent=0 // loop_footer
    %s12 = sadd.s32 1, %s8
  $region7: #{_lambda_.24} parent=0 // loop_footer_branch
    %7 = sbr.rel target = $region3
  $region8: #{_lambda_.24} parent=0 // loop_exit
    _

// kernel: _lambda_.27
$region0: #{_lambda_.27}
  #allocation0 [shape = 'u32[]', space=smem, size = 0x4, offset = 0x4, fixed_abs, tag = 'smem constant byte address 0x4 - core index']
  #allocation1 [shape = 'u32[72,128]{1,0:T(1,128)}', space=vmem, size = 0x9000, scoped, tag = 'internal scratch']
  #allocation2 [shape = 'f32[64,64]{1,0:T(8,128)}', space=vmem, size = 0x8000, scoped, tag = 'scratch operand']
  %s0 = inlined_call_operand.vmem [shape: bf16[128,576], index: 0, kind: input, shape index: {}]
  %s1 = inlined_call_operand.vmem [shape: bf16[576,64], index: 1, kind: input, shape index: {}]
  %s2 = inlined_call_operand.vmem [shape: f32[128,64], index: 2, kind: input, shape index: {}]
  %s3 = inlined_call_operand.vmem [shape: f32[128,64], index: 3, kind: output, shape index: {}]
  %s4 = sld [smem:[#allocation0]]
  $region53: #{_lambda_.27} parent=0
    _
  %s6 = ssub.s32 1, %s4
  %s7 = scalar_select 0, %s6, %s4
  loop: start=0, step=1, limit=4
  $region2: #{_lambda_.27} parent=0 // loop_pre_header
    _
  $region3: #{_lambda_.27} parent=0 // loop_header
    %s9 = sphi 0, %s13
    %p10 = scmp.ge.s32.totalorder %s9, 4
    %s16 = sphi 0, %s28
    %s17 = sphi 0, %s24
    %s18 = sphi 0, %s16
    %s19 = sphi 0, %s17
    %s20 = sphi 0, %s18
    %s21 = sphi 0, %s19
    %s33 = sphi 0, %s35
    %s36 = sphi 0, %s33
    %s37 = sphi 0, %s36
    %s53 = sphi 0, %s37
    %s59 = sphi 0, %s61
    %s62 = sphi 0, %s59
    %s63 = sphi 0, %s62
    %s79 = sphi 0, %s63
    %s85 = sphi 0, %s87
    %s88 = sphi 0, %s85
    %s89 = sphi 0, %s88
    %s105 = sphi 0, %s89
    %s111 = sphi 0, %s113
    %s114 = sphi 0, %s111
    %s115 = sphi 0, %s114
    %s131 = sphi 0, %s115
  $region4: #{_lambda_.27} parent=0 // loop_header_branch
    %12 = sbr.rel (%p10) target = $region8
  $region5: #{_lambda_.27} parent=0 // loop_body
    %s14 = ssub.s32 %s9, 1
    %s15 = ssub.s32 %s9, 2
    %s22 = sadd.s32 1, %s17
    %p23 = scmp.ge.s32.totalorder %s22, 1
    %s24 = scalar_select %p23, 0, %s22
    %s25 = sadd.s32 1, %s16
    %s26 = scalar_select %p23, %s25, %s16
    %p27 = scmp.ge.s32.totalorder %s26, 2
    %s28 = scalar_select %p27, 0, %s26
    %s29 = ssub.s32 %s16, %s28
    %s30 = ssub.s32 %s17, %s24
    %s31 = sor.u32 %s29, %s30
    %p32 = scmp.eq.s32.totalorder %s31, 0
    %s34 = sadd.s32 %s33, 1
    %s35 = scalar_select %p32, %s33, %s34
    %p38 = pneg %p32
    %p39 = scmp.eq.s32.totalorder %s9, 1
    %p40 = por %p38, %p39
    %p41 = scmp.ne.s32.totalorder %s33, %s36
    %p42 = scmp.eq.s32.totalorder %s9, 0
    %p43 = por %p41, %p42
    %p44 = scmp.ne.s32.totalorder %s33, %s36
    %p45 = scmp.eq.s32.totalorder %s14, 1
    %p46 = por %p44, %p45
    %p47 = scmp.ne.s32.totalorder %s36, %s37
    %p48 = scmp.eq.s32.totalorder %s14, 0
    %p49 = por %p47, %p48
    %p50 = scmp.ne.s32.totalorder %s36, %s37
    %p51 = scmp.eq.s32.totalorder %s15, 1
    %p52 = por %p50, %p51
    %p54 = scmp.ne.s32.totalorder %s37, %s53
    %p55 = scmp.eq.s32.totalorder %s15, 0
    %p56 = por %p54, %p55
    %s57 = ssub.s32 %s17, %s24
    %p58 = scmp.eq.s32.totalorder %s57, 0
    %s60 = sadd.s32 %s59, 1
    %s61 = scalar_select %p58, %s59, %s60
    %p64 = pneg %p58
    %p65 = scmp.eq.s32.totalorder %s9, 1
    %p66 = por %p64, %p65
    %p67 = scmp.ne.s32.totalorder %s59, %s62
    %p68 = scmp.eq.s32.totalorder %s9, 0
    %p69 = por %p67, %p68
    %p70 = scmp.ne.s32.totalorder %s59, %s62
    %p71 = scmp.eq.s32.totalorder %s14, 1
    %p72 = por %p70, %p71
    %p73 = scmp.ne.s32.totalorder %s62, %s63
    %p74 = scmp.eq.s32.totalorder %s14, 0
    %p75 = por %p73, %p74
    %p76 = scmp.ne.s32.totalorder %s62, %s63
    %p77 = scmp.eq.s32.totalorder %s15, 1
    %p78 = por %p76, %p77
    %p80 = scmp.ne.s32.totalorder %s63, %s79
    %p81 = scmp.eq.s32.totalorder %s15, 0
    %p82 = por %p80, %p81
    %s83 = ssub.s32 %s16, %s28
    %p84 = scmp.eq.s32.totalorder %s83, 0
    %s86 = sadd.s32 %s85, 1
    %s87 = scalar_select %p84, %s85, %s86
    %p90 = pneg %p84
    %p91 = scmp.eq.s32.totalorder %s9, 1
    %p92 = por %p90, %p91
    %p93 = scmp.ne.s32.totalorder %s85, %s88
    %p94 = scmp.eq.s32.totalorder %s9, 0
    %p95 = por %p93, %p94
    %p96 = scmp.ne.s32.totalorder %s85, %s88
    %p97 = scmp.eq.s32.totalorder %s14, 1
    %p98 = por %p96, %p97
    %p99 = scmp.ne.s32.totalorder %s88, %s89
    %p100 = scmp.eq.s32.totalorder %s14, 0
    %p101 = por %p99, %p100
    %p102 = scmp.ne.s32.totalorder %s88, %s89
    %p103 = scmp.eq.s32.totalorder %s15, 1
    %p104 = por %p102, %p103
    %p106 = scmp.ne.s32.totalorder %s89, %s105
    %p107 = scmp.eq.s32.totalorder %s15, 0
    %p108 = por %p106, %p107
    %s109 = ssub.s32 %s16, %s28
    %p110 = scmp.eq.s32.totalorder %s109, 0
    %s112 = sadd.s32 %s111, 1
    %s113 = scalar_select %p110, %s111, %s112
    %p116 = pneg %p110
    %p117 = scmp.eq.s32.totalorder %s9, 1
    %p118 = por %p116, %p117
    %p119 = scmp.ne.s32.totalorder %s111, %s114
    %p120 = scmp.eq.s32.totalorder %s9, 0
    %p121 = por %p119, %p120
    %p122 = scmp.ne.s32.totalorder %s111, %s114
    %p123 = scmp.eq.s32.totalorder %s14, 1
    %p124 = por %p122, %p123
    %p125 = scmp.ne.s32.totalorder %s114, %s115
    %p126 = scmp.eq.s32.totalorder %s14, 0
    %p127 = por %p125, %p126
    %p128 = scmp.ne.s32.totalorder %s114, %s115
    %p129 = scmp.eq.s32.totalorder %s15, 1
    %p130 = por %p128, %p129
    %p132 = scmp.ne.s32.totalorder %s115, %s131
    %p133 = scmp.eq.s32.totalorder %s15, 0
    %p134 = por %p132, %p133
    %p135 = scmp.le.s32.totalorder 1, %s9
    %p136 = scmp.lt.s32.totalorder %s9, 3
    %p137 = pnand %p135, %p136
    %p138 = pneg %p137
    // Predicated region
    $region9: #{_lambda_.27} parent=5 // pred_check
      _
    $region10: #{_lambda_.27} parent=5 // pred_check_branch
      %140 = sbr.rel (%p137) target = $region12
    $region11: #{_lambda_.27} parent=5 // pred_region
      %s141 = ssub.s32 %s9, 1
      // Predicated region
      $region13: #{_lambda_.27} parent=11 // pred_check
        %p142 = pneg %p75
      $region14: #{_lambda_.27} parent=11 // pred_check_branch
        %144 = sbr.rel (%p142) target = $region16
      $region15: #{_lambda_.27} parent=11 // pred_region
        %s145 = smul.u32 72, %s19
        %p146 = scmp.lt.s32.totalorder %s145, 71
        %s147 = scalar_select %p146, %s145, 71
        %s148 = smul.addr %s147, 4
        %s149 = scalar_lea.vmem %s1, %s148
        %s150 = smul.u32 72, %s19
      $region16: #{_lambda_.27} parent=11 // pred_fallthru
        _
    $region12: #{_lambda_.27} parent=5 // pred_fallthru
      _
    %p151 = scmp.lt.s32.totalorder %s9, 2
    // Predicated region
    $region17: #{_lambda_.27} parent=5 // pred_check
      %p152 = pneg %p151
    $region18: #{_lambda_.27} parent=5 // pred_check_branch
      %154 = sbr.rel (%p152) target = $region20
    $region19: #{_lambda_.27} parent=5 // pred_region
      // Predicated region
      $region21: #{_lambda_.27} parent=19 // pred_check
        %p155 = pneg %p43
      $region22: #{_lambda_.27} parent=19 // pred_check_branch
        %157 = sbr.rel (%p155) target = $region24
      $region23: #{_lambda_.27} parent=19 // pred_region
        %s158 = smul.u32 8, %s16
        %s159 = smul.u32 5, %s17
        %p160 = scmp.lt.s32.totalorder %s158, 15
        %s161 = scalar_select %p160, %s158, 15
        %p162 = scmp.lt.s32.totalorder %s159, 4
        %s163 = scalar_select %p162, %s159, 4
        %s164 = smul.addr %s161, 5
        %s165 = sadd.s32 %s163, %s164
        %s166 = smul.addr %s165, 4
        %s167 = scalar_lea.vmem %s0, %s166
        %s168 = smul.u32 8, %s16
        %s169 = smul.u32 5, %s17
      $region24: #{_lambda_.27} parent=19 // pred_fallthru
        _
      // Predicated region
      $region25: #{_lambda_.27} parent=19 // pred_check
        %p170 = pneg %p95
      $region26: #{_lambda_.27} parent=19 // pred_check_branch
        %172 = sbr.rel (%p170) target = $region28
      $region27: #{_lambda_.27} parent=19 // pred_region
        %s173 = smul.u32 8, %s16
        %p174 = scmp.lt.s32.totalorder %s173, 15
        %s175 = scalar_select %p174, %s173, 15
        %s176 = smul.addr %s175, 8
        %s177 = scalar_lea.vmem %s2, %s176
        %s178 = smul.u32 8, %s16
      $region28: #{_lambda_.27} parent=19 // pred_fallthru
        _
    $region20: #{_lambda_.27} parent=5 // pred_fallthru
      _
    %p179 = scmp.le.s32.totalorder 1, %s9
    %p180 = scmp.lt.s32.totalorder %s9, 3
    %p181 = pnand %p179, %p180
    %p182 = pneg %p181
    // Predicated region
    $region29: #{_lambda_.27} parent=5 // pred_check
      _
    $region30: #{_lambda_.27} parent=5 // pred_check_branch
      %184 = sbr.rel (%p181) target = $region32
    $region31: #{_lambda_.27} parent=5 // pred_region
      %s185 = ssub.s32 %s9, 1
      %s186 = smul.u32 8, %s18
      %s187 = smul.u32 5, %s19
      %p188 = scmp.lt.s32.totalorder %s186, 15
      %s189 = scalar_select %p188, %s186, 15
      %p190 = scmp.lt.s32.totalorder %s187, 4
      %s191 = scalar_select %p190, %s187, 4
      %s192 = smul.addr %s189, 5
      %s193 = sadd.s32 %s191, %s192
      %s194 = smul.addr %s193, 4
      %s195 = scalar_lea.vmem %s0, %s194
      %p196 = pneg %p49
      %p197 = pneg %p46
      %s198 = smul.u32 72, %s19
      %p199 = scmp.lt.s32.totalorder %s198, 71
      %s200 = scalar_select %p199, %s198, 71
      %s201 = smul.addr %s200, 4
      %s202 = scalar_lea.vmem %s1, %s201
      %p203 = pneg %p75
      %p204 = pneg %p72
      %s205 = smul.u32 8, %s18
      %p206 = scmp.lt.s32.totalorder %s205, 15
      %s207 = scalar_select %p206, %s205, 15
      %s208 = smul.addr %s207, 8
      %s209 = scalar_lea.vmem %s2, %s208
      %p210 = pneg %p101
      %p211 = pneg %p98
      %p212 = pneg %p127
      %p213 = pneg %p124
      %s214 = smul.u32 8, %s18
      %p215 = scmp.lt.s32.totalorder %s214, 15
      %s216 = scalar_select %p215, %s214, 15
      %s217 = smul.addr %s216, 8
      %s218 = scalar_lea.vmem %s3, %s217
      %s219 = smul.u32 8, %s18
      %s220 = smul.u32 5, %s19
      %p221 = scmp.lt.s32.totalorder %s219, 15
      %s222 = scalar_select %p221, %s219, 15
      %p223 = scmp.lt.s32.totalorder %s220, 4
      %s224 = scalar_select %p223, %s220, 4
      %s225 = smul.addr %s222, 5
      %s226 = sadd.s32 %s224, %s225
      %s227 = smul.addr %s226, 4
      %s228 = scalar_lea.vmem %s0, %s227
      %s229 = smul.u32 8, %s18
      %s230 = smul.u32 5, %s19
      %s231 = smul.u32 72, %s19
      %p232 = scmp.lt.s32.totalorder %s231, 71
      %s233 = scalar_select %p232, %s231, 71
      %s234 = smul.addr %s233, 4
      %s235 = scalar_lea.vmem %s1, %s234
      %s236 = smul.u32 72, %s19
      %s237 = smul.u32 8, %s18
      %p238 = scmp.lt.s32.totalorder %s237, 15
      %s239 = scalar_select %p238, %s237, 15
      %s240 = smul.addr %s239, 8
      %s241 = scalar_lea.vmem %s2, %s240
      %s242 = smul.u32 8, %s18
      %s243 = smul.u32 8, %s18
      %p244 = scmp.lt.s32.totalorder %s243, 15
      %s245 = scalar_select %p244, %s243, 15
      %s246 = smul.addr %s245, 8
      %s247 = scalar_lea.vmem %s3, %s246
      %s248 = smul.u32 8, %s18
      %p250 = scmp.eq.s32.totalorder %s19, 0
      // Predicated region
      $region33: #{_lambda_.27} parent=31 // pred_check
        %p251 = pneg %p250
      $region34: #{_lambda_.27} parent=31 // pred_check_branch
        %253 = sbr.rel (%p251) target = $region36
      $region35: #{_lambda_.27} parent=31 // pred_region
        %vm254 = vcmask 523264
        %255 = vst.msk [vmem:[#allocation2] sm:$0xff] %vm254, 0.0
        %256 = vst.msk [vmem:[#allocation2 + $0x8] sm:$0xff] %vm254, 0.0
        %257 = vst.msk [vmem:[#allocation2 + $0x10] sm:$0xff] %vm254, 0.0
        %258 = vst.msk [vmem:[#allocation2 + $0x18] sm:$0xff] %vm254, 0.0
        %259 = vst.msk [vmem:[#allocation2 + $0x20] sm:$0xff] %vm254, 0.0
        %260 = vst.msk [vmem:[#allocation2 + $0x28] sm:$0xff] %vm254, 0.0
        %261 = vst.msk [vmem:[#allocation2 + $0x30] sm:$0xff] %vm254, 0.0
        %262 = vst.msk [vmem:[#allocation2 + $0x38] sm:$0xff] %vm254, 0.0
      $region36: #{_lambda_.27} parent=31 // pred_fallthru
        _
      %v263 = vld [vmem:[#allocation2] sm:$0xff]
      %v264 = vld [vmem:[#allocation2 + $0x8] sm:$0xff]
      %v265 = vld [vmem:[#allocation2 + $0x10] sm:$0xff]
      %v266 = vld [vmem:[#allocation2 + $0x18] sm:$0xff]
      %v267 = vld [vmem:[#allocation2 + $0x20] sm:$0xff]
      %v268 = vld [vmem:[#allocation2 + $0x28] sm:$0xff]
      %v269 = vld [vmem:[#allocation2 + $0x30] sm:$0xff]
      %v270 = vld [vmem:[#allocation2 + $0x38] sm:$0xff]
      %v271 = vld [vmem:[%s228] sm:$0xff]
      %v272 = vld [vmem:[%s228 + $0x8] sm:$0xff]
      %v273 = vld [vmem:[%s228 + $0x10] sm:$0xf]
      %v274 = vld [vmem:[%s228 + $0x14] sm:$0xff]
      %v275 = vld [vmem:[%s228 + $0x1c] sm:$0xff]
      %v276 = vld [vmem:[%s228 + $0x24] sm:$0xf]
      %v277 = vld [vmem:[%s228 + $0x28] sm:$0xff]
      %v278 = vld [vmem:[%s228 + $0x30] sm:$0xff]
      %v279 = vld [vmem:[%s228 + $0x38] sm:$0xf]
      %v280 = vld [vmem:[%s228 + $0x3c] sm:$0xff]
      %v281 = vld [vmem:[%s228 + $0x44] sm:$0xff]
      %v282 = vld [vmem:[%s228 + $0x4c] sm:$0xf]
      %v283 = vld [vmem:[%s228 + $0x50] sm:$0xff]
      %v284 = vld [vmem:[%s228 + $0x58] sm:$0xff]
      %v285 = vld [vmem:[%s228 + $0x60] sm:$0xf]
      %v286 = vld [vmem:[%s228 + $0x64] sm:$0xff]
      %v287 = vld [vmem:[%s228 + $0x6c] sm:$0xff]
      %v288 = vld [vmem:[%s228 + $0x74] sm:$0xf]
      %v289 = vld [vmem:[%s228 + $0x78] sm:$0xff]
      %v290 = vld [vmem:[%s228 + $0x80] sm:$0xff]
      %v291 = vld [vmem:[%s228 + $0x88] sm:$0xf]
      %v292 = vld [vmem:[%s228 + $0x8c] sm:$0xff]
      %v293 = vld [vmem:[%s228 + $0x94] sm:$0xff]
      %v294 = vld [vmem:[%s228 + $0x9c] sm:$0xf]
      %v295 = vld [vmem:[%s235] sm:$0xf]
      %v296 = vld [vmem:[%s235 + $0x4] sm:$0xf]
      %v297 = vld [vmem:[%s235 + $0x8] sm:$0xf]
      %v298 = vld [vmem:[%s235 + $0xc] sm:$0xf]
      %v299 = vld [vmem:[%s235 + $0x10] sm:$0xf]
      %v300 = vld [vmem:[%s235 + $0x14] sm:$0xf]
      %v301 = vld [vmem:[%s235 + $0x18] sm:$0xf]
      %v302 = vld [vmem:[%s235 + $0x1c] sm:$0xf]
      %v303 = vld [vmem:[%s235 + $0x20] sm:$0xf]
      %v304 = vld [vmem:[%s235 + $0x24] sm:$0xf]
      %v305 = vld [vmem:[%s235 + $0x28] sm:$0xf]
      %v306 = vld [vmem:[%s235 + $0x2c] sm:$0xf]
      %v307 = vld [vmem:[%s235 + $0x30] sm:$0xf]
      %v308 = vld [vmem:[%s235 + $0x34] sm:$0xf]
      %v309 = vld [vmem:[%s235 + $0x38] sm:$0xf]
      %v310 = vld [vmem:[%s235 + $0x3c] sm:$0xf]
      %v311 = vld [vmem:[%s235 + $0x40] sm:$0xf]
      %v312 = vld [vmem:[%s235 + $0x44] sm:$0xf]
      %v313 = vld [vmem:[%s235 + $0x48] sm:$0xf]
      %v314 = vld [vmem:[%s235 + $0x4c] sm:$0xf]
      %v315 = vld [vmem:[%s235 + $0x50] sm:$0xf]
      %v316 = vld [vmem:[%s235 + $0x54] sm:$0xf]
      %v317 = vld [vmem:[%s235 + $0x58] sm:$0xf]
      %v318 = vld [vmem:[%s235 + $0x5c] sm:$0xf]
      %v319 = vld [vmem:[%s235 + $0x60] sm:$0xf]
      %v320 = vld [vmem:[%s235 + $0x64] sm:$0xf]
      %v321 = vld [vmem:[%s235 + $0x68] sm:$0xf]
      %v322 = vld [vmem:[%s235 + $0x6c] sm:$0xf]
      %v323 = vld [vmem:[%s235 + $0x70] sm:$0xf]
      %v324 = vld [vmem:[%s235 + $0x74] sm:$0xf]
      %v325 = vld [vmem:[%s235 + $0x78] sm:$0xf]
      %v326 = vld [vmem:[%s235 + $0x7c] sm:$0xf]
      %v327 = vld [vmem:[%s235 + $0x80] sm:$0xf]
      %v328 = vld [vmem:[%s235 + $0x84] sm:$0xf]
      %v329 = vld [vmem:[%s235 + $0x88] sm:$0xf]
      %v330 = vld [vmem:[%s235 + $0x8c] sm:$0xf]
      %v331 = vld [vmem:[%s235 + $0x90] sm:$0xf]
      %v332 = vld [vmem:[%s235 + $0x94] sm:$0xf]
      %v333 = vld [vmem:[%s235 + $0x98] sm:$0xf]
      %v334 = vld [vmem:[%s235 + $0x9c] sm:$0xf]
      %v335 = vld [vmem:[%s235 + $0xa0] sm:$0xf]
      %v336 = vld [vmem:[%s235 + $0xa4] sm:$0xf]
      %v337 = vld [vmem:[%s235 + $0xa8] sm:$0xf]
      %v338 = vld [vmem:[%s235 + $0xac] sm:$0xf]
      %v339 = vld [vmem:[%s235 + $0xb0] sm:$0xf]
      %v340 = vld [vmem:[%s235 + $0xb4] sm:$0xf]
      %v341 = vld [vmem:[%s235 + $0xb8] sm:$0xf]
      %v342 = vld [vmem:[%s235 + $0xbc] sm:$0xf]
      %v343 = vld [vmem:[%s235 + $0xc0] sm:$0xf]
      %v344 = vld [vmem:[%s235 + $0xc4] sm:$0xf]
      %v345 = vld [vmem:[%s235 + $0xc8] sm:$0xf]
      %v346 = vld [vmem:[%s235 + $0xcc] sm:$0xf]
      %v347 = vld [vmem:[%s235 + $0xd0] sm:$0xf]
      %v348 = vld [vmem:[%s235 + $0xd4] sm:$0xf]
      %v349 = vld [vmem:[%s235 + $0xd8] sm:$0xf]
      %v350 = vld [vmem:[%s235 + $0xdc] sm:$0xf]
      %v351 = vld [vmem:[%s235 + $0xe0] sm:$0xf]
      %v352 = vld [vmem:[%s235 + $0xe4] sm:$0xf]
      %v353 = vld [vmem:[%s235 + $0xe8] sm:$0xf]
      %v354 = vld [vmem:[%s235 + $0xec] sm:$0xf]
      %v355 = vld [vmem:[%s235 + $0xf0] sm:$0xf]
      %v356 = vld [vmem:[%s235 + $0xf4] sm:$0xf]
      %v357 = vld [vmem:[%s235 + $0xf8] sm:$0xf]
      %v358 = vld [vmem:[%s235 + $0xfc] sm:$0xf]
      %v359 = vld [vmem:[%s235 + $0x100] sm:$0xf]
      %v360 = vld [vmem:[%s235 + $0x104] sm:$0xf]
      %v361 = vld [vmem:[%s235 + $0x108] sm:$0xf]
      %v362 = vld [vmem:[%s235 + $0x10c] sm:$0xf]
      %v363 = vld [vmem:[%s235 + $0x110] sm:$0xf]
      %v364 = vld [vmem:[%s235 + $0x114] sm:$0xf]
      %v365 = vld [vmem:[%s235 + $0x118] sm:$0xf]
      %v366 = vld [vmem:[%s235 + $0x11c] sm:$0xf]
      %v391 = vunpack.c.l.b16 %v271
      %v392 = vunpack.c.h.b16 %v271
      %v393 = vunpack.c.l.b16 %v272
      %v394 = vunpack.c.h.b16 %v272
      %v395 = vunpack.c.l.b16 %v273
      %v396 = vunpack.c.l.b16 %v274
      %v397 = vunpack.c.h.b16 %v274
      %v398 = vunpack.c.l.b16 %v275
      %v399 = vunpack.c.h.b16 %v275
      %v400 = vunpack.c.l.b16 %v276
      %v401 = vunpack.c.l.b16 %v277
      %v402 = vunpack.c.h.b16 %v277
      %v403 = vunpack.c.l.b16 %v278
      %v404 = vunpack.c.h.b16 %v278
      %v405 = vunpack.c.l.b16 %v279
      %v406 = vunpack.c.l.b16 %v280
      %v407 = vunpack.c.h.b16 %v280
      %v408 = vunpack.c.l.b16 %v281
      %v409 = vunpack.c.h.b16 %v281
      %v410 = vunpack.c.l.b16 %v282
      %v411 = vunpack.c.l.b16 %v283
      %v412 = vunpack.c.h.b16 %v283
      %v413 = vunpack.c.l.b16 %v284
      %v414 = vunpack.c.h.b16 %v284
      %v415 = vunpack.c.l.b16 %v285
      %v416 = vunpack.c.l.b16 %v286
      %v417 = vunpack.c.h.b16 %v286
      %v418 = vunpack.c.l.b16 %v287
      %v419 = vunpack.c.h.b16 %v287
      %v420 = vunpack.c.l.b16 %v288
      %v421 = vunpack.c.l.b16 %v289
      %v422 = vunpack.c.h.b16 %v289
      %v423 = vunpack.c.l.b16 %v290
      %v424 = vunpack.c.h.b16 %v290
      %v425 = vunpack.c.l.b16 %v291
      %v426 = vunpack.c.l.b16 %v292
      %v427 = vunpack.c.h.b16 %v292
      %v428 = vunpack.c.l.b16 %v293
      %v429 = vunpack.c.h.b16 %v293
      %v430 = vunpack.c.l.b16 %v294
      %v431 = vpack.c.b16 %v396, %v391
      %v432 = vpack.c.b16 %v397, %v392
      %v433 = vpack.c.b16 %v398, %v393
      %v434 = vpack.c.b16 %v399, %v394
      %v435 = vpack.c.b16 %v400, %v395
      %v436 = vpack.c.b16 %v406, %v401
      %v437 = vpack.c.b16 %v407, %v402
      %v438 = vpack.c.b16 %v408, %v403
      %v439 = vpack.c.b16 %v409, %v404
      %v440 = vpack.c.b16 %v410, %v405
      %v441 = vpack.c.b16 %v416, %v411
      %v442 = vpack.c.b16 %v417, %v412
      %v443 = vpack.c.b16 %v418, %v413
      %v444 = vpack.c.b16 %v419, %v414
      %v445 = vpack.c.b16 %v420, %v415
      %v446 = vpack.c.b16 %v426, %v421
      %v447 = vpack.c.b16 %v427, %v422
      %v448 = vpack.c.b16 %v428, %v423
      %v449 = vpack.c.b16 %v429, %v424
      %v450 = vpack.c.b16 %v430, %v425
      %v539 = vunpack.c.l.b16 %v295
      %v540 = vunpack.c.l.b16 %v296
      %v541 = vunpack.c.l.b16 %v297
      %v542 = vunpack.c.l.b16 %v298
      %v543 = vunpack.c.l.b16 %v299
      %v544 = vunpack.c.l.b16 %v300
      %v545 = vunpack.c.l.b16 %v301
      %v546 = vunpack.c.l.b16 %v302
      %v547 = vunpack.c.l.b16 %v303
      %v548 = vunpack.c.l.b16 %v304
      %v549 = vunpack.c.l.b16 %v305
      %v550 = vunpack.c.l.b16 %v306
      %v551 = vunpack.c.l.b16 %v307
      %v552 = vunpack.c.l.b16 %v308
      %v553 = vunpack.c.l.b16 %v309
      %v554 = vunpack.c.l.b16 %v310
      %v555 = vunpack.c.l.b16 %v311
      %v556 = vunpack.c.l.b16 %v312
      %v557 = vunpack.c.l.b16 %v313
      %v558 = vunpack.c.l.b16 %v314
      %v559 = vunpack.c.l.b16 %v315
      %v560 = vunpack.c.l.b16 %v316
      %v561 = vunpack.c.l.b16 %v317
      %v562 = vunpack.c.l.b16 %v318
      %v563 = vunpack.c.l.b16 %v319
      %v564 = vunpack.c.l.b16 %v320
      %v565 = vunpack.c.l.b16 %v321
      %v566 = vunpack.c.l.b16 %v322
      %v567 = vunpack.c.l.b16 %v323
      %v568 = vunpack.c.l.b16 %v324
      %v569 = vunpack.c.l.b16 %v325
      %v570 = vunpack.c.l.b16 %v326
      %v571 = vunpack.c.l.b16 %v327
      %v572 = vunpack.c.l.b16 %v328
      %v573 = vunpack.c.l.b16 %v329
      %v574 = vunpack.c.l.b16 %v330
      %v575 = vunpack.c.l.b16 %v331
      %v576 = vunpack.c.l.b16 %v332
      %v577 = vunpack.c.l.b16 %v333
      %v578 = vunpack.c.l.b16 %v334
      %v579 = vunpack.c.l.b16 %v335
      %v580 = vunpack.c.l.b16 %v336
      %v581 = vunpack.c.l.b16 %v337
      %v582 = vunpack.c.l.b16 %v338
      %v583 = vunpack.c.l.b16 %v339
      %v584 = vunpack.c.l.b16 %v340
      %v585 = vunpack.c.l.b16 %v341
      %v586 = vunpack.c.l.b16 %v342
      %v587 = vunpack.c.l.b16 %v343
      %v588 = vunpack.c.l.b16 %v344
      %v589 = vunpack.c.l.b16 %v345
      %v590 = vunpack.c.l.b16 %v346
      %v591 = vunpack.c.l.b16 %v347
      %v592 = vunpack.c.l.b16 %v348
      %v593 = vunpack.c.l.b16 %v349
      %v594 = vunpack.c.l.b16 %v350
      %v595 = vunpack.c.l.b16 %v351
      %v596 = vunpack.c.l.b16 %v352
      %v597 = vunpack.c.l.b16 %v353
      %v598 = vunpack.c.l.b16 %v354
      %v599 = vunpack.c.l.b16 %v355
      %v600 = vunpack.c.l.b16 %v356
      %v601 = vunpack.c.l.b16 %v357
      %v602 = vunpack.c.l.b16 %v358
      %v603 = vunpack.c.l.b16 %v359
      %v604 = vunpack.c.l.b16 %v360
      %v605 = vunpack.c.l.b16 %v361
      %v606 = vunpack.c.l.b16 %v362
      %v607 = vunpack.c.l.b16 %v363
      %v608 = vunpack.c.l.b16 %v364
      %v609 = vunpack.c.l.b16 %v365
      %v610 = vunpack.c.l.b16 %v366
      %v611 = vpack.c.b16 %v540, %v539
      %v612 = vpack.c.b16 %v542, %v541
      %v613 = vpack.c.b16 %v544, %v543
      %v614 = vpack.c.b16 %v546, %v545
      %v615 = vpack.c.b16 %v548, %v547
      %v616 = vpack.c.b16 %v550, %v549
      %v617 = vpack.c.b16 %v552, %v551
      %v618 = vpack.c.b16 %v554, %v553
      %v619 = vpack.c.b16 %v556, %v555
      %v620 = vpack.c.b16 %v558, %v557
      %v621 = vpack.c.b16 %v560, %v559
      %v622 = vpack.c.b16 %v562, %v561
      %v623 = vpack.c.b16 %v564, %v563
      %v624 = vpack.c.b16 %v566, %v565
      %v625 = vpack.c.b16 %v568, %v567
      %v626 = vpack.c.b16 %v570, %v569
      %v627 = vpack.c.b16 %v572, %v571
      %v628 = vpack.c.b16 %v574, %v573
      %v629 = vpack.c.b16 %v576, %v575
      %v630 = vpack.c.b16 %v578, %v577
      %v631 = vpack.c.b16 %v580, %v579
      %v632 = vpack.c.b16 %v582, %v581
      %v633 = vpack.c.b16 %v584, %v583
      %v634 = vpack.c.b16 %v586, %v585
      %v635 = vpack.c.b16 %v588, %v587
      %v636 = vpack.c.b16 %v590, %v589
      %v637 = vpack.c.b16 %v592, %v591
      %v638 = vpack.c.b16 %v594, %v593
      %v639 = vpack.c.b16 %v596, %v595
      %v640 = vpack.c.b16 %v598, %v597
      %v641 = vpack.c.b16 %v600, %v599
      %v642 = vpack.c.b16 %v602, %v601
      %v643 = vpack.c.b16 %v604, %v603
      %v644 = vpack.c.b16 %v606, %v605
      %v645 = vpack.c.b16 %v608, %v607
      %v646 = vpack.c.b16 %v610, %v609
      %vm683 = vcmask 523264
      %v685 = vsel %vm683, %v435, 0
      %v688 = vsel %vm683, %v440, 0
      %v691 = vsel %vm683, %v445, 0
      %v694 = vsel %vm683, %v450, 0
      %696 = vmatpush.bf16.msra.mxu0 %v618
      %697 = vmatpush.bf16.msra.mxu0 %v617
      %698 = vmatpush.bf16.msra.mxu0 %v616
      %699 = vmatpush.bf16.msra.mxu0 %v615
      %700 = vmatpush.bf16.msra.mxu0 %v614
      %701 = vmatpush.bf16.msra.mxu0 %v613
      %702 = vmatpush.bf16.msra.mxu0 %v612
      %703 = vmatpush.bf16.msra.mxu0 %v611
      %704 = vmatmul.bf16.gmra.mxu0 %v431
      %v705 = vpop.f32.mrf.mxu0
      %v706 = vadd.f32 0.0, %v705
      %v707 = vpop.f32.mrf.mxu0
      %v708 = vadd.f32 0.0, %v707
      %709 = vmatmul.bf16.gmra.mxu0 %v436
      %v710 = vpop.f32.mrf.mxu0
      %v711 = vadd.f32 0.0, %v710
      %v712 = vpop.f32.mrf.mxu0
      %v713 = vadd.f32 0.0, %v712
      %714 = vmatmul.bf16.gmra.mxu0 %v441
      %v715 = vpop.f32.mrf.mxu0
      %v716 = vadd.f32 0.0, %v715
      %v717 = vpop.f32.mrf.mxu0
      %v718 = vadd.f32 0.0, %v717
      %719 = vmatmul.bf16.gmra.mxu0 %v446
      %v720 = vpop.f32.mrf.mxu0
      %v721 = vadd.f32 0.0, %v720
      %v722 = vpop.f32.mrf.mxu0
      %v723 = vadd.f32 0.0, %v722
      %724 = vdwg.mxu0
      %725 = vmatpush.bf16.msra.mxu0 %v626
      %726 = vmatpush.bf16.msra.mxu0 %v625
      %727 = vmatpush.bf16.msra.mxu0 %v624
      %728 = vmatpush.bf16.msra.mxu0 %v623
      %729 = vmatpush.bf16.msra.mxu0 %v622
      %730 = vmatpush.bf16.msra.mxu0 %v621
      %731 = vmatpush.bf16.msra.mxu0 %v620
      %732 = vmatpush.bf16.msra.mxu0 %v619
      %733 = vmatmul.bf16.gmra.mxu0 %v432
      %v734 = vpop.f32.mrf.mxu0
      %v735 = vadd.f32 %v706, %v734
      %v736 = vpop.f32.mrf.mxu0
      %v737 = vadd.f32 %v708, %v736
      %738 = vmatmul.bf16.gmra.mxu0 %v437
      %v739 = vpop.f32.mrf.mxu0
      %v740 = vadd.f32 %v711, %v739
      %v741 = vpop.f32.mrf.mxu0
      %v742 = vadd.f32 %v713, %v741
      %743 = vmatmul.bf16.gmra.mxu0 %v442
      %v744 = vpop.f32.mrf.mxu0
      %v745 = vadd.f32 %v716, %v744
      %v746 = vpop.f32.mrf.mxu0
      %v747 = vadd.f32 %v718, %v746
      %748 = vmatmul.bf16.gmra.mxu0 %v447
      %v749 = vpop.f32.mrf.mxu0
      %v750 = vadd.f32 %v721, %v749
      %v751 = vpop.f32.mrf.mxu0
      %v752 = vadd.f32 %v723, %v751
      %753 = vdwg.mxu0
      %754 = vmatpush.bf16.msra.mxu0 %v634
      %755 = vmatpush.bf16.msra.mxu0 %v633
      %756 = vmatpush.bf16.msra.mxu0 %v632
      %757 = vmatpush.bf16.msra.mxu0 %v631
      %758 = vmatpush.bf16.msra.mxu0 %v630
      %759 = vmatpush.bf16.msra.mxu0 %v629
      %760 = vmatpush.bf16.msra.mxu0 %v628
      %761 = vmatpush.bf16.msra.mxu0 %v627
      %762 = vmatmul.bf16.gmra.mxu0 %v433
      %v763 = vpop.f32.mrf.mxu0
      %v764 = vadd.f32 %v735, %v763
      %v765 = vpop.f32.mrf.mxu0
      %v766 = vadd.f32 %v737, %v765
      %767 = vmatmul.bf16.gmra.mxu0 %v438
      %v768 = vpop.f32.mrf.mxu0
      %v769 = vadd.f32 %v740, %v768
      %v770 = vpop.f32.mrf.mxu0
      %v771 = vadd.f32 %v742, %v770
      %772 = vmatmul.bf16.gmra.mxu0 %v443
      %v773 = vpop.f32.mrf.mxu0
      %v774 = vadd.f32 %v745, %v773
      %v775 = vpop.f32.mrf.mxu0
      %v776 = vadd.f32 %v747, %v775
      %777 = vmatmul.bf16.gmra.mxu0 %v448
      %v778 = vpop.f32.mrf.mxu0
      %v779 = vadd.f32 %v750, %v778
      %v780 = vpop.f32.mrf.mxu0
      %v781 = vadd.f32 %v752, %v780
      %782 = vdwg.mxu0
      %783 = vmatpush.bf16.msra.mxu0 %v642
      %784 = vmatpush.bf16.msra.mxu0 %v641
      %785 = vmatpush.bf16.msra.mxu0 %v640
      %786 = vmatpush.bf16.msra.mxu0 %v639
      %787 = vmatpush.bf16.msra.mxu0 %v638
      %788 = vmatpush.bf16.msra.mxu0 %v637
      %789 = vmatpush.bf16.msra.mxu0 %v636
      %790 = vmatpush.bf16.msra.mxu0 %v635
      %791 = vmatmul.bf16.gmra.mxu0 %v434
      %v792 = vpop.f32.mrf.mxu0
      %v793 = vadd.f32 %v764, %v792
      %v794 = vpop.f32.mrf.mxu0
      %v795 = vadd.f32 %v766, %v794
      %796 = vmatmul.bf16.gmra.mxu0 %v439
      %v797 = vpop.f32.mrf.mxu0
      %v798 = vadd.f32 %v769, %v797
      %v799 = vpop.f32.mrf.mxu0
      %v800 = vadd.f32 %v771, %v799
      %801 = vmatmul.bf16.gmra.mxu0 %v444
      %v802 = vpop.f32.mrf.mxu0
      %v803 = vadd.f32 %v774, %v802
      %v804 = vpop.f32.mrf.mxu0
      %v805 = vadd.f32 %v776, %v804
      %806 = vmatmul.bf16.gmra.mxu0 %v449
      %v807 = vpop.f32.mrf.mxu0
      %v808 = vadd.f32 %v779, %v807
      %v809 = vpop.f32.mrf.mxu0
      %v810 = vadd.f32 %v781, %v809
      %811 = vdwg.mxu0
      %812 = vmatpush.bf16.msra.mxu0 0
      %813 = vmatpush.bf16.msra.mxu0 0
      %814 = vmatpush.bf16.msra.mxu0 0
      %815 = vmatpush.bf16.msra.mxu0 0
      %816 = vmatpush.bf16.msra.mxu0 %v646
      %817 = vmatpush.bf16.msra.mxu0 %v645
      %818 = vmatpush.bf16.msra.mxu0 %v644
      %819 = vmatpush.bf16.msra.mxu0 %v643
      %820 = vmatmul.bf16.gmra.mxu0 %v685
      %v821 = vpop.f32.mrf.mxu0
      %v822 = vadd.f32 %v793, %v821
      %v823 = vpop.f32.mrf.mxu0
      %v824 = vadd.f32 %v795, %v823
      %825 = vmatmul.bf16.gmra.mxu0 %v688
      %v826 = vpop.f32.mrf.mxu0
      %v827 = vadd.f32 %v798, %v826
      %v828 = vpop.f32.mrf.mxu0
      %v829 = vadd.f32 %v800, %v828
      %830 = vmatmul.bf16.gmra.mxu0 %v691
      %v831 = vpop.f32.mrf.mxu0
      %v832 = vadd.f32 %v803, %v831
      %v833 = vpop.f32.mrf.mxu0
      %v834 = vadd.f32 %v805, %v833
      %835 = vmatmul.bf16.gmra.mxu0 %v694
      %v836 = vpop.f32.mrf.mxu0
      %v837 = vadd.f32 %v808, %v836
      %v838 = vpop.f32.mrf.mxu0
      %v839 = vadd.f32 %v810, %v838
      %840 = vdwg.mxu0
      %v841 = vadd.f32 %v263, %v822
      %v842 = vadd.f32 %v264, %v824
      %v843 = vadd.f32 %v265, %v827
      %v844 = vadd.f32 %v266, %v829
      %v845 = vadd.f32 %v267, %v832
      %v846 = vadd.f32 %v268, %v834
      %v847 = vadd.f32 %v269, %v837
      %v848 = vadd.f32 %v270, %v839
      %849 = vst.msk [vmem:[#allocation2] sm:$0xff] %vm683, %v841
      %850 = vst.msk [vmem:[#allocation2 + $0x8] sm:$0xff] %vm683, %v842
      %851 = vst.msk [vmem:[#allocation2 + $0x10] sm:$0xff] %vm683, %v843
      %852 = vst.msk [vmem:[#allocation2 + $0x18] sm:$0xff] %vm683, %v844
      %853 = vst.msk [vmem:[#allocation2 + $0x20] sm:$0xff] %vm683, %v845
      %854 = vst.msk [vmem:[#allocation2 + $0x28] sm:$0xff] %vm683, %v846
      %855 = vst.msk [vmem:[#allocation2 + $0x30] sm:$0xff] %vm683, %v847
      %856 = vst.msk [vmem:[#allocation2 + $0x38] sm:$0xff] %vm683, %v848
      // Predicated region
      $region37: #{_lambda_.27} parent=31 // pred_check
        %p857 = pneg %p250
      $region38: #{_lambda_.27} parent=31 // pred_check_branch
        %859 = sbr.rel (%p857) target = $region40
      $region39: #{_lambda_.27} parent=31 // pred_region
        %v860 = vld [vmem:[#allocation2] sm:$0xff]
        %v861 = vld [vmem:[#allocation2 + $0x8] sm:$0xff]
        %v862 = vld [vmem:[#allocation2 + $0x10] sm:$0xff]
        %v863 = vld [vmem:[#allocation2 + $0x18] sm:$0xff]
        %v864 = vld [vmem:[#allocation2 + $0x20] sm:$0xff]
        %v865 = vld [vmem:[#allocation2 + $0x28] sm:$0xff]
        %v866 = vld [vmem:[#allocation2 + $0x30] sm:$0xff]
        %v867 = vld [vmem:[#allocation2 + $0x38] sm:$0xff]
        %v868 = vld [vmem:[%s241] sm:$0xff]
        %v869 = vld [vmem:[%s241 + $0x8] sm:$0xff]
        %v870 = vld [vmem:[%s241 + $0x10] sm:$0xff]
        %v871 = vld [vmem:[%s241 + $0x18] sm:$0xff]
        %v872 = vld [vmem:[%s241 + $0x20] sm:$0xff]
        %v873 = vld [vmem:[%s241 + $0x28] sm:$0xff]
        %v874 = vld [vmem:[%s241 + $0x30] sm:$0xff]
        %v875 = vld [vmem:[%s241 + $0x38] sm:$0xff]
        %v876 = vadd.f32 %v860, %v868
        %v877 = vadd.f32 %v861, %v869
        %v878 = vadd.f32 %v862, %v870
        %v879 = vadd.f32 %v863, %v871
        %v880 = vadd.f32 %v864, %v872
        %v881 = vadd.f32 %v865, %v873
        %v882 = vadd.f32 %v866, %v874
        %v883 = vadd.f32 %v867, %v875
        %884 = vst.msk [vmem:[%s247] sm:$0xff] %vm683, %v876
        %885 = vst.msk [vmem:[%s247 + $0x8] sm:$0xff] %vm683, %v877
        %886 = vst.msk [vmem:[%s247 + $0x10] sm:$0xff] %vm683, %v878
        %887 = vst.msk [vmem:[%s247 + $0x18] sm:$0xff] %vm683, %v879
        %888 = vst.msk [vmem:[%s247 + $0x20] sm:$0xff] %vm683, %v880
        %889 = vst.msk [vmem:[%s247 + $0x28] sm:$0xff] %vm683, %v881
        %890 = vst.msk [vmem:[%s247 + $0x30] sm:$0xff] %vm683, %v882
        %891 = vst.msk [vmem:[%s247 + $0x38] sm:$0xff] %vm683, %v883
      $region40: #{_lambda_.27} parent=31 // pred_fallthru
        _
      %s892 = smul.u32 8, %s18
      %p893 = scmp.lt.s32.totalorder %s892, 15
      %s894 = scalar_select %p893, %s892, 15
      %s895 = smul.addr %s894, 8
      %s896 = scalar_lea.vmem %s3, %s895
      // Predicated region
      $region41: #{_lambda_.27} parent=31 // pred_check
        %p897 = pneg %p124
      $region42: #{_lambda_.27} parent=31 // pred_check_branch
        %899 = sbr.rel (%p897) target = $region44
      $region43: #{_lambda_.27} parent=31 // pred_region
        %s900 = smul.u32 8, %s18
      $region44: #{_lambda_.27} parent=31 // pred_fallthru
        _
    $region32: #{_lambda_.27} parent=5 // pred_fallthru
      _
    %p901 = scmp.le.s32.totalorder 2, %s9
    // Predicated region
    $region45: #{_lambda_.27} parent=5 // pred_check
      %p902 = pneg %p901
    $region46: #{_lambda_.27} parent=5 // pred_check_branch
      %904 = sbr.rel (%p902) target = $region48
    $region47: #{_lambda_.27} parent=5 // pred_region
      %s905 = ssub.s32 %s9, 2
      // Predicated region
      $region49: #{_lambda_.27} parent=47 // pred_check
        %p906 = pneg %p130
      $region50: #{_lambda_.27} parent=47 // pred_check_branch
        %908 = sbr.rel (%p906) target = $region52
      $region51: #{_lambda_.27} parent=47 // pred_region
        %s909 = smul.u32 8, %s20
        %p910 = scmp.lt.s32.totalorder %s909, 15
        %s911 = scalar_select %p910, %s909, 15
        %s912 = smul.addr %s911, 8
        %s913 = scalar_lea.vmem %s3, %s912
      $region52: #{_lambda_.27} parent=47 // pred_fallthru
        _
    $region48: #{_lambda_.27} parent=5 // pred_fallthru
      _
  $region6: #{_lambda_.27} parent=0 // loop_footer
    %s13 = sadd.s32 1, %s9
  $region7: #{_lambda_.27} parent=0 // loop_footer_branch
    %8 = sbr.rel target = $region3
  $region8: #{_lambda_.27} parent=0 // loop_exit
    _

// kernel: _lambda_.31
$region0: #{_lambda_.31}
  #allocation0 [shape = 'u32[]', space=smem, size = 0x4, offset = 0x4, fixed_abs, tag = 'smem constant byte address 0x4 - core index']
  #allocation1 [shape = 'u32[72,128]{1,0:T(1,128)}', space=vmem, size = 0x9000, scoped, tag = 'internal scratch']
  %s0 = inlined_call_operand.vmem [shape: f32[32,128], index: 0, kind: input, shape index: {}]
  %s1 = inlined_call_operand.vmem [shape: f32[1,128], index: 1, kind: input, shape index: {}]
  %s2 = inlined_call_operand.vmem [shape: f32[1,128], index: 2, kind: input, shape index: {}]
  %s3 = inlined_call_operand.vmem [shape: bf16[32,128], index: 3, kind: output, shape index: {}]
  %s4 = sld [smem:[#allocation0]]
  $region45: #{_lambda_.31} parent=0
    _
  %s6 = ssub.s32 1, %s4
  %s7 = scalar_select 0, %s6, %s4
  loop: start=0, step=1, limit=4
  $region2: #{_lambda_.31} parent=0 // loop_pre_header
    _
  $region3: #{_lambda_.31} parent=0 // loop_header
    %s9 = sphi 0, %s13
    %p10 = scmp.ge.s32.totalorder %s9, 4
    %s19 = sphi 0, %s21
    %s22 = sphi 0, %s19
    %s23 = sphi 0, %s22
    %s39 = sphi 0, %s23
    %s43 = sphi 0, %s43
    %s45 = sphi 0, %s43
    %s46 = sphi 0, %s45
    %s60 = sphi 0, %s46
    %s64 = sphi 0, %s64
    %s66 = sphi 0, %s64
    %s67 = sphi 0, %s66
    %s81 = sphi 0, %s67
    %s87 = sphi 0, %s89
    %s90 = sphi 0, %s87
    %s91 = sphi 0, %s90
    %s107 = sphi 0, %s91
  $region4: #{_lambda_.31} parent=0 // loop_header_branch
    %12 = sbr.rel (%p10) target = $region8
  $region5: #{_lambda_.31} parent=0 // loop_body
    %s14 = ssub.s32 %s9, 1
    %s15 = ssub.s32 %s9, 2
    %s16 = sadd.s32 %s9, 1
    %s17 = ssub.s32 %s9, %s16
    %p18 = scmp.eq.s32.totalorder %s17, 0
    %s20 = sadd.s32 %s19, 1
    %s21 = scalar_select %p18, %s19, %s20
    %p24 = pneg %p18
    %p25 = scmp.eq.s32.totalorder %s9, 1
    %p26 = por %p24, %p25
    %p27 = scmp.ne.s32.totalorder %s19, %s22
    %p28 = scmp.eq.s32.totalorder %s9, 0
    %p29 = por %p27, %p28
    %p30 = scmp.ne.s32.totalorder %s19, %s22
    %p31 = scmp.eq.s32.totalorder %s14, 1
    %p32 = por %p30, %p31
    %p33 = scmp.ne.s32.totalorder %s22, %s23
    %p34 = scmp.eq.s32.totalorder %s14, 0
    %p35 = por %p33, %p34
    %p36 = scmp.ne.s32.totalorder %s22, %s23
    %p37 = scmp.eq.s32.totalorder %s15, 1
    %p38 = por %p36, %p37
    %p40 = scmp.ne.s32.totalorder %s23, %s39
    %p41 = scmp.eq.s32.totalorder %s15, 0
    %p42 = por %p40, %p41
    %s44 = sadd.s32 %s43, 1
    %p47 = scmp.eq.s32.totalorder %s9, 1
    %p48 = scmp.ne.s32.totalorder %s43, %s45
    %p49 = scmp.eq.s32.totalorder %s9, 0
    %p50 = por %p48, %p49
    %p51 = scmp.ne.s32.totalorder %s43, %s45
    %p52 = scmp.eq.s32.totalorder %s14, 1
    %p53 = por %p51, %p52
    %p54 = scmp.ne.s32.totalorder %s45, %s46
    %p55 = scmp.eq.s32.totalorder %s14, 0
    %p56 = por %p54, %p55
    %p57 = scmp.ne.s32.totalorder %s45, %s46
    %p58 = scmp.eq.s32.totalorder %s15, 1
    %p59 = por %p57, %p58
    %p61 = scmp.ne.s32.totalorder %s46, %s60
    %p62 = scmp.eq.s32.totalorder %s15, 0
    %p63 = por %p61, %p62
    %s65 = sadd.s32 %s64, 1
    %p68 = scmp.eq.s32.totalorder %s9, 1
    %p69 = scmp.ne.s32.totalorder %s64, %s66
    %p70 = scmp.eq.s32.totalorder %s9, 0
    %p71 = por %p69, %p70
    %p72 = scmp.ne.s32.totalorder %s64, %s66
    %p73 = scmp.eq.s32.totalorder %s14, 1
    %p74 = por %p72, %p73
    %p75 = scmp.ne.s32.totalorder %s66, %s67
    %p76 = scmp.eq.s32.totalorder %s14, 0
    %p77 = por %p75, %p76
    %p78 = scmp.ne.s32.totalorder %s66, %s67
    %p79 = scmp.eq.s32.totalorder %s15, 1
    %p80 = por %p78, %p79
    %p82 = scmp.ne.s32.totalorder %s67, %s81
    %p83 = scmp.eq.s32.totalorder %s15, 0
    %p84 = por %p82, %p83
    %s85 = ssub.s32 %s9, %s16
    %p86 = scmp.eq.s32.totalorder %s85, 0
    %s88 = sadd.s32 %s87, 1
    %s89 = scalar_select %p86, %s87, %s88
    %p92 = pneg %p86
    %p93 = scmp.eq.s32.totalorder %s9, 1
    %p94 = por %p92, %p93
    %p95 = scmp.ne.s32.totalorder %s87, %s90
    %p96 = scmp.eq.s32.totalorder %s9, 0
    %p97 = por %p95, %p96
    %p98 = scmp.ne.s32.totalorder %s87, %s90
    %p99 = scmp.eq.s32.totalorder %s14, 1
    %p100 = por %p98, %p99
    %p101 = scmp.ne.s32.totalorder %s90, %s91
    %p102 = scmp.eq.s32.totalorder %s14, 0
    %p103 = por %p101, %p102
    %p104 = scmp.ne.s32.totalorder %s90, %s91
    %p105 = scmp.eq.s32.totalorder %s15, 1
    %p106 = por %p104, %p105
    %p108 = scmp.ne.s32.totalorder %s91, %s107
    %p109 = scmp.eq.s32.totalorder %s15, 0
    %p110 = por %p108, %p109
    %p111 = scmp.le.s32.totalorder 1, %s9
    %p112 = scmp.lt.s32.totalorder %s9, 3
    %p113 = pnand %p111, %p112
    %p114 = pneg %p113
    // Predicated region
    $region9: #{_lambda_.31} parent=5 // pred_check
      _
    $region10: #{_lambda_.31} parent=5 // pred_check_branch
      %116 = sbr.rel (%p113) target = $region12
    $region11: #{_lambda_.31} parent=5 // pred_region
      %s117 = ssub.s32 %s9, 1
      // Predicated region
      $region13: #{_lambda_.31} parent=11 // pred_check
        %p118 = pneg %p56
      $region14: #{_lambda_.31} parent=11 // pred_check_branch
        %120 = sbr.rel (%p118) target = $region16
      $region15: #{_lambda_.31} parent=11 // pred_region
        _
      $region16: #{_lambda_.31} parent=11 // pred_fallthru
        _
      // Predicated region
      $region17: #{_lambda_.31} parent=11 // pred_check
        %p121 = pneg %p77
      $region18: #{_lambda_.31} parent=11 // pred_check_branch
        %123 = sbr.rel (%p121) target = $region20
      $region19: #{_lambda_.31} parent=11 // pred_region
        _
      $region20: #{_lambda_.31} parent=11 // pred_fallthru
        _
    $region12: #{_lambda_.31} parent=5 // pred_fallthru
      _
    %p124 = scmp.lt.s32.totalorder %s9, 2
    // Predicated region
    $region21: #{_lambda_.31} parent=5 // pred_check
      %p125 = pneg %p124
    $region22: #{_lambda_.31} parent=5 // pred_check_branch
      %127 = sbr.rel (%p125) target = $region24
    $region23: #{_lambda_.31} parent=5 // pred_region
      // Predicated region
      $region25: #{_lambda_.31} parent=23 // pred_check
        %p128 = pneg %p29
      $region26: #{_lambda_.31} parent=23 // pred_check_branch
        %130 = sbr.rel (%p128) target = $region28
      $region27: #{_lambda_.31} parent=23 // pred_region
        %s131 = smul.u32 2, %s9
        %p132 = scmp.lt.s32.totalorder %s131, 3
        %s133 = scalar_select %p132, %s131, 3
        %s134 = smul.addr %s133, 8
        %s135 = scalar_lea.vmem %s0, %s134
        %s136 = smul.u32 2, %s9
      $region28: #{_lambda_.31} parent=23 // pred_fallthru
        _
    $region24: #{_lambda_.31} parent=5 // pred_fallthru
      _
    %p137 = scmp.le.s32.totalorder 1, %s9
    %p138 = scmp.lt.s32.totalorder %s9, 3
    %p139 = pnand %p137, %p138
    %p140 = pneg %p139
    // Predicated region
    $region29: #{_lambda_.31} parent=5 // pred_check
      _
    $region30: #{_lambda_.31} parent=5 // pred_check_branch
      %142 = sbr.rel (%p139) target = $region32
    $region31: #{_lambda_.31} parent=5 // pred_region
      %s143 = ssub.s32 %s9, 1
      %s144 = smul.u32 2, %s14
      %p145 = scmp.lt.s32.totalorder %s144, 3
      %s146 = scalar_select %p145, %s144, 3
      %s147 = smul.addr %s146, 8
      %s148 = scalar_lea.vmem %s0, %s147
      %p149 = pneg %p35
      %p150 = pneg %p32
      %p151 = pneg %p56
      %p152 = pneg %p53
      %p153 = pneg %p77
      %p154 = pneg %p74
      %p155 = pneg %p103
      %p156 = pneg %p100
      %s157 = smul.u32 2, %s14
      %p158 = scmp.lt.s32.totalorder %s157, 3
      %s159 = scalar_select %p158, %s157, 3
      %s160 = smul.addr %s159, 4
      %s161 = scalar_lea.vmem %s3, %s160
      %s162 = smul.u32 2, %s14
      %p163 = scmp.lt.s32.totalorder %s162, 3
      %s164 = scalar_select %p163, %s162, 3
      %s165 = smul.addr %s164, 8
      %s166 = scalar_lea.vmem %s0, %s165
      %s167 = smul.u32 2, %s14
      %s168 = smul.u32 2, %s14
      %p169 = scmp.lt.s32.totalorder %s168, 3
      %s170 = scalar_select %p169, %s168, 3
      %s171 = smul.addr %s170, 4
      %s172 = scalar_lea.vmem %s3, %s171
      %s173 = smul.u32 2, %s14
      %v174 = vld [vmem:[%s166] sm:$0xff]
      %v175 = vld [vmem:[%s166 + $0x8] sm:$0xff]
      %v176 = vld [vmem:[%s1] sm:$0x1]
      %v178 = vperm.slane %v176, 0
      %v180 = vmul.f32 %v174, %v178
      %v181 = vmul.f32 %v175, %v178
      %v182 = vld [vmem:[%s2] sm:$0x1]
      %v184 = vperm.slane %v182, 0
      %v186 = vadd.f32 %v180, %v184
      %v187 = vadd.f32 %v181, %v184
      %v188 = vmax.f32 %v186, 0.0
      %v189 = vmax.f32 %v187, 0.0
      %v190 = vpack.c.bf16 %v188, %v188
      %v191 = vpack.c.bf16 %v189, %v189
      %192 = vst [vmem:[%s172] sm:$0xf] %v190
      %193 = vst [vmem:[%s172 + $0x4] sm:$0xf] %v191
      %s194 = smul.u32 2, %s14
      %p195 = scmp.lt.s32.totalorder %s194, 3
      %s196 = scalar_select %p195, %s194, 3
      %s197 = smul.addr %s196, 4
      %s198 = scalar_lea.vmem %s3, %s197
      // Predicated region
      $region33: #{_lambda_.31} parent=31 // pred_check
        %p199 = pneg %p100
      $region34: #{_lambda_.31} parent=31 // pred_check_branch
        %201 = sbr.rel (%p199) target = $region36
      $region35: #{_lambda_.31} parent=31 // pred_region
        %s202 = smul.u32 2, %s14
      $region36: #{_lambda_.31} parent=31 // pred_fallthru
        _
    $region32: #{_lambda_.31} parent=5 // pred_fallthru
      _
    %p203 = scmp.le.s32.totalorder 2, %s9
    // Predicated region
    $region37: #{_lambda_.31} parent=5 // pred_check
      %p204 = pneg %p203
    $region38: #{_lambda_.31} parent=5 // pred_check_branch
      %206 = sbr.rel (%p204) target = $region40
    $region39: #{_lambda_.31} parent=5 // pred_region
      %s207 = ssub.s32 %s9, 2
      // Predicated region
      $region41: #{_lambda_.31} parent=39 // pred_check
        %p208 = pneg %p106
      $region42: #{_lambda_.31} parent=39 // pred_check_branch
        %210 = sbr.rel (%p208) target = $region44
      $region43: #{_lambda_.31} parent=39 // pred_region
        %s211 = smul.u32 2, %s15
        %p212 = scmp.lt.s32.totalorder %s211, 3
        %s213 = scalar_select %p212, %s211, 3
        %s214 = smul.addr %s213, 4
        %s215 = scalar_lea.vmem %s3, %s214
      $region44: #{_lambda_.31} parent=39 // pred_fallthru
        _
    $region40: #{_lambda_.31} parent=5 // pred_fallthru
      _
  $region6: #{_lambda_.31} parent=0 // loop_footer
    %s13 = sadd.s32 1, %s9
  $region7: #{_lambda_.31} parent=0 // loop_footer_branch
    %8 = sbr.rel target = $region3
  $region8: #{_lambda_.31} parent=0 // loop_exit
    _

// kernel: _lambda_.30
$region0: #{_lambda_.30}
  #allocation0 [shape = 'u32[]', space=smem, size = 0x4, offset = 0x4, fixed_abs, tag = 'smem constant byte address 0x4 - core index']
  #allocation1 [shape = 'u32[72,128]{1,0:T(1,128)}', space=vmem, size = 0x9000, scoped, tag = 'internal scratch']
  #allocation2 [shape = 'f32[16,128]{1,0:T(8,128)}', space=vmem, size = 0x2000, scoped, tag = 'scratch operand']
  %s0 = inlined_call_operand.vmem [shape: bf16[32,576], index: 0, kind: input, shape index: {}]
  %s1 = inlined_call_operand.vmem [shape: bf16[576,128], index: 1, kind: input, shape index: {}]
  %s2 = inlined_call_operand.vmem [shape: f32[32,128], index: 2, kind: output, shape index: {}]
  %s3 = sld [smem:[#allocation0]]
  $region49: #{_lambda_.30} parent=0
    _
  %s5 = ssub.s32 1, %s3
  %s6 = scalar_select 0, %s5, %s3
  loop: start=0, step=1, limit=4
  $region2: #{_lambda_.30} parent=0 // loop_pre_header
    _
  $region3: #{_lambda_.30} parent=0 // loop_header
    %s8 = sphi 0, %s12
    %p9 = scmp.ge.s32.totalorder %s8, 4
    %s15 = sphi 0, %s27
    %s16 = sphi 0, %s23
    %s17 = sphi 0, %s15
    %s18 = sphi 0, %s16
    %s19 = sphi 0, %s17
    %s20 = sphi 0, %s18
    %s32 = sphi 0, %s34
    %s35 = sphi 0, %s32
    %s36 = sphi 0, %s35
    %s52 = sphi 0, %s36
    %s58 = sphi 0, %s60
    %s61 = sphi 0, %s58
    %s62 = sphi 0, %s61
    %s78 = sphi 0, %s62
    %s84 = sphi 0, %s86
    %s87 = sphi 0, %s84
    %s88 = sphi 0, %s87
    %s104 = sphi 0, %s88
  $region4: #{_lambda_.30} parent=0 // loop_header_branch
    %11 = sbr.rel (%p9) target = $region8
  $region5: #{_lambda_.30} parent=0 // loop_body
    %s13 = ssub.s32 %s8, 1
    %s14 = ssub.s32 %s8, 2
    %s21 = sadd.s32 1, %s16
    %p22 = scmp.ge.s32.totalorder %s21, 1
    %s23 = scalar_select %p22, 0, %s21
    %s24 = sadd.s32 1, %s15
    %s25 = scalar_select %p22, %s24, %s15
    %p26 = scmp.ge.s32.totalorder %s25, 2
    %s27 = scalar_select %p26, 0, %s25
    %s28 = ssub.s32 %s15, %s27
    %s29 = ssub.s32 %s16, %s23
    %s30 = sor.u32 %s28, %s29
    %p31 = scmp.eq.s32.totalorder %s30, 0
    %s33 = sadd.s32 %s32, 1
    %s34 = scalar_select %p31, %s32, %s33
    %p37 = pneg %p31
    %p38 = scmp.eq.s32.totalorder %s8, 1
    %p39 = por %p37, %p38
    %p40 = scmp.ne.s32.totalorder %s32, %s35
    %p41 = scmp.eq.s32.totalorder %s8, 0
    %p42 = por %p40, %p41
    %p43 = scmp.ne.s32.totalorder %s32, %s35
    %p44 = scmp.eq.s32.totalorder %s13, 1
    %p45 = por %p43, %p44
    %p46 = scmp.ne.s32.totalorder %s35, %s36
    %p47 = scmp.eq.s32.totalorder %s13, 0
    %p48 = por %p46, %p47
    %p49 = scmp.ne.s32.totalorder %s35, %s36
    %p50 = scmp.eq.s32.totalorder %s14, 1
    %p51 = por %p49, %p50
    %p53 = scmp.ne.s32.totalorder %s36, %s52
    %p54 = scmp.eq.s32.totalorder %s14, 0
    %p55 = por %p53, %p54
    %s56 = ssub.s32 %s16, %s23
    %p57 = scmp.eq.s32.totalorder %s56, 0
    %s59 = sadd.s32 %s58, 1
    %s60 = scalar_select %p57, %s58, %s59
    %p63 = pneg %p57
    %p64 = scmp.eq.s32.totalorder %s8, 1
    %p65 = por %p63, %p64
    %p66 = scmp.ne.s32.totalorder %s58, %s61
    %p67 = scmp.eq.s32.totalorder %s8, 0
    %p68 = por %p66, %p67
    %p69 = scmp.ne.s32.totalorder %s58, %s61
    %p70 = scmp.eq.s32.totalorder %s13, 1
    %p71 = por %p69, %p70
    %p72 = scmp.ne.s32.totalorder %s61, %s62
    %p73 = scmp.eq.s32.totalorder %s13, 0
    %p74 = por %p72, %p73
    %p75 = scmp.ne.s32.totalorder %s61, %s62
    %p76 = scmp.eq.s32.totalorder %s14, 1
    %p77 = por %p75, %p76
    %p79 = scmp.ne.s32.totalorder %s62, %s78
    %p80 = scmp.eq.s32.totalorder %s14, 0
    %p81 = por %p79, %p80
    %s82 = ssub.s32 %s15, %s27
    %p83 = scmp.eq.s32.totalorder %s82, 0
    %s85 = sadd.s32 %s84, 1
    %s86 = scalar_select %p83, %s84, %s85
    %p89 = pneg %p83
    %p90 = scmp.eq.s32.totalorder %s8, 1
    %p91 = por %p89, %p90
    %p92 = scmp.ne.s32.totalorder %s84, %s87
    %p93 = scmp.eq.s32.totalorder %s8, 0
    %p94 = por %p92, %p93
    %p95 = scmp.ne.s32.totalorder %s84, %s87
    %p96 = scmp.eq.s32.totalorder %s13, 1
    %p97 = por %p95, %p96
    %p98 = scmp.ne.s32.totalorder %s87, %s88
    %p99 = scmp.eq.s32.totalorder %s13, 0
    %p100 = por %p98, %p99
    %p101 = scmp.ne.s32.totalorder %s87, %s88
    %p102 = scmp.eq.s32.totalorder %s14, 1
    %p103 = por %p101, %p102
    %p105 = scmp.ne.s32.totalorder %s88, %s104
    %p106 = scmp.eq.s32.totalorder %s14, 0
    %p107 = por %p105, %p106
    %p108 = scmp.le.s32.totalorder 1, %s8
    %p109 = scmp.lt.s32.totalorder %s8, 3
    %p110 = pnand %p108, %p109
    %p111 = pneg %p110
    // Predicated region
    $region9: #{_lambda_.30} parent=5 // pred_check
      _
    $region10: #{_lambda_.30} parent=5 // pred_check_branch
      %113 = sbr.rel (%p110) target = $region12
    $region11: #{_lambda_.30} parent=5 // pred_region
      %s114 = ssub.s32 %s8, 1
      // Predicated region
      $region13: #{_lambda_.30} parent=11 // pred_check
        %p115 = pneg %p74
      $region14: #{_lambda_.30} parent=11 // pred_check_branch
        %117 = sbr.rel (%p115) target = $region16
      $region15: #{_lambda_.30} parent=11 // pred_region
        %s118 = smul.u32 72, %s18
        %p119 = scmp.lt.s32.totalorder %s118, 71
        %s120 = scalar_select %p119, %s118, 71
        %s121 = smul.addr %s120, 4
        %s122 = scalar_lea.vmem %s1, %s121
        %s123 = smul.u32 72, %s18
      $region16: #{_lambda_.30} parent=11 // pred_fallthru
        _
    $region12: #{_lambda_.30} parent=5 // pred_fallthru
      _
    %p124 = scmp.lt.s32.totalorder %s8, 2
    // Predicated region
    $region17: #{_lambda_.30} parent=5 // pred_check
      %p125 = pneg %p124
    $region18: #{_lambda_.30} parent=5 // pred_check_branch
      %127 = sbr.rel (%p125) target = $region20
    $region19: #{_lambda_.30} parent=5 // pred_region
      // Predicated region
      $region21: #{_lambda_.30} parent=19 // pred_check
        %p128 = pneg %p42
      $region22: #{_lambda_.30} parent=19 // pred_check_branch
        %130 = sbr.rel (%p128) target = $region24
      $region23: #{_lambda_.30} parent=19 // pred_region
        %s131 = smul.u32 2, %s15
        %s132 = smul.u32 5, %s16
        %p133 = scmp.lt.s32.totalorder %s131, 3
        %s134 = scalar_select %p133, %s131, 3
        %p135 = scmp.lt.s32.totalorder %s132, 4
        %s136 = scalar_select %p135, %s132, 4
        %s137 = smul.addr %s134, 5
        %s138 = sadd.s32 %s136, %s137
        %s139 = smul.addr %s138, 4
        %s140 = scalar_lea.vmem %s0, %s139
        %s141 = smul.u32 2, %s15
        %s142 = smul.u32 5, %s16
      $region24: #{_lambda_.30} parent=19 // pred_fallthru
        _
    $region20: #{_lambda_.30} parent=5 // pred_fallthru
      _
    %p143 = scmp.le.s32.totalorder 1, %s8
    %p144 = scmp.lt.s32.totalorder %s8, 3
    %p145 = pnand %p143, %p144
    %p146 = pneg %p145
    // Predicated region
    $region25: #{_lambda_.30} parent=5 // pred_check
      _
    $region26: #{_lambda_.30} parent=5 // pred_check_branch
      %148 = sbr.rel (%p145) target = $region28
    $region27: #{_lambda_.30} parent=5 // pred_region
      %s149 = ssub.s32 %s8, 1
      %s150 = smul.u32 2, %s17
      %s151 = smul.u32 5, %s18
      %p152 = scmp.lt.s32.totalorder %s150, 3
      %s153 = scalar_select %p152, %s150, 3
      %p154 = scmp.lt.s32.totalorder %s151, 4
      %s155 = scalar_select %p154, %s151, 4
      %s156 = smul.addr %s153, 5
      %s157 = sadd.s32 %s155, %s156
      %s158 = smul.addr %s157, 4
      %s159 = scalar_lea.vmem %s0, %s158
      %p160 = pneg %p48
      %p161 = pneg %p45
      %s162 = smul.u32 72, %s18
      %p163 = scmp.lt.s32.totalorder %s162, 71
      %s164 = scalar_select %p163, %s162, 71
      %s165 = smul.addr %s164, 4
      %s166 = scalar_lea.vmem %s1, %s165
      %p167 = pneg %p74
      %p168 = pneg %p71
      %p169 = pneg %p100
      %p170 = pneg %p97
      %s171 = smul.u32 2, %s17
      %p172 = scmp.lt.s32.totalorder %s171, 3
      %s173 = scalar_select %p172, %s171, 3
      %s174 = smul.addr %s173, 8
      %s175 = scalar_lea.vmem %s2, %s174
      %s176 = smul.u32 2, %s17
      %s177 = smul.u32 5, %s18
      %p178 = scmp.lt.s32.totalorder %s176, 3
      %s179 = scalar_select %p178, %s176, 3
      %p180 = scmp.lt.s32.totalorder %s177, 4
      %s181 = scalar_select %p180, %s177, 4
      %s182 = smul.addr %s179, 5
      %s183 = sadd.s32 %s181, %s182
      %s184 = smul.addr %s183, 4
      %s185 = scalar_lea.vmem %s0, %s184
      %s186 = smul.u32 2, %s17
      %s187 = smul.u32 5, %s18
      %s188 = smul.u32 72, %s18
      %p189 = scmp.lt.s32.totalorder %s188, 71
      %s190 = scalar_select %p189, %s188, 71
      %s191 = smul.addr %s190, 4
      %s192 = scalar_lea.vmem %s1, %s191
      %s193 = smul.u32 72, %s18
      %s194 = smul.u32 2, %s17
      %p195 = scmp.lt.s32.totalorder %s194, 3
      %s196 = scalar_select %p195, %s194, 3
      %s197 = smul.addr %s196, 8
      %s198 = scalar_lea.vmem %s2, %s197
      %s199 = smul.u32 2, %s17
      %p201 = scmp.eq.s32.totalorder %s18, 0
      // Predicated region
      $region29: #{_lambda_.30} parent=27 // pred_check
        %p202 = pneg %p201
      $region30: #{_lambda_.30} parent=27 // pred_check_branch
        %204 = sbr.rel (%p202) target = $region32
      $region31: #{_lambda_.30} parent=27 // pred_region
        %205 = vst [vmem:[#allocation2] sm:$0xff] 0.0
        %206 = vst [vmem:[#allocation2 + $0x8] sm:$0xff] 0.0
      $region32: #{_lambda_.30} parent=27 // pred_fallthru
        _
      %v207 = vld [vmem:[#allocation2] sm:$0xff]
      %v208 = vld [vmem:[#allocation2 + $0x8] sm:$0xff]
      %v209 = vld [vmem:[%s185] sm:$0xff]
      %v210 = vld [vmem:[%s185 + $0x8] sm:$0xff]
      %v211 = vld [vmem:[%s185 + $0x10] sm:$0xf]
      %v212 = vld [vmem:[%s185 + $0x14] sm:$0xff]
      %v213 = vld [vmem:[%s185 + $0x1c] sm:$0xff]
      %v214 = vld [vmem:[%s185 + $0x24] sm:$0xf]
      %v215 = vld [vmem:[%s192] sm:$0xf]
      %v216 = vld [vmem:[%s192 + $0x4] sm:$0xf]
      %v217 = vld [vmem:[%s192 + $0x8] sm:$0xf]
      %v218 = vld [vmem:[%s192 + $0xc] sm:$0xf]
      %v219 = vld [vmem:[%s192 + $0x10] sm:$0xf]
      %v220 = vld [vmem:[%s192 + $0x14] sm:$0xf]
      %v221 = vld [vmem:[%s192 + $0x18] sm:$0xf]
      %v222 = vld [vmem:[%s192 + $0x1c] sm:$0xf]
      %v223 = vld [vmem:[%s192 + $0x20] sm:$0xf]
      %v224 = vld [vmem:[%s192 + $0x24] sm:$0xf]
      %v225 = vld [vmem:[%s192 + $0x28] sm:$0xf]
      %v226 = vld [vmem:[%s192 + $0x2c] sm:$0xf]
      %v227 = vld [vmem:[%s192 + $0x30] sm:$0xf]
      %v228 = vld [vmem:[%s192 + $0x34] sm:$0xf]
      %v229 = vld [vmem:[%s192 + $0x38] sm:$0xf]
      %v230 = vld [vmem:[%s192 + $0x3c] sm:$0xf]
      %v231 = vld [vmem:[%s192 + $0x40] sm:$0xf]
      %v232 = vld [vmem:[%s192 + $0x44] sm:$0xf]
      %v233 = vld [vmem:[%s192 + $0x48] sm:$0xf]
      %v234 = vld [vmem:[%s192 + $0x4c] sm:$0xf]
      %v235 = vld [vmem:[%s192 + $0x50] sm:$0xf]
      %v236 = vld [vmem:[%s192 + $0x54] sm:$0xf]
      %v237 = vld [vmem:[%s192 + $0x58] sm:$0xf]
      %v238 = vld [vmem:[%s192 + $0x5c] sm:$0xf]
      %v239 = vld [vmem:[%s192 + $0x60] sm:$0xf]
      %v240 = vld [vmem:[%s192 + $0x64] sm:$0xf]
      %v241 = vld [vmem:[%s192 + $0x68] sm:$0xf]
      %v242 = vld [vmem:[%s192 + $0x6c] sm:$0xf]
      %v243 = vld [vmem:[%s192 + $0x70] sm:$0xf]
      %v244 = vld [vmem:[%s192 + $0x74] sm:$0xf]
      %v245 = vld [vmem:[%s192 + $0x78] sm:$0xf]
      %v246 = vld [vmem:[%s192 + $0x7c] sm:$0xf]
      %v247 = vld [vmem:[%s192 + $0x80] sm:$0xf]
      %v248 = vld [vmem:[%s192 + $0x84] sm:$0xf]
      %v249 = vld [vmem:[%s192 + $0x88] sm:$0xf]
      %v250 = vld [vmem:[%s192 + $0x8c] sm:$0xf]
      %v251 = vld [vmem:[%s192 + $0x90] sm:$0xf]
      %v252 = vld [vmem:[%s192 + $0x94] sm:$0xf]
      %v253 = vld [vmem:[%s192 + $0x98] sm:$0xf]
      %v254 = vld [vmem:[%s192 + $0x9c] sm:$0xf]
      %v255 = vld [vmem:[%s192 + $0xa0] sm:$0xf]
      %v256 = vld [vmem:[%s192 + $0xa4] sm:$0xf]
      %v257 = vld [vmem:[%s192 + $0xa8] sm:$0xf]
      %v258 = vld [vmem:[%s192 + $0xac] sm:$0xf]
      %v259 = vld [vmem:[%s192 + $0xb0] sm:$0xf]
      %v260 = vld [vmem:[%s192 + $0xb4] sm:$0xf]
      %v261 = vld [vmem:[%s192 + $0xb8] sm:$0xf]
      %v262 = vld [vmem:[%s192 + $0xbc] sm:$0xf]
      %v263 = vld [vmem:[%s192 + $0xc0] sm:$0xf]
      %v264 = vld [vmem:[%s192 + $0xc4] sm:$0xf]
      %v265 = vld [vmem:[%s192 + $0xc8] sm:$0xf]
      %v266 = vld [vmem:[%s192 + $0xcc] sm:$0xf]
      %v267 = vld [vmem:[%s192 + $0xd0] sm:$0xf]
      %v268 = vld [vmem:[%s192 + $0xd4] sm:$0xf]
      %v269 = vld [vmem:[%s192 + $0xd8] sm:$0xf]
      %v270 = vld [vmem:[%s192 + $0xdc] sm:$0xf]
      %v271 = vld [vmem:[%s192 + $0xe0] sm:$0xf]
      %v272 = vld [vmem:[%s192 + $0xe4] sm:$0xf]
      %v273 = vld [vmem:[%s192 + $0xe8] sm:$0xf]
      %v274 = vld [vmem:[%s192 + $0xec] sm:$0xf]
      %v275 = vld [vmem:[%s192 + $0xf0] sm:$0xf]
      %v276 = vld [vmem:[%s192 + $0xf4] sm:$0xf]
      %v277 = vld [vmem:[%s192 + $0xf8] sm:$0xf]
      %v278 = vld [vmem:[%s192 + $0xfc] sm:$0xf]
      %v279 = vld [vmem:[%s192 + $0x100] sm:$0xf]
      %v280 = vld [vmem:[%s192 + $0x104] sm:$0xf]
      %v281 = vld [vmem:[%s192 + $0x108] sm:$0xf]
      %v282 = vld [vmem:[%s192 + $0x10c] sm:$0xf]
      %v283 = vld [vmem:[%s192 + $0x110] sm:$0xf]
      %v284 = vld [vmem:[%s192 + $0x114] sm:$0xf]
      %v285 = vld [vmem:[%s192 + $0x118] sm:$0xf]
      %v286 = vld [vmem:[%s192 + $0x11c] sm:$0xf]
      %v293 = vunpack.c.l.b16 %v209
      %v294 = vunpack.c.h.b16 %v209
      %v295 = vunpack.c.l.b16 %v210
      %v296 = vunpack.c.h.b16 %v210
      %v297 = vunpack.c.l.b16 %v211
      %v298 = vunpack.c.l.b16 %v212
      %v299 = vunpack.c.h.b16 %v212
      %v300 = vunpack.c.l.b16 %v213
      %v301 = vunpack.c.h.b16 %v213
      %v302 = vunpack.c.l.b16 %v214
      %v303 = vpack.c.b16 %v298, %v293
      %v304 = vpack.c.b16 %v299, %v294
      %v305 = vpack.c.b16 %v300, %v295
      %v306 = vpack.c.b16 %v301, %v296
      %v307 = vpack.c.b16 %v302, %v297
      %v384 = vunpack.c.l.b16 %v215
      %v385 = vunpack.c.l.b16 %v216
      %v386 = vunpack.c.l.b16 %v217
      %v387 = vunpack.c.l.b16 %v218
      %v388 = vunpack.c.l.b16 %v219
      %v389 = vunpack.c.l.b16 %v220
      %v390 = vunpack.c.l.b16 %v221
      %v391 = vunpack.c.l.b16 %v222
      %v392 = vunpack.c.l.b16 %v223
      %v393 = vunpack.c.l.b16 %v224
      %v394 = vunpack.c.l.b16 %v225
      %v395 = vunpack.c.l.b16 %v226
      %v396 = vunpack.c.l.b16 %v227
      %v397 = vunpack.c.l.b16 %v228
      %v398 = vunpack.c.l.b16 %v229
      %v399 = vunpack.c.l.b16 %v230
      %v400 = vunpack.c.l.b16 %v231
      %v401 = vunpack.c.l.b16 %v232
      %v402 = vunpack.c.l.b16 %v233
      %v403 = vunpack.c.l.b16 %v234
      %v404 = vunpack.c.l.b16 %v235
      %v405 = vunpack.c.l.b16 %v236
      %v406 = vunpack.c.l.b16 %v237
      %v407 = vunpack.c.l.b16 %v238
      %v408 = vunpack.c.l.b16 %v239
      %v409 = vunpack.c.l.b16 %v240
      %v410 = vunpack.c.l.b16 %v241
      %v411 = vunpack.c.l.b16 %v242
      %v412 = vunpack.c.l.b16 %v243
      %v413 = vunpack.c.l.b16 %v244
      %v414 = vunpack.c.l.b16 %v245
      %v415 = vunpack.c.l.b16 %v246
      %v416 = vunpack.c.l.b16 %v247
      %v417 = vunpack.c.l.b16 %v248
      %v418 = vunpack.c.l.b16 %v249
      %v419 = vunpack.c.l.b16 %v250
      %v420 = vunpack.c.l.b16 %v251
      %v421 = vunpack.c.l.b16 %v252
      %v422 = vunpack.c.l.b16 %v253
      %v423 = vunpack.c.l.b16 %v254
      %v424 = vunpack.c.l.b16 %v255
      %v425 = vunpack.c.l.b16 %v256
      %v426 = vunpack.c.l.b16 %v257
      %v427 = vunpack.c.l.b16 %v258
      %v428 = vunpack.c.l.b16 %v259
      %v429 = vunpack.c.l.b16 %v260
      %v430 = vunpack.c.l.b16 %v261
      %v431 = vunpack.c.l.b16 %v262
      %v432 = vunpack.c.l.b16 %v263
      %v433 = vunpack.c.l.b16 %v264
      %v434 = vunpack.c.l.b16 %v265
      %v435 = vunpack.c.l.b16 %v266
      %v436 = vunpack.c.l.b16 %v267
      %v437 = vunpack.c.l.b16 %v268
      %v438 = vunpack.c.l.b16 %v269
      %v439 = vunpack.c.l.b16 %v270
      %v440 = vunpack.c.l.b16 %v271
      %v441 = vunpack.c.l.b16 %v272
      %v442 = vunpack.c.l.b16 %v273
      %v443 = vunpack.c.l.b16 %v274
      %v444 = vunpack.c.l.b16 %v275
      %v445 = vunpack.c.l.b16 %v276
      %v446 = vunpack.c.l.b16 %v277
      %v447 = vunpack.c.l.b16 %v278
      %v448 = vunpack.c.l.b16 %v279
      %v449 = vunpack.c.l.b16 %v280
      %v450 = vunpack.c.l.b16 %v281
      %v451 = vunpack.c.l.b16 %v282
      %v452 = vunpack.c.l.b16 %v283
      %v453 = vunpack.c.l.b16 %v284
      %v454 = vunpack.c.l.b16 %v285
      %v455 = vunpack.c.l.b16 %v286
      %v456 = vpack.c.b16 %v385, %v384
      %v457 = vpack.c.b16 %v387, %v386
      %v458 = vpack.c.b16 %v389, %v388
      %v459 = vpack.c.b16 %v391, %v390
      %v460 = vpack.c.b16 %v393, %v392
      %v461 = vpack.c.b16 %v395, %v394
      %v462 = vpack.c.b16 %v397, %v396
      %v463 = vpack.c.b16 %v399, %v398
      %v464 = vpack.c.b16 %v401, %v400
      %v465 = vpack.c.b16 %v403, %v402
      %v466 = vpack.c.b16 %v405, %v404
      %v467 = vpack.c.b16 %v407, %v406
      %v468 = vpack.c.b16 %v409, %v408
      %v469 = vpack.c.b16 %v411, %v410
      %v470 = vpack.c.b16 %v413, %v412
      %v471 = vpack.c.b16 %v415, %v414
      %v472 = vpack.c.b16 %v417, %v416
      %v473 = vpack.c.b16 %v419, %v418
      %v474 = vpack.c.b16 %v421, %v420
      %v475 = vpack.c.b16 %v423, %v422
      %v476 = vpack.c.b16 %v425, %v424
      %v477 = vpack.c.b16 %v427, %v426
      %v478 = vpack.c.b16 %v429, %v428
      %v479 = vpack.c.b16 %v431, %v430
      %v480 = vpack.c.b16 %v433, %v432
      %v481 = vpack.c.b16 %v435, %v434
      %v482 = vpack.c.b16 %v437, %v436
      %v483 = vpack.c.b16 %v439, %v438
      %v484 = vpack.c.b16 %v441, %v440
      %v485 = vpack.c.b16 %v443, %v442
      %v486 = vpack.c.b16 %v445, %v444
      %v487 = vpack.c.b16 %v447, %v446
      %v488 = vpack.c.b16 %v449, %v448
      %v489 = vpack.c.b16 %v451, %v450
      %v490 = vpack.c.b16 %v453, %v452
      %v491 = vpack.c.b16 %v455, %v454
      %vm528 = vcmask 523264
      %v530 = vsel %vm528, %v307, 0
      %532 = vmatpush.bf16.msra.mxu0 %v463
      %533 = vmatpush.bf16.msra.mxu0 %v462
      %534 = vmatpush.bf16.msra.mxu0 %v461
      %535 = vmatpush.bf16.msra.mxu0 %v460
      %536 = vmatpush.bf16.msra.mxu0 %v459
      %537 = vmatpush.bf16.msra.mxu0 %v458
      %538 = vmatpush.bf16.msra.mxu0 %v457
      %539 = vmatpush.bf16.msra.mxu0 %v456
      %540 = vmatmul.bf16.gmra.mxu0 %v303
      %v541 = vpop.f32.mrf.mxu0
      %v542 = vadd.f32 0.0, %v541
      %v543 = vpop.f32.mrf.mxu0
      %v544 = vadd.f32 0.0, %v543
      %545 = vdwg.mxu0
      %546 = vmatpush.bf16.msra.mxu0 %v471
      %547 = vmatpush.bf16.msra.mxu0 %v470
      %548 = vmatpush.bf16.msra.mxu0 %v469
      %549 = vmatpush.bf16.msra.mxu0 %v468
      %550 = vmatpush.bf16.msra.mxu0 %v467
      %551 = vmatpush.bf16.msra.mxu0 %v466
      %552 = vmatpush.bf16.msra.mxu0 %v465
      %553 = vmatpush.bf16.msra.mxu0 %v464
      %554 = vmatmul.bf16.gmra.mxu0 %v304
      %v555 = vpop.f32.mrf.mxu0
      %v556 = vadd.f32 %v542, %v555
      %v557 = vpop.f32.mrf.mxu0
      %v558 = vadd.f32 %v544, %v557
      %559 = vdwg.mxu0
      %560 = vmatpush.bf16.msra.mxu0 %v479
      %561 = vmatpush.bf16.msra.mxu0 %v478
      %562 = vmatpush.bf16.msra.mxu0 %v477
      %563 = vmatpush.bf16.msra.mxu0 %v476
      %564 = vmatpush.bf16.msra.mxu0 %v475
      %565 = vmatpush.bf16.msra.mxu0 %v474
      %566 = vmatpush.bf16.msra.mxu0 %v473
      %567 = vmatpush.bf16.msra.mxu0 %v472
      %568 = vmatmul.bf16.gmra.mxu0 %v305
      %v569 = vpop.f32.mrf.mxu0
      %v570 = vadd.f32 %v556, %v569
      %v571 = vpop.f32.mrf.mxu0
      %v572 = vadd.f32 %v558, %v571
      %573 = vdwg.mxu0
      %574 = vmatpush.bf16.msra.mxu0 %v487
      %575 = vmatpush.bf16.msra.mxu0 %v486
      %576 = vmatpush.bf16.msra.mxu0 %v485
      %577 = vmatpush.bf16.msra.mxu0 %v484
      %578 = vmatpush.bf16.msra.mxu0 %v483
      %579 = vmatpush.bf16.msra.mxu0 %v482
      %580 = vmatpush.bf16.msra.mxu0 %v481
      %581 = vmatpush.bf16.msra.mxu0 %v480
      %582 = vmatmul.bf16.gmra.mxu0 %v306
      %v583 = vpop.f32.mrf.mxu0
      %v584 = vadd.f32 %v570, %v583
      %v585 = vpop.f32.mrf.mxu0
      %v586 = vadd.f32 %v572, %v585
      %587 = vdwg.mxu0
      %588 = vmatpush.bf16.msra.mxu0 0
      %589 = vmatpush.bf16.msra.mxu0 0
      %590 = vmatpush.bf16.msra.mxu0 0
      %591 = vmatpush.bf16.msra.mxu0 0
      %592 = vmatpush.bf16.msra.mxu0 %v491
      %593 = vmatpush.bf16.msra.mxu0 %v490
      %594 = vmatpush.bf16.msra.mxu0 %v489
      %595 = vmatpush.bf16.msra.mxu0 %v488
      %596 = vmatmul.bf16.gmra.mxu0 %v530
      %v597 = vpop.f32.mrf.mxu0
      %v598 = vadd.f32 %v584, %v597
      %v599 = vpop.f32.mrf.mxu0
      %v600 = vadd.f32 %v586, %v599
      %601 = vdwg.mxu0
      %v602 = vadd.f32 %v207, %v598
      %v603 = vadd.f32 %v208, %v600
      %604 = vst [vmem:[#allocation2] sm:$0xff] %v602
      %605 = vst [vmem:[#allocation2 + $0x8] sm:$0xff] %v603
      // Predicated region
      $region33: #{_lambda_.30} parent=27 // pred_check
        %p606 = pneg %p201
      $region34: #{_lambda_.30} parent=27 // pred_check_branch
        %608 = sbr.rel (%p606) target = $region36
      $region35: #{_lambda_.30} parent=27 // pred_region
        %v609 = vld [vmem:[#allocation2] sm:$0xff]
        %v610 = vld [vmem:[#allocation2 + $0x8] sm:$0xff]
        %611 = vst [vmem:[%s198] sm:$0xff] %v609
        %612 = vst [vmem:[%s198 + $0x8] sm:$0xff] %v610
      $region36: #{_lambda_.30} parent=27 // pred_fallthru
        _
      %s613 = smul.u32 2, %s17
      %p614 = scmp.lt.s32.totalorder %s613, 3
      %s615 = scalar_select %p614, %s613, 3
      %s616 = smul.addr %s615, 8
      %s617 = scalar_lea.vmem %s2, %s616
      // Predicated region
      $region37: #{_lambda_.30} parent=27 // pred_check
        %p618 = pneg %p97
      $region38: #{_lambda_.30} parent=27 // pred_check_branch
        %620 = sbr.rel (%p618) target = $region40
      $region39: #{_lambda_.30} parent=27 // pred_region
        %s621 = smul.u32 2, %s17
      $region40: #{_lambda_.30} parent=27 // pred_fallthru
        _
    $region28: #{_lambda_.30} parent=5 // pred_fallthru
      _
    %p622 = scmp.le.s32.totalorder 2, %s8
    // Predicated region
    $region41: #{_lambda_.30} parent=5 // pred_check
      %p623 = pneg %p622
    $region42: #{_lambda_.30} parent=5 // pred_check_branch
      %625 = sbr.rel (%p623) target = $region44
    $region43: #{_lambda_.30} parent=5 // pred_region
      %s626 = ssub.s32 %s8, 2
      // Predicated region
      $region45: #{_lambda_.30} parent=43 // pred_check
        %p627 = pneg %p103
      $region46: #{_lambda_.30} parent=43 // pred_check_branch
        %629 = sbr.rel (%p627) target = $region48
      $region47: #{_lambda_.30} parent=43 // pred_region
        %s630 = smul.u32 2, %s19
        %p631 = scmp.lt.s32.totalorder %s630, 3
        %s632 = scalar_select %p631, %s630, 3
        %s633 = smul.addr %s632, 8
        %s634 = scalar_lea.vmem %s2, %s633
      $region48: #{_lambda_.30} parent=43 // pred_fallthru
        _
    $region44: #{_lambda_.30} parent=5 // pred_fallthru
      _
  $region6: #{_lambda_.30} parent=0 // loop_footer
    %s12 = sadd.s32 1, %s8
  $region7: #{_lambda_.30} parent=0 // loop_footer_branch
    %7 = sbr.rel target = $region3
  $region8: #{_lambda_.30} parent=0 // loop_exit
    _

// kernel: _lambda_.29
$region0: #{_lambda_.29}
  #allocation0 [shape = 'u32[]', space=smem, size = 0x4, offset = 0x4, fixed_abs, tag = 'smem constant byte address 0x4 - core index']
  #allocation1 [shape = 'u32[72,128]{1,0:T(1,128)}', space=vmem, size = 0x9000, scoped, tag = 'internal scratch']
  #allocation2 [shape = 'f32[16,128]{1,0:T(8,128)}', space=vmem, size = 0x2000, scoped, tag = 'scratch operand']
  %s0 = inlined_call_operand.vmem [shape: bf16[32,64], index: 0, kind: input, shape index: {}]
  %s1 = inlined_call_operand.vmem [shape: bf16[64,128], index: 1, kind: input, shape index: {}]
  %s2 = inlined_call_operand.vmem [shape: f32[32,128], index: 2, kind: output, shape index: {}]
  %s3 = sld [smem:[#allocation0]]
  $region49: #{_lambda_.29} parent=0
    _
  %s5 = ssub.s32 1, %s3
  %s6 = scalar_select 0, %s5, %s3
  loop: start=0, step=1, limit=4
  $region2: #{_lambda_.29} parent=0 // loop_pre_header
    _
  $region3: #{_lambda_.29} parent=0 // loop_header
    %s8 = sphi 0, %s12
    %p9 = scmp.ge.s32.totalorder %s8, 4
    %s15 = sphi 0, %s27
    %s16 = sphi 0, %s23
    %s17 = sphi 0, %s15
    %s18 = sphi 0, %s16
    %s19 = sphi 0, %s17
    %s20 = sphi 0, %s18
    %s32 = sphi 0, %s34
    %s35 = sphi 0, %s32
    %s36 = sphi 0, %s35
    %s52 = sphi 0, %s36
    %s58 = sphi 0, %s60
    %s61 = sphi 0, %s58
    %s62 = sphi 0, %s61
    %s78 = sphi 0, %s62
    %s84 = sphi 0, %s86
    %s87 = sphi 0, %s84
    %s88 = sphi 0, %s87
    %s104 = sphi 0, %s88
  $region4: #{_lambda_.29} parent=0 // loop_header_branch
    %11 = sbr.rel (%p9) target = $region8
  $region5: #{_lambda_.29} parent=0 // loop_body
    %s13 = ssub.s32 %s8, 1
    %s14 = ssub.s32 %s8, 2
    %s21 = sadd.s32 1, %s16
    %p22 = scmp.ge.s32.totalorder %s21, 1
    %s23 = scalar_select %p22, 0, %s21
    %s24 = sadd.s32 1, %s15
    %s25 = scalar_select %p22, %s24, %s15
    %p26 = scmp.ge.s32.totalorder %s25, 2
    %s27 = scalar_select %p26, 0, %s25
    %s28 = ssub.s32 %s15, %s27
    %s29 = ssub.s32 %s16, %s23
    %s30 = sor.u32 %s28, %s29
    %p31 = scmp.eq.s32.totalorder %s30, 0
    %s33 = sadd.s32 %s32, 1
    %s34 = scalar_select %p31, %s32, %s33
    %p37 = pneg %p31
    %p38 = scmp.eq.s32.totalorder %s8, 1
    %p39 = por %p37, %p38
    %p40 = scmp.ne.s32.totalorder %s32, %s35
    %p41 = scmp.eq.s32.totalorder %s8, 0
    %p42 = por %p40, %p41
    %p43 = scmp.ne.s32.totalorder %s32, %s35
    %p44 = scmp.eq.s32.totalorder %s13, 1
    %p45 = por %p43, %p44
    %p46 = scmp.ne.s32.totalorder %s35, %s36
    %p47 = scmp.eq.s32.totalorder %s13, 0
    %p48 = por %p46, %p47
    %p49 = scmp.ne.s32.totalorder %s35, %s36
    %p50 = scmp.eq.s32.totalorder %s14, 1
    %p51 = por %p49, %p50
    %p53 = scmp.ne.s32.totalorder %s36, %s52
    %p54 = scmp.eq.s32.totalorder %s14, 0
    %p55 = por %p53, %p54
    %s56 = ssub.s32 %s16, %s23
    %p57 = scmp.eq.s32.totalorder %s56, 0
    %s59 = sadd.s32 %s58, 1
    %s60 = scalar_select %p57, %s58, %s59
    %p63 = pneg %p57
    %p64 = scmp.eq.s32.totalorder %s8, 1
    %p65 = por %p63, %p64
    %p66 = scmp.ne.s32.totalorder %s58, %s61
    %p67 = scmp.eq.s32.totalorder %s8, 0
    %p68 = por %p66, %p67
    %p69 = scmp.ne.s32.totalorder %s58, %s61
    %p70 = scmp.eq.s32.totalorder %s13, 1
    %p71 = por %p69, %p70
    %p72 = scmp.ne.s32.totalorder %s61, %s62
    %p73 = scmp.eq.s32.totalorder %s13, 0
    %p74 = por %p72, %p73
    %p75 = scmp.ne.s32.totalorder %s61, %s62
    %p76 = scmp.eq.s32.totalorder %s14, 1
    %p77 = por %p75, %p76
    %p79 = scmp.ne.s32.totalorder %s62, %s78
    %p80 = scmp.eq.s32.totalorder %s14, 0
    %p81 = por %p79, %p80
    %s82 = ssub.s32 %s15, %s27
    %p83 = scmp.eq.s32.totalorder %s82, 0
    %s85 = sadd.s32 %s84, 1
    %s86 = scalar_select %p83, %s84, %s85
    %p89 = pneg %p83
    %p90 = scmp.eq.s32.totalorder %s8, 1
    %p91 = por %p89, %p90
    %p92 = scmp.ne.s32.totalorder %s84, %s87
    %p93 = scmp.eq.s32.totalorder %s8, 0
    %p94 = por %p92, %p93
    %p95 = scmp.ne.s32.totalorder %s84, %s87
    %p96 = scmp.eq.s32.totalorder %s13, 1
    %p97 = por %p95, %p96
    %p98 = scmp.ne.s32.totalorder %s87, %s88
    %p99 = scmp.eq.s32.totalorder %s13, 0
    %p100 = por %p98, %p99
    %p101 = scmp.ne.s32.totalorder %s87, %s88
    %p102 = scmp.eq.s32.totalorder %s14, 1
    %p103 = por %p101, %p102
    %p105 = scmp.ne.s32.totalorder %s88, %s104
    %p106 = scmp.eq.s32.totalorder %s14, 0
    %p107 = por %p105, %p106
    %p108 = scmp.le.s32.totalorder 1, %s8
    %p109 = scmp.lt.s32.totalorder %s8, 3
    %p110 = pnand %p108, %p109
    %p111 = pneg %p110
    // Predicated region
    $region9: #{_lambda_.29} parent=5 // pred_check
      _
    $region10: #{_lambda_.29} parent=5 // pred_check_branch
      %113 = sbr.rel (%p110) target = $region12
    $region11: #{_lambda_.29} parent=5 // pred_region
      %s114 = ssub.s32 %s8, 1
      // Predicated region
      $region13: #{_lambda_.29} parent=11 // pred_check
        %p115 = pneg %p74
      $region14: #{_lambda_.29} parent=11 // pred_check_branch
        %117 = sbr.rel (%p115) target = $region16
      $region15: #{_lambda_.29} parent=11 // pred_region
        %s118 = smul.u32 8, %s18
        %p119 = scmp.lt.s32.totalorder %s118, 7
        %s120 = scalar_select %p119, %s118, 7
        %s121 = smul.addr %s120, 4
        %s122 = scalar_lea.vmem %s1, %s121
        %s123 = smul.u32 8, %s18
      $region16: #{_lambda_.29} parent=11 // pred_fallthru
        _
    $region12: #{_lambda_.29} parent=5 // pred_fallthru
      _
    %p124 = scmp.lt.s32.totalorder %s8, 2
    // Predicated region
    $region17: #{_lambda_.29} parent=5 // pred_check
      %p125 = pneg %p124
    $region18: #{_lambda_.29} parent=5 // pred_check_branch
      %127 = sbr.rel (%p125) target = $region20
    $region19: #{_lambda_.29} parent=5 // pred_region
      // Predicated region
      $region21: #{_lambda_.29} parent=19 // pred_check
        %p128 = pneg %p42
      $region22: #{_lambda_.29} parent=19 // pred_check_branch
        %130 = sbr.rel (%p128) target = $region24
      $region23: #{_lambda_.29} parent=19 // pred_region
        %s131 = smul.u32 2, %s15
        %p132 = scmp.lt.s32.totalorder %s131, 3
        %s133 = scalar_select %p132, %s131, 3
        %p134 = scmp.lt.s32.totalorder %s16, 0
        %s135 = scalar_select %p134, %s16, 0
        %s136 = sadd.s32 %s135, %s133
        %s137 = smul.addr %s136, 4
        %s138 = scalar_lea.vmem %s0, %s137
        %s139 = smul.u32 2, %s15
      $region24: #{_lambda_.29} parent=19 // pred_fallthru
        _
    $region20: #{_lambda_.29} parent=5 // pred_fallthru
      _
    %p140 = scmp.le.s32.totalorder 1, %s8
    %p141 = scmp.lt.s32.totalorder %s8, 3
    %p142 = pnand %p140, %p141
    %p143 = pneg %p142
    // Predicated region
    $region25: #{_lambda_.29} parent=5 // pred_check
      _
    $region26: #{_lambda_.29} parent=5 // pred_check_branch
      %145 = sbr.rel (%p142) target = $region28
    $region27: #{_lambda_.29} parent=5 // pred_region
      %s146 = ssub.s32 %s8, 1
      %s147 = smul.u32 2, %s17
      %p148 = scmp.lt.s32.totalorder %s147, 3
      %s149 = scalar_select %p148, %s147, 3
      %p150 = scmp.lt.s32.totalorder %s18, 0
      %s151 = scalar_select %p150, %s18, 0
      %s152 = sadd.s32 %s151, %s149
      %s153 = smul.addr %s152, 4
      %s154 = scalar_lea.vmem %s0, %s153
      %p155 = pneg %p48
      %p156 = pneg %p45
      %s157 = smul.u32 8, %s18
      %p158 = scmp.lt.s32.totalorder %s157, 7
      %s159 = scalar_select %p158, %s157, 7
      %s160 = smul.addr %s159, 4
      %s161 = scalar_lea.vmem %s1, %s160
      %p162 = pneg %p74
      %p163 = pneg %p71
      %p164 = pneg %p100
      %p165 = pneg %p97
      %s166 = smul.u32 2, %s17
      %p167 = scmp.lt.s32.totalorder %s166, 3
      %s168 = scalar_select %p167, %s166, 3
      %s169 = smul.addr %s168, 8
      %s170 = scalar_lea.vmem %s2, %s169
      %s171 = smul.u32 2, %s17
      %p172 = scmp.lt.s32.totalorder %s171, 3
      %s173 = scalar_select %p172, %s171, 3
      %p174 = scmp.lt.s32.totalorder %s18, 0
      %s175 = scalar_select %p174, %s18, 0
      %s176 = sadd.s32 %s175, %s173
      %s177 = smul.addr %s176, 4
      %s178 = scalar_lea.vmem %s0, %s177
      %s179 = smul.u32 2, %s17
      %s180 = smul.u32 8, %s18
      %p181 = scmp.lt.s32.totalorder %s180, 7
      %s182 = scalar_select %p181, %s180, 7
      %s183 = smul.addr %s182, 4
      %s184 = scalar_lea.vmem %s1, %s183
      %s185 = smul.u32 8, %s18
      %s186 = smul.u32 2, %s17
      %p187 = scmp.lt.s32.totalorder %s186, 3
      %s188 = scalar_select %p187, %s186, 3
      %s189 = smul.addr %s188, 8
      %s190 = scalar_lea.vmem %s2, %s189
      %s191 = smul.u32 2, %s17
      %p193 = scmp.eq.s32.totalorder %s18, 0
      // Predicated region
      $region29: #{_lambda_.29} parent=27 // pred_check
        %p194 = pneg %p193
      $region30: #{_lambda_.29} parent=27 // pred_check_branch
        %196 = sbr.rel (%p194) target = $region32
      $region31: #{_lambda_.29} parent=27 // pred_region
        %197 = vst [vmem:[#allocation2] sm:$0xff] 0.0
        %198 = vst [vmem:[#allocation2 + $0x8] sm:$0xff] 0.0
      $region32: #{_lambda_.29} parent=27 // pred_fallthru
        _
      %v199 = vld [vmem:[#allocation2] sm:$0xff]
      %v200 = vld [vmem:[#allocation2 + $0x8] sm:$0xff]
      %v201 = vld [vmem:[%s178] sm:$0xf]
      %v202 = vld [vmem:[%s178 + $0x4] sm:$0xf]
      %v203 = vld [vmem:[%s184] sm:$0xf]
      %v204 = vld [vmem:[%s184 + $0x4] sm:$0xf]
      %v205 = vld [vmem:[%s184 + $0x8] sm:$0xf]
      %v206 = vld [vmem:[%s184 + $0xc] sm:$0xf]
      %v207 = vld [vmem:[%s184 + $0x10] sm:$0xf]
      %v208 = vld [vmem:[%s184 + $0x14] sm:$0xf]
      %v209 = vld [vmem:[%s184 + $0x18] sm:$0xf]
      %v210 = vld [vmem:[%s184 + $0x1c] sm:$0xf]
      %v213 = vunpack.c.l.b16 %v201
      %v214 = vunpack.c.l.b16 %v202
      %v215 = vpack.c.b16 %v214, %v213
      %v224 = vunpack.c.l.b16 %v203
      %v225 = vunpack.c.l.b16 %v204
      %v226 = vunpack.c.l.b16 %v205
      %v227 = vunpack.c.l.b16 %v206
      %v228 = vunpack.c.l.b16 %v207
      %v229 = vunpack.c.l.b16 %v208
      %v230 = vunpack.c.l.b16 %v209
      %v231 = vunpack.c.l.b16 %v210
      %v232 = vpack.c.b16 %v225, %v224
      %v233 = vpack.c.b16 %v227, %v226
      %v234 = vpack.c.b16 %v229, %v228
      %v235 = vpack.c.b16 %v231, %v230
      %vm240 = vcmask 523264
      %v242 = vsel %vm240, %v215, 0
      %244 = vmatpush.bf16.msra.mxu0 0
      %245 = vmatpush.bf16.msra.mxu0 0
      %246 = vmatpush.bf16.msra.mxu0 0
      %247 = vmatpush.bf16.msra.mxu0 0
      %248 = vmatpush.bf16.msra.mxu0 %v235
      %249 = vmatpush.bf16.msra.mxu0 %v234
      %250 = vmatpush.bf16.msra.mxu0 %v233
      %251 = vmatpush.bf16.msra.mxu0 %v232
      %252 = vmatmul.bf16.gmra.mxu0 %v242
      %v253 = vpop.f32.mrf.mxu0
      %v254 = vadd.f32 0.0, %v253
      %v255 = vpop.f32.mrf.mxu0
      %v256 = vadd.f32 0.0, %v255
      %257 = vdwg.mxu0
      %v258 = vadd.f32 %v199, %v254
      %v259 = vadd.f32 %v200, %v256
      %260 = vst [vmem:[#allocation2] sm:$0xff] %v258
      %261 = vst [vmem:[#allocation2 + $0x8] sm:$0xff] %v259
      // Predicated region
      $region33: #{_lambda_.29} parent=27 // pred_check
        %p262 = pneg %p193
      $region34: #{_lambda_.29} parent=27 // pred_check_branch
        %264 = sbr.rel (%p262) target = $region36
      $region35: #{_lambda_.29} parent=27 // pred_region
        %v265 = vld [vmem:[#allocation2] sm:$0xff]
        %v266 = vld [vmem:[#allocation2 + $0x8] sm:$0xff]
        %267 = vst [vmem:[%s190] sm:$0xff] %v265
        %268 = vst [vmem:[%s190 + $0x8] sm:$0xff] %v266
      $region36: #{_lambda_.29} parent=27 // pred_fallthru
        _
      %s269 = smul.u32 2, %s17
      %p270 = scmp.lt.s32.totalorder %s269, 3
      %s271 = scalar_select %p270, %s269, 3
      %s272 = smul.addr %s271, 8
      %s273 = scalar_lea.vmem %s2, %s272
      // Predicated region
      $region37: #{_lambda_.29} parent=27 // pred_check
        %p274 = pneg %p97
      $region38: #{_lambda_.29} parent=27 // pred_check_branch
        %276 = sbr.rel (%p274) target = $region40
      $region39: #{_lambda_.29} parent=27 // pred_region
        %s277 = smul.u32 2, %s17
      $region40: #{_lambda_.29} parent=27 // pred_fallthru
        _
    $region28: #{_lambda_.29} parent=5 // pred_fallthru
      _
    %p278 = scmp.le.s32.totalorder 2, %s8
    // Predicated region
    $region41: #{_lambda_.29} parent=5 // pred_check
      %p279 = pneg %p278
    $region42: #{_lambda_.29} parent=5 // pred_check_branch
      %281 = sbr.rel (%p279) target = $region44
    $region43: #{_lambda_.29} parent=5 // pred_region
      %s282 = ssub.s32 %s8, 2
      // Predicated region
      $region45: #{_lambda_.29} parent=43 // pred_check
        %p283 = pneg %p103
      $region46: #{_lambda_.29} parent=43 // pred_check_branch
        %285 = sbr.rel (%p283) target = $region48
      $region47: #{_lambda_.29} parent=43 // pred_region
        %s286 = smul.u32 2, %s19
        %p287 = scmp.lt.s32.totalorder %s286, 3
        %s288 = scalar_select %p287, %s286, 3
        %s289 = smul.addr %s288, 8
        %s290 = scalar_lea.vmem %s2, %s289
      $region48: #{_lambda_.29} parent=43 // pred_fallthru
        _
    $region44: #{_lambda_.29} parent=5 // pred_fallthru
      _
  $region6: #{_lambda_.29} parent=0 // loop_footer
    %s12 = sadd.s32 1, %s8
  $region7: #{_lambda_.29} parent=0 // loop_footer_branch
    %7 = sbr.rel target = $region3
  $region8: #{_lambda_.29} parent=0 // loop_exit
    _

// kernel: _lambda_.33
$region0: #{_lambda_.33}
  #allocation0 [shape = 'u32[]', space=smem, size = 0x4, offset = 0x4, fixed_abs, tag = 'smem constant byte address 0x4 - core index']
  #allocation1 [shape = 'u32[72,128]{1,0:T(1,128)}', space=vmem, size = 0x9000, scoped, tag = 'internal scratch']
  %s0 = inlined_call_operand.vmem [shape: f32[2,16,128], index: 0, kind: input, shape index: {}]
  %s1 = inlined_call_operand.vmem [shape: f32[1,1,128], index: 1, kind: input, shape index: {}]
  %s2 = inlined_call_operand.vmem [shape: f32[1,1,128], index: 2, kind: input, shape index: {}]
  %s3 = inlined_call_operand.hbm [shape: f32[2,128], index: 3, kind: output, shape index: {}]
  %s4 = sld [smem:[#allocation0]]
  $region22: #{_lambda_.33} parent=0
    _
  %s6 = ssub.s32 1, %s4
  %s7 = scalar_select 0, %s6, %s4
  $region1: #{_lambda_.33} parent=0
    #allocation2 [shape = 'u8[1024]{0}', space=vmem, size = 0x400, scoped, tag = 'output window, operand 0, single buffered']
    #allocation3 [shape = 's32[1]{0}', space=sflag, size = 0x4, scoped, tag = 'scoped memory for _lambda_.33']
    %8 = vsyncpa [#allocation3], 0
    // Predicated region
    $region2: #{_lambda_.33} parent=1 // pred_check
      _
    $region3: #{_lambda_.33} parent=1 // pred_check_branch
      %10 = sbr.rel (0) target = $region5
    $region4: #{_lambda_.33} parent=1 // pred_region
      _
    $region5: #{_lambda_.33} parent=1 // pred_fallthru
      _
    // Predicated region
    $region6: #{_lambda_.33} parent=1 // pred_check
      _
    $region7: #{_lambda_.33} parent=1 // pred_check_branch
      %12 = sbr.rel (0) target = $region9
    $region8: #{_lambda_.33} parent=1 // pred_region
      _
    $region9: #{_lambda_.33} parent=1 // pred_fallthru
      _
    // Predicated region
    $region10: #{_lambda_.33} parent=1 // pred_check
      _
    $region11: #{_lambda_.33} parent=1 // pred_check_branch
      %14 = sbr.rel (0) target = $region13
    $region12: #{_lambda_.33} parent=1 // pred_region
      _
    $region13: #{_lambda_.33} parent=1 // pred_fallthru
      _
    %v15 = vld [vmem:[%s0] sm:$0xff]
    %v16 = vld [vmem:[%s0 + $0x8] sm:$0xff]
    %v17 = vld [vmem:[%s0 + $0x10] sm:$0xff]
    %v18 = vld [vmem:[%s0 + $0x18] sm:$0xff]
    %v19 = vld [vmem:[%s1] sm:$0x1]
    %v21 = vperm.slane %v19, 0
    %v23 = vmul.f32 %v15, %v21
    %v24 = vmul.f32 %v16, %v21
    %v25 = vmul.f32 %v17, %v21
    %v26 = vmul.f32 %v18, %v21
    %v27 = vld [vmem:[%s2] sm:$0x1]
    %v29 = vperm.slane %v27, 0
    %v31 = vadd.f32 %v23, %v29
    %v32 = vadd.f32 %v24, %v29
    %v33 = vadd.f32 %v25, %v29
    %v34 = vadd.f32 %v26, %v29
    %v35 = vmax.f32 %v31, 0.0
    %v36 = vmax.f32 %v32, 0.0
    %v37 = vmax.f32 %v33, 0.0
    %v38 = vmax.f32 %v34, 0.0
    %v39 = vadd.f32 %v35, %v36
    %v40 = vrot.slane %v39, 4
    %v41 = vadd.f32 %v39, %v40
    %v42 = vrot.slane %v41, 2
    %v43 = vadd.f32 %v41, %v42
    %v44 = vrot.slane %v43, 1
    %v45 = vadd.f32 %v43, %v44
    %v46 = vadd.f32 %v37, %v38
    %v47 = vrot.slane %v46, 4
    %v48 = vadd.f32 %v46, %v47
    %v49 = vrot.slane %v48, 2
    %v50 = vadd.f32 %v48, %v49
    %v51 = vrot.slane %v50, 1
    %v52 = vadd.f32 %v50, %v51
    %v53 = vrcp.pop 16.0
    %v54 = vmul.f32 16.0, %v53
    %v55 = vsub.f32 1.0, %v54
    %v56 = vmul.f32 %v53, %v55
    %v57 = vadd.f32 %v53, %v56
    %vm58 = vweird.f32 %v53
    %v59 = vsel %vm58, %v53, %v57
    %v60 = vmul.f32 %v45, %v59
    %v61 = vmul.f32 %v52, %v59
    %vm64 = vcmask 1041409
    %v65 = vsel %vm64, %v61, %v60
    %67 = vst [vmem:[#allocation2] sm:$0x3] %v65
    // Predicated region
    $region14: #{_lambda_.33} parent=1 // pred_check
      _
    $region15: #{_lambda_.33} parent=1 // pred_check_branch
      %69 = sbr.rel (0) target = $region17
    $region16: #{_lambda_.33} parent=1 // pred_region
      %71 = vsyncadd [#allocation3], 0
      %s73 = sshll.u32 [#allocation2], 4
      %s74 = int_to_ptr.vmem [resolvable:$true] %s73
      %s75 = sshll.u32 %s3, 4
      %s76 = int_to_ptr.hbm [resolvable:$true] %s75
      %78 = dma.vmem_to_hbm [thread:$0]  %s74, 32, %s76, [#allocation3]
    $region17: #{_lambda_.33} parent=1 // pred_fallthru
      _
    // Predicated region
    $region18: #{_lambda_.33} parent=1 // pred_check
      _
    $region19: #{_lambda_.33} parent=1 // pred_check_branch
      %80 = sbr.rel (0) target = $region21
    $region20: #{_lambda_.33} parent=1 // pred_region
      %82 = dma.done [#allocation3], 32
    $region21: #{_lambda_.33} parent=1 // pred_fallthru
      _
    %83 = vsyncpa [#allocation3], 1

// kernel: _lambda_.32
$region0: #{_lambda_.32}
  #allocation0 [shape = 'u32[]', space=smem, size = 0x4, offset = 0x4, fixed_abs, tag = 'smem constant byte address 0x4 - core index']
  #allocation1 [shape = 'u32[72,128]{1,0:T(1,128)}', space=vmem, size = 0x9000, scoped, tag = 'internal scratch']
  #allocation2 [shape = 'f32[16,128]{1,0:T(8,128)}', space=vmem, size = 0x2000, scoped, tag = 'scratch operand']
  %s0 = inlined_call_operand.vmem [shape: bf16[32,1152], index: 0, kind: input, shape index: {}]
  %s1 = inlined_call_operand.vmem [shape: bf16[1152,128], index: 1, kind: input, shape index: {}]
  %s2 = inlined_call_operand.vmem [shape: f32[32,128], index: 2, kind: input, shape index: {}]
  %s3 = inlined_call_operand.vmem [shape: f32[32,128], index: 3, kind: output, shape index: {}]
  %s4 = sld [smem:[#allocation0]]
  $region79: #{_lambda_.32} parent=0
    _
  %s6 = ssub.s32 1, %s4
  %s7 = scalar_select 0, %s6, %s4
  $region1: #{_lambda_.32} parent=0
    #allocation3 [shape = 'u8[24576]{0}', space=vmem, size = 0x6000, scoped, tag = 'input window, operand 0']
    loop: start=0, step=1, limit=8
    $region2: #{_lambda_.32} parent=1 // loop_pre_header
      _
    $region3: #{_lambda_.32} parent=1 // loop_header
      %s9 = sphi 0, %s13
      %p10 = scmp.ge.s32.totalorder %s9, 8
      %s16 = sphi 0, %s28
      %s17 = sphi 0, %s24
      %s18 = sphi 0, %s16
      %s19 = sphi 0, %s17
      %s20 = sphi 0, %s18
      %s21 = sphi 0, %s19
      %s33 = sphi 0, %s35
      %s36 = sphi 0, %s33
      %s37 = sphi 0, %s36
      %s53 = sphi 0, %s37
      %s59 = sphi 0, %s61
      %s62 = sphi 0, %s59
      %s63 = sphi 0, %s62
      %s79 = sphi 0, %s63
      %s85 = sphi 0, %s87
      %s88 = sphi 0, %s85
      %s89 = sphi 0, %s88
      %s105 = sphi 0, %s89
      %s111 = sphi 0, %s113
      %s114 = sphi 0, %s111
      %s115 = sphi 0, %s114
      %s131 = sphi 0, %s115
    $region4: #{_lambda_.32} parent=1 // loop_header_branch
      %12 = sbr.rel (%p10) target = $region8
    $region5: #{_lambda_.32} parent=1 // loop_body
      %s14 = ssub.s32 %s9, 1
      %s15 = ssub.s32 %s9, 2
      %s22 = sadd.s32 1, %s17
      %p23 = scmp.ge.s32.totalorder %s22, 3
      %s24 = scalar_select %p23, 0, %s22
      %s25 = sadd.s32 1, %s16
      %s26 = scalar_select %p23, %s25, %s16
      %p27 = scmp.ge.s32.totalorder %s26, 2
      %s28 = scalar_select %p27, 0, %s26
      %s29 = ssub.s32 %s16, %s28
      %s30 = ssub.s32 %s17, %s24
      %s31 = sor.u32 %s29, %s30
      %p32 = scmp.eq.s32.totalorder %s31, 0
      %s34 = sadd.s32 %s33, 1
      %s35 = scalar_select %p32, %s33, %s34
      %p38 = pneg %p32
      %p39 = scmp.eq.s32.totalorder %s9, 5
      %p40 = por %p38, %p39
      %p41 = scmp.ne.s32.totalorder %s33, %s36
      %p42 = scmp.eq.s32.totalorder %s9, 0
      %p43 = por %p41, %p42
      %p44 = scmp.ne.s32.totalorder %s33, %s36
      %p45 = scmp.eq.s32.totalorder %s14, 5
      %p46 = por %p44, %p45
      %p47 = scmp.ne.s32.totalorder %s36, %s37
      %p48 = scmp.eq.s32.totalorder %s14, 0
      %p49 = por %p47, %p48
      %p50 = scmp.ne.s32.totalorder %s36, %s37
      %p51 = scmp.eq.s32.totalorder %s15, 5
      %p52 = por %p50, %p51
      %p54 = scmp.ne.s32.totalorder %s37, %s53
      %p55 = scmp.eq.s32.totalorder %s15, 0
      %p56 = por %p54, %p55
      %s57 = ssub.s32 %s17, %s24
      %p58 = scmp.eq.s32.totalorder %s57, 0
      %s60 = sadd.s32 %s59, 1
      %s61 = scalar_select %p58, %s59, %s60
      %p64 = pneg %p58
      %p65 = scmp.eq.s32.totalorder %s9, 5
      %p66 = por %p64, %p65
      %p67 = scmp.ne.s32.totalorder %s59, %s62
      %p68 = scmp.eq.s32.totalorder %s9, 0
      %p69 = por %p67, %p68
      %p70 = scmp.ne.s32.totalorder %s59, %s62
      %p71 = scmp.eq.s32.totalorder %s14, 5
      %p72 = por %p70, %p71
      %p73 = scmp.ne.s32.totalorder %s62, %s63
      %p74 = scmp.eq.s32.totalorder %s14, 0
      %p75 = por %p73, %p74
      %p76 = scmp.ne.s32.totalorder %s62, %s63
      %p77 = scmp.eq.s32.totalorder %s15, 5
      %p78 = por %p76, %p77
      %p80 = scmp.ne.s32.totalorder %s63, %s79
      %p81 = scmp.eq.s32.totalorder %s15, 0
      %p82 = por %p80, %p81
      %s83 = ssub.s32 %s16, %s28
      %p84 = scmp.eq.s32.totalorder %s83, 0
      %s86 = sadd.s32 %s85, 1
      %s87 = scalar_select %p84, %s85, %s86
      %p90 = pneg %p84
      %p91 = scmp.eq.s32.totalorder %s9, 5
      %p92 = por %p90, %p91
      %p93 = scmp.ne.s32.totalorder %s85, %s88
      %p94 = scmp.eq.s32.totalorder %s9, 0
      %p95 = por %p93, %p94
      %p96 = scmp.ne.s32.totalorder %s85, %s88
      %p97 = scmp.eq.s32.totalorder %s14, 5
      %p98 = por %p96, %p97
      %p99 = scmp.ne.s32.totalorder %s88, %s89
      %p100 = scmp.eq.s32.totalorder %s14, 0
      %p101 = por %p99, %p100
      %p102 = scmp.ne.s32.totalorder %s88, %s89
      %p103 = scmp.eq.s32.totalorder %s15, 5
      %p104 = por %p102, %p103
      %p106 = scmp.ne.s32.totalorder %s89, %s105
      %p107 = scmp.eq.s32.totalorder %s15, 0
      %p108 = por %p106, %p107
      %s109 = ssub.s32 %s16, %s28
      %p110 = scmp.eq.s32.totalorder %s109, 0
      %s112 = sadd.s32 %s111, 1
      %s113 = scalar_select %p110, %s111, %s112
      %p116 = pneg %p110
      %p117 = scmp.eq.s32.totalorder %s9, 5
      %p118 = por %p116, %p117
      %p119 = scmp.ne.s32.totalorder %s111, %s114
      %p120 = scmp.eq.s32.totalorder %s9, 0
      %p121 = por %p119, %p120
      %p122 = scmp.ne.s32.totalorder %s111, %s114
      %p123 = scmp.eq.s32.totalorder %s14, 5
      %p124 = por %p122, %p123
      %p125 = scmp.ne.s32.totalorder %s114, %s115
      %p126 = scmp.eq.s32.totalorder %s14, 0
      %p127 = por %p125, %p126
      %p128 = scmp.ne.s32.totalorder %s114, %s115
      %p129 = scmp.eq.s32.totalorder %s15, 5
      %p130 = por %p128, %p129
      %p132 = scmp.ne.s32.totalorder %s115, %s131
      %p133 = scmp.eq.s32.totalorder %s15, 0
      %p134 = por %p132, %p133
      %p135 = scmp.le.s32.totalorder 1, %s9
      %p136 = scmp.lt.s32.totalorder %s9, 7
      %p137 = pnand %p135, %p136
      %p138 = pneg %p137
      // Predicated region
      $region9: #{_lambda_.32} parent=5 // pred_check
        _
      $region10: #{_lambda_.32} parent=5 // pred_check_branch
        %140 = sbr.rel (%p137) target = $region12
      $region11: #{_lambda_.32} parent=5 // pred_region
        %s141 = ssub.s32 %s9, 1
      $region12: #{_lambda_.32} parent=5 // pred_fallthru
        _
      %p142 = scmp.lt.s32.totalorder %s9, 6
      // Predicated region
      $region13: #{_lambda_.32} parent=5 // pred_check
        %p143 = pneg %p142
      $region14: #{_lambda_.32} parent=5 // pred_check_branch
        %145 = sbr.rel (%p143) target = $region16
      $region15: #{_lambda_.32} parent=5 // pred_region
        // Predicated region
        $region17: #{_lambda_.32} parent=15 // pred_check
          %p146 = pneg %p43
        $region18: #{_lambda_.32} parent=15 // pred_check_branch
          %148 = sbr.rel (%p146) target = $region20
        $region19: #{_lambda_.32} parent=15 // pred_region
          %s149 = sand.u32 %s33, 1
          %s150 = sand.u32 %s33, 1
          %s151 = smul.addr %s150, 24
          %s152 = scalar_lea.vmem [#allocation3], %s151
          %s153 = smul.u32 2, %s16
          %s154 = smul.u32 3, %s17
          %s155 = smul.addr %s153, 9
          %s156 = sadd.s32 %s154, %s155
          %s157 = smul.addr %s156, 4
          %s158 = scalar_lea.vmem %s0, %s157
          // Predicated region
          $region21: #{_lambda_.32} parent=19 // pred_check
            _
          $region22: #{_lambda_.32} parent=19 // pred_check_branch
            %160 = sbr.rel (0) target = $region24
          $region23: #{_lambda_.32} parent=19 // pred_region
            // Predicated region
            $region25: #{_lambda_.32} parent=23 // pred_check
              _
            $region26: #{_lambda_.32} parent=23 // pred_check_branch
              %162 = sbr.rel (0) target = $region28
            $region27: #{_lambda_.32} parent=23 // pred_region
              %s163 = scalar_lea.vmem %s158, 8
              %s164 = scalar_lea.vmem %s152, 8 [#allocation3]
              loop: start=0, step=1, limit=1
              $region29: #{_lambda_.32} parent=27 // loop_pre_header
                _
              $region30: #{_lambda_.32} parent=27 // loop_header
                %s166 = sphi 0, %s170
                %p167 = scmp.ge.s32.totalorder %s166, 1
                %s171 = sphi %s158, %s158
                %s172 = sphi %s152, %s152
              $region31: #{_lambda_.32} parent=27 // loop_header_branch
                %169 = sbr.rel (%p167) target = $region35
              $region32: #{_lambda_.32} parent=27 // loop_body
                %v173 = vld [vmem:[%s171] sm:$0xff]
                %174 = vst [vmem:[%s172] sm:$0xff] %v173
                %v175 = vld [vmem:[%s171 + $0x24] sm:$0xff]
                %176 = vst [vmem:[%s172 + $0xc] sm:$0xff] %v175
              $region33: #{_lambda_.32} parent=27 // loop_footer
                %s170 = sadd.s32 1, %s166
              $region34: #{_lambda_.32} parent=27 // loop_footer_branch
                %165 = sbr.rel target = $region30
              $region35: #{_lambda_.32} parent=27 // loop_exit
                _
              %s178 = ssub.s32 16, 1
              loop: start=0, step=1, limit=1
              $region36: #{_lambda_.32} parent=27 // loop_pre_header
                _
              $region37: #{_lambda_.32} parent=27 // loop_header
                %s180 = sphi 0, %s184
                %p181 = scmp.ge.s32.totalorder %s180, 1
                %s185 = sphi %s163, %s163
                %s186 = sphi %s164, %s164
              $region38: #{_lambda_.32} parent=27 // loop_header_branch
                %183 = sbr.rel (%p181) target = $region42
              $region39: #{_lambda_.32} parent=27 // loop_body
                %v187 = vld [vmem:[%s185] sm:%s178]
                %188 = vst [vmem:[%s186] sm:%s178] %v187
                %v189 = vld [vmem:[%s185 + $0x24] sm:%s178]
                %190 = vst [vmem:[%s186 + $0xc] sm:%s178] %v189
              $region40: #{_lambda_.32} parent=27 // loop_footer
                %s184 = sadd.s32 1, %s180
              $region41: #{_lambda_.32} parent=27 // loop_footer_branch
                %179 = sbr.rel target = $region37
              $region42: #{_lambda_.32} parent=27 // loop_exit
                _
            $region28: #{_lambda_.32} parent=23 // pred_fallthru
              _
          $region24: #{_lambda_.32} parent=19 // pred_fallthru
            _
          %191 = vnop
        $region20: #{_lambda_.32} parent=15 // pred_fallthru
          _
        // Predicated region
        $region43: #{_lambda_.32} parent=15 // pred_check
          %p192 = pneg %p69
        $region44: #{_lambda_.32} parent=15 // pred_check_branch
          %194 = sbr.rel (%p192) target = $region46
        $region45: #{_lambda_.32} parent=15 // pred_region
          %s195 = smul.u32 48, %s17
          %p196 = scmp.lt.s32.totalorder %s195, 143
          %s197 = scalar_select %p196, %s195, 143
          %s198 = smul.addr %s197, 4
          %s199 = scalar_lea.vmem %s1, %s198
          %s200 = smul.u32 48, %s17
        $region46: #{_lambda_.32} parent=15 // pred_fallthru
          _
        // Predicated region
        $region47: #{_lambda_.32} parent=15 // pred_check
          %p201 = pneg %p95
        $region48: #{_lambda_.32} parent=15 // pred_check_branch
          %203 = sbr.rel (%p201) target = $region50
        $region49: #{_lambda_.32} parent=15 // pred_region
          %s204 = smul.u32 2, %s16
          %p205 = scmp.lt.s32.totalorder %s204, 3
          %s206 = scalar_select %p205, %s204, 3
          %s207 = smul.addr %s206, 8
          %s208 = scalar_lea.vmem %s2, %s207
          %s209 = smul.u32 2, %s16
        $region50: #{_lambda_.32} parent=15 // pred_fallthru
          _
      $region16: #{_lambda_.32} parent=5 // pred_fallthru
        _
      %p210 = scmp.le.s32.totalorder 1, %s9
      %p211 = scmp.lt.s32.totalorder %s9, 7
      %p212 = pnand %p210, %p211
      %p213 = pneg %p212
      // Predicated region
      $region51: #{_lambda_.32} parent=5 // pred_check
        _
      $region52: #{_lambda_.32} parent=5 // pred_check_branch
        %215 = sbr.rel (%p212) target = $region54
      $region53: #{_lambda_.32} parent=5 // pred_region
        %s216 = ssub.s32 %s9, 1
        %s217 = sand.u32 %s36, 1
        %s218 = sand.u32 %s36, 1
        %s219 = smul.addr %s218, 24
        %s220 = scalar_lea.vmem [#allocation3], %s219
        // Predicated region
        $region55: #{_lambda_.32} parent=53 // pred_check
          %p221 = pneg %p49
        $region56: #{_lambda_.32} parent=53 // pred_check_branch
          %223 = sbr.rel (%p221) target = $region58
        $region57: #{_lambda_.32} parent=53 // pred_region
          _
        $region58: #{_lambda_.32} parent=53 // pred_fallthru
          _
        %s224 = sand.u32 %s36, 1
        %s225 = sand.u32 %s36, 1
        %s226 = smul.addr %s225, 24
        %s227 = scalar_lea.vmem [#allocation3], %s226
        %p228 = pneg %p49
        %p229 = pneg %p46
        %s230 = smul.u32 48, %s19
        %p231 = scmp.lt.s32.totalorder %s230, 143
        %s232 = scalar_select %p231, %s230, 143
        %s233 = smul.addr %s232, 4
        %s234 = scalar_lea.vmem %s1, %s233
        %p235 = pneg %p75
        %p236 = pneg %p72
        %s237 = smul.u32 2, %s18
        %p238 = scmp.lt.s32.totalorder %s237, 3
        %s239 = scalar_select %p238, %s237, 3
        %s240 = smul.addr %s239, 8
        %s241 = scalar_lea.vmem %s2, %s240
        %p242 = pneg %p101
        %p243 = pneg %p98
        %p244 = pneg %p127
        %p245 = pneg %p124
        %s246 = smul.u32 2, %s18
        %p247 = scmp.lt.s32.totalorder %s246, 3
        %s248 = scalar_select %p247, %s246, 3
        %s249 = smul.addr %s248, 8
        %s250 = scalar_lea.vmem %s3, %s249
        %s251 = smul.u32 2, %s18
        %s252 = smul.u32 3, %s19
        %s253 = smul.u32 48, %s19
        %p254 = scmp.lt.s32.totalorder %s253, 143
        %s255 = scalar_select %p254, %s253, 143
        %s256 = smul.addr %s255, 4
        %s257 = scalar_lea.vmem %s1, %s256
        %s258 = smul.u32 48, %s19
        %s259 = smul.u32 2, %s18
        %p260 = scmp.lt.s32.totalorder %s259, 3
        %s261 = scalar_select %p260, %s259, 3
        %s262 = smul.addr %s261, 8
        %s263 = scalar_lea.vmem %s2, %s262
        %s264 = smul.u32 2, %s18
        %s265 = smul.u32 2, %s18
        %p266 = scmp.lt.s32.totalorder %s265, 3
        %s267 = scalar_select %p266, %s265, 3
        %s268 = smul.addr %s267, 8
        %s269 = scalar_lea.vmem %s3, %s268
        %s270 = smul.u32 2, %s18
        %p271 = scmp.eq.s32.totalorder %s19, 0
        // Predicated region
        $region59: #{_lambda_.32} parent=53 // pred_check
          %p272 = pneg %p271
        $region60: #{_lambda_.32} parent=53 // pred_check_branch
          %274 = sbr.rel (%p272) target = $region62
        $region61: #{_lambda_.32} parent=53 // pred_region
          %275 = vst [vmem:[#allocation2] sm:$0xff] 0.0
          %276 = vst [vmem:[#allocation2 + $0x8] sm:$0xff] 0.0
        $region62: #{_lambda_.32} parent=53 // pred_fallthru
          _
        %v277 = vld [vmem:[#allocation2] sm:$0xff]
        %v278 = vld [vmem:[#allocation2 + $0x8] sm:$0xff]
        %v279 = vld [vmem:[%s220] sm:$0xff]
        %v280 = vld [vmem:[%s220 + $0x8] sm:$0xf]
        %v281 = vld [vmem:[%s220 + $0xc] sm:$0xff]
        %v282 = vld [vmem:[%s220 + $0x14] sm:$0xf]
        %v283 = vld [vmem:[%s257] sm:$0xf]
        %v284 = vld [vmem:[%s257 + $0x4] sm:$0xf]
        %v285 = vld [vmem:[%s257 + $0x8] sm:$0xf]
        %v286 = vld [vmem:[%s257 + $0xc] sm:$0xf]
        %v287 = vld [vmem:[%s257 + $0x10] sm:$0xf]
        %v288 = vld [vmem:[%s257 + $0x14] sm:$0xf]
        %v289 = vld [vmem:[%s257 + $0x18] sm:$0xf]
        %v290 = vld [vmem:[%s257 + $0x1c] sm:$0xf]
        %v291 = vld [vmem:[%s257 + $0x20] sm:$0xf]
        %v292 = vld [vmem:[%s257 + $0x24] sm:$0xf]
        %v293 = vld [vmem:[%s257 + $0x28] sm:$0xf]
        %v294 = vld [vmem:[%s257 + $0x2c] sm:$0xf]
        %v295 = vld [vmem:[%s257 + $0x30] sm:$0xf]
        %v296 = vld [vmem:[%s257 + $0x34] sm:$0xf]
        %v297 = vld [vmem:[%s257 + $0x38] sm:$0xf]
        %v298 = vld [vmem:[%s257 + $0x3c] sm:$0xf]
        %v299 = vld [vmem:[%s257 + $0x40] sm:$0xf]
        %v300 = vld [vmem:[%s257 + $0x44] sm:$0xf]
        %v301 = vld [vmem:[%s257 + $0x48] sm:$0xf]
        %v302 = vld [vmem:[%s257 + $0x4c] sm:$0xf]
        %v303 = vld [vmem:[%s257 + $0x50] sm:$0xf]
        %v304 = vld [vmem:[%s257 + $0x54] sm:$0xf]
        %v305 = vld [vmem:[%s257 + $0x58] sm:$0xf]
        %v306 = vld [vmem:[%s257 + $0x5c] sm:$0xf]
        %v307 = vld [vmem:[%s257 + $0x60] sm:$0xf]
        %v308 = vld [vmem:[%s257 + $0x64] sm:$0xf]
        %v309 = vld [vmem:[%s257 + $0x68] sm:$0xf]
        %v310 = vld [vmem:[%s257 + $0x6c] sm:$0xf]
        %v311 = vld [vmem:[%s257 + $0x70] sm:$0xf]
        %v312 = vld [vmem:[%s257 + $0x74] sm:$0xf]
        %v313 = vld [vmem:[%s257 + $0x78] sm:$0xf]
        %v314 = vld [vmem:[%s257 + $0x7c] sm:$0xf]
        %v315 = vld [vmem:[%s257 + $0x80] sm:$0xf]
        %v316 = vld [vmem:[%s257 + $0x84] sm:$0xf]
        %v317 = vld [vmem:[%s257 + $0x88] sm:$0xf]
        %v318 = vld [vmem:[%s257 + $0x8c] sm:$0xf]
        %v319 = vld [vmem:[%s257 + $0x90] sm:$0xf]
        %v320 = vld [vmem:[%s257 + $0x94] sm:$0xf]
        %v321 = vld [vmem:[%s257 + $0x98] sm:$0xf]
        %v322 = vld [vmem:[%s257 + $0x9c] sm:$0xf]
        %v323 = vld [vmem:[%s257 + $0xa0] sm:$0xf]
        %v324 = vld [vmem:[%s257 + $0xa4] sm:$0xf]
        %v325 = vld [vmem:[%s257 + $0xa8] sm:$0xf]
        %v326 = vld [vmem:[%s257 + $0xac] sm:$0xf]
        %v327 = vld [vmem:[%s257 + $0xb0] sm:$0xf]
        %v328 = vld [vmem:[%s257 + $0xb4] sm:$0xf]
        %v329 = vld [vmem:[%s257 + $0xb8] sm:$0xf]
        %v330 = vld [vmem:[%s257 + $0xbc] sm:$0xf]
        %v335 = vunpack.c.l.b16 %v279
        %v336 = vunpack.c.h.b16 %v279
        %v337 = vunpack.c.l.b16 %v280
        %v338 = vunpack.c.l.b16 %v281
        %v339 = vunpack.c.h.b16 %v281
        %v340 = vunpack.c.l.b16 %v282
        %v341 = vpack.c.b16 %v338, %v335
        %v342 = vpack.c.b16 %v339, %v336
        %v343 = vpack.c.b16 %v340, %v337
        %v395 = vunpack.c.l.b16 %v283
        %v396 = vunpack.c.l.b16 %v284
        %v397 = vunpack.c.l.b16 %v285
        %v398 = vunpack.c.l.b16 %v286
        %v399 = vunpack.c.l.b16 %v287
        %v400 = vunpack.c.l.b16 %v288
        %v401 = vunpack.c.l.b16 %v289
        %v402 = vunpack.c.l.b16 %v290
        %v403 = vunpack.c.l.b16 %v291
        %v404 = vunpack.c.l.b16 %v292
        %v405 = vunpack.c.l.b16 %v293
        %v406 = vunpack.c.l.b16 %v294
        %v407 = vunpack.c.l.b16 %v295
        %v408 = vunpack.c.l.b16 %v296
        %v409 = vunpack.c.l.b16 %v297
        %v410 = vunpack.c.l.b16 %v298
        %v411 = vunpack.c.l.b16 %v299
        %v412 = vunpack.c.l.b16 %v300
        %v413 = vunpack.c.l.b16 %v301
        %v414 = vunpack.c.l.b16 %v302
        %v415 = vunpack.c.l.b16 %v303
        %v416 = vunpack.c.l.b16 %v304
        %v417 = vunpack.c.l.b16 %v305
        %v418 = vunpack.c.l.b16 %v306
        %v419 = vunpack.c.l.b16 %v307
        %v420 = vunpack.c.l.b16 %v308
        %v421 = vunpack.c.l.b16 %v309
        %v422 = vunpack.c.l.b16 %v310
        %v423 = vunpack.c.l.b16 %v311
        %v424 = vunpack.c.l.b16 %v312
        %v425 = vunpack.c.l.b16 %v313
        %v426 = vunpack.c.l.b16 %v314
        %v427 = vunpack.c.l.b16 %v315
        %v428 = vunpack.c.l.b16 %v316
        %v429 = vunpack.c.l.b16 %v317
        %v430 = vunpack.c.l.b16 %v318
        %v431 = vunpack.c.l.b16 %v319
        %v432 = vunpack.c.l.b16 %v320
        %v433 = vunpack.c.l.b16 %v321
        %v434 = vunpack.c.l.b16 %v322
        %v435 = vunpack.c.l.b16 %v323
        %v436 = vunpack.c.l.b16 %v324
        %v437 = vunpack.c.l.b16 %v325
        %v438 = vunpack.c.l.b16 %v326
        %v439 = vunpack.c.l.b16 %v327
        %v440 = vunpack.c.l.b16 %v328
        %v441 = vunpack.c.l.b16 %v329
        %v442 = vunpack.c.l.b16 %v330
        %v443 = vpack.c.b16 %v396, %v395
        %v444 = vpack.c.b16 %v398, %v397
        %v445 = vpack.c.b16 %v400, %v399
        %v446 = vpack.c.b16 %v402, %v401
        %v447 = vpack.c.b16 %v404, %v403
        %v448 = vpack.c.b16 %v406, %v405
        %v449 = vpack.c.b16 %v408, %v407
        %v450 = vpack.c.b16 %v410, %v409
        %v451 = vpack.c.b16 %v412, %v411
        %v452 = vpack.c.b16 %v414, %v413
        %v453 = vpack.c.b16 %v416, %v415
        %v454 = vpack.c.b16 %v418, %v417
        %v455 = vpack.c.b16 %v420, %v419
        %v456 = vpack.c.b16 %v422, %v421
        %v457 = vpack.c.b16 %v424, %v423
        %v458 = vpack.c.b16 %v426, %v425
        %v459 = vpack.c.b16 %v428, %v427
        %v460 = vpack.c.b16 %v430, %v429
        %v461 = vpack.c.b16 %v432, %v431
        %v462 = vpack.c.b16 %v434, %v433
        %v463 = vpack.c.b16 %v436, %v435
        %v464 = vpack.c.b16 %v438, %v437
        %v465 = vpack.c.b16 %v440, %v439
        %v466 = vpack.c.b16 %v442, %v441
        %491 = vmatpush.bf16.msra.mxu0 %v450
        %492 = vmatpush.bf16.msra.mxu0 %v449
        %493 = vmatpush.bf16.msra.mxu0 %v448
        %494 = vmatpush.bf16.msra.mxu0 %v447
        %495 = vmatpush.bf16.msra.mxu0 %v446
        %496 = vmatpush.bf16.msra.mxu0 %v445
        %497 = vmatpush.bf16.msra.mxu0 %v444
        %498 = vmatpush.bf16.msra.mxu0 %v443
        %499 = vmatmul.bf16.gmra.mxu0 %v341
        %v500 = vpop.f32.mrf.mxu0
        %v501 = vadd.f32 0.0, %v500
        %v502 = vpop.f32.mrf.mxu0
        %v503 = vadd.f32 0.0, %v502
        %504 = vdwg.mxu0
        %505 = vmatpush.bf16.msra.mxu0 %v458
        %506 = vmatpush.bf16.msra.mxu0 %v457
        %507 = vmatpush.bf16.msra.mxu0 %v456
        %508 = vmatpush.bf16.msra.mxu0 %v455
        %509 = vmatpush.bf16.msra.mxu0 %v454
        %510 = vmatpush.bf16.msra.mxu0 %v453
        %511 = vmatpush.bf16.msra.mxu0 %v452
        %512 = vmatpush.bf16.msra.mxu0 %v451
        %513 = vmatmul.bf16.gmra.mxu0 %v342
        %v514 = vpop.f32.mrf.mxu0
        %v515 = vadd.f32 %v501, %v514
        %v516 = vpop.f32.mrf.mxu0
        %v517 = vadd.f32 %v503, %v516
        %518 = vdwg.mxu0
        %519 = vmatpush.bf16.msra.mxu0 %v466
        %520 = vmatpush.bf16.msra.mxu0 %v465
        %521 = vmatpush.bf16.msra.mxu0 %v464
        %522 = vmatpush.bf16.msra.mxu0 %v463
        %523 = vmatpush.bf16.msra.mxu0 %v462
        %524 = vmatpush.bf16.msra.mxu0 %v461
        %525 = vmatpush.bf16.msra.mxu0 %v460
        %526 = vmatpush.bf16.msra.mxu0 %v459
        %527 = vmatmul.bf16.gmra.mxu0 %v343
        %v528 = vpop.f32.mrf.mxu0
        %v529 = vadd.f32 %v515, %v528
        %v530 = vpop.f32.mrf.mxu0
        %v531 = vadd.f32 %v517, %v530
        %532 = vdwg.mxu0
        %v533 = vadd.f32 %v277, %v529
        %v534 = vadd.f32 %v278, %v531
        %535 = vst [vmem:[#allocation2] sm:$0xff] %v533
        %536 = vst [vmem:[#allocation2 + $0x8] sm:$0xff] %v534
        %p537 = scmp.eq.s32.totalorder %s19, 2
        // Predicated region
        $region63: #{_lambda_.32} parent=53 // pred_check
          %p538 = pneg %p537
        $region64: #{_lambda_.32} parent=53 // pred_check_branch
          %540 = sbr.rel (%p538) target = $region66
        $region65: #{_lambda_.32} parent=53 // pred_region
          %v541 = vld [vmem:[#allocation2] sm:$0xff]
          %v542 = vld [vmem:[#allocation2 + $0x8] sm:$0xff]
          %v543 = vld [vmem:[%s263] sm:$0xff]
          %v544 = vld [vmem:[%s263 + $0x8] sm:$0xff]
          %v545 = vadd.f32 %v541, %v543
          %v546 = vadd.f32 %v542, %v544
          %547 = vst [vmem:[%s269] sm:$0xff] %v545
          %548 = vst [vmem:[%s269 + $0x8] sm:$0xff] %v546
        $region66: #{_lambda_.32} parent=53 // pred_fallthru
          _
        %s549 = smul.u32 2, %s18
        %p550 = scmp.lt.s32.totalorder %s549, 3
        %s551 = scalar_select %p550, %s549, 3
        %s552 = smul.addr %s551, 8
        %s553 = scalar_lea.vmem %s3, %s552
        // Predicated region
        $region67: #{_lambda_.32} parent=53 // pred_check
          %p554 = pneg %p124
        $region68: #{_lambda_.32} parent=53 // pred_check_branch
          %556 = sbr.rel (%p554) target = $region70
        $region69: #{_lambda_.32} parent=53 // pred_region
          %s557 = smul.u32 2, %s18
        $region70: #{_lambda_.32} parent=53 // pred_fallthru
          _
      $region54: #{_lambda_.32} parent=5 // pred_fallthru
        _
      %p558 = scmp.le.s32.totalorder 2, %s9
      // Predicated region
      $region71: #{_lambda_.32} parent=5 // pred_check
        %p559 = pneg %p558
      $region72: #{_lambda_.32} parent=5 // pred_check_branch
        %561 = sbr.rel (%p559) target = $region74
      $region73: #{_lambda_.32} parent=5 // pred_region
        %s562 = ssub.s32 %s9, 2
        // Predicated region
        $region75: #{_lambda_.32} parent=73 // pred_check
          %p563 = pneg %p130
        $region76: #{_lambda_.32} parent=73 // pred_check_branch
          %565 = sbr.rel (%p563) target = $region78
        $region77: #{_lambda_.32} parent=73 // pred_region
          %s566 = smul.u32 2, %s20
          %p567 = scmp.lt.s32.totalorder %s566, 3
          %s568 = scalar_select %p567, %s566, 3
          %s569 = smul.addr %s568, 8
          %s570 = scalar_lea.vmem %s3, %s569
        $region78: #{_lambda_.32} parent=73 // pred_fallthru
          _
      $region74: #{_lambda_.32} parent=5 // pred_fallthru
        _
    $region6: #{_lambda_.32} parent=1 // loop_footer
      %s13 = sadd.s32 1, %s9
    $region7: #{_lambda_.32} parent=1 // loop_footer_branch
      %8 = sbr.rel target = $region3
    $region8: #{_lambda_.32} parent=1 // loop_exit
      _

</llo_original>
